<compile_context>
chip_gen: v7x
topology: tpu7x:2x2x1
jax: 0.10.0
libtpu: 0.0.40
codegen_flags: <defaults>
</compile_context>

<pallas_src>
import functools
import math

import jax
import jax.numpy as jnp
from jax.experimental import pallas as pl
from jax.experimental.pallas import tpu as pltpu

EPS = 1e-5
# Conservative everywhere (incl. v7x's 64 MiB physical VMEM); slabs keep the
# per-step working set small instead of raising the limit.
VMEM_LIMIT_BYTES = 32 * 1024 * 1024


# ------------------------------ small helpers -------------------------------

def _pick_fc_tile(n, c0):
    """Largest divisor of n that is a multiple of lcm(c0,128) and <= ~30720."""
    base = (c0 * 128) // math.gcd(c0, 128)          # 1920 for c0=15
    target = max(base, min(30720, n // 2))
    for k in range(target // base, 0, -1):
        t = k * base
        if n % t == 0:
            return t
    return n                                        # n = HW*15 is always a multiple of 15


def _pick_rows(h, cap):
    """Largest divisor of h that is <= min(cap, h//2)."""
    target = max(1, min(cap, h // 2))
    for t in range(target, 0, -1):
        if h % t == 0:
            return t
    return h


def _bn_scale_shift(s, q, n, gamma, beta):
    """Fold per-channel sum / sumsq into train-mode BN scale & shift (f32)."""
    mean = s / n
    var = jnp.maximum(q / n - mean * mean, 0.0)      # biased, train-mode
    scale = gamma * jax.lax.rsqrt(var + EPS)
    shift = beta - mean * scale
    return (scale.reshape(1, -1).astype(jnp.float32),
            shift.reshape(1, -1).astype(jnp.float32))


def _stats_rows(s, q, c):
    """Pack (1,C) sum / sumsq into an (8,C) block (rows 0/1 used, rest zero)."""
    row = jax.lax.broadcasted_iota(jnp.int32, (8, c), 0)
    return jnp.where(row == 0, s, jnp.where(row == 1, q, 0.0))


# --------------------------------- kernels ----------------------------------

def fc_kernel(x_ref, w_ref, b_ref, z_ref, st_ref, *, C0):
    # x_ref : (B, Din)  bf16      w_ref : (Din, TR) bf16     b_ref : (1, TR) f32
    # z_ref : (B, TR)   bf16 (raw fc output, hw-major/channel-minor columns)
    # st_ref: (1, 8, C0) f32 (per-tile channel sum / sumsq)
    TR = w_ref.shape[1]
    z = jnp.dot(x_ref[...], w_ref[...],
                preferred_element_type=jnp.float32) + b_ref[...]
    z_ref[...] = z.astype(jnp.bfloat16)
    # Column l of this tile holds channel l % C0 (tile size is a multiple of C0).
    col = jax.lax.broadcasted_iota(jnp.int32, (TR, C0), 0) % C0
    ch = jax.lax.broadcasted_iota(jnp.int32, (TR, C0), 1)
    sel = (col == ch).astype(jnp.float32)
    sums = jnp.concatenate([jnp.sum(z, axis=0, keepdims=True),
                            jnp.sum(z * z, axis=0, keepdims=True)], axis=0)
    sq = jnp.dot(sums, sel, preferred_element_type=jnp.float32)   # (2, C0)
    st_ref[0] = _stats_rows(sq[0:1], sq[1:2], C0)


def conv3x3_kernel(xc_ref, xt_ref, xb_ref, sc_ref, sh_ref, w_ref, cb_ref,
                   y_ref, st_ref, s_ref, *, TH, W):
    # xc_ref: (1, TH*W, Cin) bf16  -- raw previous-layer output, TH image rows
    # xt_ref/xb_ref: (1, W, Cin) bf16 -- halo rows (zeroed at image edges)
    # sc/sh : (1, Cin) f32 BN(prev layer);  w_ref: (3, 3*Cin, Cout) bf16
    # cb_ref: (1, Cout) f32;  y_ref: (1, TH*W, Cout) bf16 (raw conv output)
    # st_ref: (1, 1, 8, Cout) f32;  s_ref: VMEM (TH+2, W, 3*Cin) bf16
    Cin = xc_ref.shape[-1]
    Cout = y_ref.shape[-1]
    j = pl.program_id(1)
    ns = pl.num_programs(1)

    sc = sc_ref[...]
    sh = sh_ref[...]

    def act(v):   # fused BN(previous layer) + ReLU, then bf16 for the MXU
        return jnp.maximum(v.astype(jnp.float32) * sc + sh, 0.0).astype(jnp.bfloat16)

    top_m = (j > 0).astype(jnp.bfloat16)          # zero halo at image top
    bot_m = (j < ns - 1).astype(jnp.bfloat16)     # zero halo at image bottom
    a_t = act(xt_ref[0]) * top_m                  # (W, Cin)
    a_c = act(xc_ref[0])                          # (TH*W, Cin)
    a_b = act(xb_ref[0]) * bot_m                  # (W, Cin)

    a3 = jnp.concatenate([a_t, a_c, a_b], axis=0).reshape(TH + 2, W, Cin)
    zc = jnp.zeros((TH + 2, 1, Cin), jnp.bfloat16)
    left = jnp.concatenate([zc, a3[:, :W - 1, :]], axis=1)    # x[.., w-1], zero col pad
    right = jnp.concatenate([a3[:, 1:, :], zc], axis=1)       # x[.., w+1], zero col pad
    # dx taps folded into K: channel groups [w-1 | w | w+1], no per-tap masks.
    s_ref[...] = jnp.concatenate([left, a3, right], axis=-1)

    acc = jnp.zeros((TH * W, Cout), jnp.float32)
    for dy in range(3):                                        # unrolled: 3 matmuls
        patch = s_ref[dy:dy + TH].reshape(TH * W, 3 * Cin)
        acc = acc + jnp.dot(patch, w_ref[dy], preferred_element_type=jnp.float32)
    acc = acc + cb_ref[...]                                    # f32 pre-BN output

    y_ref[0] = acc.astype(jnp.bfloat16)
    st_ref[0, 0] = _stats_rows(jnp.sum(acc, axis=0, keepdims=True),
                               jnp.sum(acc * acc, axis=0, keepdims=True), Cout)


def conv2x2s2_kernel(x_ref, sc_ref, sh_ref, w_ref, cb_ref, o_ref, *, THo, Wo):
    # x_ref : (1, 2*THo*Wo, 50) bf16 -- conv2 output viewed with the even/odd
    #         column pair folded into the channel dim (dx taps in K).
    # sc/sh : (1, 50) f32 (BN2, tiled x2);  w_ref: (2, 50, 3) bf16; cb: (1,3) f32
    # o_ref : (1, THo*Wo, 3) f32 -- final tanh output slab
    C2p = x_ref.shape[-1]
    Cout = o_ref.shape[-1]
    x = x_ref[0].astype(jnp.float32)
    h = jnp.maximum(x * sc_ref[...] + sh_ref[...], 0.0).astype(jnp.bfloat16)
    h4 = h.reshape(THo, 2, Wo, C2p)                 # (out-row, dy, out-col, 2*Cin)
    acc = jnp.zeros((THo * Wo, Cout), jnp.float32)
    for dy in range(2):                             # 2 slab-wide matmuls
        part = h4[:, dy, :, :].reshape(THo * Wo, C2p)
        acc = acc + jnp.dot(part, w_ref[dy], preferred_element_type=jnp.float32)
    o_ref[0] = jnp.tanh(acc + cb_ref[...])


# ----------------------------- pallas_call wrappers -------------------------

def _fc(xb, w7, b7, c0):
    B, Din = xb.shape
    N = w7.shape[1]
    TR = _pick_fc_tile(N, c0)
    nt = N // TR
    kern = functools.partial(fc_kernel, C0=c0)
    return pl.pallas_call(
        kern,
        grid=(nt,),
        in_specs=[
            pl.BlockSpec((B, Din), lambda j: (0, 0)),
            pl.BlockSpec((Din, TR), lambda j: (0, j)),
            pl.BlockSpec((1, TR), lambda j: (0, j)),
        ],
        out_specs=[
            pl.BlockSpec((B, TR), lambda j: (0, j)),
            pl.BlockSpec((1, 8, c0), lambda j: (j, 0, 0)),
        ],
        out_shape=[
            jax.ShapeDtypeStruct((B, N), jnp.bfloat16),
            jax.ShapeDtypeStruct((nt, 8, c0), jnp.float32),
        ],
        compiler_params=pltpu.CompilerParams(
            dimension_semantics=("parallel",),
            vmem_limit_bytes=VMEM_LIMIT_BYTES),
    )(xb, w7, b7)


def _conv3x3(x, scale, shift, w, cb, H, W):
    B, HW, Cin = x.shape
    Cout = w.shape[-1]
    TH = _pick_rows(H, 32)                 # image rows per slab
    ns = H // TH
    kern = functools.partial(conv3x3_kernel, TH=TH, W=W)
    return pl.pallas_call(
        kern,
        grid=(B, ns),
        in_specs=[
            pl.BlockSpec((1, TH * W, Cin), lambda b, j: (b, j, 0)),
            # one-row halo above / below the slab (clamped at image edges,
            # zeroed in-kernel when at the boundary)
            pl.BlockSpec((1, W, Cin),
                         lambda b, j: (b, jnp.maximum(j * TH - 1, 0), 0)),
            pl.BlockSpec((1, W, Cin),
                         lambda b, j: (b, jnp.minimum((j + 1) * TH, H - 1), 0)),
            pl.BlockSpec((1, Cin), lambda b, j: (0, 0)),
            pl.BlockSpec((1, Cin), lambda b, j: (0, 0)),
            pl.BlockSpec((3, 3 * Cin, Cout), lambda b, j: (0, 0, 0)),
            pl.BlockSpec((1, Cout), lambda b, j: (0, 0)),
        ],
        out_specs=[
            pl.BlockSpec((1, TH * W, Cout), lambda b, j: (b, j, 0)),
            pl.BlockSpec((1, 1, 8, Cout), lambda b, j: (b, j, 0, 0)),
        ],
        out_shape=[
            jax.ShapeDtypeStruct((B, HW, Cout), jnp.bfloat16),
            jax.ShapeDtypeStruct((B, ns, 8, Cout), jnp.float32),
        ],
        scratch_shapes=[pltpu.VMEM((TH + 2, W, 3 * Cin), jnp.bfloat16)],
        compiler_params=pltpu.CompilerParams(
            dimension_semantics=("parallel", "parallel"),
            vmem_limit_bytes=VMEM_LIMIT_BYTES),
    )(x, x, x, scale, shift, w, cb)


def _conv2x2s2(x2, scale2, shift2, w3, cb3, Ho, Wo):
    B, _, C2p = x2.shape                   # x2: (B, 2*Ho*Wo, 50)
    Cout = w3.shape[-1]
    THo = _pick_rows(Ho, 16)               # output rows per slab
    ns = Ho // THo
    kern = functools.partial(conv2x2s2_kernel, THo=THo, Wo=Wo)
    return pl.pallas_call(
        kern,
        grid=(B, ns),
        in_specs=[
            pl.BlockSpec((1, 2 * THo * Wo, C2p), lambda b, j: (b, j, 0)),
            pl.BlockSpec((1, C2p), lambda b, j: (0, 0)),
            pl.BlockSpec((1, C2p), lambda b, j: (0, 0)),
            pl.BlockSpec((2, C2p, Cout), lambda b, j: (0, 0, 0)),
            pl.BlockSpec((1, Cout), lambda b, j: (0, 0)),
        ],
        out_specs=pl.BlockSpec((1, THo * Wo, Cout), lambda b, j: (b, j, 0)),
        out_shape=jax.ShapeDtypeStruct((B, Ho * Wo, Cout), jnp.float32),
        compiler_params=pltpu.CompilerParams(
            dimension_semantics=("parallel", "parallel"),
            vmem_limit_bytes=VMEM_LIMIT_BYTES),
    )(x2, scale2, shift2, w3, cb3)


# --------------------------------- forward ----------------------------------

def cnn_generator_forward(prep, x, *, H, W):
    B = x.shape[0]
    C0, C1, C2 = 15, 50, 25
    HW = H * W
    Ho, Wo = H // 2, W // 2
    n = float(B * HW)

    zflat, st0 = _fc(x.astype(jnp.bfloat16), prep['w7'], prep['b7'], C0)
    z = zflat.reshape(B, HW, C0)                       # free: columns are hw-major
    sc0, sh0 = _bn_scale_shift(st0[:, 0, :].sum(0), st0[:, 1, :].sum(0), n,
                               prep['bn0_g'], prep['bn0_b'])

    y1, st1 = _conv3x3(z, sc0, sh0, prep['c1_w'], prep['c1_b'], H, W)
    sc1, sh1 = _bn_scale_shift(st1[:, :, 0, :].sum((0, 1)),
                               st1[:, :, 1, :].sum((0, 1)), n,
                               prep['bn1_g'], prep['bn1_b'])

    y2, st2 = _conv3x3(y1, sc1, sh1, prep['c2_w'], prep['c2_b'], H, W)
    sc2, sh2 = _bn_scale_shift(st2[:, :, 0, :].sum((0, 1)),
                               st2[:, :, 1, :].sum((0, 1)), n,
                               prep['bn2_g'], prep['bn2_b'])

    # Free reshape: (B, H*W, 25) -> (B, H*Wo, 50).  The 50 "channels" are the
    # even/odd column pair of the 25 real channels, so conv3's dx taps are
    # folded into K with no strided access.
    y2r = y2.reshape(B, H * Wo, 2 * C2)
    sc2t = jnp.tile(sc2, (1, 2))
    sh2t = jnp.tile(sh2, (1, 2))
    y3 = _conv2x2s2(y2r, sc2t, sh2t, prep['c3_w'], prep['c3_b'], Ho, Wo)

    # back to NCHW to match the PyTorch module's output convention
    return y3.reshape(B, Ho, Wo, 3).transpose(0, 3, 1, 2)


# ------------------------ parameters (PyTorch layout) ------------------------

def init_params(key, noize_dim, label_dim, H, W):
    Din = noize_dim + label_dim
    HW = H * W
    C0, C1, C2, C3 = 15, 50, 25, 3
    ks = jax.random.split(key, 8)

    def u(k, shape, fan_in):
        bound = 1.0 / jnp.sqrt(jnp.float32(fan_in))
        return jax.random.uniform(k, shape, jnp.float32, -bound, bound)

    return dict(
        # nn.Linear(Din, 15*H*W) stored (Din, 15*HW); column f corresponds to
        # PyTorch feature f = c*HW + h*W + w (matches the .view(B,15,H,W)).
        fc_w=u(ks[0], (Din, C0 * HW), Din),
        fc_b=u(ks[1], (C0 * HW,), Din),
        bn0_g=jnp.ones((C0,), jnp.float32), bn0_b=jnp.zeros((C0,), jnp.float32),
        # Conv2d weights stored (kh, kw, Cin, Cout)
        c1_w=u(ks[2], (3, 3, C0, C1), C0 * 9), c1_b=u(ks[3], (C1,), C0 * 9),
        bn1_g=jnp.ones((C1,), jnp.float32), bn1_b=jnp.zeros((C1,), jnp.float32),
        c2_w=u(ks[4], (3, 3, C1, C2), C1 * 9), c2_b=u(ks[5], (C2,), C1 * 9),
        bn2_g=jnp.ones((C2,), jnp.float32), bn2_b=jnp.zeros((C2,), jnp.float32),
        c3_w=u(ks[6], (2, 2, C2, C3), C2 * 4), c3_b=u(ks[7], (C3,), C2 * 4),
    )


def prepare_params(params, H, W):
    """One-time layout / dtype prep for the kernels."""
    HW = H * W
    C0, C1, C2, C3 = 15, 50, 25, 3
    Din = params['fc_w'].shape[0]
    # fc columns reordered hw-major/channel-minor: col' = hw*15 + c
    w7 = params['fc_w'].reshape(Din, C0, HW).transpose(0, 2, 1).reshape(Din, HW * C0)
    b7 = params['fc_b'].reshape(C0, HW).T.reshape(1, HW * C0)
    # 3x3 conv weights packed (kh, 3*Cin, Cout): row = kx*Cin + c  (dx in K)
    c1 = params['c1_w'].reshape(3, 3 * C0, C1)
    c2 = params['c2_w'].reshape(3, 3 * C1, C2)
    # 2x2/s2 conv packed (kh, 2*Cin, Cout): rows [kx=0 chans | kx=1 chans]
    c3 = params['c3_w']
    w3 = jnp.stack([jnp.concatenate([c3[dy, 0], c3[dy, 1]], axis=0)
                    for dy in range(2)], axis=0)
    return dict(
        w7=w7.astype(jnp.bfloat16), b7=b7.astype(jnp.float32),
        c1_w=c1.astype(jnp.bfloat16),
        c1_b=params['c1_b'].reshape(1, C1).astype(jnp.float32),
        c2_w=c2.astype(jnp.bfloat16),
        c2_b=params['c2_b'].reshape(1, C2).astype(jnp.float32),
        c3_w=w3.astype(jnp.bfloat16),
        c3_b=params['c3_b'].reshape(1, C3).astype(jnp.float32),
        bn0_g=params['bn0_g'], bn0_b=params['bn0_b'],
        bn1_g=params['bn1_g'], bn1_b=params['bn1_b'],
        bn2_g=params['bn2_g'], bn2_b=params['bn2_b'],
    )


# ----------------------------- pure-JAX reference ----------------------------

def _ref_forward(params, x, H, W):
    """Reference mirroring the kernel path's bf16 quantization points."""
    B = x.shape[0]
    C0 = 15
    f32 = jnp.float32
    bf = lambda a: a.astype(jnp.bfloat16).astype(f32)

    y = bf(x) @ bf(params['fc_w']) + params['fc_b']
    a = y.reshape(B, C0, H, W).transpose(0, 2, 3, 1)          # NHWC, f32

    def bn(a_raw, g, b):  # train-mode stats from the f32 pre-activation
        m = a_raw.mean(axis=(0, 1, 2))
        v = a_raw.var(axis=(0, 1, 2))
        return (bf(a_raw) - m) * jax.lax.rsqrt(v + EPS) * g + b

    def conv(a_in, w, b, stride, pad):
        return jax.lax.conv_general_dilated(
            bf(a_in), bf(w), window_strides=(stride, stride), padding=pad,
            dimension_numbers=('NHWC', 'HWIO', 'NHWC')) + b

    h = jnp.maximum(bn(a, params['bn0_g'], params['bn0_b']), 0.0)
    y1 = conv(h, params['c1_w'], params['c1_b'], 1, 'SAME')
    h = jnp.maximum(bn(y1, params['bn1_g'], params['bn1_b']), 0.0)
    y2 = conv(h, params['c2_w'], params['c2_b'], 1, 'SAME')
    h = jnp.maximum(bn(y2, params['bn2_g'], params['bn2_b']), 0.0)
    y3 = jnp.tanh(conv(h, params['c3_w'], params['c3_b'], 2, 'VALID'))
    return y3.transpose(0, 3, 1, 2)


if __name__ == "__main__":
    key = jax.random.PRNGKey(0)
    noize_dim, label_dim = 10, 6
    H = W = 16                       # small stand-in for the module's 192x192
    B = 2

    kp, kx = jax.random.split(key)
    params = init_params(kp, noize_dim, label_dim, H, W)
    prep = prepare_params(params, H, W)
    x = jax.random.normal(kx, (B, noize_dim + label_dim), jnp.float32)

    fwd = jax.jit(functools.partial(cnn_generator_forward, H=H, W=W))
    out = fwd(prep, x)
    jax.block_until_ready(out)

    assert out.shape == (B, 3, H // 2, W // 2), out.shape
    assert out.dtype == jnp.float32
    assert bool(jnp.all(jnp.isfinite(out)))

    ref = _ref_forward(params, x, H, W)
    err = float(jnp.max(jnp.abs(out - ref)))
    assert err < 2e-2, f"max abs error vs reference: {err}"

    print("KERNEL_OK")
</pallas_src>

<mosaic_0001>
module attributes {stable_mosaic.version = 11 : i64} {
  func.func @fc_kernel(%arg0: i32, %arg1: memref<2x16xbf16, #tpu.memory_space<vmem>>, %arg2: memref<16x1920xbf16, #tpu.memory_space<vmem>>, %arg3: memref<1x1920xf32, #tpu.memory_space<vmem>>, %arg4: memref<2x1920xbf16, #tpu.memory_space<vmem>>, %arg5: memref<1x8x15xf32, #tpu.memory_space<vmem>>) attributes {dimension_semantics = [#tpu.dimension_semantics<parallel>], iteration_bounds = array<i64: 2>, scalar_prefetch = 0 : i64, scratch_operands = 0 : i64, tpu.core_type = #tpu.core_type<tc>, window_params = [{pipeline_mode = #tpu.pipeline_mode<synchronous>, transform_indices = @transform_0, window_bounds = array<i64: 2, 16>}, {transform_indices = @transform_1, window_bounds = array<i64: 16, 1920>}, {transform_indices = @transform_2, window_bounds = array<i64: 1, 1920>}, {transform_indices = @transform_3, window_bounds = array<i64: 2, 1920>}, {transform_indices = @transform_4, window_bounds = array<i64: 1, 8, 15>}]} {
    %c0 = arith.constant 0 : index
    %c0_0 = arith.constant 0 : index
    %0 = vector.load %arg1[%c0, %c0_0] : memref<2x16xbf16, #tpu.memory_space<vmem>>, vector<2x16xbf16>
    %c0_1 = arith.constant 0 : index
    %c0_2 = arith.constant 0 : index
    %1 = vector.load %arg2[%c0_1, %c0_2] : memref<16x1920xbf16, #tpu.memory_space<vmem>>, vector<16x1920xbf16>
    %cst = arith.constant dense<0.000000e+00> : vector<2x1920xf32>
    %2 = tpu.matmul %0, %1, %cst {dimension_numbers = #tpu.dot_dimension_numbers<[1], [0], [0], [1], [0, 0, 1, 1], [], []>} : vector<2x16xbf16>, vector<16x1920xbf16>, vector<2x1920xf32> -> vector<2x1920xf32>
    %c0_3 = arith.constant 0 : index
    %c0_4 = arith.constant 0 : index
    %3 = vector.load %arg3[%c0_3, %c0_4] : memref<1x1920xf32, #tpu.memory_space<vmem>>, vector<1x1920xf32>
    %4 = vector.broadcast %3 : vector<1x1920xf32> to vector<2x1920xf32>
    %5 = arith.addf %2, %4 : vector<2x1920xf32>
    %6 = arith.truncf %5 : vector<2x1920xf32> to vector<2x1920xbf16>
    %c0_5 = arith.constant 0 : index
    %c0_6 = arith.constant 0 : index
    %7 = vector.load %arg4[%c0_5, %c0_6] : memref<2x1920xbf16, #tpu.memory_space<vmem>>, vector<2x1920xbf16>
    tpu.vector_store %arg4[%c0_5, %c0_6], %6 {strides = array<i32>} : memref<2x1920xbf16, #tpu.memory_space<vmem>>, vector<2x1920xbf16>,
    %8 = tpu.iota {dimensions = array<i32: 0>} : vector<1920x15xi32>
    %c15_i32 = arith.constant 15 : i32
    %c0_i32 = arith.constant 0 : i32
    %9 = arith.cmpi eq, %c15_i32, %c0_i32 : i32
    %c1_i32 = arith.constant 1 : i32
    %10 = arith.select %9, %c1_i32, %c15_i32 : i32
    %11 = vector.broadcast %10 : i32 to vector<1920x15xi32>
    %12 = arith.remsi %8, %11 : vector<1920x15xi32>
    %c0_i32_7 = arith.constant 0 : i32
    %13 = vector.broadcast %c0_i32_7 : i32 to vector<1920x15xi32>
    %14 = arith.cmpi ne, %12, %13 : vector<1920x15xi32>
    %c0_i32_8 = arith.constant 0 : i32
    %15 = vector.broadcast %c0_i32_8 : i32 to vector<1920x15xi32>
    %16 = arith.cmpi slt, %12, %15 : vector<1920x15xi32>
    %c0_i32_9 = arith.constant 0 : i32
    %17 = arith.cmpi slt, %10, %c0_i32_9 : i32
    %18 = vector.broadcast %17 : i1 to vector<1920x15xi1>
    %19 = vector.broadcast %18 : vector<1920x15xi1> to vector<1920x15xi1>
    %20 = arith.xori %16, %19 : vector<1920x15xi1>
    %21 = arith.andi %20, %14 : vector<1920x15xi1>
    %22 = vector.broadcast %10 : i32 to vector<1920x15xi32>
    %23 = arith.addi %12, %22 : vector<1920x15xi32>
    %24 = arith.select %21, %23, %12 : vector<1920x15xi1>, vector<1920x15xi32>
    %25 = tpu.iota {dimensions = array<i32: 1>} : vector<1920x15xi32>
    %26 = arith.cmpi eq, %24, %25 : vector<1920x15xi32>
    %27 = arith.extui %26 : vector<1920x15xi1> to vector<1920x15xi32>
    %28 = arith.sitofp %27 : vector<1920x15xi32> to vector<1920x15xf32>
    %cst_10 = arith.constant dense<0.000000e+00> : vector<1920xf32>
    %29 = vector.multi_reduction <add>, %5, %cst_10 [0] : vector<2x1920xf32> to vector<1920xf32>
    %30 = vector.shape_cast %29 : vector<1920xf32> to vector<1x1920xf32>
    %31 = arith.mulf %5, %5 : vector<2x1920xf32>
    %cst_11 = arith.constant dense<0.000000e+00> : vector<1920xf32>
    %32 = vector.multi_reduction <add>, %31, %cst_11 [0] : vector<2x1920xf32> to vector<1920xf32>
    %33 = vector.shape_cast %32 : vector<1920xf32> to vector<1x1920xf32>
    %34 = tpu.concatenate %30, %33 in 0 : vector<1x1920xf32>, vector<1x1920xf32> -> vector<2x1920xf32>
    %cst_12 = arith.constant dense<0.000000e+00> : vector<2x15xf32>
    %35 = tpu.matmul %34, %28, %cst_12 {dimension_numbers = #tpu.dot_dimension_numbers<[1], [0], [0], [1], [0, 0, 1, 1], [], []>} : vector<2x1920xf32>, vector<1920x15xf32>, vector<2x15xf32> -> vector<2x15xf32>
    %36 = vector.extract_strided_slice %35 {offsets = [0, 0], sizes = [1, 15], strides = [1, 1]} : vector<2x15xf32> to vector<1x15xf32>
    %37 = vector.extract_strided_slice %35 {offsets = [1, 0], sizes = [1, 15], strides = [1, 1]} : vector<2x15xf32> to vector<1x15xf32>
    %38 = tpu.iota {dimensions = array<i32: 0>} : vector<8x15xi32>
    %c0_i32_13 = arith.constant 0 : i32
    %39 = vector.broadcast %c0_i32_13 : i32 to vector<8x15xi32>
    %40 = arith.cmpi eq, %38, %39 : vector<8x15xi32>
    %c1_i32_14 = arith.constant 1 : i32
    %41 = vector.broadcast %c1_i32_14 : i32 to vector<8x15xi32>
    %42 = arith.cmpi eq, %38, %41 : vector<8x15xi32>
    %cst_15 = arith.constant 0.000000e+00 : f32
    %43 = vector.shape_cast %37 : vector<1x15xf32> to vector<1x15xf32>
    %44 = vector.broadcast %43 : vector<1x15xf32> to vector<8x15xf32>
    %45 = vector.broadcast %cst_15 : f32 to vector<8x15xf32>
    %46 = arith.select %42, %44, %45 : vector<8x15xi1>, vector<8x15xf32>
    %47 = vector.shape_cast %36 : vector<1x15xf32> to vector<1x15xf32>
    %48 = vector.broadcast %47 : vector<1x15xf32> to vector<8x15xf32>
    %49 = arith.select %40, %48, %46 : vector<8x15xi1>, vector<8x15xf32>
    %c0_16 = arith.constant 0 : index
    %c0_17 = arith.constant 0 : index
    %c0_18 = arith.constant 0 : index
    %50 = vector.load %arg5[%c0_16, %c0_17, %c0_18] : memref<1x8x15xf32, #tpu.memory_space<vmem>>, vector<1x8x15xf32>
    %51 = vector.shape_cast %50 : vector<1x8x15xf32> to vector<8x15xf32>
    %52 = vector.shape_cast %49 : vector<8x15xf32> to vector<1x8x15xf32>
    tpu.vector_store %arg5[%c0_16, %c0_17, %c0_18], %52 {strides = array<i32>} : memref<1x8x15xf32, #tpu.memory_space<vmem>>, vector<1x8x15xf32>,
    return
  }
  func.func @transform_0(%arg0: i32) -> (i32, i32) {
    %c0_i32 = arith.constant 0 : i32
    %c0_i32_0 = arith.constant 0 : i32
    %c0_i32_1 = arith.constant 0 : i32
    return %c0_i32, %c0_i32_0 : i32, i32
  }
  func.func @transform_1(%arg0: i32) -> (i32, i32) {
    %c0_i32 = arith.constant 0 : i32
    %c0_i32_0 = arith.constant 0 : i32
    return %c0_i32, %arg0 : i32, i32
  }
  func.func @transform_2(%arg0: i32) -> (i32, i32) {
    %c0_i32 = arith.constant 0 : i32
    %c0_i32_0 = arith.constant 0 : i32
    return %c0_i32, %arg0 : i32, i32
  }
  func.func @transform_3(%arg0: i32) -> (i32, i32) {
    %c0_i32 = arith.constant 0 : i32
    %c0_i32_0 = arith.constant 0 : i32
    return %c0_i32, %arg0 : i32, i32
  }
  func.func @transform_4(%arg0: i32) -> (i32, i32, i32) {
    %c0_i32 = arith.constant 0 : i32
    %c0_i32_0 = arith.constant 0 : i32
    %c0_i32_1 = arith.constant 0 : i32
    return %arg0, %c0_i32, %c0_i32_0 : i32, i32, i32
  }
}

module attributes {stable_mosaic.version = 11 : i64} {
  func.func @conv3x3_kernel(%arg0: i32, %arg1: i32, %arg2: memref<1x128x15xbf16, #tpu.memory_space<vmem>>, %arg3: memref<1x16x15xbf16, #tpu.memory_space<vmem>>, %arg4: memref<1x16x15xbf16, #tpu.memory_space<vmem>>, %arg5: memref<1x15xf32, #tpu.memory_space<vmem>>, %arg6: memref<1x15xf32, #tpu.memory_space<vmem>>, %arg7: memref<3x45x50xbf16, #tpu.memory_space<vmem>>, %arg8: memref<1x50xf32, #tpu.memory_space<vmem>>, %arg9: memref<1x128x50xbf16, #tpu.memory_space<vmem>>, %arg10: memref<1x1x8x50xf32, #tpu.memory_space<vmem>>, %arg11: memref<10x16x45xbf16, #tpu.memory_space<vmem>>) attributes {dimension_semantics = [#tpu.dimension_semantics<parallel>, #tpu.dimension_semantics<parallel>], iteration_bounds = array<i64: 2, 2>, scalar_prefetch = 0 : i64, scratch_operands = 1 : i64, tpu.core_type = #tpu.core_type<tc>, window_params = [{transform_indices = @transform_0, window_bounds = array<i64: 1, 128, 15>}, {transform_indices = @transform_1, window_bounds = array<i64: 1, 16, 15>}, {transform_indices = @transform_2, window_bounds = array<i64: 1, 16, 15>}, {pipeline_mode = #tpu.pipeline_mode<synchronous>, transform_indices = @transform_3, window_bounds = array<i64: 1, 15>}, {pipeline_mode = #tpu.pipeline_mode<synchronous>, transform_indices = @transform_4, window_bounds = array<i64: 1, 15>}, {pipeline_mode = #tpu.pipeline_mode<synchronous>, transform_indices = @transform_5, window_bounds = array<i64: 3, 45, 50>}, {pipeline_mode = #tpu.pipeline_mode<synchronous>, transform_indices = @transform_6, window_bounds = array<i64: 1, 50>}, {transform_indices = @transform_7, window_bounds = array<i64: 1, 128, 50>}, {transform_indices = @transform_8, window_bounds = array<i64: 1, 1, 8, 50>}]} {
    %c0 = arith.constant 0 : index
    %c0_0 = arith.constant 0 : index
    %0 = vector.load %arg5[%c0, %c0_0] : memref<1x15xf32, #tpu.memory_space<vmem>>, vector<1x15xf32>
    %c0_1 = arith.constant 0 : index
    %c0_2 = arith.constant 0 : index
    %1 = vector.load %arg6[%c0_1, %c0_2] : memref<1x15xf32, #tpu.memory_space<vmem>>, vector<1x15xf32>
    %c0_i32 = arith.constant 0 : i32
    %2 = arith.cmpi sgt, %arg1, %c0_i32 : i32
    %3 = arith.extui %2 : i1 to i32
    %4 = arith.sitofp %3 : i32 to f32
    %5 = arith.truncf %4 : f32 to bf16
    %c1_i32 = arith.constant 1 : i32
    %6 = arith.cmpi slt, %arg1, %c1_i32 : i32
    %7 = arith.extui %6 : i1 to i32
    %8 = arith.sitofp %7 : i32 to f32
    %9 = arith.truncf %8 : f32 to bf16
    %c0_3 = arith.constant 0 : index
    %c0_4 = arith.constant 0 : index
    %c0_5 = arith.constant 0 : index
    %10 = vector.load %arg3[%c0_3, %c0_4, %c0_5] : memref<1x16x15xbf16, #tpu.memory_space<vmem>>, vector<1x16x15xbf16>
    %11 = vector.shape_cast %10 : vector<1x16x15xbf16> to vector<16x15xbf16>
    %12 = arith.extf %11 : vector<16x15xbf16> to vector<16x15xf32>
    %13 = vector.broadcast %0 : vector<1x15xf32> to vector<16x15xf32>
    %14 = arith.mulf %12, %13 : vector<16x15xf32>
    %15 = vector.broadcast %1 : vector<1x15xf32> to vector<16x15xf32>
    %16 = arith.addf %14, %15 : vector<16x15xf32>
    %cst = arith.constant 0.000000e+00 : f32
    %17 = vector.broadcast %cst : f32 to vector<16x15xf32>
    %18 = arith.maximumf %16, %17 : vector<16x15xf32>
    %19 = arith.truncf %18 : vector<16x15xf32> to vector<16x15xbf16>
    %20 = vector.broadcast %5 : bf16 to vector<16x15xbf16>
    %21 = arith.mulf %19, %20 : vector<16x15xbf16>
    %c0_6 = arith.constant 0 : index
    %c0_7 = arith.constant 0 : index
    %c0_8 = arith.constant 0 : index
    %22 = vector.load %arg2[%c0_6, %c0_7, %c0_8] : memref<1x128x15xbf16, #tpu.memory_space<vmem>>, vector<1x128x15xbf16>
    %23 = vector.shape_cast %22 : vector<1x128x15xbf16> to vector<128x15xbf16>
    %24 = arith.extf %23 : vector<128x15xbf16> to vector<128x15xf32>
    %25 = vector.broadcast %0 : vector<1x15xf32> to vector<128x15xf32>
    %26 = arith.mulf %24, %25 : vector<128x15xf32>
    %27 = vector.broadcast %1 : vector<1x15xf32> to vector<128x15xf32>
    %28 = arith.addf %26, %27 : vector<128x15xf32>
    %cst_9 = arith.constant 0.000000e+00 : f32
    %29 = vector.broadcast %cst_9 : f32 to vector<128x15xf32>
    %30 = arith.maximumf %28, %29 : vector<128x15xf32>
    %31 = arith.truncf %30 : vector<128x15xf32> to vector<128x15xbf16>
    %c0_10 = arith.constant 0 : index
    %c0_11 = arith.constant 0 : index
    %c0_12 = arith.constant 0 : index
    %32 = vector.load %arg4[%c0_10, %c0_11, %c0_12] : memref<1x16x15xbf16, #tpu.memory_space<vmem>>, vector<1x16x15xbf16>
    %33 = vector.shape_cast %32 : vector<1x16x15xbf16> to vector<16x15xbf16>
    %34 = arith.extf %33 : vector<16x15xbf16> to vector<16x15xf32>
    %35 = vector.broadcast %0 : vector<1x15xf32> to vector<16x15xf32>
    %36 = arith.mulf %34, %35 : vector<16x15xf32>
    %37 = vector.broadcast %1 : vector<1x15xf32> to vector<16x15xf32>
    %38 = arith.addf %36, %37 : vector<16x15xf32>
    %cst_13 = arith.constant 0.000000e+00 : f32
    %39 = vector.broadcast %cst_13 : f32 to vector<16x15xf32>
    %40 = arith.maximumf %38, %39 : vector<16x15xf32>
    %41 = arith.truncf %40 : vector<16x15xf32> to vector<16x15xbf16>
    %42 = vector.broadcast %9 : bf16 to vector<16x15xbf16>
    %43 = arith.mulf %41, %42 : vector<16x15xbf16>
    %44 = tpu.concatenate %21, %31, %43 in 0 : vector<16x15xbf16>, vector<128x15xbf16>, vector<16x15xbf16> -> vector<160x15xbf16>
    %45 = vector.shape_cast %44 : vector<160x15xbf16> to vector<10x16x15xbf16>
    %cst_14 = arith.constant 0.000000e+00 : bf16
    %46 = vector.broadcast %cst_14 : bf16 to vector<10x1x15xbf16>
    %47 = vector.extract_strided_slice %45 {offsets = [0, 0, 0], sizes = [10, 15, 15], strides = [1, 1, 1]} : vector<10x16x15xbf16> to vector<10x15x15xbf16>
    %48 = tpu.concatenate %46, %47 in 1 : vector<10x1x15xbf16>, vector<10x15x15xbf16> -> vector<10x16x15xbf16>
    %49 = vector.extract_strided_slice %45 {offsets = [0, 1, 0], sizes = [10, 15, 15], strides = [1, 1, 1]} : vector<10x16x15xbf16> to vector<10x15x15xbf16>
    %50 = tpu.concatenate %49, %46 in 1 : vector<10x15x15xbf16>, vector<10x1x15xbf16> -> vector<10x16x15xbf16>
    %51 = tpu.concatenate %48, %45, %50 in 2 : vector<10x16x15xbf16>, vector<10x16x15xbf16>, vector<10x16x15xbf16> -> vector<10x16x45xbf16>
    %c0_15 = arith.constant 0 : index
    %c0_16 = arith.constant 0 : index
    %c0_17 = arith.constant 0 : index
    %52 = vector.load %arg11[%c0_15, %c0_16, %c0_17] : memref<10x16x45xbf16, #tpu.memory_space<vmem>>, vector<10x16x45xbf16>
    tpu.vector_store %arg11[%c0_15, %c0_16, %c0_17], %51 {strides = array<i32>} : memref<10x16x45xbf16, #tpu.memory_space<vmem>>, vector<10x16x45xbf16>,
    %cst_18 = arith.constant 0.000000e+00 : f32
    %53 = vector.broadcast %cst_18 : f32 to vector<128x50xf32>
    %c0_19 = arith.constant 0 : index
    %c0_20 = arith.constant 0 : index
    %c0_21 = arith.constant 0 : index
    %54 = vector.load %arg11[%c0_19, %c0_20, %c0_21] : memref<10x16x45xbf16, #tpu.memory_space<vmem>>, vector<8x16x45xbf16>
    %55 = vector.shape_cast %54 : vector<8x16x45xbf16> to vector<128x45xbf16>
    %c0_22 = arith.constant 0 : index
    %c0_23 = arith.constant 0 : index
    %c0_24 = arith.constant 0 : index
    %56 = vector.load %arg7[%c0_22, %c0_23, %c0_24] : memref<3x45x50xbf16, #tpu.memory_space<vmem>>, vector<1x45x50xbf16>
    %57 = vector.shape_cast %56 : vector<1x45x50xbf16> to vector<45x50xbf16>
    %cst_25 = arith.constant dense<0.000000e+00> : vector<128x50xf32>
    %58 = tpu.matmul %55, %57, %cst_25 {dimension_numbers = #tpu.dot_dimension_numbers<[1], [0], [0], [1], [0, 0, 1, 1], [], []>} : vector<128x45xbf16>, vector<45x50xbf16>, vector<128x50xf32> -> vector<128x50xf32>
    %59 = arith.addf %53, %58 : vector<128x50xf32>
    %c1 = arith.constant 1 : index
    %c0_26 = arith.constant 0 : index
    %c0_27 = arith.constant 0 : index
    %60 = vector.load %arg11[%c1, %c0_26, %c0_27] : memref<10x16x45xbf16, #tpu.memory_space<vmem>>, vector<8x16x45xbf16>
    %61 = vector.shape_cast %60 : vector<8x16x45xbf16> to vector<128x45xbf16>
    %c1_28 = arith.constant 1 : index
    %c0_29 = arith.constant 0 : index
    %c0_30 = arith.constant 0 : index
    %62 = vector.load %arg7[%c1_28, %c0_29, %c0_30] : memref<3x45x50xbf16, #tpu.memory_space<vmem>>, vector<1x45x50xbf16>
    %63 = vector.shape_cast %62 : vector<1x45x50xbf16> to vector<45x50xbf16>
    %cst_31 = arith.constant dense<0.000000e+00> : vector<128x50xf32>
    %64 = tpu.matmul %61, %63, %cst_31 {dimension_numbers = #tpu.dot_dimension_numbers<[1], [0], [0], [1], [0, 0, 1, 1], [], []>} : vector<128x45xbf16>, vector<45x50xbf16>, vector<128x50xf32> -> vector<128x50xf32>
    %65 = arith.addf %59, %64 : vector<128x50xf32>
    %c2 = arith.constant 2 : index
    %c0_32 = arith.constant 0 : index
    %c0_33 = arith.constant 0 : index
    %66 = vector.load %arg11[%c2, %c0_32, %c0_33] : memref<10x16x45xbf16, #tpu.memory_space<vmem>>, vector<8x16x45xbf16>
    %67 = vector.shape_cast %66 : vector<8x16x45xbf16> to vector<128x45xbf16>
    %c2_34 = arith.constant 2 : index
    %c0_35 = arith.constant 0 : index
    %c0_36 = arith.constant 0 : index
    %68 = vector.load %arg7[%c2_34, %c0_35, %c0_36] : memref<3x45x50xbf16, #tpu.memory_space<vmem>>, vector<1x45x50xbf16>
    %69 = vector.shape_cast %68 : vector<1x45x50xbf16> to vector<45x50xbf16>
    %cst_37 = arith.constant dense<0.000000e+00> : vector<128x50xf32>
    %70 = tpu.matmul %67, %69, %cst_37 {dimension_numbers = #tpu.dot_dimension_numbers<[1], [0], [0], [1], [0, 0, 1, 1], [], []>} : vector<128x45xbf16>, vector<45x50xbf16>, vector<128x50xf32> -> vector<128x50xf32>
    %71 = arith.addf %65, %70 : vector<128x50xf32>
    %c0_38 = arith.constant 0 : index
    %c0_39 = arith.constant 0 : index
    %72 = vector.load %arg8[%c0_38, %c0_39] : memref<1x50xf32, #tpu.memory_space<vmem>>, vector<1x50xf32>
    %73 = vector.broadcast %72 : vector<1x50xf32> to vector<128x50xf32>
    %74 = arith.addf %71, %73 : vector<128x50xf32>
    %75 = arith.truncf %74 : vector<128x50xf32> to vector<128x50xbf16>
    %c0_40 = arith.constant 0 : index
    %c0_41 = arith.constant 0 : index
    %c0_42 = arith.constant 0 : index
    %76 = vector.load %arg9[%c0_40, %c0_41, %c0_42] : memref<1x128x50xbf16, #tpu.memory_space<vmem>>, vector<1x128x50xbf16>
    %77 = vector.shape_cast %76 : vector<1x128x50xbf16> to vector<128x50xbf16>
    %78 = vector.shape_cast %75 : vector<128x50xbf16> to vector<1x128x50xbf16>
    tpu.vector_store %arg9[%c0_40, %c0_41, %c0_42], %78 {strides = array<i32>} : memref<1x128x50xbf16, #tpu.memory_space<vmem>>, vector<1x128x50xbf16>,
    %cst_43 = arith.constant dense<0.000000e+00> : vector<50xf32>
    %79 = vector.multi_reduction <add>, %74, %cst_43 [0] : vector<128x50xf32> to vector<50xf32>
    %80 = vector.shape_cast %79 : vector<50xf32> to vector<1x50xf32>
    %81 = arith.mulf %74, %74 : vector<128x50xf32>
    %cst_44 = arith.constant dense<0.000000e+00> : vector<50xf32>
    %82 = vector.multi_reduction <add>, %81, %cst_44 [0] : vector<128x50xf32> to vector<50xf32>
    %83 = vector.shape_cast %82 : vector<50xf32> to vector<1x50xf32>
    %84 = tpu.iota {dimensions = array<i32: 0>} : vector<8x50xi32>
    %c0_i32_45 = arith.constant 0 : i32
    %85 = vector.broadcast %c0_i32_45 : i32 to vector<8x50xi32>
    %86 = arith.cmpi eq, %84, %85 : vector<8x50xi32>
    %c1_i32_46 = arith.constant 1 : i32
    %87 = vector.broadcast %c1_i32_46 : i32 to vector<8x50xi32>
    %88 = arith.cmpi eq, %84, %87 : vector<8x50xi32>
    %cst_47 = arith.constant 0.000000e+00 : f32
    %89 = vector.shape_cast %83 : vector<1x50xf32> to vector<1x50xf32>
    %90 = vector.broadcast %89 : vector<1x50xf32> to vector<8x50xf32>
    %91 = vector.broadcast %cst_47 : f32 to vector<8x50xf32>
    %92 = arith.select %88, %90, %91 : vector<8x50xi1>, vector<8x50xf32>
    %93 = vector.shape_cast %80 : vector<1x50xf32> to vector<1x50xf32>
    %94 = vector.broadcast %93 : vector<1x50xf32> to vector<8x50xf32>
    %95 = arith.select %86, %94, %92 : vector<8x50xi1>, vector<8x50xf32>
    %c0_48 = arith.constant 0 : index
    %c0_49 = arith.constant 0 : index
    %c0_50 = arith.constant 0 : index
    %c0_51 = arith.constant 0 : index
    %96 = vector.load %arg10[%c0_48, %c0_49, %c0_50, %c0_51] : memref<1x1x8x50xf32, #tpu.memory_space<vmem>>, vector<1x1x8x50xf32>
    %97 = vector.shape_cast %96 : vector<1x1x8x50xf32> to vector<8x50xf32>
    %98 = vector.shape_cast %95 : vector<8x50xf32> to vector<1x1x8x50xf32>
    tpu.vector_store %arg10[%c0_48, %c0_49, %c0_50, %c0_51], %98 {strides = array<i32>} : memref<1x1x8x50xf32, #tpu.memory_space<vmem>>, vector<1x1x8x50xf32>,
    return
  }
  func.func @transform_0(%arg0: i32, %arg1: i32) -> (i32, i32, i32) {
    %c0_i32 = arith.constant 0 : i32
    %c0_i32_0 = arith.constant 0 : i32
    return %arg0, %arg1, %c0_i32 : i32, i32, i32
  }
  func.func @transform_1(%arg0: i32, %arg1: i32) -> (i32, i32, i32) {
    %c8_i32 = arith.constant 8 : i32
    %0 = arith.muli %arg1, %c8_i32 : i32
    %c1_i32 = arith.constant 1 : i32
    %1 = arith.subi %0, %c1_i32 : i32
    %c0_i32 = arith.constant 0 : i32
    %2 = arith.maxsi %1, %c0_i32 : i32
    %c0_i32_0 = arith.constant 0 : i32
    %c0_i32_1 = arith.constant 0 : i32
    return %arg0, %2, %c0_i32_0 : i32, i32, i32
  }
  func.func @transform_2(%arg0: i32, %arg1: i32) -> (i32, i32, i32) {
    %c1_i32 = arith.constant 1 : i32
    %0 = arith.addi %arg1, %c1_i32 : i32
    %c8_i32 = arith.constant 8 : i32
    %1 = arith.muli %0, %c8_i32 : i32
    %c15_i32 = arith.constant 15 : i32
    %2 = arith.minsi %1, %c15_i32 : i32
    %c0_i32 = arith.constant 0 : i32
    %c0_i32_0 = arith.constant 0 : i32
    return %arg0, %2, %c0_i32 : i32, i32, i32
  }
  func.func @transform_3(%arg0: i32, %arg1: i32) -> (i32, i32) {
    %c0_i32 = arith.constant 0 : i32
    %c0_i32_0 = arith.constant 0 : i32
    %c0_i32_1 = arith.constant 0 : i32
    return %c0_i32, %c0_i32_0 : i32, i32
  }
  func.func @transform_4(%arg0: i32, %arg1: i32) -> (i32, i32) {
    %c0_i32 = arith.constant 0 : i32
    %c0_i32_0 = arith.constant 0 : i32
    %c0_i32_1 = arith.constant 0 : i32
    return %c0_i32, %c0_i32_0 : i32, i32
  }
  func.func @transform_5(%arg0: i32, %arg1: i32) -> (i32, i32, i32) {
    %c0_i32 = arith.constant 0 : i32
    %c0_i32_0 = arith.constant 0 : i32
    %c0_i32_1 = arith.constant 0 : i32
    %c0_i32_2 = arith.constant 0 : i32
    return %c0_i32, %c0_i32_0, %c0_i32_1 : i32, i32, i32
  }
  func.func @transform_6(%arg0: i32, %arg1: i32) -> (i32, i32) {
    %c0_i32 = arith.constant 0 : i32
    %c0_i32_0 = arith.constant 0 : i32
    %c0_i32_1 = arith.constant 0 : i32
    return %c0_i32, %c0_i32_0 : i32, i32
  }
  func.func @transform_7(%arg0: i32, %arg1: i32) -> (i32, i32, i32) {
    %c0_i32 = arith.constant 0 : i32
    %c0_i32_0 = arith.constant 0 : i32
    return %arg0, %arg1, %c0_i32 : i32, i32, i32
  }
  func.func @transform_8(%arg0: i32, %arg1: i32) -> (i32, i32, i32, i32) {
    %c0_i32 = arith.constant 0 : i32
    %c0_i32_0 = arith.constant 0 : i32
    %c0_i32_1 = arith.constant 0 : i32
    return %arg0, %arg1, %c0_i32, %c0_i32_0 : i32, i32, i32, i32
  }
}

module attributes {stable_mosaic.version = 11 : i64} {
  func.func @conv3x3_kernel(%arg0: i32, %arg1: i32, %arg2: memref<1x128x50xbf16, #tpu.memory_space<vmem>>, %arg3: memref<1x16x50xbf16, #tpu.memory_space<vmem>>, %arg4: memref<1x16x50xbf16, #tpu.memory_space<vmem>>, %arg5: memref<1x50xf32, #tpu.memory_space<vmem>>, %arg6: memref<1x50xf32, #tpu.memory_space<vmem>>, %arg7: memref<3x150x25xbf16, #tpu.memory_space<vmem>>, %arg8: memref<1x25xf32, #tpu.memory_space<vmem>>, %arg9: memref<1x128x25xbf16, #tpu.memory_space<vmem>>, %arg10: memref<1x1x8x25xf32, #tpu.memory_space<vmem>>, %arg11: memref<10x16x150xbf16, #tpu.memory_space<vmem>>) attributes {dimension_semantics = [#tpu.dimension_semantics<parallel>, #tpu.dimension_semantics<parallel>], iteration_bounds = array<i64: 2, 2>, scalar_prefetch = 0 : i64, scratch_operands = 1 : i64, tpu.core_type = #tpu.core_type<tc>, window_params = [{transform_indices = @transform_0, window_bounds = array<i64: 1, 128, 50>}, {transform_indices = @transform_1, window_bounds = array<i64: 1, 16, 50>}, {transform_indices = @transform_2, window_bounds = array<i64: 1, 16, 50>}, {pipeline_mode = #tpu.pipeline_mode<synchronous>, transform_indices = @transform_3, window_bounds = array<i64: 1, 50>}, {pipeline_mode = #tpu.pipeline_mode<synchronous>, transform_indices = @transform_4, window_bounds = array<i64: 1, 50>}, {pipeline_mode = #tpu.pipeline_mode<synchronous>, transform_indices = @transform_5, window_bounds = array<i64: 3, 150, 25>}, {pipeline_mode = #tpu.pipeline_mode<synchronous>, transform_indices = @transform_6, window_bounds = array<i64: 1, 25>}, {transform_indices = @transform_7, window_bounds = array<i64: 1, 128, 25>}, {transform_indices = @transform_8, window_bounds = array<i64: 1, 1, 8, 25>}]} {
    %c0 = arith.constant 0 : index
    %c0_0 = arith.constant 0 : index
    %0 = vector.load %arg5[%c0, %c0_0] : memref<1x50xf32, #tpu.memory_space<vmem>>, vector<1x50xf32>
    %c0_1 = arith.constant 0 : index
    %c0_2 = arith.constant 0 : index
    %1 = vector.load %arg6[%c0_1, %c0_2] : memref<1x50xf32, #tpu.memory_space<vmem>>, vector<1x50xf32>
    %c0_i32 = arith.constant 0 : i32
    %2 = arith.cmpi sgt, %arg1, %c0_i32 : i32
    %3 = arith.extui %2 : i1 to i32
    %4 = arith.sitofp %3 : i32 to f32
    %5 = arith.truncf %4 : f32 to bf16
    %c1_i32 = arith.constant 1 : i32
    %6 = arith.cmpi slt, %arg1, %c1_i32 : i32
    %7 = arith.extui %6 : i1 to i32
    %8 = arith.sitofp %7 : i32 to f32
    %9 = arith.truncf %8 : f32 to bf16
    %c0_3 = arith.constant 0 : index
    %c0_4 = arith.constant 0 : index
    %c0_5 = arith.constant 0 : index
    %10 = vector.load %arg3[%c0_3, %c0_4, %c0_5] : memref<1x16x50xbf16, #tpu.memory_space<vmem>>, vector<1x16x50xbf16>
    %11 = vector.shape_cast %10 : vector<1x16x50xbf16> to vector<16x50xbf16>
    %12 = arith.extf %11 : vector<16x50xbf16> to vector<16x50xf32>
    %13 = vector.broadcast %0 : vector<1x50xf32> to vector<16x50xf32>
    %14 = arith.mulf %12, %13 : vector<16x50xf32>
    %15 = vector.broadcast %1 : vector<1x50xf32> to vector<16x50xf32>
    %16 = arith.addf %14, %15 : vector<16x50xf32>
    %cst = arith.constant 0.000000e+00 : f32
    %17 = vector.broadcast %cst : f32 to vector<16x50xf32>
    %18 = arith.maximumf %16, %17 : vector<16x50xf32>
    %19 = arith.truncf %18 : vector<16x50xf32> to vector<16x50xbf16>
    %20 = vector.broadcast %5 : bf16 to vector<16x50xbf16>
    %21 = arith.mulf %19, %20 : vector<16x50xbf16>
    %c0_6 = arith.constant 0 : index
    %c0_7 = arith.constant 0 : index
    %c0_8 = arith.constant 0 : index
    %22 = vector.load %arg2[%c0_6, %c0_7, %c0_8] : memref<1x128x50xbf16, #tpu.memory_space<vmem>>, vector<1x128x50xbf16>
    %23 = vector.shape_cast %22 : vector<1x128x50xbf16> to vector<128x50xbf16>
    %24 = arith.extf %23 : vector<128x50xbf16> to vector<128x50xf32>
    %25 = vector.broadcast %0 : vector<1x50xf32> to vector<128x50xf32>
    %26 = arith.mulf %24, %25 : vector<128x50xf32>
    %27 = vector.broadcast %1 : vector<1x50xf32> to vector<128x50xf32>
    %28 = arith.addf %26, %27 : vector<128x50xf32>
    %cst_9 = arith.constant 0.000000e+00 : f32
    %29 = vector.broadcast %cst_9 : f32 to vector<128x50xf32>
    %30 = arith.maximumf %28, %29 : vector<128x50xf32>
    %31 = arith.truncf %30 : vector<128x50xf32> to vector<128x50xbf16>
    %c0_10 = arith.constant 0 : index
    %c0_11 = arith.constant 0 : index
    %c0_12 = arith.constant 0 : index
    %32 = vector.load %arg4[%c0_10, %c0_11, %c0_12] : memref<1x16x50xbf16, #tpu.memory_space<vmem>>, vector<1x16x50xbf16>
    %33 = vector.shape_cast %32 : vector<1x16x50xbf16> to vector<16x50xbf16>
    %34 = arith.extf %33 : vector<16x50xbf16> to vector<16x50xf32>
    %35 = vector.broadcast %0 : vector<1x50xf32> to vector<16x50xf32>
    %36 = arith.mulf %34, %35 : vector<16x50xf32>
    %37 = vector.broadcast %1 : vector<1x50xf32> to vector<16x50xf32>
    %38 = arith.addf %36, %37 : vector<16x50xf32>
    %cst_13 = arith.constant 0.000000e+00 : f32
    %39 = vector.broadcast %cst_13 : f32 to vector<16x50xf32>
    %40 = arith.maximumf %38, %39 : vector<16x50xf32>
    %41 = arith.truncf %40 : vector<16x50xf32> to vector<16x50xbf16>
    %42 = vector.broadcast %9 : bf16 to vector<16x50xbf16>
    %43 = arith.mulf %41, %42 : vector<16x50xbf16>
    %44 = tpu.concatenate %21, %31, %43 in 0 : vector<16x50xbf16>, vector<128x50xbf16>, vector<16x50xbf16> -> vector<160x50xbf16>
    %45 = vector.shape_cast %44 : vector<160x50xbf16> to vector<10x16x50xbf16>
    %cst_14 = arith.constant 0.000000e+00 : bf16
    %46 = vector.broadcast %cst_14 : bf16 to vector<10x1x50xbf16>
    %47 = vector.extract_strided_slice %45 {offsets = [0, 0, 0], sizes = [10, 15, 50], strides = [1, 1, 1]} : vector<10x16x50xbf16> to vector<10x15x50xbf16>
    %48 = tpu.concatenate %46, %47 in 1 : vector<10x1x50xbf16>, vector<10x15x50xbf16> -> vector<10x16x50xbf16>
    %49 = vector.extract_strided_slice %45 {offsets = [0, 1, 0], sizes = [10, 15, 50], strides = [1, 1, 1]} : vector<10x16x50xbf16> to vector<10x15x50xbf16>
    %50 = tpu.concatenate %49, %46 in 1 : vector<10x15x50xbf16>, vector<10x1x50xbf16> -> vector<10x16x50xbf16>
    %51 = tpu.concatenate %48, %45, %50 in 2 : vector<10x16x50xbf16>, vector<10x16x50xbf16>, vector<10x16x50xbf16> -> vector<10x16x150xbf16>
    %c0_15 = arith.constant 0 : index
    %c0_16 = arith.constant 0 : index
    %c0_17 = arith.constant 0 : index
    %52 = vector.load %arg11[%c0_15, %c0_16, %c0_17] : memref<10x16x150xbf16, #tpu.memory_space<vmem>>, vector<10x16x150xbf16>
    tpu.vector_store %arg11[%c0_15, %c0_16, %c0_17], %51 {strides = array<i32>} : memref<10x16x150xbf16, #tpu.memory_space<vmem>>, vector<10x16x150xbf16>,
    %cst_18 = arith.constant 0.000000e+00 : f32
    %53 = vector.broadcast %cst_18 : f32 to vector<128x25xf32>
    %c0_19 = arith.constant 0 : index
    %c0_20 = arith.constant 0 : index
    %c0_21 = arith.constant 0 : index
    %54 = vector.load %arg11[%c0_19, %c0_20, %c0_21] : memref<10x16x150xbf16, #tpu.memory_space<vmem>>, vector<8x16x150xbf16>
    %55 = vector.shape_cast %54 : vector<8x16x150xbf16> to vector<128x150xbf16>
    %c0_22 = arith.constant 0 : index
    %c0_23 = arith.constant 0 : index
    %c0_24 = arith.constant 0 : index
    %56 = vector.load %arg7[%c0_22, %c0_23, %c0_24] : memref<3x150x25xbf16, #tpu.memory_space<vmem>>, vector<1x150x25xbf16>
    %57 = vector.shape_cast %56 : vector<1x150x25xbf16> to vector<150x25xbf16>
    %cst_25 = arith.constant dense<0.000000e+00> : vector<128x25xf32>
    %58 = tpu.matmul %55, %57, %cst_25 {dimension_numbers = #tpu.dot_dimension_numbers<[1], [0], [0], [1], [0, 0, 1, 1], [], []>} : vector<128x150xbf16>, vector<150x25xbf16>, vector<128x25xf32> -> vector<128x25xf32>
    %59 = arith.addf %53, %58 : vector<128x25xf32>
    %c1 = arith.constant 1 : index
    %c0_26 = arith.constant 0 : index
    %c0_27 = arith.constant 0 : index
    %60 = vector.load %arg11[%c1, %c0_26, %c0_27] : memref<10x16x150xbf16, #tpu.memory_space<vmem>>, vector<8x16x150xbf16>
    %61 = vector.shape_cast %60 : vector<8x16x150xbf16> to vector<128x150xbf16>
    %c1_28 = arith.constant 1 : index
    %c0_29 = arith.constant 0 : index
    %c0_30 = arith.constant 0 : index
    %62 = vector.load %arg7[%c1_28, %c0_29, %c0_30] : memref<3x150x25xbf16, #tpu.memory_space<vmem>>, vector<1x150x25xbf16>
    %63 = vector.shape_cast %62 : vector<1x150x25xbf16> to vector<150x25xbf16>
    %cst_31 = arith.constant dense<0.000000e+00> : vector<128x25xf32>
    %64 = tpu.matmul %61, %63, %cst_31 {dimension_numbers = #tpu.dot_dimension_numbers<[1], [0], [0], [1], [0, 0, 1, 1], [], []>} : vector<128x150xbf16>, vector<150x25xbf16>, vector<128x25xf32> -> vector<128x25xf32>
    %65 = arith.addf %59, %64 : vector<128x25xf32>
    %c2 = arith.constant 2 : index
    %c0_32 = arith.constant 0 : index
    %c0_33 = arith.constant 0 : index
    %66 = vector.load %arg11[%c2, %c0_32, %c0_33] : memref<10x16x150xbf16, #tpu.memory_space<vmem>>, vector<8x16x150xbf16>
    %67 = vector.shape_cast %66 : vector<8x16x150xbf16> to vector<128x150xbf16>
    %c2_34 = arith.constant 2 : index
    %c0_35 = arith.constant 0 : index
    %c0_36 = arith.constant 0 : index
    %68 = vector.load %arg7[%c2_34, %c0_35, %c0_36] : memref<3x150x25xbf16, #tpu.memory_space<vmem>>, vector<1x150x25xbf16>
    %69 = vector.shape_cast %68 : vector<1x150x25xbf16> to vector<150x25xbf16>
    %cst_37 = arith.constant dense<0.000000e+00> : vector<128x25xf32>
    %70 = tpu.matmul %67, %69, %cst_37 {dimension_numbers = #tpu.dot_dimension_numbers<[1], [0], [0], [1], [0, 0, 1, 1], [], []>} : vector<128x150xbf16>, vector<150x25xbf16>, vector<128x25xf32> -> vector<128x25xf32>
    %71 = arith.addf %65, %70 : vector<128x25xf32>
    %c0_38 = arith.constant 0 : index
    %c0_39 = arith.constant 0 : index
    %72 = vector.load %arg8[%c0_38, %c0_39] : memref<1x25xf32, #tpu.memory_space<vmem>>, vector<1x25xf32>
    %73 = vector.broadcast %72 : vector<1x25xf32> to vector<128x25xf32>
    %74 = arith.addf %71, %73 : vector<128x25xf32>
    %75 = arith.truncf %74 : vector<128x25xf32> to vector<128x25xbf16>
    %c0_40 = arith.constant 0 : index
    %c0_41 = arith.constant 0 : index
    %c0_42 = arith.constant 0 : index
    %76 = vector.load %arg9[%c0_40, %c0_41, %c0_42] : memref<1x128x25xbf16, #tpu.memory_space<vmem>>, vector<1x128x25xbf16>
    %77 = vector.shape_cast %76 : vector<1x128x25xbf16> to vector<128x25xbf16>
    %78 = vector.shape_cast %75 : vector<128x25xbf16> to vector<1x128x25xbf16>
    tpu.vector_store %arg9[%c0_40, %c0_41, %c0_42], %78 {strides = array<i32>} : memref<1x128x25xbf16, #tpu.memory_space<vmem>>, vector<1x128x25xbf16>,
    %cst_43 = arith.constant dense<0.000000e+00> : vector<25xf32>
    %79 = vector.multi_reduction <add>, %74, %cst_43 [0] : vector<128x25xf32> to vector<25xf32>
    %80 = vector.shape_cast %79 : vector<25xf32> to vector<1x25xf32>
    %81 = arith.mulf %74, %74 : vector<128x25xf32>
    %cst_44 = arith.constant dense<0.000000e+00> : vector<25xf32>
    %82 = vector.multi_reduction <add>, %81, %cst_44 [0] : vector<128x25xf32> to vector<25xf32>
    %83 = vector.shape_cast %82 : vector<25xf32> to vector<1x25xf32>
    %84 = tpu.iota {dimensions = array<i32: 0>} : vector<8x25xi32>
    %c0_i32_45 = arith.constant 0 : i32
    %85 = vector.broadcast %c0_i32_45 : i32 to vector<8x25xi32>
    %86 = arith.cmpi eq, %84, %85 : vector<8x25xi32>
    %c1_i32_46 = arith.constant 1 : i32
    %87 = vector.broadcast %c1_i32_46 : i32 to vector<8x25xi32>
    %88 = arith.cmpi eq, %84, %87 : vector<8x25xi32>
    %cst_47 = arith.constant 0.000000e+00 : f32
    %89 = vector.shape_cast %83 : vector<1x25xf32> to vector<1x25xf32>
    %90 = vector.broadcast %89 : vector<1x25xf32> to vector<8x25xf32>
    %91 = vector.broadcast %cst_47 : f32 to vector<8x25xf32>
    %92 = arith.select %88, %90, %91 : vector<8x25xi1>, vector<8x25xf32>
    %93 = vector.shape_cast %80 : vector<1x25xf32> to vector<1x25xf32>
    %94 = vector.broadcast %93 : vector<1x25xf32> to vector<8x25xf32>
    %95 = arith.select %86, %94, %92 : vector<8x25xi1>, vector<8x25xf32>
    %c0_48 = arith.constant 0 : index
    %c0_49 = arith.constant 0 : index
    %c0_50 = arith.constant 0 : index
    %c0_51 = arith.constant 0 : index
    %96 = vector.load %arg10[%c0_48, %c0_49, %c0_50, %c0_51] : memref<1x1x8x25xf32, #tpu.memory_space<vmem>>, vector<1x1x8x25xf32>
    %97 = vector.shape_cast %96 : vector<1x1x8x25xf32> to vector<8x25xf32>
    %98 = vector.shape_cast %95 : vector<8x25xf32> to vector<1x1x8x25xf32>
    tpu.vector_store %arg10[%c0_48, %c0_49, %c0_50, %c0_51], %98 {strides = array<i32>} : memref<1x1x8x25xf32, #tpu.memory_space<vmem>>, vector<1x1x8x25xf32>,
    return
  }
  func.func @transform_0(%arg0: i32, %arg1: i32) -> (i32, i32, i32) {
    %c0_i32 = arith.constant 0 : i32
    %c0_i32_0 = arith.constant 0 : i32
    return %arg0, %arg1, %c0_i32 : i32, i32, i32
  }
  func.func @transform_1(%arg0: i32, %arg1: i32) -> (i32, i32, i32) {
    %c8_i32 = arith.constant 8 : i32
    %0 = arith.muli %arg1, %c8_i32 : i32
    %c1_i32 = arith.constant 1 : i32
    %1 = arith.subi %0, %c1_i32 : i32
    %c0_i32 = arith.constant 0 : i32
    %2 = arith.maxsi %1, %c0_i32 : i32
    %c0_i32_0 = arith.constant 0 : i32
    %c0_i32_1 = arith.constant 0 : i32
    return %arg0, %2, %c0_i32_0 : i32, i32, i32
  }
  func.func @transform_2(%arg0: i32, %arg1: i32) -> (i32, i32, i32) {
    %c1_i32 = arith.constant 1 : i32
    %0 = arith.addi %arg1, %c1_i32 : i32
    %c8_i32 = arith.constant 8 : i32
    %1 = arith.muli %0, %c8_i32 : i32
    %c15_i32 = arith.constant 15 : i32
    %2 = arith.minsi %1, %c15_i32 : i32
    %c0_i32 = arith.constant 0 : i32
    %c0_i32_0 = arith.constant 0 : i32
    return %arg0, %2, %c0_i32 : i32, i32, i32
  }
  func.func @transform_3(%arg0: i32, %arg1: i32) -> (i32, i32) {
    %c0_i32 = arith.constant 0 : i32
    %c0_i32_0 = arith.constant 0 : i32
    %c0_i32_1 = arith.constant 0 : i32
    return %c0_i32, %c0_i32_0 : i32, i32
  }
  func.func @transform_4(%arg0: i32, %arg1: i32) -> (i32, i32) {
    %c0_i32 = arith.constant 0 : i32
    %c0_i32_0 = arith.constant 0 : i32
    %c0_i32_1 = arith.constant 0 : i32
    return %c0_i32, %c0_i32_0 : i32, i32
  }
  func.func @transform_5(%arg0: i32, %arg1: i32) -> (i32, i32, i32) {
    %c0_i32 = arith.constant 0 : i32
    %c0_i32_0 = arith.constant 0 : i32
    %c0_i32_1 = arith.constant 0 : i32
    %c0_i32_2 = arith.constant 0 : i32
    return %c0_i32, %c0_i32_0, %c0_i32_1 : i32, i32, i32
  }
  func.func @transform_6(%arg0: i32, %arg1: i32) -> (i32, i32) {
    %c0_i32 = arith.constant 0 : i32
    %c0_i32_0 = arith.constant 0 : i32
    %c0_i32_1 = arith.constant 0 : i32
    return %c0_i32, %c0_i32_0 : i32, i32
  }
  func.func @transform_7(%arg0: i32, %arg1: i32) -> (i32, i32, i32) {
    %c0_i32 = arith.constant 0 : i32
    %c0_i32_0 = arith.constant 0 : i32
    return %arg0, %arg1, %c0_i32 : i32, i32, i32
  }
  func.func @transform_8(%arg0: i32, %arg1: i32) -> (i32, i32, i32, i32) {
    %c0_i32 = arith.constant 0 : i32
    %c0_i32_0 = arith.constant 0 : i32
    %c0_i32_1 = arith.constant 0 : i32
    return %arg0, %arg1, %c0_i32, %c0_i32_0 : i32, i32, i32, i32
  }
}

module attributes {stable_mosaic.version = 11 : i64} {
  func.func @conv2x2s2_kernel(%arg0: i32, %arg1: i32, %arg2: memref<1x64x50xbf16, #tpu.memory_space<vmem>>, %arg3: memref<1x50xf32, #tpu.memory_space<vmem>>, %arg4: memref<1x50xf32, #tpu.memory_space<vmem>>, %arg5: memref<2x50x3xbf16, #tpu.memory_space<vmem>>, %arg6: memref<1x3xf32, #tpu.memory_space<vmem>>, %arg7: memref<1x32x3xf32, #tpu.memory_space<vmem>>) attributes {dimension_semantics = [#tpu.dimension_semantics<parallel>, #tpu.dimension_semantics<parallel>], iteration_bounds = array<i64: 2, 2>, scalar_prefetch = 0 : i64, scratch_operands = 0 : i64, tpu.core_type = #tpu.core_type<tc>, window_params = [{transform_indices = @transform_0, window_bounds = array<i64: 1, 64, 50>}, {pipeline_mode = #tpu.pipeline_mode<synchronous>, transform_indices = @transform_1, window_bounds = array<i64: 1, 50>}, {pipeline_mode = #tpu.pipeline_mode<synchronous>, transform_indices = @transform_2, window_bounds = array<i64: 1, 50>}, {pipeline_mode = #tpu.pipeline_mode<synchronous>, transform_indices = @transform_3, window_bounds = array<i64: 2, 50, 3>}, {pipeline_mode = #tpu.pipeline_mode<synchronous>, transform_indices = @transform_4, window_bounds = array<i64: 1, 3>}, {transform_indices = @transform_5, window_bounds = array<i64: 1, 32, 3>}]} {
    %c0 = arith.constant 0 : index
    %c0_0 = arith.constant 0 : index
    %c0_1 = arith.constant 0 : index
    %0 = vector.load %arg2[%c0, %c0_0, %c0_1] : memref<1x64x50xbf16, #tpu.memory_space<vmem>>, vector<1x64x50xbf16>
    %1 = vector.shape_cast %0 : vector<1x64x50xbf16> to vector<64x50xbf16>
    %2 = arith.extf %1 : vector<64x50xbf16> to vector<64x50xf32>
    %c0_2 = arith.constant 0 : index
    %c0_3 = arith.constant 0 : index
    %3 = vector.load %arg3[%c0_2, %c0_3] : memref<1x50xf32, #tpu.memory_space<vmem>>, vector<1x50xf32>
    %4 = vector.broadcast %3 : vector<1x50xf32> to vector<64x50xf32>
    %5 = arith.mulf %2, %4 : vector<64x50xf32>
    %c0_4 = arith.constant 0 : index
    %c0_5 = arith.constant 0 : index
    %6 = vector.load %arg4[%c0_4, %c0_5] : memref<1x50xf32, #tpu.memory_space<vmem>>, vector<1x50xf32>
    %7 = vector.broadcast %6 : vector<1x50xf32> to vector<64x50xf32>
    %8 = arith.addf %5, %7 : vector<64x50xf32>
    %cst = arith.constant 0.000000e+00 : f32
    %9 = vector.broadcast %cst : f32 to vector<64x50xf32>
    %10 = arith.maximumf %8, %9 : vector<64x50xf32>
    %11 = arith.truncf %10 : vector<64x50xf32> to vector<64x50xbf16>
    %12 = vector.shape_cast %11 : vector<64x50xbf16> to vector<4x2x8x50xbf16>
    %cst_6 = arith.constant 0.000000e+00 : f32
    %13 = vector.broadcast %cst_6 : f32 to vector<32x3xf32>
    %14 = vector.extract_strided_slice %12 {offsets = [0, 0, 0, 0], sizes = [4, 1, 8, 50], strides = [1, 1, 1, 1]} : vector<4x2x8x50xbf16> to vector<4x1x8x50xbf16>
    %15 = vector.shape_cast %14 : vector<4x1x8x50xbf16> to vector<4x8x50xbf16>
    %16 = vector.shape_cast %15 : vector<4x8x50xbf16> to vector<32x50xbf16>
    %c0_7 = arith.constant 0 : index
    %c0_8 = arith.constant 0 : index
    %c0_9 = arith.constant 0 : index
    %17 = vector.load %arg5[%c0_7, %c0_8, %c0_9] : memref<2x50x3xbf16, #tpu.memory_space<vmem>>, vector<1x50x3xbf16>
    %18 = vector.shape_cast %17 : vector<1x50x3xbf16> to vector<50x3xbf16>
    %cst_10 = arith.constant dense<0.000000e+00> : vector<32x3xf32>
    %19 = tpu.matmul %16, %18, %cst_10 {dimension_numbers = #tpu.dot_dimension_numbers<[1], [0], [0], [1], [0, 0, 1, 1], [], []>} : vector<32x50xbf16>, vector<50x3xbf16>, vector<32x3xf32> -> vector<32x3xf32>
    %20 = arith.addf %13, %19 : vector<32x3xf32>
    %21 = vector.extract_strided_slice %12 {offsets = [0, 1, 0, 0], sizes = [4, 1, 8, 50], strides = [1, 1, 1, 1]} : vector<4x2x8x50xbf16> to vector<4x1x8x50xbf16>
    %22 = vector.shape_cast %21 : vector<4x1x8x50xbf16> to vector<4x8x50xbf16>
    %23 = vector.shape_cast %22 : vector<4x8x50xbf16> to vector<32x50xbf16>
    %c1 = arith.constant 1 : index
    %c0_11 = arith.constant 0 : index
    %c0_12 = arith.constant 0 : index
    %24 = vector.load %arg5[%c1, %c0_11, %c0_12] : memref<2x50x3xbf16, #tpu.memory_space<vmem>>, vector<1x50x3xbf16>
    %25 = vector.shape_cast %24 : vector<1x50x3xbf16> to vector<50x3xbf16>
    %cst_13 = arith.constant dense<0.000000e+00> : vector<32x3xf32>
    %26 = tpu.matmul %23, %25, %cst_13 {dimension_numbers = #tpu.dot_dimension_numbers<[1], [0], [0], [1], [0, 0, 1, 1], [], []>} : vector<32x50xbf16>, vector<50x3xbf16>, vector<32x3xf32> -> vector<32x3xf32>
    %27 = arith.addf %20, %26 : vector<32x3xf32>
    %c0_14 = arith.constant 0 : index
    %c0_15 = arith.constant 0 : index
    %28 = vector.load %arg6[%c0_14, %c0_15] : memref<1x3xf32, #tpu.memory_space<vmem>>, vector<1x3xf32>
    %29 = vector.broadcast %28 : vector<1x3xf32> to vector<32x3xf32>
    %30 = arith.addf %27, %29 : vector<32x3xf32>
    %31 = math.tanh %30 : vector<32x3xf32>
    %c0_16 = arith.constant 0 : index
    %c0_17 = arith.constant 0 : index
    %c0_18 = arith.constant 0 : index
    %32 = vector.load %arg7[%c0_16, %c0_17, %c0_18] : memref<1x32x3xf32, #tpu.memory_space<vmem>>, vector<1x32x3xf32>
    %33 = vector.shape_cast %32 : vector<1x32x3xf32> to vector<32x3xf32>
    %34 = vector.shape_cast %31 : vector<32x3xf32> to vector<1x32x3xf32>
    tpu.vector_store %arg7[%c0_16, %c0_17, %c0_18], %34 {strides = array<i32>} : memref<1x32x3xf32, #tpu.memory_space<vmem>>, vector<1x32x3xf32>,
    return
  }
  func.func @transform_0(%arg0: i32, %arg1: i32) -> (i32, i32, i32) {
    %c0_i32 = arith.constant 0 : i32
    %c0_i32_0 = arith.constant 0 : i32
    return %arg0, %arg1, %c0_i32 : i32, i32, i32
  }
  func.func @transform_1(%arg0: i32, %arg1: i32) -> (i32, i32) {
    %c0_i32 = arith.constant 0 : i32
    %c0_i32_0 = arith.constant 0 : i32
    %c0_i32_1 = arith.constant 0 : i32
    return %c0_i32, %c0_i32_0 : i32, i32
  }
  func.func @transform_2(%arg0: i32, %arg1: i32) -> (i32, i32) {
    %c0_i32 = arith.constant 0 : i32
    %c0_i32_0 = arith.constant 0 : i32
    %c0_i32_1 = arith.constant 0 : i32
    return %c0_i32, %c0_i32_0 : i32, i32
  }
  func.func @transform_3(%arg0: i32, %arg1: i32) -> (i32, i32, i32) {
    %c0_i32 = arith.constant 0 : i32
    %c0_i32_0 = arith.constant 0 : i32
    %c0_i32_1 = arith.constant 0 : i32
    %c0_i32_2 = arith.constant 0 : i32
    return %c0_i32, %c0_i32_0, %c0_i32_1 : i32, i32, i32
  }
  func.func @transform_4(%arg0: i32, %arg1: i32) -> (i32, i32) {
    %c0_i32 = arith.constant 0 : i32
    %c0_i32_0 = arith.constant 0 : i32
    %c0_i32_1 = arith.constant 0 : i32
    return %c0_i32, %c0_i32_0 : i32, i32
  }
  func.func @transform_5(%arg0: i32, %arg1: i32) -> (i32, i32, i32) {
    %c0_i32 = arith.constant 0 : i32
    %c0_i32_0 = arith.constant 0 : i32
    return %arg0, %arg1, %c0_i32 : i32, i32, i32
  }
}

</mosaic_0001>

<llo_original>
// kernel: cnn_generator_forward.5
$region0: #{cnn_generator_forward.5}
  #allocation0 [shape = 'u32[]', space=smem, size = 0x4, offset = 0x4, fixed_abs, tag = 'smem constant byte address 0x4 - core index']
  #allocation1 [shape = 'u32[144,128]{1,0:T(1,128)}', space=vmem, size = 0x12000, scoped, tag = 'internal scratch']
  #allocation2 [shape = 'bf16[10,16,45]{2,1,0:T(16,128)(2,1)}', space=vmem, size = 0xa000, scoped, tag = 'scratch operand']
  %s0 = inlined_call_operand.vmem [shape: bf16[2,256,15], index: 0, kind: input, shape index: {}, may-alias: {0,1,2}]
  %s1 = inlined_call_operand.vmem [shape: bf16[2,256,15], index: 1, kind: input, shape index: {}, may-alias: {0,1,2}]
  %s2 = inlined_call_operand.vmem [shape: bf16[2,256,15], index: 2, kind: input, shape index: {}, may-alias: {0,1,2}]
  %s3 = inlined_call_operand.vmem [shape: f32[1,15], index: 3, kind: input, shape index: {}]
  %s4 = inlined_call_operand.vmem [shape: f32[1,15], index: 4, kind: input, shape index: {}]
  %s5 = inlined_call_operand.vmem [shape: bf16[3,45,50], index: 5, kind: input, shape index: {}]
  %s6 = inlined_call_operand.vmem [shape: f32[1,50], index: 6, kind: input, shape index: {}]
  %s7 = inlined_call_operand.vmem [shape: bf16[2,256,50], index: 7, kind: output, shape index: {0}]
  %s8 = inlined_call_operand.vmem [shape: f32[2,2,8,50], index: 8, kind: output, shape index: {1}]
  %9 = xla_tuple %s7, %s8
  %s10 = sld [smem:[#allocation0]]
  $region69: #{cnn_generator_forward.5} parent=0
    _
  %s12 = ssub.s32 1, %s10
  %s13 = scalar_select 0, %s12, %s10
  loop: start=0, step=1, limit=6
  $region2: #{cnn_generator_forward.5} parent=0 // loop_pre_header
    _
  $region3: #{cnn_generator_forward.5} parent=0 // loop_header
    %s15 = sphi 0, %s19
    %p16 = scmp.ge.s32.totalorder %s15, 6
    %s22 = sphi 0, %s34
    %s23 = sphi 0, %s30
    %s24 = sphi 0, %s22
    %s25 = sphi 0, %s23
    %s26 = sphi 0, %s24
    %s27 = sphi 0, %s25
    %s39 = sphi 0, %s41
    %s42 = sphi 0, %s39
    %s43 = sphi 0, %s42
    %s59 = sphi 0, %s43
    %s75 = sphi 0, %s77
    %s78 = sphi 0, %s75
    %s79 = sphi 0, %s78
    %s95 = sphi 0, %s79
    %s111 = sphi 0, %s113
    %s114 = sphi 0, %s111
    %s115 = sphi 0, %s114
    %s131 = sphi 0, %s115
    %s135 = sphi 0, %s135
    %s137 = sphi 0, %s135
    %s138 = sphi 0, %s137
    %s152 = sphi 0, %s138
    %s156 = sphi 0, %s156
    %s158 = sphi 0, %s156
    %s159 = sphi 0, %s158
    %s173 = sphi 0, %s159
    %s177 = sphi 0, %s177
    %s179 = sphi 0, %s177
    %s180 = sphi 0, %s179
    %s194 = sphi 0, %s180
    %s198 = sphi 0, %s198
    %s200 = sphi 0, %s198
    %s201 = sphi 0, %s200
    %s215 = sphi 0, %s201
    %s223 = sphi 0, %s225
    %s226 = sphi 0, %s223
    %s227 = sphi 0, %s226
    %s243 = sphi 0, %s227
    %s251 = sphi 0, %s253
    %s254 = sphi 0, %s251
    %s255 = sphi 0, %s254
    %s271 = sphi 0, %s255
  $region4: #{cnn_generator_forward.5} parent=0 // loop_header_branch
    %18 = sbr.rel (%p16) target = $region8
  $region5: #{cnn_generator_forward.5} parent=0 // loop_body
    %s20 = ssub.s32 %s15, 1
    %s21 = ssub.s32 %s15, 2
    %s28 = sadd.s32 1, %s23
    %p29 = scmp.ge.s32.totalorder %s28, 2
    %s30 = scalar_select %p29, 0, %s28
    %s31 = sadd.s32 1, %s22
    %s32 = scalar_select %p29, %s31, %s22
    %p33 = scmp.ge.s32.totalorder %s32, 2
    %s34 = scalar_select %p33, 0, %s32
    %s35 = ssub.s32 %s22, %s34
    %s36 = ssub.s32 %s23, %s30
    %s37 = sor.u32 %s35, %s36
    %p38 = scmp.eq.s32.totalorder %s37, 0
    %s40 = sadd.s32 %s39, 1
    %s41 = scalar_select %p38, %s39, %s40
    %p44 = pneg %p38
    %p45 = scmp.eq.s32.totalorder %s15, 3
    %p46 = por %p44, %p45
    %p47 = scmp.ne.s32.totalorder %s39, %s42
    %p48 = scmp.eq.s32.totalorder %s15, 0
    %p49 = por %p47, %p48
    %p50 = scmp.ne.s32.totalorder %s39, %s42
    %p51 = scmp.eq.s32.totalorder %s20, 3
    %p52 = por %p50, %p51
    %p53 = scmp.ne.s32.totalorder %s42, %s43
    %p54 = scmp.eq.s32.totalorder %s20, 0
    %p55 = por %p53, %p54
    %p56 = scmp.ne.s32.totalorder %s42, %s43
    %p57 = scmp.eq.s32.totalorder %s21, 3
    %p58 = por %p56, %p57
    %p60 = scmp.ne.s32.totalorder %s43, %s59
    %p61 = scmp.eq.s32.totalorder %s21, 0
    %p62 = por %p60, %p61
    %s63 = smul.u32 %s23, 8
    %s64 = ssub.s32 %s63, 1
    %p65 = scmp.gt.s32.totalorder %s64, 0
    %s66 = scalar_select %p65, %s64, 0
    %s67 = smul.u32 %s30, 8
    %s68 = ssub.s32 %s67, 1
    %p69 = scmp.gt.s32.totalorder %s68, 0
    %s70 = scalar_select %p69, %s68, 0
    %s71 = ssub.s32 %s22, %s34
    %s72 = ssub.s32 %s66, %s70
    %s73 = sor.u32 %s71, %s72
    %p74 = scmp.eq.s32.totalorder %s73, 0
    %s76 = sadd.s32 %s75, 1
    %s77 = scalar_select %p74, %s75, %s76
    %p80 = pneg %p74
    %p81 = scmp.eq.s32.totalorder %s15, 3
    %p82 = por %p80, %p81
    %p83 = scmp.ne.s32.totalorder %s75, %s78
    %p84 = scmp.eq.s32.totalorder %s15, 0
    %p85 = por %p83, %p84
    %p86 = scmp.ne.s32.totalorder %s75, %s78
    %p87 = scmp.eq.s32.totalorder %s20, 3
    %p88 = por %p86, %p87
    %p89 = scmp.ne.s32.totalorder %s78, %s79
    %p90 = scmp.eq.s32.totalorder %s20, 0
    %p91 = por %p89, %p90
    %p92 = scmp.ne.s32.totalorder %s78, %s79
    %p93 = scmp.eq.s32.totalorder %s21, 3
    %p94 = por %p92, %p93
    %p96 = scmp.ne.s32.totalorder %s79, %s95
    %p97 = scmp.eq.s32.totalorder %s21, 0
    %p98 = por %p96, %p97
    %s99 = sadd.s32 %s23, 1
    %s100 = smul.u32 %s99, 8
    %p101 = scmp.lt.s32.totalorder %s100, 15
    %s102 = scalar_select %p101, %s100, 15
    %s103 = sadd.s32 %s30, 1
    %s104 = smul.u32 %s103, 8
    %p105 = scmp.lt.s32.totalorder %s104, 15
    %s106 = scalar_select %p105, %s104, 15
    %s107 = ssub.s32 %s22, %s34
    %s108 = ssub.s32 %s102, %s106
    %s109 = sor.u32 %s107, %s108
    %p110 = scmp.eq.s32.totalorder %s109, 0
    %s112 = sadd.s32 %s111, 1
    %s113 = scalar_select %p110, %s111, %s112
    %p116 = pneg %p110
    %p117 = scmp.eq.s32.totalorder %s15, 3
    %p118 = por %p116, %p117
    %p119 = scmp.ne.s32.totalorder %s111, %s114
    %p120 = scmp.eq.s32.totalorder %s15, 0
    %p121 = por %p119, %p120
    %p122 = scmp.ne.s32.totalorder %s111, %s114
    %p123 = scmp.eq.s32.totalorder %s20, 3
    %p124 = por %p122, %p123
    %p125 = scmp.ne.s32.totalorder %s114, %s115
    %p126 = scmp.eq.s32.totalorder %s20, 0
    %p127 = por %p125, %p126
    %p128 = scmp.ne.s32.totalorder %s114, %s115
    %p129 = scmp.eq.s32.totalorder %s21, 3
    %p130 = por %p128, %p129
    %p132 = scmp.ne.s32.totalorder %s115, %s131
    %p133 = scmp.eq.s32.totalorder %s21, 0
    %p134 = por %p132, %p133
    %s136 = sadd.s32 %s135, 1
    %p139 = scmp.eq.s32.totalorder %s15, 3
    %p140 = scmp.ne.s32.totalorder %s135, %s137
    %p141 = scmp.eq.s32.totalorder %s15, 0
    %p142 = por %p140, %p141
    %p143 = scmp.ne.s32.totalorder %s135, %s137
    %p144 = scmp.eq.s32.totalorder %s20, 3
    %p145 = por %p143, %p144
    %p146 = scmp.ne.s32.totalorder %s137, %s138
    %p147 = scmp.eq.s32.totalorder %s20, 0
    %p148 = por %p146, %p147
    %p149 = scmp.ne.s32.totalorder %s137, %s138
    %p150 = scmp.eq.s32.totalorder %s21, 3
    %p151 = por %p149, %p150
    %p153 = scmp.ne.s32.totalorder %s138, %s152
    %p154 = scmp.eq.s32.totalorder %s21, 0
    %p155 = por %p153, %p154
    %s157 = sadd.s32 %s156, 1
    %p160 = scmp.eq.s32.totalorder %s15, 3
    %p161 = scmp.ne.s32.totalorder %s156, %s158
    %p162 = scmp.eq.s32.totalorder %s15, 0
    %p163 = por %p161, %p162
    %p164 = scmp.ne.s32.totalorder %s156, %s158
    %p165 = scmp.eq.s32.totalorder %s20, 3
    %p166 = por %p164, %p165
    %p167 = scmp.ne.s32.totalorder %s158, %s159
    %p168 = scmp.eq.s32.totalorder %s20, 0
    %p169 = por %p167, %p168
    %p170 = scmp.ne.s32.totalorder %s158, %s159
    %p171 = scmp.eq.s32.totalorder %s21, 3
    %p172 = por %p170, %p171
    %p174 = scmp.ne.s32.totalorder %s159, %s173
    %p175 = scmp.eq.s32.totalorder %s21, 0
    %p176 = por %p174, %p175
    %s178 = sadd.s32 %s177, 1
    %p181 = scmp.eq.s32.totalorder %s15, 3
    %p182 = scmp.ne.s32.totalorder %s177, %s179
    %p183 = scmp.eq.s32.totalorder %s15, 0
    %p184 = por %p182, %p183
    %p185 = scmp.ne.s32.totalorder %s177, %s179
    %p186 = scmp.eq.s32.totalorder %s20, 3
    %p187 = por %p185, %p186
    %p188 = scmp.ne.s32.totalorder %s179, %s180
    %p189 = scmp.eq.s32.totalorder %s20, 0
    %p190 = por %p188, %p189
    %p191 = scmp.ne.s32.totalorder %s179, %s180
    %p192 = scmp.eq.s32.totalorder %s21, 3
    %p193 = por %p191, %p192
    %p195 = scmp.ne.s32.totalorder %s180, %s194
    %p196 = scmp.eq.s32.totalorder %s21, 0
    %p197 = por %p195, %p196
    %s199 = sadd.s32 %s198, 1
    %p202 = scmp.eq.s32.totalorder %s15, 3
    %p203 = scmp.ne.s32.totalorder %s198, %s200
    %p204 = scmp.eq.s32.totalorder %s15, 0
    %p205 = por %p203, %p204
    %p206 = scmp.ne.s32.totalorder %s198, %s200
    %p207 = scmp.eq.s32.totalorder %s20, 3
    %p208 = por %p206, %p207
    %p209 = scmp.ne.s32.totalorder %s200, %s201
    %p210 = scmp.eq.s32.totalorder %s20, 0
    %p211 = por %p209, %p210
    %p212 = scmp.ne.s32.totalorder %s200, %s201
    %p213 = scmp.eq.s32.totalorder %s21, 3
    %p214 = por %p212, %p213
    %p216 = scmp.ne.s32.totalorder %s201, %s215
    %p217 = scmp.eq.s32.totalorder %s21, 0
    %p218 = por %p216, %p217
    %s219 = ssub.s32 %s22, %s34
    %s220 = ssub.s32 %s23, %s30
    %s221 = sor.u32 %s219, %s220
    %p222 = scmp.eq.s32.totalorder %s221, 0
    %s224 = sadd.s32 %s223, 1
    %s225 = scalar_select %p222, %s223, %s224
    %p228 = pneg %p222
    %p229 = scmp.eq.s32.totalorder %s15, 3
    %p230 = por %p228, %p229
    %p231 = scmp.ne.s32.totalorder %s223, %s226
    %p232 = scmp.eq.s32.totalorder %s15, 0
    %p233 = por %p231, %p232
    %p234 = scmp.ne.s32.totalorder %s223, %s226
    %p235 = scmp.eq.s32.totalorder %s20, 3
    %p236 = por %p234, %p235
    %p237 = scmp.ne.s32.totalorder %s226, %s227
    %p238 = scmp.eq.s32.totalorder %s20, 0
    %p239 = por %p237, %p238
    %p240 = scmp.ne.s32.totalorder %s226, %s227
    %p241 = scmp.eq.s32.totalorder %s21, 3
    %p242 = por %p240, %p241
    %p244 = scmp.ne.s32.totalorder %s227, %s243
    %p245 = scmp.eq.s32.totalorder %s21, 0
    %p246 = por %p244, %p245
    %s247 = ssub.s32 %s22, %s34
    %s248 = ssub.s32 %s23, %s30
    %s249 = sor.u32 %s247, %s248
    %p250 = scmp.eq.s32.totalorder %s249, 0
    %s252 = sadd.s32 %s251, 1
    %s253 = scalar_select %p250, %s251, %s252
    %p256 = pneg %p250
    %p257 = scmp.eq.s32.totalorder %s15, 3
    %p258 = por %p256, %p257
    %p259 = scmp.ne.s32.totalorder %s251, %s254
    %p260 = scmp.eq.s32.totalorder %s15, 0
    %p261 = por %p259, %p260
    %p262 = scmp.ne.s32.totalorder %s251, %s254
    %p263 = scmp.eq.s32.totalorder %s20, 3
    %p264 = por %p262, %p263
    %p265 = scmp.ne.s32.totalorder %s254, %s255
    %p266 = scmp.eq.s32.totalorder %s20, 0
    %p267 = por %p265, %p266
    %p268 = scmp.ne.s32.totalorder %s254, %s255
    %p269 = scmp.eq.s32.totalorder %s21, 3
    %p270 = por %p268, %p269
    %p272 = scmp.ne.s32.totalorder %s255, %s271
    %p273 = scmp.eq.s32.totalorder %s21, 0
    %p274 = por %p272, %p273
    %p275 = scmp.le.s32.totalorder 1, %s15
    %p276 = scmp.lt.s32.totalorder %s15, 5
    %p277 = pnand %p275, %p276
    %p278 = pneg %p277
    // Predicated region
    $region9: #{cnn_generator_forward.5} parent=5 // pred_check
      _
    $region10: #{cnn_generator_forward.5} parent=5 // pred_check_branch
      %280 = sbr.rel (%p277) target = $region12
    $region11: #{cnn_generator_forward.5} parent=5 // pred_region
      %s281 = ssub.s32 %s15, 1
      // Predicated region
      $region13: #{cnn_generator_forward.5} parent=11 // pred_check
        %p282 = pneg %p148
      $region14: #{cnn_generator_forward.5} parent=11 // pred_check_branch
        %284 = sbr.rel (%p282) target = $region16
      $region15: #{cnn_generator_forward.5} parent=11 // pred_region
        _
      $region16: #{cnn_generator_forward.5} parent=11 // pred_fallthru
        _
      // Predicated region
      $region17: #{cnn_generator_forward.5} parent=11 // pred_check
        %p285 = pneg %p169
      $region18: #{cnn_generator_forward.5} parent=11 // pred_check_branch
        %287 = sbr.rel (%p285) target = $region20
      $region19: #{cnn_generator_forward.5} parent=11 // pred_region
        _
      $region20: #{cnn_generator_forward.5} parent=11 // pred_fallthru
        _
      // Predicated region
      $region21: #{cnn_generator_forward.5} parent=11 // pred_check
        %p288 = pneg %p190
      $region22: #{cnn_generator_forward.5} parent=11 // pred_check_branch
        %290 = sbr.rel (%p288) target = $region24
      $region23: #{cnn_generator_forward.5} parent=11 // pred_region
        _
      $region24: #{cnn_generator_forward.5} parent=11 // pred_fallthru
        _
      // Predicated region
      $region25: #{cnn_generator_forward.5} parent=11 // pred_check
        %p291 = pneg %p211
      $region26: #{cnn_generator_forward.5} parent=11 // pred_check_branch
        %293 = sbr.rel (%p291) target = $region28
      $region27: #{cnn_generator_forward.5} parent=11 // pred_region
        _
      $region28: #{cnn_generator_forward.5} parent=11 // pred_fallthru
        _
    $region12: #{cnn_generator_forward.5} parent=5 // pred_fallthru
      _
    %p294 = scmp.lt.s32.totalorder %s15, 4
    // Predicated region
    $region29: #{cnn_generator_forward.5} parent=5 // pred_check
      %p295 = pneg %p294
    $region30: #{cnn_generator_forward.5} parent=5 // pred_check_branch
      %297 = sbr.rel (%p295) target = $region32
    $region31: #{cnn_generator_forward.5} parent=5 // pred_region
      // Predicated region
      $region33: #{cnn_generator_forward.5} parent=31 // pred_check
        %p298 = pneg %p49
      $region34: #{cnn_generator_forward.5} parent=31 // pred_check_branch
        %300 = sbr.rel (%p298) target = $region36
      $region35: #{cnn_generator_forward.5} parent=31 // pred_region
        %s301 = smul.u32 16, %s23
        %p302 = scmp.lt.s32.totalorder %s22, 1
        %s303 = scalar_select %p302, %s22, 1
        %p304 = scmp.lt.s32.totalorder %s301, 31
        %s305 = scalar_select %p304, %s301, 31
        %s306 = smul.addr %s303, 32
        %s307 = sadd.s32 %s305, %s306
        %s308 = smul.addr %s307, 4
        %s309 = scalar_lea.vmem %s0, %s308
        %s310 = smul.u32 16, %s23
      $region36: #{cnn_generator_forward.5} parent=31 // pred_fallthru
        _
      // Predicated region
      $region37: #{cnn_generator_forward.5} parent=31 // pred_check
        %p311 = pneg %p85
      $region38: #{cnn_generator_forward.5} parent=31 // pred_check_branch
        %313 = sbr.rel (%p311) target = $region40
      $region39: #{cnn_generator_forward.5} parent=31 // pred_region
        %s314 = smul.u32 %s23, 8
        %s315 = ssub.s32 %s314, 1
        %p316 = scmp.gt.s32.totalorder %s315, 0
        %s317 = scalar_select %p316, %s315, 0
        %s318 = smul.u32 2, %s317
        %p319 = scmp.lt.s32.totalorder %s22, 1
        %s320 = scalar_select %p319, %s22, 1
        %p321 = scmp.lt.s32.totalorder %s318, 31
        %s322 = scalar_select %p321, %s318, 31
        %s323 = smul.addr %s320, 32
        %s324 = sadd.s32 %s322, %s323
        %s325 = smul.addr %s324, 4
        %s326 = scalar_lea.vmem %s1, %s325
        %s327 = smul.u32 %s23, 8
        %s328 = ssub.s32 %s327, 1
        %p329 = scmp.gt.s32.totalorder %s328, 0
        %s330 = scalar_select %p329, %s328, 0
        %s331 = smul.u32 2, %s330
      $region40: #{cnn_generator_forward.5} parent=31 // pred_fallthru
        _
      // Predicated region
      $region41: #{cnn_generator_forward.5} parent=31 // pred_check
        %p332 = pneg %p121
      $region42: #{cnn_generator_forward.5} parent=31 // pred_check_branch
        %334 = sbr.rel (%p332) target = $region44
      $region43: #{cnn_generator_forward.5} parent=31 // pred_region
        %s335 = sadd.s32 %s23, 1
        %s336 = smul.u32 %s335, 8
        %p337 = scmp.lt.s32.totalorder %s336, 15
        %s338 = scalar_select %p337, %s336, 15
        %s339 = smul.u32 2, %s338
        %p340 = scmp.lt.s32.totalorder %s22, 1
        %s341 = scalar_select %p340, %s22, 1
        %p342 = scmp.lt.s32.totalorder %s339, 31
        %s343 = scalar_select %p342, %s339, 31
        %s344 = smul.addr %s341, 32
        %s345 = sadd.s32 %s343, %s344
        %s346 = smul.addr %s345, 4
        %s347 = scalar_lea.vmem %s2, %s346
        %s348 = sadd.s32 %s23, 1
        %s349 = smul.u32 %s348, 8
        %p350 = scmp.lt.s32.totalorder %s349, 15
        %s351 = scalar_select %p350, %s349, 15
        %s352 = smul.u32 2, %s351
      $region44: #{cnn_generator_forward.5} parent=31 // pred_fallthru
        _
    $region32: #{cnn_generator_forward.5} parent=5 // pred_fallthru
      _
    %p353 = scmp.le.s32.totalorder 1, %s15
    %p354 = scmp.lt.s32.totalorder %s15, 5
    %p355 = pnand %p353, %p354
    %p356 = pneg %p355
    // Predicated region
    $region45: #{cnn_generator_forward.5} parent=5 // pred_check
      _
    $region46: #{cnn_generator_forward.5} parent=5 // pred_check_branch
      %358 = sbr.rel (%p355) target = $region48
    $region47: #{cnn_generator_forward.5} parent=5 // pred_region
      %s359 = ssub.s32 %s15, 1
      %s360 = smul.u32 16, %s25
      %p361 = scmp.lt.s32.totalorder %s24, 1
      %s362 = scalar_select %p361, %s24, 1
      %p363 = scmp.lt.s32.totalorder %s360, 31
      %s364 = scalar_select %p363, %s360, 31
      %s365 = smul.addr %s362, 32
      %s366 = sadd.s32 %s364, %s365
      %s367 = smul.addr %s366, 4
      %s368 = scalar_lea.vmem %s0, %s367
      %p369 = pneg %p55
      %p370 = pneg %p52
      %s371 = smul.u32 %s25, 8
      %s372 = ssub.s32 %s371, 1
      %p373 = scmp.gt.s32.totalorder %s372, 0
      %s374 = scalar_select %p373, %s372, 0
      %s375 = smul.u32 2, %s374
      %p376 = scmp.lt.s32.totalorder %s24, 1
      %s377 = scalar_select %p376, %s24, 1
      %p378 = scmp.lt.s32.totalorder %s375, 31
      %s379 = scalar_select %p378, %s375, 31
      %s380 = smul.addr %s377, 32
      %s381 = sadd.s32 %s379, %s380
      %s382 = smul.addr %s381, 4
      %s383 = scalar_lea.vmem %s1, %s382
      %p384 = pneg %p91
      %p385 = pneg %p88
      %s386 = sadd.s32 %s25, 1
      %s387 = smul.u32 %s386, 8
      %p388 = scmp.lt.s32.totalorder %s387, 15
      %s389 = scalar_select %p388, %s387, 15
      %s390 = smul.u32 2, %s389
      %p391 = scmp.lt.s32.totalorder %s24, 1
      %s392 = scalar_select %p391, %s24, 1
      %p393 = scmp.lt.s32.totalorder %s390, 31
      %s394 = scalar_select %p393, %s390, 31
      %s395 = smul.addr %s392, 32
      %s396 = sadd.s32 %s394, %s395
      %s397 = smul.addr %s396, 4
      %s398 = scalar_lea.vmem %s2, %s397
      %p399 = pneg %p127
      %p400 = pneg %p124
      %p401 = pneg %p148
      %p402 = pneg %p145
      %p403 = pneg %p169
      %p404 = pneg %p166
      %p405 = pneg %p190
      %p406 = pneg %p187
      %p407 = pneg %p211
      %p408 = pneg %p208
      %p409 = pneg %p239
      %p410 = pneg %p236
      %s411 = smul.u32 16, %s25
      %p412 = scmp.lt.s32.totalorder %s24, 1
      %s413 = scalar_select %p412, %s24, 1
      %p414 = scmp.lt.s32.totalorder %s411, 31
      %s415 = scalar_select %p414, %s411, 31
      %s416 = smul.addr %s413, 32
      %s417 = sadd.s32 %s415, %s416
      %s418 = smul.addr %s417, 4
      %s419 = scalar_lea.vmem %s7, %s418
      %p420 = pneg %p267
      %p421 = pneg %p264
      %p422 = scmp.lt.s32.totalorder %s24, 1
      %s423 = scalar_select %p422, %s24, 1
      %p424 = scmp.lt.s32.totalorder %s25, 1
      %s425 = scalar_select %p424, %s25, 1
      %s426 = smul.addr %s423, 2
      %s427 = sadd.s32 %s425, %s426
      %s428 = smul.addr %s427, 8
      %s429 = scalar_lea.vmem %s8, %s428
      %s430 = smul.u32 16, %s25
      %p431 = scmp.lt.s32.totalorder %s24, 1
      %s432 = scalar_select %p431, %s24, 1
      %p433 = scmp.lt.s32.totalorder %s430, 31
      %s434 = scalar_select %p433, %s430, 31
      %s435 = smul.addr %s432, 32
      %s436 = sadd.s32 %s434, %s435
      %s437 = smul.addr %s436, 4
      %s438 = scalar_lea.vmem %s0, %s437
      %s439 = smul.u32 16, %s25
      %s440 = smul.u32 %s25, 8
      %s441 = ssub.s32 %s440, 1
      %p442 = scmp.gt.s32.totalorder %s441, 0
      %s443 = scalar_select %p442, %s441, 0
      %s444 = smul.u32 2, %s443
      %p445 = scmp.lt.s32.totalorder %s24, 1
      %s446 = scalar_select %p445, %s24, 1
      %p447 = scmp.lt.s32.totalorder %s444, 31
      %s448 = scalar_select %p447, %s444, 31
      %s449 = smul.addr %s446, 32
      %s450 = sadd.s32 %s448, %s449
      %s451 = smul.addr %s450, 4
      %s452 = scalar_lea.vmem %s1, %s451
      %s453 = smul.u32 %s25, 8
      %s454 = ssub.s32 %s453, 1
      %p455 = scmp.gt.s32.totalorder %s454, 0
      %s456 = scalar_select %p455, %s454, 0
      %s457 = smul.u32 2, %s456
      %s458 = sadd.s32 %s25, 1
      %s459 = smul.u32 %s458, 8
      %p460 = scmp.lt.s32.totalorder %s459, 15
      %s461 = scalar_select %p460, %s459, 15
      %s462 = smul.u32 2, %s461
      %p463 = scmp.lt.s32.totalorder %s24, 1
      %s464 = scalar_select %p463, %s24, 1
      %p465 = scmp.lt.s32.totalorder %s462, 31
      %s466 = scalar_select %p465, %s462, 31
      %s467 = smul.addr %s464, 32
      %s468 = sadd.s32 %s466, %s467
      %s469 = smul.addr %s468, 4
      %s470 = scalar_lea.vmem %s2, %s469
      %s471 = sadd.s32 %s25, 1
      %s472 = smul.u32 %s471, 8
      %p473 = scmp.lt.s32.totalorder %s472, 15
      %s474 = scalar_select %p473, %s472, 15
      %s475 = smul.u32 2, %s474
      %s476 = smul.u32 16, %s25
      %p477 = scmp.lt.s32.totalorder %s24, 1
      %s478 = scalar_select %p477, %s24, 1
      %p479 = scmp.lt.s32.totalorder %s476, 31
      %s480 = scalar_select %p479, %s476, 31
      %s481 = smul.addr %s478, 32
      %s482 = sadd.s32 %s480, %s481
      %s483 = smul.addr %s482, 4
      %s484 = scalar_lea.vmem %s7, %s483
      %s485 = smul.u32 16, %s25
      %p486 = scmp.lt.s32.totalorder %s24, 1
      %s487 = scalar_select %p486, %s24, 1
      %p488 = scmp.lt.s32.totalorder %s25, 1
      %s489 = scalar_select %p488, %s25, 1
      %s490 = smul.addr %s487, 2
      %s491 = sadd.s32 %s489, %s490
      %s492 = smul.addr %s491, 8
      %s493 = scalar_lea.vmem %s8, %s492
      %v495 = vld [vmem:[%s3] sm:$0x1]
      %v496 = vld [vmem:[%s4] sm:$0x1]
      %p497 = scmp.gt.s32.totalorder %s25, 0
      %s498 = scalar_select %p497, 1, 0
      %s499 = scvt.s32.f32 %s498
      %p501 = scmp.ne.f32.partialorder %s499, %s499
      %s502 = sshrl.u32 %s499, 16
      %s503 = sand.u32 %s502, 1
      %s504 = sadd.s32 32767, %s503
      %s505 = sadd.s32 %s499, %s504
      %s506 = sand.u32 %s505, 4294901760
      %s507 = scalar_select %p501, 2143289344, %s506
      %s509 = sshrl.u32 %s507, 16
      %p510 = scmp.lt.s32.totalorder %s25, 1
      %s511 = scalar_select %p510, 1, 0
      %s512 = scvt.s32.f32 %s511
      %p514 = scmp.ne.f32.partialorder %s512, %s512
      %s515 = sshrl.u32 %s512, 16
      %s516 = sand.u32 %s515, 1
      %s517 = sadd.s32 32767, %s516
      %s518 = sadd.s32 %s512, %s517
      %s519 = sand.u32 %s518, 4294901760
      %s520 = scalar_select %p514, 2143289344, %s519
      %s522 = sshrl.u32 %s520, 16
      %v523 = vld [vmem:[%s452] sm:$0xf]
      %v524 = vld [vmem:[%s452 + $0x4] sm:$0xf]
      %v525 = vunpack.c.l.bf16 %v523
      %v526 = vunpack.c.l.bf16 %v524
      %v528 = vlaneseq
      %v529 = vshrl.u32 %v528, 7
      %v530 = vsub.s32 0, %v529
      %v531 = vrot.slane %v495, %v530
      %v533 = vmul.f32 %v525, %v531
      %v534 = vmul.f32 %v526, %v531
      %v536 = vlaneseq
      %v537 = vshrl.u32 %v536, 7
      %v538 = vsub.s32 0, %v537
      %v539 = vrot.slane %v496, %v538
      %v541 = vadd.f32 %v533, %v539
      %v542 = vadd.f32 %v534, %v539
      %v543 = vmax.f32 %v541, 0.0
      %v544 = vmax.f32 %v542, 0.0
      %v545 = vpack.c.bf16 %v544, %v543
      %s546 = sshll.u32 %s509, 16
      %s547 = sor.u32 %s509, %s546
      %v548 = vstv %s547
      %v550 = vmul.bf16 %v545, %v548
      %v551 = vld [vmem:[%s438] sm:$0xf]
      %v552 = vld [vmem:[%s438 + $0x4] sm:$0xf]
      %v553 = vld [vmem:[%s438 + $0x8] sm:$0xf]
      %v554 = vld [vmem:[%s438 + $0xc] sm:$0xf]
      %v555 = vld [vmem:[%s438 + $0x10] sm:$0xf]
      %v556 = vld [vmem:[%s438 + $0x14] sm:$0xf]
      %v557 = vld [vmem:[%s438 + $0x18] sm:$0xf]
      %v558 = vld [vmem:[%s438 + $0x1c] sm:$0xf]
      %v559 = vld [vmem:[%s438 + $0x20] sm:$0xf]
      %v560 = vld [vmem:[%s438 + $0x24] sm:$0xf]
      %v561 = vld [vmem:[%s438 + $0x28] sm:$0xf]
      %v562 = vld [vmem:[%s438 + $0x2c] sm:$0xf]
      %v563 = vld [vmem:[%s438 + $0x30] sm:$0xf]
      %v564 = vld [vmem:[%s438 + $0x34] sm:$0xf]
      %v565 = vld [vmem:[%s438 + $0x38] sm:$0xf]
      %v566 = vld [vmem:[%s438 + $0x3c] sm:$0xf]
      %v567 = vunpack.c.l.bf16 %v551
      %v568 = vunpack.c.l.bf16 %v552
      %v569 = vunpack.c.l.bf16 %v553
      %v570 = vunpack.c.l.bf16 %v554
      %v571 = vunpack.c.l.bf16 %v555
      %v572 = vunpack.c.l.bf16 %v556
      %v573 = vunpack.c.l.bf16 %v557
      %v574 = vunpack.c.l.bf16 %v558
      %v575 = vunpack.c.l.bf16 %v559
      %v576 = vunpack.c.l.bf16 %v560
      %v577 = vunpack.c.l.bf16 %v561
      %v578 = vunpack.c.l.bf16 %v562
      %v579 = vunpack.c.l.bf16 %v563
      %v580 = vunpack.c.l.bf16 %v564
      %v581 = vunpack.c.l.bf16 %v565
      %v582 = vunpack.c.l.bf16 %v566
      %v583 = vmul.f32 %v567, %v531
      %v584 = vmul.f32 %v568, %v531
      %v585 = vmul.f32 %v569, %v531
      %v586 = vmul.f32 %v570, %v531
      %v587 = vmul.f32 %v571, %v531
      %v588 = vmul.f32 %v572, %v531
      %v589 = vmul.f32 %v573, %v531
      %v590 = vmul.f32 %v574, %v531
      %v591 = vmul.f32 %v575, %v531
      %v592 = vmul.f32 %v576, %v531
      %v593 = vmul.f32 %v577, %v531
      %v594 = vmul.f32 %v578, %v531
      %v595 = vmul.f32 %v579, %v531
      %v596 = vmul.f32 %v580, %v531
      %v597 = vmul.f32 %v581, %v531
      %v598 = vmul.f32 %v582, %v531
      %v599 = vadd.f32 %v583, %v539
      %v600 = vadd.f32 %v584, %v539
      %v601 = vadd.f32 %v585, %v539
      %v602 = vadd.f32 %v586, %v539
      %v603 = vadd.f32 %v587, %v539
      %v604 = vadd.f32 %v588, %v539
      %v605 = vadd.f32 %v589, %v539
      %v606 = vadd.f32 %v590, %v539
      %v607 = vadd.f32 %v591, %v539
      %v608 = vadd.f32 %v592, %v539
      %v609 = vadd.f32 %v593, %v539
      %v610 = vadd.f32 %v594, %v539
      %v611 = vadd.f32 %v595, %v539
      %v612 = vadd.f32 %v596, %v539
      %v613 = vadd.f32 %v597, %v539
      %v614 = vadd.f32 %v598, %v539
      %v615 = vmax.f32 %v599, 0.0
      %v616 = vmax.f32 %v600, 0.0
      %v617 = vmax.f32 %v601, 0.0
      %v618 = vmax.f32 %v602, 0.0
      %v619 = vmax.f32 %v603, 0.0
      %v620 = vmax.f32 %v604, 0.0
      %v621 = vmax.f32 %v605, 0.0
      %v622 = vmax.f32 %v606, 0.0
      %v623 = vmax.f32 %v607, 0.0
      %v624 = vmax.f32 %v608, 0.0
      %v625 = vmax.f32 %v609, 0.0
      %v626 = vmax.f32 %v610, 0.0
      %v627 = vmax.f32 %v611, 0.0
      %v628 = vmax.f32 %v612, 0.0
      %v629 = vmax.f32 %v613, 0.0
      %v630 = vmax.f32 %v614, 0.0
      %v631 = vpack.c.bf16 %v616, %v615
      %v632 = vpack.c.bf16 %v618, %v617
      %v633 = vpack.c.bf16 %v620, %v619
      %v634 = vpack.c.bf16 %v622, %v621
      %v635 = vpack.c.bf16 %v624, %v623
      %v636 = vpack.c.bf16 %v626, %v625
      %v637 = vpack.c.bf16 %v628, %v627
      %v638 = vpack.c.bf16 %v630, %v629
      %v639 = vld [vmem:[%s470] sm:$0xf]
      %v640 = vld [vmem:[%s470 + $0x4] sm:$0xf]
      %v641 = vunpack.c.l.bf16 %v639
      %v642 = vunpack.c.l.bf16 %v640
      %v643 = vmul.f32 %v641, %v531
      %v644 = vmul.f32 %v642, %v531
      %v645 = vadd.f32 %v643, %v539
      %v646 = vadd.f32 %v644, %v539
      %v647 = vmax.f32 %v645, 0.0
      %v648 = vmax.f32 %v646, 0.0
      %v649 = vpack.c.bf16 %v648, %v647
      %s650 = sshll.u32 %s522, 16
      %s651 = sor.u32 %s522, %s650
      %v652 = vstv %s651
      %v654 = vmul.bf16 %v649, %v652
      %v656 = vshrl.u32 %v550, 16
      %v658 = vrot.slane %v656, 7
      %v659 = vshll.u32 %v550, 16
      %v661 = vor.u32 %v658, %v659
      %v663 = vshrl.u32 %v631, 16
      %v665 = vrot.slane %v663, 7
      %v666 = vshll.u32 %v631, 16
      %v668 = vor.u32 %v665, %v666
      %v670 = vshrl.u32 %v632, 16
      %v672 = vrot.slane %v670, 7
      %v673 = vshll.u32 %v632, 16
      %v675 = vor.u32 %v672, %v673
      %v677 = vshrl.u32 %v633, 16
      %v679 = vrot.slane %v677, 7
      %v680 = vshll.u32 %v633, 16
      %v682 = vor.u32 %v679, %v680
      %v684 = vshrl.u32 %v634, 16
      %v686 = vrot.slane %v684, 7
      %v687 = vshll.u32 %v634, 16
      %v689 = vor.u32 %v686, %v687
      %v691 = vshrl.u32 %v635, 16
      %v693 = vrot.slane %v691, 7
      %v694 = vshll.u32 %v635, 16
      %v696 = vor.u32 %v693, %v694
      %v698 = vshrl.u32 %v636, 16
      %v700 = vrot.slane %v698, 7
      %v701 = vshll.u32 %v636, 16
      %v703 = vor.u32 %v700, %v701
      %v705 = vshrl.u32 %v637, 16
      %v707 = vrot.slane %v705, 7
      %v708 = vshll.u32 %v637, 16
      %v710 = vor.u32 %v707, %v708
      %v712 = vshrl.u32 %v638, 16
      %v714 = vrot.slane %v712, 7
      %v715 = vshll.u32 %v638, 16
      %v717 = vor.u32 %v714, %v715
      %v719 = vshrl.u32 %v654, 16
      %v721 = vrot.slane %v719, 7
      %v722 = vshll.u32 %v654, 16
      %v724 = vor.u32 %v721, %v722
      %vm735 = vcmask 1040384
      %vm736 = vsmask.f32 256
      %vm737 = vmand %vm735, %vm736
      %v738 = vsel %vm737, 0, %v661
      %v739 = vsel %vm737, 0, %v668
      %v740 = vsel %vm737, 0, %v675
      %v741 = vsel %vm737, 0, %v682
      %v742 = vsel %vm737, 0, %v689
      %v743 = vsel %vm737, 0, %v696
      %v744 = vsel %vm737, 0, %v703
      %v745 = vsel %vm737, 0, %v710
      %v746 = vsel %vm737, 0, %v717
      %v747 = vsel %vm737, 0, %v724
      %v748 = vrot.slane %v659, 1
      %v749 = vor.u32 %v656, %v748
      %v750 = vrot.slane %v666, 1
      %v751 = vor.u32 %v663, %v750
      %v752 = vrot.slane %v673, 1
      %v753 = vor.u32 %v670, %v752
      %v754 = vrot.slane %v680, 1
      %v755 = vor.u32 %v677, %v754
      %v756 = vrot.slane %v687, 1
      %v757 = vor.u32 %v684, %v756
      %v758 = vrot.slane %v694, 1
      %v759 = vor.u32 %v691, %v758
      %v760 = vrot.slane %v701, 1
      %v761 = vor.u32 %v698, %v760
      %v762 = vrot.slane %v708, 1
      %v763 = vor.u32 %v705, %v762
      %v764 = vrot.slane %v715, 1
      %v765 = vor.u32 %v712, %v764
      %v766 = vrot.slane %v722, 1
      %v767 = vor.u32 %v719, %v766
      %vm778 = vcmask 1047552
      %vm779 = vsmask.f32 7424
      %vm780 = vmand %vm778, %vm779
      %v781 = vsel %vm780, %v749, 0
      %v782 = vsel %vm780, %v751, 0
      %v783 = vsel %vm780, %v753, 0
      %v784 = vsel %vm780, %v755, 0
      %v785 = vsel %vm780, %v757, 0
      %v786 = vsel %vm780, %v759, 0
      %v787 = vsel %vm780, %v761, 0
      %v788 = vsel %vm780, %v763, 0
      %v789 = vsel %vm780, %v765, 0
      %v790 = vsel %vm780, %v767, 0
      %801 = vrot.lane.b32.xlu0 %v550, 15
      %v802 = vpop.permute.xlu0 %801
      %803 = vrot.lane.b32.xlu0 %v631, 15
      %v804 = vpop.permute.xlu0 %803
      %805 = vrot.lane.b32.xlu0 %v632, 15
      %v806 = vpop.permute.xlu0 %805
      %807 = vrot.lane.b32.xlu0 %v633, 15
      %v808 = vpop.permute.xlu0 %807
      %809 = vrot.lane.b32.xlu0 %v634, 15
      %v810 = vpop.permute.xlu0 %809
      %811 = vrot.lane.b32.xlu0 %v635, 15
      %v812 = vpop.permute.xlu0 %811
      %813 = vrot.lane.b32.xlu0 %v636, 15
      %v814 = vpop.permute.xlu0 %813
      %815 = vrot.lane.b32.xlu0 %v637, 15
      %v816 = vpop.permute.xlu0 %815
      %817 = vrot.lane.b32.xlu0 %v638, 15
      %v818 = vpop.permute.xlu0 %817
      %819 = vrot.lane.b32.xlu0 %v654, 15
      %v820 = vpop.permute.xlu0 %819
      %831 = vrot.lane.b32.xlu0 %v781, 30
      %v832 = vpop.permute.xlu0 %831
      %833 = vrot.lane.b32.xlu0 %v782, 30
      %v834 = vpop.permute.xlu0 %833
      %835 = vrot.lane.b32.xlu0 %v783, 30
      %v836 = vpop.permute.xlu0 %835
      %837 = vrot.lane.b32.xlu0 %v784, 30
      %v838 = vpop.permute.xlu0 %837
      %839 = vrot.lane.b32.xlu0 %v785, 30
      %v840 = vpop.permute.xlu0 %839
      %841 = vrot.lane.b32.xlu0 %v786, 30
      %v842 = vpop.permute.xlu0 %841
      %843 = vrot.lane.b32.xlu0 %v787, 30
      %v844 = vpop.permute.xlu0 %843
      %845 = vrot.lane.b32.xlu0 %v788, 30
      %v846 = vpop.permute.xlu0 %845
      %847 = vrot.lane.b32.xlu0 %v789, 30
      %v848 = vpop.permute.xlu0 %847
      %849 = vrot.lane.b32.xlu0 %v790, 30
      %v850 = vpop.permute.xlu0 %849
      %vm851 = vcmask 121856
      %v854 = vsel %vm851, %v738, %v802
      %v857 = vsel %vm851, %v739, %v804
      %v860 = vsel %vm851, %v740, %v806
      %v863 = vsel %vm851, %v741, %v808
      %v866 = vsel %vm851, %v742, %v810
      %v869 = vsel %vm851, %v743, %v812
      %v872 = vsel %vm851, %v744, %v814
      %v875 = vsel %vm851, %v745, %v816
      %v878 = vsel %vm851, %v746, %v818
      %v881 = vsel %vm851, %v747, %v820
      %vm882 = vcmask 244736
      %v884 = vsel %vm882, %v854, %v832
      %v887 = vsel %vm882, %v857, %v834
      %v890 = vsel %vm882, %v860, %v836
      %v893 = vsel %vm882, %v863, %v838
      %v896 = vsel %vm882, %v866, %v840
      %v899 = vsel %vm882, %v869, %v842
      %v902 = vsel %vm882, %v872, %v844
      %v905 = vsel %vm882, %v875, %v846
      %v908 = vsel %vm882, %v878, %v848
      %v911 = vsel %vm882, %v881, %v850
      %vm913 = vcmask 367616
      %914 = vst.msk [vmem:[#allocation2] sm:$0xff] %vm913, %v884
      %915 = vst.msk [vmem:[#allocation2 + $0x8] sm:$0xff] %vm913, %v887
      %916 = vst.msk [vmem:[#allocation2 + $0x10] sm:$0xff] %vm913, %v890
      %917 = vst.msk [vmem:[#allocation2 + $0x18] sm:$0xff] %vm913, %v893
      %918 = vst.msk [vmem:[#allocation2 + $0x20] sm:$0xff] %vm913, %v896
      %919 = vst.msk [vmem:[#allocation2 + $0x28] sm:$0xff] %vm913, %v899
      %920 = vst.msk [vmem:[#allocation2 + $0x30] sm:$0xff] %vm913, %v902
      %921 = vst.msk [vmem:[#allocation2 + $0x38] sm:$0xff] %vm913, %v905
      %922 = vst.msk [vmem:[#allocation2 + $0x40] sm:$0xff] %vm913, %v908
      %923 = vst.msk [vmem:[#allocation2 + $0x48] sm:$0xff] %vm913, %v911
      %v924 = vld [vmem:[#allocation2] sm:$0xff]
      %v925 = vld [vmem:[#allocation2 + $0x8] sm:$0xff]
      %v926 = vld [vmem:[#allocation2 + $0x10] sm:$0xff]
      %v927 = vld [vmem:[#allocation2 + $0x18] sm:$0xff]
      %v928 = vld [vmem:[#allocation2 + $0x20] sm:$0xff]
      %v929 = vld [vmem:[#allocation2 + $0x28] sm:$0xff]
      %v930 = vld [vmem:[#allocation2 + $0x30] sm:$0xff]
      %v931 = vld [vmem:[#allocation2 + $0x38] sm:$0xff]
      %v932 = vld [vmem:[%s5] sm:$0xf]
      %v933 = vld [vmem:[%s5 + $0x4] sm:$0xf]
      %v934 = vld [vmem:[%s5 + $0x8] sm:$0xf]
      %v935 = vld [vmem:[%s5 + $0xc] sm:$0xf]
      %v936 = vld [vmem:[%s5 + $0x10] sm:$0xf]
      %v937 = vld [vmem:[%s5 + $0x14] sm:$0x7]
      %s938 = scalar_lea.vmem [#allocation2], 8
      %v939 = vld [vmem:[%s938] sm:$0xff]
      %v940 = vld [vmem:[%s938 + $0x8] sm:$0xff]
      %v941 = vld [vmem:[%s938 + $0x10] sm:$0xff]
      %v942 = vld [vmem:[%s938 + $0x18] sm:$0xff]
      %v943 = vld [vmem:[%s938 + $0x20] sm:$0xff]
      %v944 = vld [vmem:[%s938 + $0x28] sm:$0xff]
      %v945 = vld [vmem:[%s938 + $0x30] sm:$0xff]
      %v946 = vld [vmem:[%s938 + $0x38] sm:$0xff]
      %s947 = scalar_lea.vmem %s5, 24
      %v948 = vld [vmem:[%s947] sm:$0xf]
      %v949 = vld [vmem:[%s947 + $0x4] sm:$0xf]
      %v950 = vld [vmem:[%s947 + $0x8] sm:$0xf]
      %v951 = vld [vmem:[%s947 + $0xc] sm:$0xf]
      %v952 = vld [vmem:[%s947 + $0x10] sm:$0xf]
      %v953 = vld [vmem:[%s947 + $0x14] sm:$0x7]
      %v960 = vunpack.c.l.b16 %v948
      %v961 = vunpack.c.l.b16 %v949
      %v962 = vunpack.c.l.b16 %v950
      %v963 = vunpack.c.l.b16 %v951
      %v964 = vunpack.c.l.b16 %v952
      %v965 = vunpack.c.l.b16 %v953
      %v966 = vpack.c.b16 %v961, %v960
      %v967 = vpack.c.b16 %v963, %v962
      %v968 = vpack.c.b16 %v965, %v964
      %v972 = vsel %vm913, %v939, 0
      %v975 = vsel %vm913, %v940, 0
      %v978 = vsel %vm913, %v941, 0
      %v981 = vsel %vm913, %v942, 0
      %v984 = vsel %vm913, %v943, 0
      %v987 = vsel %vm913, %v944, 0
      %v990 = vsel %vm913, %v945, 0
      %v993 = vsel %vm913, %v946, 0
      %vm995 = vcmask 1045504
      %vm996 = vcmask 1046528
      %v997 = vsel %vm995, 4294967295, 65535
      %v998 = vsel %vm996, %v997, 0
      %v1000 = vand.u32 %v968, %v998
      %1002 = vmatprep.subr.bf16.mxu0 0
      %1003 = vmatpush1.bf16.msra.mxu0 %v966
      %1004 = vmatprep.subr.bf16.mxu0 0
      %1005 = vmatpush1.bf16.msra.mxu0 %v967
      %1006 = vmatprep.subr.bf16.mxu0 0
      %1007 = vmatpush1.bf16.msra.mxu0 %v1000
      %1008 = vmatprep.subr.bf16.mxu0 0
      %1009 = vmatpush1.bf16.msra.mxu0 0
      %1010 = vmatprep.subr.bf16.mxu0 0
      %1011 = vmatpush1.bf16.msra.mxu0 0
      %1012 = vmatprep.subr.bf16.mxu0 0
      %1013 = vmatpush1.bf16.msra.mxu0 0
      %1014 = vmatprep.subr.bf16.mxu0 0
      %1015 = vmatpush1.bf16.msra.mxu0 0
      %1016 = vmatprep.subr.bf16.mxu0 0
      %1017 = vmatpush1.bf16.msra.mxu0 0
      %1018 = vmatprep.subr.bf16.mxu0 0
      %1019 = vmatpush1.bf16.msra.mxu0 0
      %1020 = vmatprep.subr.bf16.mxu0 0
      %1021 = vmatpush1.bf16.msra.mxu0 0
      %1022 = vmatprep.subr.bf16.mxu0 0
      %1023 = vmatpush1.bf16.msra.mxu0 0
      %1024 = vmatprep.subr.bf16.mxu0 0
      %1025 = vmatpush1.bf16.msra.mxu0 0
      %1026 = vmatprep.subr.bf16.mxu0 0
      %1027 = vmatpush1.bf16.msra.mxu0 0
      %1028 = vmatprep.subr.bf16.mxu0 0
      %1029 = vmatpush1.bf16.msra.mxu0 0
      %1030 = vmatprep.subr.bf16.mxu0 0
      %1031 = vmatpush1.bf16.msra.mxu0 0
      %1032 = vmatprep.subr.bf16.mxu0 0
      %1033 = vmatpush1.bf16.msra.mxu0 0
      %1034 = vmatprep.mubr.bf16.mxu0 0
      %1035 = vmatmul.mubr.bf16.gmra.mrb[0].mxu0 %v972
      %v1036 = vpop.f32.mrb[0].mxu0
      %v1037 = vadd.f32 0.0, %v1036
      %v1038 = vpop.f32.mrb[0].mxu0
      %v1039 = vpop.f32.mrb[0].mxu0
      %v1040 = vadd.f32 0.0, %v1039
      %v1041 = vpop.f32.mrb[0].mxu0
      %1042 = vmatprep.mubr.bf16.mxu0 0
      %1043 = vmatmul.mubr.bf16.gmra.mrb[0].mxu0 %v975
      %v1044 = vpop.f32.mrb[0].mxu0
      %v1045 = vadd.f32 0.0, %v1044
      %v1046 = vpop.f32.mrb[0].mxu0
      %v1047 = vpop.f32.mrb[0].mxu0
      %v1048 = vadd.f32 0.0, %v1047
      %v1049 = vpop.f32.mrb[0].mxu0
      %1050 = vmatprep.mubr.bf16.mxu0 0
      %1051 = vmatmul.mubr.bf16.gmra.mrb[0].mxu0 %v978
      %v1052 = vpop.f32.mrb[0].mxu0
      %v1053 = vadd.f32 0.0, %v1052
      %v1054 = vpop.f32.mrb[0].mxu0
      %v1055 = vpop.f32.mrb[0].mxu0
      %v1056 = vadd.f32 0.0, %v1055
      %v1057 = vpop.f32.mrb[0].mxu0
      %1058 = vmatprep.mubr.bf16.mxu0 0
      %1059 = vmatmul.mubr.bf16.gmra.mrb[0].mxu0 %v981
      %v1060 = vpop.f32.mrb[0].mxu0
      %v1061 = vadd.f32 0.0, %v1060
      %v1062 = vpop.f32.mrb[0].mxu0
      %v1063 = vpop.f32.mrb[0].mxu0
      %v1064 = vadd.f32 0.0, %v1063
      %v1065 = vpop.f32.mrb[0].mxu0
      %1066 = vmatprep.mubr.bf16.mxu0 0
      %1067 = vmatmul.mubr.bf16.gmra.mrb[0].mxu0 %v984
      %v1068 = vpop.f32.mrb[0].mxu0
      %v1069 = vadd.f32 0.0, %v1068
      %v1070 = vpop.f32.mrb[0].mxu0
      %v1071 = vpop.f32.mrb[0].mxu0
      %v1072 = vadd.f32 0.0, %v1071
      %v1073 = vpop.f32.mrb[0].mxu0
      %1074 = vmatprep.mubr.bf16.mxu0 0
      %1075 = vmatmul.mubr.bf16.gmra.mrb[0].mxu0 %v987
      %v1076 = vpop.f32.mrb[0].mxu0
      %v1077 = vadd.f32 0.0, %v1076
      %v1078 = vpop.f32.mrb[0].mxu0
      %v1079 = vpop.f32.mrb[0].mxu0
      %v1080 = vadd.f32 0.0, %v1079
      %v1081 = vpop.f32.mrb[0].mxu0
      %1082 = vmatprep.mubr.bf16.mxu0 0
      %1083 = vmatmul.mubr.bf16.gmra.mrb[0].mxu0 %v990
      %v1084 = vpop.f32.mrb[0].mxu0
      %v1085 = vadd.f32 0.0, %v1084
      %v1086 = vpop.f32.mrb[0].mxu0
      %v1087 = vpop.f32.mrb[0].mxu0
      %v1088 = vadd.f32 0.0, %v1087
      %v1089 = vpop.f32.mrb[0].mxu0
      %1090 = vmatprep.mubr.bf16.mxu0 0
      %1091 = vmatmul.mubr.bf16.gmra.mrb[0].mxu0 %v993
      %v1092 = vpop.f32.mrb[0].mxu0
      %v1093 = vadd.f32 0.0, %v1092
      %v1094 = vpop.f32.mrb[0].mxu0
      %v1095 = vpop.f32.mrb[0].mxu0
      %v1096 = vadd.f32 0.0, %v1095
      %v1097 = vpop.f32.mrb[0].mxu0
      %1098 = vdwg.mxu0
      %v1105 = vunpack.c.l.b16 %v932
      %v1106 = vunpack.c.l.b16 %v933
      %v1107 = vunpack.c.l.b16 %v934
      %v1108 = vunpack.c.l.b16 %v935
      %v1109 = vunpack.c.l.b16 %v936
      %v1110 = vunpack.c.l.b16 %v937
      %v1111 = vpack.c.b16 %v1106, %v1105
      %v1112 = vpack.c.b16 %v1108, %v1107
      %v1113 = vpack.c.b16 %v1110, %v1109
      %v1117 = vsel %vm913, %v924, 0
      %v1120 = vsel %vm913, %v925, 0
      %v1123 = vsel %vm913, %v926, 0
      %v1126 = vsel %vm913, %v927, 0
      %v1129 = vsel %vm913, %v928, 0
      %v1132 = vsel %vm913, %v929, 0
      %v1135 = vsel %vm913, %v930, 0
      %v1138 = vsel %vm913, %v931, 0
      %v1141 = vand.u32 %v1113, %v998
      %1143 = vmatprep.subr.bf16.mxu0 0
      %1144 = vmatpush1.bf16.msra.mxu0 %v1111
      %1145 = vmatprep.subr.bf16.mxu0 0
      %1146 = vmatpush1.bf16.msra.mxu0 %v1112
      %1147 = vmatprep.subr.bf16.mxu0 0
      %1148 = vmatpush1.bf16.msra.mxu0 %v1141
      %1149 = vmatprep.subr.bf16.mxu0 0
      %1150 = vmatpush1.bf16.msra.mxu0 0
      %1151 = vmatprep.subr.bf16.mxu0 0
      %1152 = vmatpush1.bf16.msra.mxu0 0
      %1153 = vmatprep.subr.bf16.mxu0 0
      %1154 = vmatpush1.bf16.msra.mxu0 0
      %1155 = vmatprep.subr.bf16.mxu0 0
      %1156 = vmatpush1.bf16.msra.mxu0 0
      %1157 = vmatprep.subr.bf16.mxu0 0
      %1158 = vmatpush1.bf16.msra.mxu0 0
      %1159 = vmatprep.subr.bf16.mxu0 0
      %1160 = vmatpush1.bf16.msra.mxu0 0
      %1161 = vmatprep.subr.bf16.mxu0 0
      %1162 = vmatpush1.bf16.msra.mxu0 0
      %1163 = vmatprep.subr.bf16.mxu0 0
      %1164 = vmatpush1.bf16.msra.mxu0 0
      %1165 = vmatprep.subr.bf16.mxu0 0
      %1166 = vmatpush1.bf16.msra.mxu0 0
      %1167 = vmatprep.subr.bf16.mxu0 0
      %1168 = vmatpush1.bf16.msra.mxu0 0
      %1169 = vmatprep.subr.bf16.mxu0 0
      %1170 = vmatpush1.bf16.msra.mxu0 0
      %1171 = vmatprep.subr.bf16.mxu0 0
      %1172 = vmatpush1.bf16.msra.mxu0 0
      %1173 = vmatprep.subr.bf16.mxu0 0
      %1174 = vmatpush1.bf16.msra.mxu0 0
      %1175 = vmatprep.mubr.bf16.mxu0 0
      %1176 = vmatmul.mubr.bf16.gmra.mrb[0].mxu0 %v1117
      %v1177 = vpop.f32.mrb[0].mxu0
      %v1178 = vadd.f32 %v1037, %v1177
      %v1179 = vpop.f32.mrb[0].mxu0
      %v1180 = vpop.f32.mrb[0].mxu0
      %v1181 = vadd.f32 %v1040, %v1180
      %v1182 = vpop.f32.mrb[0].mxu0
      %1183 = vmatprep.mubr.bf16.mxu0 0
      %1184 = vmatmul.mubr.bf16.gmra.mrb[0].mxu0 %v1120
      %v1185 = vpop.f32.mrb[0].mxu0
      %v1186 = vadd.f32 %v1045, %v1185
      %v1187 = vpop.f32.mrb[0].mxu0
      %v1188 = vpop.f32.mrb[0].mxu0
      %v1189 = vadd.f32 %v1048, %v1188
      %v1190 = vpop.f32.mrb[0].mxu0
      %1191 = vmatprep.mubr.bf16.mxu0 0
      %1192 = vmatmul.mubr.bf16.gmra.mrb[0].mxu0 %v1123
      %v1193 = vpop.f32.mrb[0].mxu0
      %v1194 = vadd.f32 %v1053, %v1193
      %v1195 = vpop.f32.mrb[0].mxu0
      %v1196 = vpop.f32.mrb[0].mxu0
      %v1197 = vadd.f32 %v1056, %v1196
      %v1198 = vpop.f32.mrb[0].mxu0
      %1199 = vmatprep.mubr.bf16.mxu0 0
      %1200 = vmatmul.mubr.bf16.gmra.mrb[0].mxu0 %v1126
      %v1201 = vpop.f32.mrb[0].mxu0
      %v1202 = vadd.f32 %v1061, %v1201
      %v1203 = vpop.f32.mrb[0].mxu0
      %v1204 = vpop.f32.mrb[0].mxu0
      %v1205 = vadd.f32 %v1064, %v1204
      %v1206 = vpop.f32.mrb[0].mxu0
      %1207 = vmatprep.mubr.bf16.mxu0 0
      %1208 = vmatmul.mubr.bf16.gmra.mrb[0].mxu0 %v1129
      %v1209 = vpop.f32.mrb[0].mxu0
      %v1210 = vadd.f32 %v1069, %v1209
      %v1211 = vpop.f32.mrb[0].mxu0
      %v1212 = vpop.f32.mrb[0].mxu0
      %v1213 = vadd.f32 %v1072, %v1212
      %v1214 = vpop.f32.mrb[0].mxu0
      %1215 = vmatprep.mubr.bf16.mxu0 0
      %1216 = vmatmul.mubr.bf16.gmra.mrb[0].mxu0 %v1132
      %v1217 = vpop.f32.mrb[0].mxu0
      %v1218 = vadd.f32 %v1077, %v1217
      %v1219 = vpop.f32.mrb[0].mxu0
      %v1220 = vpop.f32.mrb[0].mxu0
      %v1221 = vadd.f32 %v1080, %v1220
      %v1222 = vpop.f32.mrb[0].mxu0
      %1223 = vmatprep.mubr.bf16.mxu0 0
      %1224 = vmatmul.mubr.bf16.gmra.mrb[0].mxu0 %v1135
      %v1225 = vpop.f32.mrb[0].mxu0
      %v1226 = vadd.f32 %v1085, %v1225
      %v1227 = vpop.f32.mrb[0].mxu0
      %v1228 = vpop.f32.mrb[0].mxu0
      %v1229 = vadd.f32 %v1088, %v1228
      %v1230 = vpop.f32.mrb[0].mxu0
      %1231 = vmatprep.mubr.bf16.mxu0 0
      %1232 = vmatmul.mubr.bf16.gmra.mrb[0].mxu0 %v1138
      %v1233 = vpop.f32.mrb[0].mxu0
      %v1234 = vadd.f32 %v1093, %v1233
      %v1235 = vpop.f32.mrb[0].mxu0
      %v1236 = vpop.f32.mrb[0].mxu0
      %v1237 = vadd.f32 %v1096, %v1236
      %v1238 = vpop.f32.mrb[0].mxu0
      %1239 = vdwg.mxu0
      %s1240 = scalar_lea.vmem [#allocation2], 16
      %v1241 = vld [vmem:[%s1240] sm:$0xff]
      %v1242 = vld [vmem:[%s1240 + $0x8] sm:$0xff]
      %v1243 = vld [vmem:[%s1240 + $0x10] sm:$0xff]
      %v1244 = vld [vmem:[%s1240 + $0x18] sm:$0xff]
      %v1245 = vld [vmem:[%s1240 + $0x20] sm:$0xff]
      %v1246 = vld [vmem:[%s1240 + $0x28] sm:$0xff]
      %v1247 = vld [vmem:[%s1240 + $0x30] sm:$0xff]
      %v1248 = vld [vmem:[%s1240 + $0x38] sm:$0xff]
      %s1249 = scalar_lea.vmem %s5, 48
      %v1250 = vld [vmem:[%s1249] sm:$0xf]
      %v1251 = vld [vmem:[%s1249 + $0x4] sm:$0xf]
      %v1252 = vld [vmem:[%s1249 + $0x8] sm:$0xf]
      %v1253 = vld [vmem:[%s1249 + $0xc] sm:$0xf]
      %v1254 = vld [vmem:[%s1249 + $0x10] sm:$0xf]
      %v1255 = vld [vmem:[%s1249 + $0x14] sm:$0x7]
      %v1262 = vunpack.c.l.b16 %v1250
      %v1263 = vunpack.c.l.b16 %v1251
      %v1264 = vunpack.c.l.b16 %v1252
      %v1265 = vunpack.c.l.b16 %v1253
      %v1266 = vunpack.c.l.b16 %v1254
      %v1267 = vunpack.c.l.b16 %v1255
      %v1268 = vpack.c.b16 %v1263, %v1262
      %v1269 = vpack.c.b16 %v1265, %v1264
      %v1270 = vpack.c.b16 %v1267, %v1266
      %v1274 = vsel %vm913, %v1241, 0
      %v1277 = vsel %vm913, %v1242, 0
      %v1280 = vsel %vm913, %v1243, 0
      %v1283 = vsel %vm913, %v1244, 0
      %v1286 = vsel %vm913, %v1245, 0
      %v1289 = vsel %vm913, %v1246, 0
      %v1292 = vsel %vm913, %v1247, 0
      %v1295 = vsel %vm913, %v1248, 0
      %v1298 = vand.u32 %v1270, %v998
      %1300 = vmatprep.subr.bf16.mxu0 0
      %1301 = vmatpush1.bf16.msra.mxu0 %v1268
      %1302 = vmatprep.subr.bf16.mxu0 0
      %1303 = vmatpush1.bf16.msra.mxu0 %v1269
      %1304 = vmatprep.subr.bf16.mxu0 0
      %1305 = vmatpush1.bf16.msra.mxu0 %v1298
      %1306 = vmatprep.subr.bf16.mxu0 0
      %1307 = vmatpush1.bf16.msra.mxu0 0
      %1308 = vmatprep.subr.bf16.mxu0 0
      %1309 = vmatpush1.bf16.msra.mxu0 0
      %1310 = vmatprep.subr.bf16.mxu0 0
      %1311 = vmatpush1.bf16.msra.mxu0 0
      %1312 = vmatprep.subr.bf16.mxu0 0
      %1313 = vmatpush1.bf16.msra.mxu0 0
      %1314 = vmatprep.subr.bf16.mxu0 0
      %1315 = vmatpush1.bf16.msra.mxu0 0
      %1316 = vmatprep.subr.bf16.mxu0 0
      %1317 = vmatpush1.bf16.msra.mxu0 0
      %1318 = vmatprep.subr.bf16.mxu0 0
      %1319 = vmatpush1.bf16.msra.mxu0 0
      %1320 = vmatprep.subr.bf16.mxu0 0
      %1321 = vmatpush1.bf16.msra.mxu0 0
      %1322 = vmatprep.subr.bf16.mxu0 0
      %1323 = vmatpush1.bf16.msra.mxu0 0
      %1324 = vmatprep.subr.bf16.mxu0 0
      %1325 = vmatpush1.bf16.msra.mxu0 0
      %1326 = vmatprep.subr.bf16.mxu0 0
      %1327 = vmatpush1.bf16.msra.mxu0 0
      %1328 = vmatprep.subr.bf16.mxu0 0
      %1329 = vmatpush1.bf16.msra.mxu0 0
      %1330 = vmatprep.subr.bf16.mxu0 0
      %1331 = vmatpush1.bf16.msra.mxu0 0
      %1332 = vmatprep.mubr.bf16.mxu0 0
      %1333 = vmatmul.mubr.bf16.gmra.mrb[0].mxu0 %v1274
      %v1334 = vpop.f32.mrb[0].mxu0
      %v1335 = vadd.f32 0.0, %v1334
      %v1336 = vpop.f32.mrb[0].mxu0
      %v1337 = vpop.f32.mrb[0].mxu0
      %v1338 = vadd.f32 0.0, %v1337
      %v1339 = vpop.f32.mrb[0].mxu0
      %1340 = vmatprep.mubr.bf16.mxu0 0
      %1341 = vmatmul.mubr.bf16.gmra.mrb[0].mxu0 %v1277
      %v1342 = vpop.f32.mrb[0].mxu0
      %v1343 = vadd.f32 0.0, %v1342
      %v1344 = vpop.f32.mrb[0].mxu0
      %v1345 = vpop.f32.mrb[0].mxu0
      %v1346 = vadd.f32 0.0, %v1345
      %v1347 = vpop.f32.mrb[0].mxu0
      %1348 = vmatprep.mubr.bf16.mxu0 0
      %1349 = vmatmul.mubr.bf16.gmra.mrb[0].mxu0 %v1280
      %v1350 = vpop.f32.mrb[0].mxu0
      %v1351 = vadd.f32 0.0, %v1350
      %v1352 = vpop.f32.mrb[0].mxu0
      %v1353 = vpop.f32.mrb[0].mxu0
      %v1354 = vadd.f32 0.0, %v1353
      %v1355 = vpop.f32.mrb[0].mxu0
      %1356 = vmatprep.mubr.bf16.mxu0 0
      %1357 = vmatmul.mubr.bf16.gmra.mrb[0].mxu0 %v1283
      %v1358 = vpop.f32.mrb[0].mxu0
      %v1359 = vadd.f32 0.0, %v1358
      %v1360 = vpop.f32.mrb[0].mxu0
      %v1361 = vpop.f32.mrb[0].mxu0
      %v1362 = vadd.f32 0.0, %v1361
      %v1363 = vpop.f32.mrb[0].mxu0
      %1364 = vmatprep.mubr.bf16.mxu0 0
      %1365 = vmatmul.mubr.bf16.gmra.mrb[0].mxu0 %v1286
      %v1366 = vpop.f32.mrb[0].mxu0
      %v1367 = vadd.f32 0.0, %v1366
      %v1368 = vpop.f32.mrb[0].mxu0
      %v1369 = vpop.f32.mrb[0].mxu0
      %v1370 = vadd.f32 0.0, %v1369
      %v1371 = vpop.f32.mrb[0].mxu0
      %1372 = vmatprep.mubr.bf16.mxu0 0
      %1373 = vmatmul.mubr.bf16.gmra.mrb[0].mxu0 %v1289
      %v1374 = vpop.f32.mrb[0].mxu0
      %v1375 = vadd.f32 0.0, %v1374
      %v1376 = vpop.f32.mrb[0].mxu0
      %v1377 = vpop.f32.mrb[0].mxu0
      %v1378 = vadd.f32 0.0, %v1377
      %v1379 = vpop.f32.mrb[0].mxu0
      %1380 = vmatprep.mubr.bf16.mxu0 0
      %1381 = vmatmul.mubr.bf16.gmra.mrb[0].mxu0 %v1292
      %v1382 = vpop.f32.mrb[0].mxu0
      %v1383 = vadd.f32 0.0, %v1382
      %v1384 = vpop.f32.mrb[0].mxu0
      %v1385 = vpop.f32.mrb[0].mxu0
      %v1386 = vadd.f32 0.0, %v1385
      %v1387 = vpop.f32.mrb[0].mxu0
      %1388 = vmatprep.mubr.bf16.mxu0 0
      %1389 = vmatmul.mubr.bf16.gmra.mrb[0].mxu0 %v1295
      %v1390 = vpop.f32.mrb[0].mxu0
      %v1391 = vadd.f32 0.0, %v1390
      %v1392 = vpop.f32.mrb[0].mxu0
      %v1393 = vpop.f32.mrb[0].mxu0
      %v1394 = vadd.f32 0.0, %v1393
      %v1395 = vpop.f32.mrb[0].mxu0
      %1396 = vdwg.mxu0
      %v1397 = vadd.f32 %v1178, %v1335
      %v1398 = vadd.f32 %v1181, %v1338
      %v1399 = vadd.f32 %v1186, %v1343
      %v1400 = vadd.f32 %v1189, %v1346
      %v1401 = vadd.f32 %v1194, %v1351
      %v1402 = vadd.f32 %v1197, %v1354
      %v1403 = vadd.f32 %v1202, %v1359
      %v1404 = vadd.f32 %v1205, %v1362
      %v1405 = vadd.f32 %v1210, %v1367
      %v1406 = vadd.f32 %v1213, %v1370
      %v1407 = vadd.f32 %v1218, %v1375
      %v1408 = vadd.f32 %v1221, %v1378
      %v1409 = vadd.f32 %v1226, %v1383
      %v1410 = vadd.f32 %v1229, %v1386
      %v1411 = vadd.f32 %v1234, %v1391
      %v1412 = vadd.f32 %v1237, %v1394
      %v1413 = vld [vmem:[%s6] sm:$0x1]
      %v1415 = vlaneseq
      %v1416 = vshrl.u32 %v1415, 7
      %v1417 = vsub.s32 0, %v1416
      %v1418 = vrot.slane %v1413, %v1417
      %v1420 = vadd.f32 %v1397, %v1418
      %v1421 = vadd.f32 %v1398, %v1418
      %v1422 = vadd.f32 %v1399, %v1418
      %v1423 = vadd.f32 %v1400, %v1418
      %v1424 = vadd.f32 %v1401, %v1418
      %v1425 = vadd.f32 %v1402, %v1418
      %v1426 = vadd.f32 %v1403, %v1418
      %v1427 = vadd.f32 %v1404, %v1418
      %v1428 = vadd.f32 %v1405, %v1418
      %v1429 = vadd.f32 %v1406, %v1418
      %v1430 = vadd.f32 %v1407, %v1418
      %v1431 = vadd.f32 %v1408, %v1418
      %v1432 = vadd.f32 %v1409, %v1418
      %v1433 = vadd.f32 %v1410, %v1418
      %v1434 = vadd.f32 %v1411, %v1418
      %v1435 = vadd.f32 %v1412, %v1418
      %v1436 = vpack.c.bf16 %v1421, %v1420
      %v1437 = vpack.c.bf16 %v1423, %v1422
      %v1438 = vpack.c.bf16 %v1425, %v1424
      %v1439 = vpack.c.bf16 %v1427, %v1426
      %v1440 = vpack.c.bf16 %v1429, %v1428
      %v1441 = vpack.c.bf16 %v1431, %v1430
      %v1442 = vpack.c.bf16 %v1433, %v1432
      %v1443 = vpack.c.bf16 %v1435, %v1434
      %v1452 = vunpack.c.l.b16 %v1436
      %v1453 = vunpack.c.h.b16 %v1436
      %v1454 = vunpack.c.l.b16 %v1437
      %v1455 = vunpack.c.h.b16 %v1437
      %v1456 = vunpack.c.l.b16 %v1438
      %v1457 = vunpack.c.h.b16 %v1438
      %v1458 = vunpack.c.l.b16 %v1439
      %v1459 = vunpack.c.h.b16 %v1439
      %v1460 = vunpack.c.l.b16 %v1440
      %v1461 = vunpack.c.h.b16 %v1440
      %v1462 = vunpack.c.l.b16 %v1441
      %v1463 = vunpack.c.h.b16 %v1441
      %v1464 = vunpack.c.l.b16 %v1442
      %v1465 = vunpack.c.h.b16 %v1442
      %v1466 = vunpack.c.l.b16 %v1443
      %v1467 = vunpack.c.h.b16 %v1443
      %v1468 = vpack.c.b16 %v1452, %v1452
      %v1469 = vpack.c.b16 %v1453, %v1453
      %v1470 = vpack.c.b16 %v1454, %v1454
      %v1471 = vpack.c.b16 %v1455, %v1455
      %v1472 = vpack.c.b16 %v1456, %v1456
      %v1473 = vpack.c.b16 %v1457, %v1457
      %v1474 = vpack.c.b16 %v1458, %v1458
      %v1475 = vpack.c.b16 %v1459, %v1459
      %v1476 = vpack.c.b16 %v1460, %v1460
      %v1477 = vpack.c.b16 %v1461, %v1461
      %v1478 = vpack.c.b16 %v1462, %v1462
      %v1479 = vpack.c.b16 %v1463, %v1463
      %v1480 = vpack.c.b16 %v1464, %v1464
      %v1481 = vpack.c.b16 %v1465, %v1465
      %v1482 = vpack.c.b16 %v1466, %v1466
      %v1483 = vpack.c.b16 %v1467, %v1467
      %vm1500 = vcmask 404480
      %1501 = vst.msk [vmem:[%s484] sm:$0xf] %vm1500, %v1468
      %1502 = vst.msk [vmem:[%s484 + $0x4] sm:$0xf] %vm1500, %v1469
      %1503 = vst.msk [vmem:[%s484 + $0x8] sm:$0xf] %vm1500, %v1470
      %1504 = vst.msk [vmem:[%s484 + $0xc] sm:$0xf] %vm1500, %v1471
      %1505 = vst.msk [vmem:[%s484 + $0x10] sm:$0xf] %vm1500, %v1472
      %1506 = vst.msk [vmem:[%s484 + $0x14] sm:$0xf] %vm1500, %v1473
      %1507 = vst.msk [vmem:[%s484 + $0x18] sm:$0xf] %vm1500, %v1474
      %1508 = vst.msk [vmem:[%s484 + $0x1c] sm:$0xf] %vm1500, %v1475
      %1509 = vst.msk [vmem:[%s484 + $0x20] sm:$0xf] %vm1500, %v1476
      %1510 = vst.msk [vmem:[%s484 + $0x24] sm:$0xf] %vm1500, %v1477
      %1511 = vst.msk [vmem:[%s484 + $0x28] sm:$0xf] %vm1500, %v1478
      %1512 = vst.msk [vmem:[%s484 + $0x2c] sm:$0xf] %vm1500, %v1479
      %1513 = vst.msk [vmem:[%s484 + $0x30] sm:$0xf] %vm1500, %v1480
      %1514 = vst.msk [vmem:[%s484 + $0x34] sm:$0xf] %vm1500, %v1481
      %1515 = vst.msk [vmem:[%s484 + $0x38] sm:$0xf] %vm1500, %v1482
      %1516 = vst.msk [vmem:[%s484 + $0x3c] sm:$0xf] %vm1500, %v1483
      %vm1517 = vcmask 408576
      %v1518 = vsel %vm1517, %v1420, 0.0
      %v1519 = vsel %vm1517, %v1421, 0.0
      %v1520 = vadd.f32 %v1518, %v1519
      %v1521 = vsel %vm1517, %v1422, 0.0
      %v1522 = vadd.f32 %v1520, %v1521
      %v1523 = vsel %vm1517, %v1423, 0.0
      %v1524 = vadd.f32 %v1522, %v1523
      %v1525 = vsel %vm1517, %v1424, 0.0
      %v1526 = vadd.f32 %v1524, %v1525
      %v1527 = vsel %vm1517, %v1425, 0.0
      %v1528 = vadd.f32 %v1526, %v1527
      %v1529 = vsel %vm1517, %v1426, 0.0
      %v1530 = vadd.f32 %v1528, %v1529
      %v1531 = vsel %vm1517, %v1427, 0.0
      %v1532 = vadd.f32 %v1530, %v1531
      %v1533 = vsel %vm1517, %v1428, 0.0
      %v1534 = vadd.f32 %v1532, %v1533
      %v1535 = vsel %vm1517, %v1429, 0.0
      %v1536 = vadd.f32 %v1534, %v1535
      %v1537 = vsel %vm1517, %v1430, 0.0
      %v1538 = vadd.f32 %v1536, %v1537
      %v1539 = vsel %vm1517, %v1431, 0.0
      %v1540 = vadd.f32 %v1538, %v1539
      %v1541 = vsel %vm1517, %v1432, 0.0
      %v1542 = vadd.f32 %v1540, %v1541
      %v1543 = vsel %vm1517, %v1433, 0.0
      %v1544 = vadd.f32 %v1542, %v1543
      %v1545 = vsel %vm1517, %v1434, 0.0
      %v1546 = vadd.f32 %v1544, %v1545
      %v1547 = vsel %vm1517, %v1435, 0.0
      %v1548 = vadd.f32 %v1546, %v1547
      %v1549 = vrot.slane %v1548, 4
      %v1550 = vadd.f32 %v1548, %v1549
      %v1551 = vrot.slane %v1550, 2
      %v1552 = vadd.f32 %v1550, %v1551
      %v1553 = vrot.slane %v1552, 1
      %v1554 = vadd.f32 %v1552, %v1553
      %v1555 = vmul.f32 %v1420, %v1420
      %v1556 = vmul.f32 %v1421, %v1421
      %v1557 = vmul.f32 %v1422, %v1422
      %v1558 = vmul.f32 %v1423, %v1423
      %v1559 = vmul.f32 %v1424, %v1424
      %v1560 = vmul.f32 %v1425, %v1425
      %v1561 = vmul.f32 %v1426, %v1426
      %v1562 = vmul.f32 %v1427, %v1427
      %v1563 = vmul.f32 %v1428, %v1428
      %v1564 = vmul.f32 %v1429, %v1429
      %v1565 = vmul.f32 %v1430, %v1430
      %v1566 = vmul.f32 %v1431, %v1431
      %v1567 = vmul.f32 %v1432, %v1432
      %v1568 = vmul.f32 %v1433, %v1433
      %v1569 = vmul.f32 %v1434, %v1434
      %v1570 = vmul.f32 %v1435, %v1435
      %v1571 = vsel %vm1517, %v1555, 0.0
      %v1572 = vsel %vm1517, %v1556, 0.0
      %v1573 = vadd.f32 %v1571, %v1572
      %v1574 = vsel %vm1517, %v1557, 0.0
      %v1575 = vadd.f32 %v1573, %v1574
      %v1576 = vsel %vm1517, %v1558, 0.0
      %v1577 = vadd.f32 %v1575, %v1576
      %v1578 = vsel %vm1517, %v1559, 0.0
      %v1579 = vadd.f32 %v1577, %v1578
      %v1580 = vsel %vm1517, %v1560, 0.0
      %v1581 = vadd.f32 %v1579, %v1580
      %v1582 = vsel %vm1517, %v1561, 0.0
      %v1583 = vadd.f32 %v1581, %v1582
      %v1584 = vsel %vm1517, %v1562, 0.0
      %v1585 = vadd.f32 %v1583, %v1584
      %v1586 = vsel %vm1517, %v1563, 0.0
      %v1587 = vadd.f32 %v1585, %v1586
      %v1588 = vsel %vm1517, %v1564, 0.0
      %v1589 = vadd.f32 %v1587, %v1588
      %v1590 = vsel %vm1517, %v1565, 0.0
      %v1591 = vadd.f32 %v1589, %v1590
      %v1592 = vsel %vm1517, %v1566, 0.0
      %v1593 = vadd.f32 %v1591, %v1592
      %v1594 = vsel %vm1517, %v1567, 0.0
      %v1595 = vadd.f32 %v1593, %v1594
      %v1596 = vsel %vm1517, %v1568, 0.0
      %v1597 = vadd.f32 %v1595, %v1596
      %v1598 = vsel %vm1517, %v1569, 0.0
      %v1599 = vadd.f32 %v1597, %v1598
      %v1600 = vsel %vm1517, %v1570, 0.0
      %v1601 = vadd.f32 %v1599, %v1600
      %v1602 = vrot.slane %v1601, 4
      %v1603 = vadd.f32 %v1601, %v1602
      %v1604 = vrot.slane %v1603, 2
      %v1605 = vadd.f32 %v1603, %v1604
      %v1606 = vrot.slane %v1605, 1
      %v1607 = vadd.f32 %v1605, %v1606
      %v1608 = vlaneseq
      %v1609 = vshrl.u32 %v1608, 7
      %vm1610 = vcmp.eq.s32.totalorder %v1609, 0
      %vm1611 = vcmp.eq.s32.totalorder %v1609, 1
      %v1612 = vsel %vm1611, %v1607, 0.0
      %v1613 = vsel %vm1610, %v1554, %v1612
      %1614 = vst.msk [vmem:[%s493] sm:$0xff] %vm1517, %v1613
      %s1615 = smul.u32 16, %s25
      %p1616 = scmp.lt.s32.totalorder %s24, 1
      %s1617 = scalar_select %p1616, %s24, 1
      %p1618 = scmp.lt.s32.totalorder %s1615, 31
      %s1619 = scalar_select %p1618, %s1615, 31
      %s1620 = smul.addr %s1617, 32
      %s1621 = sadd.s32 %s1619, %s1620
      %s1622 = smul.addr %s1621, 4
      %s1623 = scalar_lea.vmem %s7, %s1622
      %p1624 = scmp.lt.s32.totalorder %s24, 1
      %s1625 = scalar_select %p1624, %s24, 1
      %p1626 = scmp.lt.s32.totalorder %s25, 1
      %s1627 = scalar_select %p1626, %s25, 1
      %s1628 = smul.addr %s1625, 2
      %s1629 = sadd.s32 %s1627, %s1628
      %s1630 = smul.addr %s1629, 8
      %s1631 = scalar_lea.vmem %s8, %s1630
      // Predicated region
      $region49: #{cnn_generator_forward.5} parent=47 // pred_check
        %p1632 = pneg %p236
      $region50: #{cnn_generator_forward.5} parent=47 // pred_check_branch
        %1634 = sbr.rel (%p1632) target = $region52
      $region51: #{cnn_generator_forward.5} parent=47 // pred_region
        %s1635 = smul.u32 16, %s25
      $region52: #{cnn_generator_forward.5} parent=47 // pred_fallthru
        _
      // Predicated region
      $region53: #{cnn_generator_forward.5} parent=47 // pred_check
        %p1636 = pneg %p264
      $region54: #{cnn_generator_forward.5} parent=47 // pred_check_branch
        %1638 = sbr.rel (%p1636) target = $region56
      $region55: #{cnn_generator_forward.5} parent=47 // pred_region
        _
      $region56: #{cnn_generator_forward.5} parent=47 // pred_fallthru
        _
    $region48: #{cnn_generator_forward.5} parent=5 // pred_fallthru
      _
    %p1639 = scmp.le.s32.totalorder 2, %s15
    // Predicated region
    $region57: #{cnn_generator_forward.5} parent=5 // pred_check
      %p1640 = pneg %p1639
    $region58: #{cnn_generator_forward.5} parent=5 // pred_check_branch
      %1642 = sbr.rel (%p1640) target = $region60
    $region59: #{cnn_generator_forward.5} parent=5 // pred_region
      %s1643 = ssub.s32 %s15, 2
      // Predicated region
      $region61: #{cnn_generator_forward.5} parent=59 // pred_check
        %p1644 = pneg %p242
      $region62: #{cnn_generator_forward.5} parent=59 // pred_check_branch
        %1646 = sbr.rel (%p1644) target = $region64
      $region63: #{cnn_generator_forward.5} parent=59 // pred_region
        %s1647 = smul.u32 16, %s27
        %p1648 = scmp.lt.s32.totalorder %s26, 1
        %s1649 = scalar_select %p1648, %s26, 1
        %p1650 = scmp.lt.s32.totalorder %s1647, 31
        %s1651 = scalar_select %p1650, %s1647, 31
        %s1652 = smul.addr %s1649, 32
        %s1653 = sadd.s32 %s1651, %s1652
        %s1654 = smul.addr %s1653, 4
        %s1655 = scalar_lea.vmem %s7, %s1654
      $region64: #{cnn_generator_forward.5} parent=59 // pred_fallthru
        _
      // Predicated region
      $region65: #{cnn_generator_forward.5} parent=59 // pred_check
        %p1656 = pneg %p270
      $region66: #{cnn_generator_forward.5} parent=59 // pred_check_branch
        %1658 = sbr.rel (%p1656) target = $region68
      $region67: #{cnn_generator_forward.5} parent=59 // pred_region
        %p1659 = scmp.lt.s32.totalorder %s26, 1
        %s1660 = scalar_select %p1659, %s26, 1
        %p1661 = scmp.lt.s32.totalorder %s27, 1
        %s1662 = scalar_select %p1661, %s27, 1
        %s1663 = smul.addr %s1660, 2
        %s1664 = sadd.s32 %s1662, %s1663
        %s1665 = smul.addr %s1664, 8
        %s1666 = scalar_lea.vmem %s8, %s1665
      $region68: #{cnn_generator_forward.5} parent=59 // pred_fallthru
        _
    $region60: #{cnn_generator_forward.5} parent=5 // pred_fallthru
      _
  $region6: #{cnn_generator_forward.5} parent=0 // loop_footer
    %s19 = sadd.s32 1, %s15
  $region7: #{cnn_generator_forward.5} parent=0 // loop_footer_branch
    %14 = sbr.rel target = $region3
  $region8: #{cnn_generator_forward.5} parent=0 // loop_exit
    _

// kernel: cnn_generator_forward.4
$region0: #{cnn_generator_forward.4}
  #allocation0 [shape = 'u32[]', space=smem, size = 0x4, offset = 0x4, fixed_abs, tag = 'smem constant byte address 0x4 - core index']
  #allocation1 [shape = 'u32[144,128]{1,0:T(1,128)}', space=vmem, size = 0x12000, scoped, tag = 'internal scratch']
  %s0 = inlined_call_operand.vmem [shape: bf16[2,16], index: 0, kind: input, shape index: {}]
  %s1 = inlined_call_operand.hbm [shape: bf16[16,3840], index: 1, kind: input, shape index: {}]
  %s2 = inlined_call_operand.vmem [shape: f32[1,3840], index: 2, kind: input, shape index: {}]
  %s3 = inlined_call_operand.vmem [shape: bf16[2,3840], index: 3, kind: output, shape index: {0}]
  %s4 = inlined_call_operand.vmem [shape: f32[2,8,15], index: 4, kind: output, shape index: {1}]
  %5 = xla_tuple %s3, %s4
  %s6 = sld [smem:[#allocation0]]
  $region57: #{cnn_generator_forward.4} parent=0
    _
  %s8 = ssub.s32 1, %s6
  %s9 = scalar_select 0, %s8, %s6
  $region1: #{cnn_generator_forward.4} parent=0
    #allocation2 [shape = 'u8[122880]{0}', space=vmem, size = 0x1e000, scoped, tag = 'input window, operand 1']
    #allocation3 [shape = 's32[2]{0}', space=sflag, size = 0x8, scoped, tag = 'scoped memory for cnn_generator_forward.4']
    %10 = vsyncpa [#allocation3], 0
    %s11 = scalar_lea.sflag [#allocation3], 1
    %12 = vsyncpa %s11, 0
    loop: start=0, step=1, limit=4
    $region2: #{cnn_generator_forward.4} parent=1 // loop_pre_header
      _
    $region3: #{cnn_generator_forward.4} parent=1 // loop_header
      %s14 = sphi 0, %s18
      %p15 = scmp.ge.s32.totalorder %s14, 4
      %s22 = sphi 0, %s22
      %s24 = sphi 0, %s22
      %s25 = sphi 0, %s24
      %s39 = sphi 0, %s25
      %s45 = sphi 0, %s47
      %s48 = sphi 0, %s45
      %s49 = sphi 0, %s48
      %s65 = sphi 0, %s49
      %s71 = sphi 0, %s73
      %s74 = sphi 0, %s71
      %s75 = sphi 0, %s74
      %s91 = sphi 0, %s75
      %s97 = sphi 0, %s99
      %s100 = sphi 0, %s97
      %s101 = sphi 0, %s100
      %s117 = sphi 0, %s101
      %s123 = sphi 0, %s125
      %s126 = sphi 0, %s123
      %s127 = sphi 0, %s126
      %s143 = sphi 0, %s127
    $region4: #{cnn_generator_forward.4} parent=1 // loop_header_branch
      %17 = sbr.rel (%p15) target = $region8
    $region5: #{cnn_generator_forward.4} parent=1 // loop_body
      %s19 = ssub.s32 %s14, 1
      %s20 = ssub.s32 %s14, 2
      %s21 = sadd.s32 %s14, 1
      %s23 = sadd.s32 %s22, 1
      %p26 = scmp.eq.s32.totalorder %s14, 1
      %p27 = scmp.ne.s32.totalorder %s22, %s24
      %p28 = scmp.eq.s32.totalorder %s14, 0
      %p29 = por %p27, %p28
      %p30 = scmp.ne.s32.totalorder %s22, %s24
      %p31 = scmp.eq.s32.totalorder %s19, 1
      %p32 = por %p30, %p31
      %p33 = scmp.ne.s32.totalorder %s24, %s25
      %p34 = scmp.eq.s32.totalorder %s19, 0
      %p35 = por %p33, %p34
      %p36 = scmp.ne.s32.totalorder %s24, %s25
      %p37 = scmp.eq.s32.totalorder %s20, 1
      %p38 = por %p36, %p37
      %p40 = scmp.ne.s32.totalorder %s25, %s39
      %p41 = scmp.eq.s32.totalorder %s20, 0
      %p42 = por %p40, %p41
      %s43 = ssub.s32 %s14, %s21
      %p44 = scmp.eq.s32.totalorder %s43, 0
      %s46 = sadd.s32 %s45, 1
      %s47 = scalar_select %p44, %s45, %s46
      %p50 = pneg %p44
      %p51 = scmp.eq.s32.totalorder %s14, 1
      %p52 = por %p50, %p51
      %p53 = scmp.ne.s32.totalorder %s45, %s48
      %p54 = scmp.eq.s32.totalorder %s14, 0
      %p55 = por %p53, %p54
      %p56 = scmp.ne.s32.totalorder %s45, %s48
      %p57 = scmp.eq.s32.totalorder %s19, 1
      %p58 = por %p56, %p57
      %p59 = scmp.ne.s32.totalorder %s48, %s49
      %p60 = scmp.eq.s32.totalorder %s19, 0
      %p61 = por %p59, %p60
      %p62 = scmp.ne.s32.totalorder %s48, %s49
      %p63 = scmp.eq.s32.totalorder %s20, 1
      %p64 = por %p62, %p63
      %p66 = scmp.ne.s32.totalorder %s49, %s65
      %p67 = scmp.eq.s32.totalorder %s20, 0
      %p68 = por %p66, %p67
      %s69 = ssub.s32 %s14, %s21
      %p70 = scmp.eq.s32.totalorder %s69, 0
      %s72 = sadd.s32 %s71, 1
      %s73 = scalar_select %p70, %s71, %s72
      %p76 = pneg %p70
      %p77 = scmp.eq.s32.totalorder %s14, 1
      %p78 = por %p76, %p77
      %p79 = scmp.ne.s32.totalorder %s71, %s74
      %p80 = scmp.eq.s32.totalorder %s14, 0
      %p81 = por %p79, %p80
      %p82 = scmp.ne.s32.totalorder %s71, %s74
      %p83 = scmp.eq.s32.totalorder %s19, 1
      %p84 = por %p82, %p83
      %p85 = scmp.ne.s32.totalorder %s74, %s75
      %p86 = scmp.eq.s32.totalorder %s19, 0
      %p87 = por %p85, %p86
      %p88 = scmp.ne.s32.totalorder %s74, %s75
      %p89 = scmp.eq.s32.totalorder %s20, 1
      %p90 = por %p88, %p89
      %p92 = scmp.ne.s32.totalorder %s75, %s91
      %p93 = scmp.eq.s32.totalorder %s20, 0
      %p94 = por %p92, %p93
      %s95 = ssub.s32 %s14, %s21
      %p96 = scmp.eq.s32.totalorder %s95, 0
      %s98 = sadd.s32 %s97, 1
      %s99 = scalar_select %p96, %s97, %s98
      %p102 = pneg %p96
      %p103 = scmp.eq.s32.totalorder %s14, 1
      %p104 = por %p102, %p103
      %p105 = scmp.ne.s32.totalorder %s97, %s100
      %p106 = scmp.eq.s32.totalorder %s14, 0
      %p107 = por %p105, %p106
      %p108 = scmp.ne.s32.totalorder %s97, %s100
      %p109 = scmp.eq.s32.totalorder %s19, 1
      %p110 = por %p108, %p109
      %p111 = scmp.ne.s32.totalorder %s100, %s101
      %p112 = scmp.eq.s32.totalorder %s19, 0
      %p113 = por %p111, %p112
      %p114 = scmp.ne.s32.totalorder %s100, %s101
      %p115 = scmp.eq.s32.totalorder %s20, 1
      %p116 = por %p114, %p115
      %p118 = scmp.ne.s32.totalorder %s101, %s117
      %p119 = scmp.eq.s32.totalorder %s20, 0
      %p120 = por %p118, %p119
      %s121 = ssub.s32 %s14, %s21
      %p122 = scmp.eq.s32.totalorder %s121, 0
      %s124 = sadd.s32 %s123, 1
      %s125 = scalar_select %p122, %s123, %s124
      %p128 = pneg %p122
      %p129 = scmp.eq.s32.totalorder %s14, 1
      %p130 = por %p128, %p129
      %p131 = scmp.ne.s32.totalorder %s123, %s126
      %p132 = scmp.eq.s32.totalorder %s14, 0
      %p133 = por %p131, %p132
      %p134 = scmp.ne.s32.totalorder %s123, %s126
      %p135 = scmp.eq.s32.totalorder %s19, 1
      %p136 = por %p134, %p135
      %p137 = scmp.ne.s32.totalorder %s126, %s127
      %p138 = scmp.eq.s32.totalorder %s19, 0
      %p139 = por %p137, %p138
      %p140 = scmp.ne.s32.totalorder %s126, %s127
      %p141 = scmp.eq.s32.totalorder %s20, 1
      %p142 = por %p140, %p141
      %p144 = scmp.ne.s32.totalorder %s127, %s143
      %p145 = scmp.eq.s32.totalorder %s20, 0
      %p146 = por %p144, %p145
      %p147 = scmp.le.s32.totalorder 1, %s14
      %p148 = scmp.lt.s32.totalorder %s14, 3
      %p149 = pnand %p147, %p148
      %p150 = pneg %p149
      // Predicated region
      $region9: #{cnn_generator_forward.4} parent=5 // pred_check
        _
      $region10: #{cnn_generator_forward.4} parent=5 // pred_check_branch
        %152 = sbr.rel (%p149) target = $region12
      $region11: #{cnn_generator_forward.4} parent=5 // pred_region
        %s153 = ssub.s32 %s14, 1
        // Predicated region
        $region13: #{cnn_generator_forward.4} parent=11 // pred_check
          %p154 = pneg %p35
        $region14: #{cnn_generator_forward.4} parent=11 // pred_check_branch
          %156 = sbr.rel (%p154) target = $region16
        $region15: #{cnn_generator_forward.4} parent=11 // pred_region
          _
        $region16: #{cnn_generator_forward.4} parent=11 // pred_fallthru
          _
      $region12: #{cnn_generator_forward.4} parent=5 // pred_fallthru
        _
      %p157 = scmp.lt.s32.totalorder %s14, 2
      // Predicated region
      $region17: #{cnn_generator_forward.4} parent=5 // pred_check
        %p158 = pneg %p157
      $region18: #{cnn_generator_forward.4} parent=5 // pred_check_branch
        %160 = sbr.rel (%p158) target = $region20
      $region19: #{cnn_generator_forward.4} parent=5 // pred_region
        // Predicated region
        $region21: #{cnn_generator_forward.4} parent=19 // pred_check
          %p161 = pneg %p55
        $region22: #{cnn_generator_forward.4} parent=19 // pred_check_branch
          %163 = sbr.rel (%p161) target = $region24
        $region23: #{cnn_generator_forward.4} parent=19 // pred_region
          %s164 = sand.u32 %s45, 1
          %s165 = scalar_lea.sflag [#allocation3], %s164
          %s166 = sand.u32 %s45, 1
          %s167 = smul.addr %s166, 120
          %s168 = scalar_lea.vmem [#allocation2], %s167
          %s169 = smul.u32 15, %s14
          %s171 = ssub.s32 1920, 1920
          %172 = vsyncadd %s165, %s171
          %s173 = smul.addr %s169, 64
          %s174 = scalar_lea.hbm %s1, %s173
          %s175 = sshll.u32 %s168, 4
          %s176 = int_to_ptr.vmem [resolvable:$true] %s175
          %181 = dma.hbm_to_vmem [thread:$0]  %s174, 1920, %s176, %s165, 1920, 960, 60
        $region24: #{cnn_generator_forward.4} parent=19 // pred_fallthru
          _
        // Predicated region
        $region25: #{cnn_generator_forward.4} parent=19 // pred_check
          %p182 = pneg %p81
        $region26: #{cnn_generator_forward.4} parent=19 // pred_check_branch
          %184 = sbr.rel (%p182) target = $region28
        $region27: #{cnn_generator_forward.4} parent=19 // pred_region
          %s185 = smul.u32 15, %s14
          %p186 = scmp.lt.s32.totalorder %s185, 29
          %s187 = scalar_select %p186, %s185, 29
          %s188 = scalar_lea.vmem %s2, %s187
          %s189 = smul.u32 15, %s14
        $region28: #{cnn_generator_forward.4} parent=19 // pred_fallthru
          _
      $region20: #{cnn_generator_forward.4} parent=5 // pred_fallthru
        _
      %p190 = scmp.le.s32.totalorder 1, %s14
      %p191 = scmp.lt.s32.totalorder %s14, 3
      %p192 = pnand %p190, %p191
      %p193 = pneg %p192
      // Predicated region
      $region29: #{cnn_generator_forward.4} parent=5 // pred_check
        _
      $region30: #{cnn_generator_forward.4} parent=5 // pred_check_branch
        %195 = sbr.rel (%p192) target = $region32
      $region31: #{cnn_generator_forward.4} parent=5 // pred_region
        %s196 = ssub.s32 %s14, 1
        %s197 = sand.u32 %s48, 1
        %s198 = scalar_lea.sflag [#allocation3], %s197
        %s199 = sand.u32 %s48, 1
        %s200 = smul.addr %s199, 120
        %s201 = scalar_lea.vmem [#allocation2], %s200
        // Predicated region
        $region33: #{cnn_generator_forward.4} parent=31 // pred_check
          %p202 = pneg %p61
        $region34: #{cnn_generator_forward.4} parent=31 // pred_check_branch
          %204 = sbr.rel (%p202) target = $region36
        $region35: #{cnn_generator_forward.4} parent=31 // pred_region
          %205 = dma.done %s198, 1920
        $region36: #{cnn_generator_forward.4} parent=31 // pred_fallthru
          _
        %p206 = pneg %p35
        %p207 = pneg %p32
        %s208 = sand.u32 %s48, 1
        %s209 = scalar_lea.sflag [#allocation3], %s208
        %s210 = sand.u32 %s48, 1
        %s211 = smul.addr %s210, 120
        %s212 = scalar_lea.vmem [#allocation2], %s211
        %p213 = pneg %p61
        %p214 = pneg %p58
        %s215 = smul.u32 15, %s19
        %p216 = scmp.lt.s32.totalorder %s215, 29
        %s217 = scalar_select %p216, %s215, 29
        %s218 = scalar_lea.vmem %s2, %s217
        %p219 = pneg %p87
        %p220 = pneg %p84
        %p221 = pneg %p113
        %p222 = pneg %p110
        %s223 = smul.u32 15, %s19
        %p224 = scmp.lt.s32.totalorder %s223, 29
        %s225 = scalar_select %p224, %s223, 29
        %s226 = scalar_lea.vmem %s3, %s225
        %p227 = pneg %p139
        %p228 = pneg %p136
        %p229 = scmp.lt.s32.totalorder %s19, 1
        %s230 = scalar_select %p229, %s19, 1
        %s231 = smul.addr %s230, 8
        %s232 = scalar_lea.vmem %s4, %s231
        %s233 = smul.u32 15, %s19
        %s234 = smul.u32 15, %s19
        %p235 = scmp.lt.s32.totalorder %s234, 29
        %s236 = scalar_select %p235, %s234, 29
        %s237 = scalar_lea.vmem %s2, %s236
        %s238 = smul.u32 15, %s19
        %s239 = smul.u32 15, %s19
        %p240 = scmp.lt.s32.totalorder %s239, 29
        %s241 = scalar_select %p240, %s239, 29
        %s242 = scalar_lea.vmem %s3, %s241
        %s243 = smul.u32 15, %s19
        %p244 = scmp.lt.s32.totalorder %s19, 1
        %s245 = scalar_select %p244, %s19, 1
        %s246 = smul.addr %s245, 8
        %s247 = scalar_lea.vmem %s4, %s246
        %v249 = vld [vmem:[%s0] sm:$0x1]
        %v250 = vld [vmem:[%s201] sm:$0xff]
        %v251 = vld [vmem:[%s201 + $0x8] sm:$0xff]
        %v252 = vld [vmem:[%s201 + $0x10] sm:$0xff]
        %v253 = vld [vmem:[%s201 + $0x18] sm:$0xff]
        %v254 = vld [vmem:[%s201 + $0x20] sm:$0xff]
        %v255 = vld [vmem:[%s201 + $0x28] sm:$0xff]
        %v256 = vld [vmem:[%s201 + $0x30] sm:$0xff]
        %v257 = vld [vmem:[%s201 + $0x38] sm:$0xf]
        %v258 = vld [vmem:[%s201 + $0x3c] sm:$0xff]
        %v259 = vld [vmem:[%s201 + $0x44] sm:$0xff]
        %v260 = vld [vmem:[%s201 + $0x4c] sm:$0xff]
        %v261 = vld [vmem:[%s201 + $0x54] sm:$0xff]
        %v262 = vld [vmem:[%s201 + $0x5c] sm:$0xff]
        %v263 = vld [vmem:[%s201 + $0x64] sm:$0xff]
        %v264 = vld [vmem:[%s201 + $0x6c] sm:$0xff]
        %v265 = vld [vmem:[%s201 + $0x74] sm:$0xf]
        %v266 = vld [vmem:[%s237] sm:$0xff]
        %v267 = vld [vmem:[%s237 + $0x8] sm:$0xff]
        %v270 = vlaneseq
        %v271 = vshrl.u32 %v270, 7
        %v272 = vsub.s32 0, %v271
        %v273 = vrot.slane %v266, %v272
        %v274 = vlaneseq
        %v275 = vshrl.u32 %v274, 7
        %v276 = vsub.s32 1, %v275
        %v277 = vrot.slane %v266, %v276
        %v278 = vlaneseq
        %v279 = vshrl.u32 %v278, 7
        %v280 = vsub.s32 2, %v279
        %v281 = vrot.slane %v266, %v280
        %v282 = vlaneseq
        %v283 = vshrl.u32 %v282, 7
        %v284 = vsub.s32 3, %v283
        %v285 = vrot.slane %v266, %v284
        %v286 = vlaneseq
        %v287 = vshrl.u32 %v286, 7
        %v288 = vsub.s32 4, %v287
        %v289 = vrot.slane %v266, %v288
        %v290 = vlaneseq
        %v291 = vshrl.u32 %v290, 7
        %v292 = vsub.s32 5, %v291
        %v293 = vrot.slane %v266, %v292
        %v294 = vlaneseq
        %v295 = vshrl.u32 %v294, 7
        %v296 = vsub.s32 6, %v295
        %v297 = vrot.slane %v266, %v296
        %v298 = vlaneseq
        %v299 = vshrl.u32 %v298, 7
        %v300 = vsub.s32 7, %v299
        %v301 = vrot.slane %v266, %v300
        %v302 = vlaneseq
        %v303 = vshrl.u32 %v302, 7
        %v304 = vsub.s32 0, %v303
        %v305 = vrot.slane %v267, %v304
        %v306 = vlaneseq
        %v307 = vshrl.u32 %v306, 7
        %v308 = vsub.s32 1, %v307
        %v309 = vrot.slane %v267, %v308
        %v310 = vlaneseq
        %v311 = vshrl.u32 %v310, 7
        %v312 = vsub.s32 2, %v311
        %v313 = vrot.slane %v267, %v312
        %v314 = vlaneseq
        %v315 = vshrl.u32 %v314, 7
        %v316 = vsub.s32 3, %v315
        %v317 = vrot.slane %v267, %v316
        %v318 = vlaneseq
        %v319 = vshrl.u32 %v318, 7
        %v320 = vsub.s32 4, %v319
        %v321 = vrot.slane %v267, %v320
        %v322 = vlaneseq
        %v323 = vshrl.u32 %v322, 7
        %v324 = vsub.s32 5, %v323
        %v325 = vrot.slane %v267, %v324
        %v326 = vlaneseq
        %v327 = vshrl.u32 %v326, 7
        %v328 = vsub.s32 6, %v327
        %v329 = vrot.slane %v267, %v328
        %v361 = vunpack.c.l.b16 %v250
        %v362 = vunpack.c.h.b16 %v250
        %v363 = vunpack.c.l.b16 %v251
        %v364 = vunpack.c.h.b16 %v251
        %v365 = vunpack.c.l.b16 %v252
        %v366 = vunpack.c.h.b16 %v252
        %v367 = vunpack.c.l.b16 %v253
        %v368 = vunpack.c.h.b16 %v253
        %v369 = vunpack.c.l.b16 %v254
        %v370 = vunpack.c.h.b16 %v254
        %v371 = vunpack.c.l.b16 %v255
        %v372 = vunpack.c.h.b16 %v255
        %v373 = vunpack.c.l.b16 %v256
        %v374 = vunpack.c.h.b16 %v256
        %v375 = vunpack.c.l.b16 %v257
        %v376 = vunpack.c.l.b16 %v258
        %v377 = vunpack.c.h.b16 %v258
        %v378 = vunpack.c.l.b16 %v259
        %v379 = vunpack.c.h.b16 %v259
        %v380 = vunpack.c.l.b16 %v260
        %v381 = vunpack.c.h.b16 %v260
        %v382 = vunpack.c.l.b16 %v261
        %v383 = vunpack.c.h.b16 %v261
        %v384 = vunpack.c.l.b16 %v262
        %v385 = vunpack.c.h.b16 %v262
        %v386 = vunpack.c.l.b16 %v263
        %v387 = vunpack.c.h.b16 %v263
        %v388 = vunpack.c.l.b16 %v264
        %v389 = vunpack.c.h.b16 %v264
        %v390 = vunpack.c.l.b16 %v265
        %v391 = vpack.c.b16 %v376, %v361
        %v392 = vpack.c.b16 %v377, %v362
        %v393 = vpack.c.b16 %v378, %v363
        %v394 = vpack.c.b16 %v379, %v364
        %v395 = vpack.c.b16 %v380, %v365
        %v396 = vpack.c.b16 %v381, %v366
        %v397 = vpack.c.b16 %v382, %v367
        %v398 = vpack.c.b16 %v383, %v368
        %v399 = vpack.c.b16 %v384, %v369
        %v400 = vpack.c.b16 %v385, %v370
        %v401 = vpack.c.b16 %v386, %v371
        %v402 = vpack.c.b16 %v387, %v372
        %v403 = vpack.c.b16 %v388, %v373
        %v404 = vpack.c.b16 %v389, %v374
        %v405 = vpack.c.b16 %v390, %v375
        %vm421 = vcmask 130048
        %v423 = vsel %vm421, %v249, 0
        %425 = vmatprep.subr.bf16.mxu0 %v392
        %426 = vmatpush1.bf16.msra.mxu0 %v391
        %427 = vmatprep.subr.bf16.mxu0 0
        %428 = vmatpush1.bf16.msra.mxu0 0
        %429 = vmatprep.subr.bf16.mxu0 0
        %430 = vmatpush1.bf16.msra.mxu0 0
        %431 = vmatprep.subr.bf16.mxu0 0
        %432 = vmatpush1.bf16.msra.mxu0 0
        %433 = vmatprep.subr.bf16.mxu0 0
        %434 = vmatpush1.bf16.msra.mxu0 0
        %435 = vmatprep.subr.bf16.mxu0 0
        %436 = vmatpush1.bf16.msra.mxu0 0
        %437 = vmatprep.subr.bf16.mxu0 0
        %438 = vmatpush1.bf16.msra.mxu0 0
        %439 = vmatprep.subr.bf16.mxu0 0
        %440 = vmatpush1.bf16.msra.mxu0 0
        %441 = vmatprep.subr.bf16.mxu0 0
        %442 = vmatpush1.bf16.msra.mxu0 0
        %443 = vmatprep.subr.bf16.mxu0 0
        %444 = vmatpush1.bf16.msra.mxu0 0
        %445 = vmatprep.subr.bf16.mxu0 0
        %446 = vmatpush1.bf16.msra.mxu0 0
        %447 = vmatprep.subr.bf16.mxu0 0
        %448 = vmatpush1.bf16.msra.mxu0 0
        %449 = vmatprep.subr.bf16.mxu0 0
        %450 = vmatpush1.bf16.msra.mxu0 0
        %451 = vmatprep.subr.bf16.mxu0 0
        %452 = vmatpush1.bf16.msra.mxu0 0
        %453 = vmatprep.subr.bf16.mxu0 0
        %454 = vmatpush1.bf16.msra.mxu0 0
        %455 = vmatprep.subr.bf16.mxu0 0
        %456 = vmatpush1.bf16.msra.mxu0 0
        %457 = vmatprep.mubr.bf16.mxu0 0
        %458 = vmatmul.mubr.bf16.gmra.mrb[0].mxu0 %v423
        %v459 = vpop.f32.mrb[0].mxu0
        %v460 = vadd.f32 %v273, %v459
        %v461 = vpop.f32.mrb[0].mxu0
        %v462 = vadd.f32 %v277, %v461
        %v463 = vpop.f32.mrb[0].mxu0
        %v464 = vpop.f32.mrb[0].mxu0
        %465 = vdwg.mxu0
        %466 = vmatprep.subr.bf16.mxu0 %v394
        %467 = vmatpush1.bf16.msra.mxu0 %v393
        %468 = vmatprep.subr.bf16.mxu0 0
        %469 = vmatpush1.bf16.msra.mxu0 0
        %470 = vmatprep.subr.bf16.mxu0 0
        %471 = vmatpush1.bf16.msra.mxu0 0
        %472 = vmatprep.subr.bf16.mxu0 0
        %473 = vmatpush1.bf16.msra.mxu0 0
        %474 = vmatprep.subr.bf16.mxu0 0
        %475 = vmatpush1.bf16.msra.mxu0 0
        %476 = vmatprep.subr.bf16.mxu0 0
        %477 = vmatpush1.bf16.msra.mxu0 0
        %478 = vmatprep.subr.bf16.mxu0 0
        %479 = vmatpush1.bf16.msra.mxu0 0
        %480 = vmatprep.subr.bf16.mxu0 0
        %481 = vmatpush1.bf16.msra.mxu0 0
        %482 = vmatprep.subr.bf16.mxu0 0
        %483 = vmatpush1.bf16.msra.mxu0 0
        %484 = vmatprep.subr.bf16.mxu0 0
        %485 = vmatpush1.bf16.msra.mxu0 0
        %486 = vmatprep.subr.bf16.mxu0 0
        %487 = vmatpush1.bf16.msra.mxu0 0
        %488 = vmatprep.subr.bf16.mxu0 0
        %489 = vmatpush1.bf16.msra.mxu0 0
        %490 = vmatprep.subr.bf16.mxu0 0
        %491 = vmatpush1.bf16.msra.mxu0 0
        %492 = vmatprep.subr.bf16.mxu0 0
        %493 = vmatpush1.bf16.msra.mxu0 0
        %494 = vmatprep.subr.bf16.mxu0 0
        %495 = vmatpush1.bf16.msra.mxu0 0
        %496 = vmatprep.subr.bf16.mxu0 0
        %497 = vmatpush1.bf16.msra.mxu0 0
        %498 = vmatprep.mubr.bf16.mxu0 0
        %499 = vmatmul.mubr.bf16.gmra.mrb[0].mxu0 %v423
        %v500 = vpop.f32.mrb[0].mxu0
        %v501 = vadd.f32 %v281, %v500
        %v502 = vpop.f32.mrb[0].mxu0
        %v503 = vadd.f32 %v285, %v502
        %v504 = vpop.f32.mrb[0].mxu0
        %v505 = vpop.f32.mrb[0].mxu0
        %506 = vdwg.mxu0
        %507 = vmatprep.subr.bf16.mxu0 %v396
        %508 = vmatpush1.bf16.msra.mxu0 %v395
        %509 = vmatprep.subr.bf16.mxu0 0
        %510 = vmatpush1.bf16.msra.mxu0 0
        %511 = vmatprep.subr.bf16.mxu0 0
        %512 = vmatpush1.bf16.msra.mxu0 0
        %513 = vmatprep.subr.bf16.mxu0 0
        %514 = vmatpush1.bf16.msra.mxu0 0
        %515 = vmatprep.subr.bf16.mxu0 0
        %516 = vmatpush1.bf16.msra.mxu0 0
        %517 = vmatprep.subr.bf16.mxu0 0
        %518 = vmatpush1.bf16.msra.mxu0 0
        %519 = vmatprep.subr.bf16.mxu0 0
        %520 = vmatpush1.bf16.msra.mxu0 0
        %521 = vmatprep.subr.bf16.mxu0 0
        %522 = vmatpush1.bf16.msra.mxu0 0
        %523 = vmatprep.subr.bf16.mxu0 0
        %524 = vmatpush1.bf16.msra.mxu0 0
        %525 = vmatprep.subr.bf16.mxu0 0
        %526 = vmatpush1.bf16.msra.mxu0 0
        %527 = vmatprep.subr.bf16.mxu0 0
        %528 = vmatpush1.bf16.msra.mxu0 0
        %529 = vmatprep.subr.bf16.mxu0 0
        %530 = vmatpush1.bf16.msra.mxu0 0
        %531 = vmatprep.subr.bf16.mxu0 0
        %532 = vmatpush1.bf16.msra.mxu0 0
        %533 = vmatprep.subr.bf16.mxu0 0
        %534 = vmatpush1.bf16.msra.mxu0 0
        %535 = vmatprep.subr.bf16.mxu0 0
        %536 = vmatpush1.bf16.msra.mxu0 0
        %537 = vmatprep.subr.bf16.mxu0 0
        %538 = vmatpush1.bf16.msra.mxu0 0
        %539 = vmatprep.mubr.bf16.mxu0 0
        %540 = vmatmul.mubr.bf16.gmra.mrb[0].mxu0 %v423
        %v541 = vpop.f32.mrb[0].mxu0
        %v542 = vadd.f32 %v289, %v541
        %v543 = vpop.f32.mrb[0].mxu0
        %v544 = vadd.f32 %v293, %v543
        %v545 = vpop.f32.mrb[0].mxu0
        %v546 = vpop.f32.mrb[0].mxu0
        %547 = vdwg.mxu0
        %548 = vmatprep.subr.bf16.mxu0 %v398
        %549 = vmatpush1.bf16.msra.mxu0 %v397
        %550 = vmatprep.subr.bf16.mxu0 0
        %551 = vmatpush1.bf16.msra.mxu0 0
        %552 = vmatprep.subr.bf16.mxu0 0
        %553 = vmatpush1.bf16.msra.mxu0 0
        %554 = vmatprep.subr.bf16.mxu0 0
        %555 = vmatpush1.bf16.msra.mxu0 0
        %556 = vmatprep.subr.bf16.mxu0 0
        %557 = vmatpush1.bf16.msra.mxu0 0
        %558 = vmatprep.subr.bf16.mxu0 0
        %559 = vmatpush1.bf16.msra.mxu0 0
        %560 = vmatprep.subr.bf16.mxu0 0
        %561 = vmatpush1.bf16.msra.mxu0 0
        %562 = vmatprep.subr.bf16.mxu0 0
        %563 = vmatpush1.bf16.msra.mxu0 0
        %564 = vmatprep.subr.bf16.mxu0 0
        %565 = vmatpush1.bf16.msra.mxu0 0
        %566 = vmatprep.subr.bf16.mxu0 0
        %567 = vmatpush1.bf16.msra.mxu0 0
        %568 = vmatprep.subr.bf16.mxu0 0
        %569 = vmatpush1.bf16.msra.mxu0 0
        %570 = vmatprep.subr.bf16.mxu0 0
        %571 = vmatpush1.bf16.msra.mxu0 0
        %572 = vmatprep.subr.bf16.mxu0 0
        %573 = vmatpush1.bf16.msra.mxu0 0
        %574 = vmatprep.subr.bf16.mxu0 0
        %575 = vmatpush1.bf16.msra.mxu0 0
        %576 = vmatprep.subr.bf16.mxu0 0
        %577 = vmatpush1.bf16.msra.mxu0 0
        %578 = vmatprep.subr.bf16.mxu0 0
        %579 = vmatpush1.bf16.msra.mxu0 0
        %580 = vmatprep.mubr.bf16.mxu0 0
        %581 = vmatmul.mubr.bf16.gmra.mrb[0].mxu0 %v423
        %v582 = vpop.f32.mrb[0].mxu0
        %v583 = vadd.f32 %v297, %v582
        %v584 = vpop.f32.mrb[0].mxu0
        %v585 = vadd.f32 %v301, %v584
        %v586 = vpop.f32.mrb[0].mxu0
        %v587 = vpop.f32.mrb[0].mxu0
        %588 = vdwg.mxu0
        %589 = vmatprep.subr.bf16.mxu0 %v400
        %590 = vmatpush1.bf16.msra.mxu0 %v399
        %591 = vmatprep.subr.bf16.mxu0 0
        %592 = vmatpush1.bf16.msra.mxu0 0
        %593 = vmatprep.subr.bf16.mxu0 0
        %594 = vmatpush1.bf16.msra.mxu0 0
        %595 = vmatprep.subr.bf16.mxu0 0
        %596 = vmatpush1.bf16.msra.mxu0 0
        %597 = vmatprep.subr.bf16.mxu0 0
        %598 = vmatpush1.bf16.msra.mxu0 0
        %599 = vmatprep.subr.bf16.mxu0 0
        %600 = vmatpush1.bf16.msra.mxu0 0
        %601 = vmatprep.subr.bf16.mxu0 0
        %602 = vmatpush1.bf16.msra.mxu0 0
        %603 = vmatprep.subr.bf16.mxu0 0
        %604 = vmatpush1.bf16.msra.mxu0 0
        %605 = vmatprep.subr.bf16.mxu0 0
        %606 = vmatpush1.bf16.msra.mxu0 0
        %607 = vmatprep.subr.bf16.mxu0 0
        %608 = vmatpush1.bf16.msra.mxu0 0
        %609 = vmatprep.subr.bf16.mxu0 0
        %610 = vmatpush1.bf16.msra.mxu0 0
        %611 = vmatprep.subr.bf16.mxu0 0
        %612 = vmatpush1.bf16.msra.mxu0 0
        %613 = vmatprep.subr.bf16.mxu0 0
        %614 = vmatpush1.bf16.msra.mxu0 0
        %615 = vmatprep.subr.bf16.mxu0 0
        %616 = vmatpush1.bf16.msra.mxu0 0
        %617 = vmatprep.subr.bf16.mxu0 0
        %618 = vmatpush1.bf16.msra.mxu0 0
        %619 = vmatprep.subr.bf16.mxu0 0
        %620 = vmatpush1.bf16.msra.mxu0 0
        %621 = vmatprep.mubr.bf16.mxu0 0
        %622 = vmatmul.mubr.bf16.gmra.mrb[0].mxu0 %v423
        %v623 = vpop.f32.mrb[0].mxu0
        %v624 = vadd.f32 %v305, %v623
        %v625 = vpop.f32.mrb[0].mxu0
        %v626 = vadd.f32 %v309, %v625
        %v627 = vpop.f32.mrb[0].mxu0
        %v628 = vpop.f32.mrb[0].mxu0
        %629 = vdwg.mxu0
        %630 = vmatprep.subr.bf16.mxu0 %v402
        %631 = vmatpush1.bf16.msra.mxu0 %v401
        %632 = vmatprep.subr.bf16.mxu0 0
        %633 = vmatpush1.bf16.msra.mxu0 0
        %634 = vmatprep.subr.bf16.mxu0 0
        %635 = vmatpush1.bf16.msra.mxu0 0
        %636 = vmatprep.subr.bf16.mxu0 0
        %637 = vmatpush1.bf16.msra.mxu0 0
        %638 = vmatprep.subr.bf16.mxu0 0
        %639 = vmatpush1.bf16.msra.mxu0 0
        %640 = vmatprep.subr.bf16.mxu0 0
        %641 = vmatpush1.bf16.msra.mxu0 0
        %642 = vmatprep.subr.bf16.mxu0 0
        %643 = vmatpush1.bf16.msra.mxu0 0
        %644 = vmatprep.subr.bf16.mxu0 0
        %645 = vmatpush1.bf16.msra.mxu0 0
        %646 = vmatprep.subr.bf16.mxu0 0
        %647 = vmatpush1.bf16.msra.mxu0 0
        %648 = vmatprep.subr.bf16.mxu0 0
        %649 = vmatpush1.bf16.msra.mxu0 0
        %650 = vmatprep.subr.bf16.mxu0 0
        %651 = vmatpush1.bf16.msra.mxu0 0
        %652 = vmatprep.subr.bf16.mxu0 0
        %653 = vmatpush1.bf16.msra.mxu0 0
        %654 = vmatprep.subr.bf16.mxu0 0
        %655 = vmatpush1.bf16.msra.mxu0 0
        %656 = vmatprep.subr.bf16.mxu0 0
        %657 = vmatpush1.bf16.msra.mxu0 0
        %658 = vmatprep.subr.bf16.mxu0 0
        %659 = vmatpush1.bf16.msra.mxu0 0
        %660 = vmatprep.subr.bf16.mxu0 0
        %661 = vmatpush1.bf16.msra.mxu0 0
        %662 = vmatprep.mubr.bf16.mxu0 0
        %663 = vmatmul.mubr.bf16.gmra.mrb[0].mxu0 %v423
        %v664 = vpop.f32.mrb[0].mxu0
        %v665 = vadd.f32 %v313, %v664
        %v666 = vpop.f32.mrb[0].mxu0
        %v667 = vadd.f32 %v317, %v666
        %v668 = vpop.f32.mrb[0].mxu0
        %v669 = vpop.f32.mrb[0].mxu0
        %670 = vdwg.mxu0
        %671 = vmatprep.subr.bf16.mxu0 %v404
        %672 = vmatpush1.bf16.msra.mxu0 %v403
        %673 = vmatprep.subr.bf16.mxu0 0
        %674 = vmatpush1.bf16.msra.mxu0 0
        %675 = vmatprep.subr.bf16.mxu0 0
        %676 = vmatpush1.bf16.msra.mxu0 0
        %677 = vmatprep.subr.bf16.mxu0 0
        %678 = vmatpush1.bf16.msra.mxu0 0
        %679 = vmatprep.subr.bf16.mxu0 0
        %680 = vmatpush1.bf16.msra.mxu0 0
        %681 = vmatprep.subr.bf16.mxu0 0
        %682 = vmatpush1.bf16.msra.mxu0 0
        %683 = vmatprep.subr.bf16.mxu0 0
        %684 = vmatpush1.bf16.msra.mxu0 0
        %685 = vmatprep.subr.bf16.mxu0 0
        %686 = vmatpush1.bf16.msra.mxu0 0
        %687 = vmatprep.subr.bf16.mxu0 0
        %688 = vmatpush1.bf16.msra.mxu0 0
        %689 = vmatprep.subr.bf16.mxu0 0
        %690 = vmatpush1.bf16.msra.mxu0 0
        %691 = vmatprep.subr.bf16.mxu0 0
        %692 = vmatpush1.bf16.msra.mxu0 0
        %693 = vmatprep.subr.bf16.mxu0 0
        %694 = vmatpush1.bf16.msra.mxu0 0
        %695 = vmatprep.subr.bf16.mxu0 0
        %696 = vmatpush1.bf16.msra.mxu0 0
        %697 = vmatprep.subr.bf16.mxu0 0
        %698 = vmatpush1.bf16.msra.mxu0 0
        %699 = vmatprep.subr.bf16.mxu0 0
        %700 = vmatpush1.bf16.msra.mxu0 0
        %701 = vmatprep.subr.bf16.mxu0 0
        %702 = vmatpush1.bf16.msra.mxu0 0
        %703 = vmatprep.mubr.bf16.mxu0 0
        %704 = vmatmul.mubr.bf16.gmra.mrb[0].mxu0 %v423
        %v705 = vpop.f32.mrb[0].mxu0
        %v706 = vadd.f32 %v321, %v705
        %v707 = vpop.f32.mrb[0].mxu0
        %v708 = vadd.f32 %v325, %v707
        %v709 = vpop.f32.mrb[0].mxu0
        %v710 = vpop.f32.mrb[0].mxu0
        %711 = vdwg.mxu0
        %712 = vmatprep.subr.bf16.mxu0 0
        %713 = vmatpush1.bf16.msra.mxu0 %v405
        %714 = vmatprep.subr.bf16.mxu0 0
        %715 = vmatpush1.bf16.msra.mxu0 0
        %716 = vmatprep.subr.bf16.mxu0 0
        %717 = vmatpush1.bf16.msra.mxu0 0
        %718 = vmatprep.subr.bf16.mxu0 0
        %719 = vmatpush1.bf16.msra.mxu0 0
        %720 = vmatprep.subr.bf16.mxu0 0
        %721 = vmatpush1.bf16.msra.mxu0 0
        %722 = vmatprep.subr.bf16.mxu0 0
        %723 = vmatpush1.bf16.msra.mxu0 0
        %724 = vmatprep.subr.bf16.mxu0 0
        %725 = vmatpush1.bf16.msra.mxu0 0
        %726 = vmatprep.subr.bf16.mxu0 0
        %727 = vmatpush1.bf16.msra.mxu0 0
        %728 = vmatprep.subr.bf16.mxu0 0
        %729 = vmatpush1.bf16.msra.mxu0 0
        %730 = vmatprep.subr.bf16.mxu0 0
        %731 = vmatpush1.bf16.msra.mxu0 0
        %732 = vmatprep.subr.bf16.mxu0 0
        %733 = vmatpush1.bf16.msra.mxu0 0
        %734 = vmatprep.subr.bf16.mxu0 0
        %735 = vmatpush1.bf16.msra.mxu0 0
        %736 = vmatprep.subr.bf16.mxu0 0
        %737 = vmatpush1.bf16.msra.mxu0 0
        %738 = vmatprep.subr.bf16.mxu0 0
        %739 = vmatpush1.bf16.msra.mxu0 0
        %740 = vmatprep.subr.bf16.mxu0 0
        %741 = vmatpush1.bf16.msra.mxu0 0
        %742 = vmatprep.subr.bf16.mxu0 0
        %743 = vmatpush1.bf16.msra.mxu0 0
        %744 = vmatprep.mubr.bf16.mxu0 0
        %745 = vmatmul.mubr.bf16.gmra.mrb[0].mxu0 %v423
        %v746 = vpop.f32.mrb[0].mxu0
        %v747 = vadd.f32 %v329, %v746
        %v748 = vpop.f32.mrb[0].mxu0
        %v749 = vpop.f32.mrb[0].mxu0
        %v750 = vpop.f32.mrb[0].mxu0
        %751 = vdwg.mxu0
        %v752 = vpack.c.bf16 %v460, %v460
        %v753 = vpack.c.bf16 %v462, %v462
        %v754 = vpack.c.bf16 %v501, %v501
        %v755 = vpack.c.bf16 %v503, %v503
        %v756 = vpack.c.bf16 %v542, %v542
        %v757 = vpack.c.bf16 %v544, %v544
        %v758 = vpack.c.bf16 %v583, %v583
        %v759 = vpack.c.bf16 %v585, %v585
        %v760 = vpack.c.bf16 %v624, %v624
        %v761 = vpack.c.bf16 %v626, %v626
        %v762 = vpack.c.bf16 %v665, %v665
        %v763 = vpack.c.bf16 %v667, %v667
        %v764 = vpack.c.bf16 %v706, %v706
        %v765 = vpack.c.bf16 %v708, %v708
        %v766 = vpack.c.bf16 %v747, %v747
        %v782 = vcombine.low %v752, %v753
        %v783 = vcombine.low %v754, %v755
        %v784 = vcombine.low %v756, %v757
        %v785 = vcombine.low %v758, %v759
        %v787 = vunpack.c.l.s4 1966171168
        %v788 = vunpack.c.0.s8 %v787
        %v789 = vlaneseq
        %v790 = vshrl.u32 %v789, 7
        %v791 = vsub.s32 %v788, %v790
        %v792 = vrot.slane %v782, %v791
        %v794 = vunpack.c.l.s4 1966171168
        %v795 = vunpack.c.0.s8 %v794
        %v796 = vlaneseq
        %v797 = vshrl.u32 %v796, 7
        %v798 = vsub.s32 %v795, %v797
        %v799 = vrot.slane %v783, %v798
        %v801 = vunpack.c.l.s4 1966171168
        %v802 = vunpack.c.0.s8 %v801
        %v803 = vlaneseq
        %v804 = vshrl.u32 %v803, 7
        %v805 = vsub.s32 %v802, %v804
        %v806 = vrot.slane %v784, %v805
        %v808 = vunpack.c.l.s4 1966171168
        %v809 = vunpack.c.0.s8 %v808
        %v810 = vlaneseq
        %v811 = vshrl.u32 %v810, 7
        %v812 = vsub.s32 %v809, %v811
        %v813 = vrot.slane %v785, %v812
        %v814 = vcombine.low %v792, %v799
        %v815 = vcombine.low %v806, %v813
        %v817 = vunpack.c.l.s4 1966171168
        %v818 = vunpack.c.0.s8 %v817
        %v819 = vlaneseq
        %v820 = vshrl.u32 %v819, 7
        %v821 = vsub.s32 %v818, %v820
        %v822 = vrot.slane %v814, %v821
        %v824 = vunpack.c.l.s4 1966171168
        %v825 = vunpack.c.0.s8 %v824
        %v826 = vlaneseq
        %v827 = vshrl.u32 %v826, 7
        %v828 = vsub.s32 %v825, %v827
        %v829 = vrot.slane %v815, %v828
        %v830 = vcombine.low %v822, %v829
        %v831 = vcombine.low %v760, %v761
        %v832 = vcombine.low %v762, %v763
        %v833 = vcombine.low %v764, %v765
        %v835 = vunpack.c.l.s4 1966171168
        %v836 = vunpack.c.0.s8 %v835
        %v837 = vlaneseq
        %v838 = vshrl.u32 %v837, 7
        %v839 = vsub.s32 %v836, %v838
        %v840 = vrot.slane %v831, %v839
        %v842 = vunpack.c.l.s4 1966171168
        %v843 = vunpack.c.0.s8 %v842
        %v844 = vlaneseq
        %v845 = vshrl.u32 %v844, 7
        %v846 = vsub.s32 %v843, %v845
        %v847 = vrot.slane %v832, %v846
        %v849 = vunpack.c.l.s4 1966171168
        %v850 = vunpack.c.0.s8 %v849
        %v851 = vlaneseq
        %v852 = vshrl.u32 %v851, 7
        %v853 = vsub.s32 %v850, %v852
        %v854 = vrot.slane %v833, %v853
        %v856 = vunpack.c.l.s4 1966171168
        %v857 = vunpack.c.0.s8 %v856
        %v858 = vlaneseq
        %v859 = vshrl.u32 %v858, 7
        %v860 = vsub.s32 %v857, %v859
        %v861 = vrot.slane %v766, %v860
        %v862 = vcombine.low %v840, %v847
        %v863 = vcombine.low %v854, %v861
        %v865 = vunpack.c.l.s4 1966171168
        %v866 = vunpack.c.0.s8 %v865
        %v867 = vlaneseq
        %v868 = vshrl.u32 %v867, 7
        %v869 = vsub.s32 %v866, %v868
        %v870 = vrot.slane %v862, %v869
        %v872 = vunpack.c.l.s4 1966171168
        %v873 = vunpack.c.0.s8 %v872
        %v874 = vlaneseq
        %v875 = vshrl.u32 %v874, 7
        %v876 = vsub.s32 %v873, %v875
        %v877 = vrot.slane %v863, %v876
        %v878 = vcombine.low %v870, %v877
        %881 = vst [vmem:[%s242] sm:$0xff] %v830
        %882 = vst [vmem:[%s242 + $0x8] sm:$0x7f] %v878
        %v883 = vlaneseq
        %v884 = vshrl.u32 %v883, 7
        %v885 = vadd.s32 %v884, 8
        %v886 = vadd.s32 %v884, 16
        %v887 = vadd.s32 %v884, 24
        %v888 = vadd.s32 %v884, 32
        %v889 = vadd.s32 %v884, 40
        %v890 = vadd.s32 %v884, 48
        %v891 = vadd.s32 %v884, 56
        %v892 = vadd.s32 %v884, 64
        %v893 = vadd.s32 %v884, 72
        %v894 = vadd.s32 %v884, 80
        %v895 = vadd.s32 %v884, 88
        %v896 = vadd.s32 %v884, 96
        %v897 = vadd.s32 %v884, 104
        %v898 = vadd.s32 %v884, 112
        %v899 = vadd.s32 %v884, 120
        %v900 = vadd.s32 %v884, 128
        %v901 = vadd.s32 %v884, 136
        %v902 = vadd.s32 %v884, 144
        %v903 = vadd.s32 %v884, 152
        %v904 = vadd.s32 %v884, 160
        %v905 = vadd.s32 %v884, 168
        %v906 = vadd.s32 %v884, 176
        %v907 = vadd.s32 %v884, 184
        %v908 = vadd.s32 %v884, 192
        %v909 = vadd.s32 %v884, 200
        %v910 = vadd.s32 %v884, 208
        %v911 = vadd.s32 %v884, 216
        %v912 = vadd.s32 %v884, 224
        %v913 = vadd.s32 %v884, 232
        %v914 = vadd.s32 %v884, 240
        %v915 = vadd.s32 %v884, 248
        %v916 = vadd.s32 %v884, 256
        %v917 = vadd.s32 %v884, 264
        %v918 = vadd.s32 %v884, 272
        %v919 = vadd.s32 %v884, 280
        %v920 = vadd.s32 %v884, 288
        %v921 = vadd.s32 %v884, 296
        %v922 = vadd.s32 %v884, 304
        %v923 = vadd.s32 %v884, 312
        %v924 = vadd.s32 %v884, 320
        %v925 = vadd.s32 %v884, 328
        %v926 = vadd.s32 %v884, 336
        %v927 = vadd.s32 %v884, 344
        %v928 = vadd.s32 %v884, 352
        %v929 = vadd.s32 %v884, 360
        %v930 = vadd.s32 %v884, 368
        %v931 = vadd.s32 %v884, 376
        %v932 = vadd.s32 %v884, 384
        %v933 = vadd.s32 %v884, 392
        %v934 = vadd.s32 %v884, 400
        %v935 = vadd.s32 %v884, 408
        %v936 = vadd.s32 %v884, 416
        %v937 = vadd.s32 %v884, 424
        %v938 = vadd.s32 %v884, 432
        %v939 = vadd.s32 %v884, 440
        %v940 = vadd.s32 %v884, 448
        %v941 = vadd.s32 %v884, 456
        %v942 = vadd.s32 %v884, 464
        %v943 = vadd.s32 %v884, 472
        %v944 = vadd.s32 %v884, 480
        %v945 = vadd.s32 %v884, 488
        %v946 = vadd.s32 %v884, 496
        %v947 = vadd.s32 %v884, 504
        %v948 = vadd.s32 %v884, 512
        %v949 = vadd.s32 %v884, 520
        %v950 = vadd.s32 %v884, 528
        %v951 = vadd.s32 %v884, 536
        %v952 = vadd.s32 %v884, 544
        %v953 = vadd.s32 %v884, 552
        %v954 = vadd.s32 %v884, 560
        %v955 = vadd.s32 %v884, 568
        %v956 = vadd.s32 %v884, 576
        %v957 = vadd.s32 %v884, 584
        %v958 = vadd.s32 %v884, 592
        %v959 = vadd.s32 %v884, 600
        %v960 = vadd.s32 %v884, 608
        %v961 = vadd.s32 %v884, 616
        %v962 = vadd.s32 %v884, 624
        %v963 = vadd.s32 %v884, 632
        %v964 = vadd.s32 %v884, 640
        %v965 = vadd.s32 %v884, 648
        %v966 = vadd.s32 %v884, 656
        %v967 = vadd.s32 %v884, 664
        %v968 = vadd.s32 %v884, 672
        %v969 = vadd.s32 %v884, 680
        %v970 = vadd.s32 %v884, 688
        %v971 = vadd.s32 %v884, 696
        %v972 = vadd.s32 %v884, 704
        %v973 = vadd.s32 %v884, 712
        %v974 = vadd.s32 %v884, 720
        %v975 = vadd.s32 %v884, 728
        %v976 = vadd.s32 %v884, 736
        %v977 = vadd.s32 %v884, 744
        %v978 = vadd.s32 %v884, 752
        %v979 = vadd.s32 %v884, 760
        %v980 = vadd.s32 %v884, 768
        %v981 = vadd.s32 %v884, 776
        %v982 = vadd.s32 %v884, 784
        %v983 = vadd.s32 %v884, 792
        %v984 = vadd.s32 %v884, 800
        %v985 = vadd.s32 %v884, 808
        %v986 = vadd.s32 %v884, 816
        %v987 = vadd.s32 %v884, 824
        %v988 = vadd.s32 %v884, 832
        %v989 = vadd.s32 %v884, 840
        %v990 = vadd.s32 %v884, 848
        %v991 = vadd.s32 %v884, 856
        %v992 = vadd.s32 %v884, 864
        %v993 = vadd.s32 %v884, 872
        %v994 = vadd.s32 %v884, 880
        %v995 = vadd.s32 %v884, 888
        %v996 = vadd.s32 %v884, 896
        %v997 = vadd.s32 %v884, 904
        %v998 = vadd.s32 %v884, 912
        %v999 = vadd.s32 %v884, 920
        %v1000 = vadd.s32 %v884, 928
        %v1001 = vadd.s32 %v884, 936
        %v1002 = vadd.s32 %v884, 944
        %v1003 = vadd.s32 %v884, 952
        %v1004 = vadd.s32 %v884, 960
        %v1005 = vadd.s32 %v884, 968
        %v1006 = vadd.s32 %v884, 976
        %v1007 = vadd.s32 %v884, 984
        %v1008 = vadd.s32 %v884, 992
        %v1009 = vadd.s32 %v884, 1000
        %v1010 = vadd.s32 %v884, 1008
        %v1011 = vadd.s32 %v884, 1016
        %v1012 = vadd.s32 %v884, 1024
        %v1013 = vadd.s32 %v884, 1032
        %v1014 = vadd.s32 %v884, 1040
        %v1015 = vadd.s32 %v884, 1048
        %v1016 = vadd.s32 %v884, 1056
        %v1017 = vadd.s32 %v884, 1064
        %v1018 = vadd.s32 %v884, 1072
        %v1019 = vadd.s32 %v884, 1080
        %v1020 = vadd.s32 %v884, 1088
        %v1021 = vadd.s32 %v884, 1096
        %v1022 = vadd.s32 %v884, 1104
        %v1023 = vadd.s32 %v884, 1112
        %v1024 = vadd.s32 %v884, 1120
        %v1025 = vadd.s32 %v884, 1128
        %v1026 = vadd.s32 %v884, 1136
        %v1027 = vadd.s32 %v884, 1144
        %v1028 = vadd.s32 %v884, 1152
        %v1029 = vadd.s32 %v884, 1160
        %v1030 = vadd.s32 %v884, 1168
        %v1031 = vadd.s32 %v884, 1176
        %v1032 = vadd.s32 %v884, 1184
        %v1033 = vadd.s32 %v884, 1192
        %v1034 = vadd.s32 %v884, 1200
        %v1035 = vadd.s32 %v884, 1208
        %v1036 = vadd.s32 %v884, 1216
        %v1037 = vadd.s32 %v884, 1224
        %v1038 = vadd.s32 %v884, 1232
        %v1039 = vadd.s32 %v884, 1240
        %v1040 = vadd.s32 %v884, 1248
        %v1041 = vadd.s32 %v884, 1256
        %v1042 = vadd.s32 %v884, 1264
        %v1043 = vadd.s32 %v884, 1272
        %v1044 = vadd.s32 %v884, 1280
        %v1045 = vadd.s32 %v884, 1288
        %v1046 = vadd.s32 %v884, 1296
        %v1047 = vadd.s32 %v884, 1304
        %v1048 = vadd.s32 %v884, 1312
        %v1049 = vadd.s32 %v884, 1320
        %v1050 = vadd.s32 %v884, 1328
        %v1051 = vadd.s32 %v884, 1336
        %v1052 = vadd.s32 %v884, 1344
        %v1053 = vadd.s32 %v884, 1352
        %v1054 = vadd.s32 %v884, 1360
        %v1055 = vadd.s32 %v884, 1368
        %v1056 = vadd.s32 %v884, 1376
        %v1057 = vadd.s32 %v884, 1384
        %v1058 = vadd.s32 %v884, 1392
        %v1059 = vadd.s32 %v884, 1400
        %v1060 = vadd.s32 %v884, 1408
        %v1061 = vadd.s32 %v884, 1416
        %v1062 = vadd.s32 %v884, 1424
        %v1063 = vadd.s32 %v884, 1432
        %v1064 = vadd.s32 %v884, 1440
        %v1065 = vadd.s32 %v884, 1448
        %v1066 = vadd.s32 %v884, 1456
        %v1067 = vadd.s32 %v884, 1464
        %v1068 = vadd.s32 %v884, 1472
        %v1069 = vadd.s32 %v884, 1480
        %v1070 = vadd.s32 %v884, 1488
        %v1071 = vadd.s32 %v884, 1496
        %v1072 = vadd.s32 %v884, 1504
        %v1073 = vadd.s32 %v884, 1512
        %v1074 = vadd.s32 %v884, 1520
        %v1075 = vadd.s32 %v884, 1528
        %v1076 = vadd.s32 %v884, 1536
        %v1077 = vadd.s32 %v884, 1544
        %v1078 = vadd.s32 %v884, 1552
        %v1079 = vadd.s32 %v884, 1560
        %v1080 = vadd.s32 %v884, 1568
        %v1081 = vadd.s32 %v884, 1576
        %v1082 = vadd.s32 %v884, 1584
        %v1083 = vadd.s32 %v884, 1592
        %v1084 = vadd.s32 %v884, 1600
        %v1085 = vadd.s32 %v884, 1608
        %v1086 = vadd.s32 %v884, 1616
        %v1087 = vadd.s32 %v884, 1624
        %v1088 = vadd.s32 %v884, 1632
        %v1089 = vadd.s32 %v884, 1640
        %v1090 = vadd.s32 %v884, 1648
        %v1091 = vadd.s32 %v884, 1656
        %v1092 = vadd.s32 %v884, 1664
        %v1093 = vadd.s32 %v884, 1672
        %v1094 = vadd.s32 %v884, 1680
        %v1095 = vadd.s32 %v884, 1688
        %v1096 = vadd.s32 %v884, 1696
        %v1097 = vadd.s32 %v884, 1704
        %v1098 = vadd.s32 %v884, 1712
        %v1099 = vadd.s32 %v884, 1720
        %v1100 = vadd.s32 %v884, 1728
        %v1101 = vadd.s32 %v884, 1736
        %v1102 = vadd.s32 %v884, 1744
        %v1103 = vadd.s32 %v884, 1752
        %v1104 = vadd.s32 %v884, 1760
        %v1105 = vadd.s32 %v884, 1768
        %v1106 = vadd.s32 %v884, 1776
        %v1107 = vadd.s32 %v884, 1784
        %v1108 = vadd.s32 %v884, 1792
        %v1109 = vadd.s32 %v884, 1800
        %v1110 = vadd.s32 %v884, 1808
        %v1111 = vadd.s32 %v884, 1816
        %v1112 = vadd.s32 %v884, 1824
        %v1113 = vadd.s32 %v884, 1832
        %v1114 = vadd.s32 %v884, 1840
        %v1115 = vadd.s32 %v884, 1848
        %v1116 = vadd.s32 %v884, 1856
        %v1117 = vadd.s32 %v884, 1864
        %v1118 = vadd.s32 %v884, 1872
        %v1119 = vadd.s32 %v884, 1880
        %v1120 = vadd.s32 %v884, 1888
        %v1121 = vadd.s32 %v884, 1896
        %v1122 = vadd.s32 %v884, 1904
        %v1123 = vadd.s32 %v884, 1912
        %vm1124 = vcmp.lt.s32.totalorder %v884, 0
        %v1125 = vsub.s32 0, %v884
        %v1126 = vsel %vm1124, %v1125, %v884
        %v1127 = vmul.u32.u64.compose %v1126, 2290649225
        %v1128 = vextract.low.u32 %v1127
        %v1129 = vextract.high.u32 %v1127
        %v1130 = vshrl.u32 %v1129, 3
        %v1131 = vmul.u32 %v1130, 15
        %v1132 = vsub.s32 %v1126, %v1131
        %v1133 = vsub.s32 0, %v1132
        %v1134 = vsel %vm1124, %v1133, %v1132
        %vm1135 = vcmp.lt.s32.totalorder %v885, 0
        %v1136 = vsub.s32 0, %v885
        %v1137 = vsel %vm1135, %v1136, %v885
        %v1138 = vmul.u32.u64.compose %v1137, 2290649225
        %v1139 = vextract.low.u32 %v1138
        %v1140 = vextract.high.u32 %v1138
        %v1141 = vshrl.u32 %v1140, 3
        %v1142 = vmul.u32 %v1141, 15
        %v1143 = vsub.s32 %v1137, %v1142
        %v1144 = vsub.s32 0, %v1143
        %v1145 = vsel %vm1135, %v1144, %v1143
        %vm1146 = vcmp.lt.s32.totalorder %v886, 0
        %v1147 = vsub.s32 0, %v886
        %v1148 = vsel %vm1146, %v1147, %v886
        %v1149 = vmul.u32.u64.compose %v1148, 2290649225
        %v1150 = vextract.low.u32 %v1149
        %v1151 = vextract.high.u32 %v1149
        %v1152 = vshrl.u32 %v1151, 3
        %v1153 = vmul.u32 %v1152, 15
        %v1154 = vsub.s32 %v1148, %v1153
        %v1155 = vsub.s32 0, %v1154
        %v1156 = vsel %vm1146, %v1155, %v1154
        %vm1157 = vcmp.lt.s32.totalorder %v887, 0
        %v1158 = vsub.s32 0, %v887
        %v1159 = vsel %vm1157, %v1158, %v887
        %v1160 = vmul.u32.u64.compose %v1159, 2290649225
        %v1161 = vextract.low.u32 %v1160
        %v1162 = vextract.high.u32 %v1160
        %v1163 = vshrl.u32 %v1162, 3
        %v1164 = vmul.u32 %v1163, 15
        %v1165 = vsub.s32 %v1159, %v1164
        %v1166 = vsub.s32 0, %v1165
        %v1167 = vsel %vm1157, %v1166, %v1165
        %vm1168 = vcmp.lt.s32.totalorder %v888, 0
        %v1169 = vsub.s32 0, %v888
        %v1170 = vsel %vm1168, %v1169, %v888
        %v1171 = vmul.u32.u64.compose %v1170, 2290649225
        %v1172 = vextract.low.u32 %v1171
        %v1173 = vextract.high.u32 %v1171
        %v1174 = vshrl.u32 %v1173, 3
        %v1175 = vmul.u32 %v1174, 15
        %v1176 = vsub.s32 %v1170, %v1175
        %v1177 = vsub.s32 0, %v1176
        %v1178 = vsel %vm1168, %v1177, %v1176
        %vm1179 = vcmp.lt.s32.totalorder %v889, 0
        %v1180 = vsub.s32 0, %v889
        %v1181 = vsel %vm1179, %v1180, %v889
        %v1182 = vmul.u32.u64.compose %v1181, 2290649225
        %v1183 = vextract.low.u32 %v1182
        %v1184 = vextract.high.u32 %v1182
        %v1185 = vshrl.u32 %v1184, 3
        %v1186 = vmul.u32 %v1185, 15
        %v1187 = vsub.s32 %v1181, %v1186
        %v1188 = vsub.s32 0, %v1187
        %v1189 = vsel %vm1179, %v1188, %v1187
        %vm1190 = vcmp.lt.s32.totalorder %v890, 0
        %v1191 = vsub.s32 0, %v890
        %v1192 = vsel %vm1190, %v1191, %v890
        %v1193 = vmul.u32.u64.compose %v1192, 2290649225
        %v1194 = vextract.low.u32 %v1193
        %v1195 = vextract.high.u32 %v1193
        %v1196 = vshrl.u32 %v1195, 3
        %v1197 = vmul.u32 %v1196, 15
        %v1198 = vsub.s32 %v1192, %v1197
        %v1199 = vsub.s32 0, %v1198
        %v1200 = vsel %vm1190, %v1199, %v1198
        %vm1201 = vcmp.lt.s32.totalorder %v891, 0
        %v1202 = vsub.s32 0, %v891
        %v1203 = vsel %vm1201, %v1202, %v891
        %v1204 = vmul.u32.u64.compose %v1203, 2290649225
        %v1205 = vextract.low.u32 %v1204
        %v1206 = vextract.high.u32 %v1204
        %v1207 = vshrl.u32 %v1206, 3
        %v1208 = vmul.u32 %v1207, 15
        %v1209 = vsub.s32 %v1203, %v1208
        %v1210 = vsub.s32 0, %v1209
        %v1211 = vsel %vm1201, %v1210, %v1209
        %vm1212 = vcmp.lt.s32.totalorder %v892, 0
        %v1213 = vsub.s32 0, %v892
        %v1214 = vsel %vm1212, %v1213, %v892
        %v1215 = vmul.u32.u64.compose %v1214, 2290649225
        %v1216 = vextract.low.u32 %v1215
        %v1217 = vextract.high.u32 %v1215
        %v1218 = vshrl.u32 %v1217, 3
        %v1219 = vmul.u32 %v1218, 15
        %v1220 = vsub.s32 %v1214, %v1219
        %v1221 = vsub.s32 0, %v1220
        %v1222 = vsel %vm1212, %v1221, %v1220
        %vm1223 = vcmp.lt.s32.totalorder %v893, 0
        %v1224 = vsub.s32 0, %v893
        %v1225 = vsel %vm1223, %v1224, %v893
        %v1226 = vmul.u32.u64.compose %v1225, 2290649225
        %v1227 = vextract.low.u32 %v1226
        %v1228 = vextract.high.u32 %v1226
        %v1229 = vshrl.u32 %v1228, 3
        %v1230 = vmul.u32 %v1229, 15
        %v1231 = vsub.s32 %v1225, %v1230
        %v1232 = vsub.s32 0, %v1231
        %v1233 = vsel %vm1223, %v1232, %v1231
        %vm1234 = vcmp.lt.s32.totalorder %v894, 0
        %v1235 = vsub.s32 0, %v894
        %v1236 = vsel %vm1234, %v1235, %v894
        %v1237 = vmul.u32.u64.compose %v1236, 2290649225
        %v1238 = vextract.low.u32 %v1237
        %v1239 = vextract.high.u32 %v1237
        %v1240 = vshrl.u32 %v1239, 3
        %v1241 = vmul.u32 %v1240, 15
        %v1242 = vsub.s32 %v1236, %v1241
        %v1243 = vsub.s32 0, %v1242
        %v1244 = vsel %vm1234, %v1243, %v1242
        %vm1245 = vcmp.lt.s32.totalorder %v895, 0
        %v1246 = vsub.s32 0, %v895
        %v1247 = vsel %vm1245, %v1246, %v895
        %v1248 = vmul.u32.u64.compose %v1247, 2290649225
        %v1249 = vextract.low.u32 %v1248
        %v1250 = vextract.high.u32 %v1248
        %v1251 = vshrl.u32 %v1250, 3
        %v1252 = vmul.u32 %v1251, 15
        %v1253 = vsub.s32 %v1247, %v1252
        %v1254 = vsub.s32 0, %v1253
        %v1255 = vsel %vm1245, %v1254, %v1253
        %vm1256 = vcmp.lt.s32.totalorder %v896, 0
        %v1257 = vsub.s32 0, %v896
        %v1258 = vsel %vm1256, %v1257, %v896
        %v1259 = vmul.u32.u64.compose %v1258, 2290649225
        %v1260 = vextract.low.u32 %v1259
        %v1261 = vextract.high.u32 %v1259
        %v1262 = vshrl.u32 %v1261, 3
        %v1263 = vmul.u32 %v1262, 15
        %v1264 = vsub.s32 %v1258, %v1263
        %v1265 = vsub.s32 0, %v1264
        %v1266 = vsel %vm1256, %v1265, %v1264
        %vm1267 = vcmp.lt.s32.totalorder %v897, 0
        %v1268 = vsub.s32 0, %v897
        %v1269 = vsel %vm1267, %v1268, %v897
        %v1270 = vmul.u32.u64.compose %v1269, 2290649225
        %v1271 = vextract.low.u32 %v1270
        %v1272 = vextract.high.u32 %v1270
        %v1273 = vshrl.u32 %v1272, 3
        %v1274 = vmul.u32 %v1273, 15
        %v1275 = vsub.s32 %v1269, %v1274
        %v1276 = vsub.s32 0, %v1275
        %v1277 = vsel %vm1267, %v1276, %v1275
        %vm1278 = vcmp.lt.s32.totalorder %v898, 0
        %v1279 = vsub.s32 0, %v898
        %v1280 = vsel %vm1278, %v1279, %v898
        %v1281 = vmul.u32.u64.compose %v1280, 2290649225
        %v1282 = vextract.low.u32 %v1281
        %v1283 = vextract.high.u32 %v1281
        %v1284 = vshrl.u32 %v1283, 3
        %v1285 = vmul.u32 %v1284, 15
        %v1286 = vsub.s32 %v1280, %v1285
        %v1287 = vsub.s32 0, %v1286
        %v1288 = vsel %vm1278, %v1287, %v1286
        %vm1289 = vcmp.lt.s32.totalorder %v899, 0
        %v1290 = vsub.s32 0, %v899
        %v1291 = vsel %vm1289, %v1290, %v899
        %v1292 = vmul.u32.u64.compose %v1291, 2290649225
        %v1293 = vextract.low.u32 %v1292
        %v1294 = vextract.high.u32 %v1292
        %v1295 = vshrl.u32 %v1294, 3
        %v1296 = vmul.u32 %v1295, 15
        %v1297 = vsub.s32 %v1291, %v1296
        %v1298 = vsub.s32 0, %v1297
        %v1299 = vsel %vm1289, %v1298, %v1297
        %vm1300 = vcmp.lt.s32.totalorder %v900, 0
        %v1301 = vsub.s32 0, %v900
        %v1302 = vsel %vm1300, %v1301, %v900
        %v1303 = vmul.u32.u64.compose %v1302, 2290649225
        %v1304 = vextract.low.u32 %v1303
        %v1305 = vextract.high.u32 %v1303
        %v1306 = vshrl.u32 %v1305, 3
        %v1307 = vmul.u32 %v1306, 15
        %v1308 = vsub.s32 %v1302, %v1307
        %v1309 = vsub.s32 0, %v1308
        %v1310 = vsel %vm1300, %v1309, %v1308
        %vm1311 = vcmp.lt.s32.totalorder %v901, 0
        %v1312 = vsub.s32 0, %v901
        %v1313 = vsel %vm1311, %v1312, %v901
        %v1314 = vmul.u32.u64.compose %v1313, 2290649225
        %v1315 = vextract.low.u32 %v1314
        %v1316 = vextract.high.u32 %v1314
        %v1317 = vshrl.u32 %v1316, 3
        %v1318 = vmul.u32 %v1317, 15
        %v1319 = vsub.s32 %v1313, %v1318
        %v1320 = vsub.s32 0, %v1319
        %v1321 = vsel %vm1311, %v1320, %v1319
        %vm1322 = vcmp.lt.s32.totalorder %v902, 0
        %v1323 = vsub.s32 0, %v902
        %v1324 = vsel %vm1322, %v1323, %v902
        %v1325 = vmul.u32.u64.compose %v1324, 2290649225
        %v1326 = vextract.low.u32 %v1325
        %v1327 = vextract.high.u32 %v1325
        %v1328 = vshrl.u32 %v1327, 3
        %v1329 = vmul.u32 %v1328, 15
        %v1330 = vsub.s32 %v1324, %v1329
        %v1331 = vsub.s32 0, %v1330
        %v1332 = vsel %vm1322, %v1331, %v1330
        %vm1333 = vcmp.lt.s32.totalorder %v903, 0
        %v1334 = vsub.s32 0, %v903
        %v1335 = vsel %vm1333, %v1334, %v903
        %v1336 = vmul.u32.u64.compose %v1335, 2290649225
        %v1337 = vextract.low.u32 %v1336
        %v1338 = vextract.high.u32 %v1336
        %v1339 = vshrl.u32 %v1338, 3
        %v1340 = vmul.u32 %v1339, 15
        %v1341 = vsub.s32 %v1335, %v1340
        %v1342 = vsub.s32 0, %v1341
        %v1343 = vsel %vm1333, %v1342, %v1341
        %vm1344 = vcmp.lt.s32.totalorder %v904, 0
        %v1345 = vsub.s32 0, %v904
        %v1346 = vsel %vm1344, %v1345, %v904
        %v1347 = vmul.u32.u64.compose %v1346, 2290649225
        %v1348 = vextract.low.u32 %v1347
        %v1349 = vextract.high.u32 %v1347
        %v1350 = vshrl.u32 %v1349, 3
        %v1351 = vmul.u32 %v1350, 15
        %v1352 = vsub.s32 %v1346, %v1351
        %v1353 = vsub.s32 0, %v1352
        %v1354 = vsel %vm1344, %v1353, %v1352
        %vm1355 = vcmp.lt.s32.totalorder %v905, 0
        %v1356 = vsub.s32 0, %v905
        %v1357 = vsel %vm1355, %v1356, %v905
        %v1358 = vmul.u32.u64.compose %v1357, 2290649225
        %v1359 = vextract.low.u32 %v1358
        %v1360 = vextract.high.u32 %v1358
        %v1361 = vshrl.u32 %v1360, 3
        %v1362 = vmul.u32 %v1361, 15
        %v1363 = vsub.s32 %v1357, %v1362
        %v1364 = vsub.s32 0, %v1363
        %v1365 = vsel %vm1355, %v1364, %v1363
        %vm1366 = vcmp.lt.s32.totalorder %v906, 0
        %v1367 = vsub.s32 0, %v906
        %v1368 = vsel %vm1366, %v1367, %v906
        %v1369 = vmul.u32.u64.compose %v1368, 2290649225
        %v1370 = vextract.low.u32 %v1369
        %v1371 = vextract.high.u32 %v1369
        %v1372 = vshrl.u32 %v1371, 3
        %v1373 = vmul.u32 %v1372, 15
        %v1374 = vsub.s32 %v1368, %v1373
        %v1375 = vsub.s32 0, %v1374
        %v1376 = vsel %vm1366, %v1375, %v1374
        %vm1377 = vcmp.lt.s32.totalorder %v907, 0
        %v1378 = vsub.s32 0, %v907
        %v1379 = vsel %vm1377, %v1378, %v907
        %v1380 = vmul.u32.u64.compose %v1379, 2290649225
        %v1381 = vextract.low.u32 %v1380
        %v1382 = vextract.high.u32 %v1380
        %v1383 = vshrl.u32 %v1382, 3
        %v1384 = vmul.u32 %v1383, 15
        %v1385 = vsub.s32 %v1379, %v1384
        %v1386 = vsub.s32 0, %v1385
        %v1387 = vsel %vm1377, %v1386, %v1385
        %vm1388 = vcmp.lt.s32.totalorder %v908, 0
        %v1389 = vsub.s32 0, %v908
        %v1390 = vsel %vm1388, %v1389, %v908
        %v1391 = vmul.u32.u64.compose %v1390, 2290649225
        %v1392 = vextract.low.u32 %v1391
        %v1393 = vextract.high.u32 %v1391
        %v1394 = vshrl.u32 %v1393, 3
        %v1395 = vmul.u32 %v1394, 15
        %v1396 = vsub.s32 %v1390, %v1395
        %v1397 = vsub.s32 0, %v1396
        %v1398 = vsel %vm1388, %v1397, %v1396
        %vm1399 = vcmp.lt.s32.totalorder %v909, 0
        %v1400 = vsub.s32 0, %v909
        %v1401 = vsel %vm1399, %v1400, %v909
        %v1402 = vmul.u32.u64.compose %v1401, 2290649225
        %v1403 = vextract.low.u32 %v1402
        %v1404 = vextract.high.u32 %v1402
        %v1405 = vshrl.u32 %v1404, 3
        %v1406 = vmul.u32 %v1405, 15
        %v1407 = vsub.s32 %v1401, %v1406
        %v1408 = vsub.s32 0, %v1407
        %v1409 = vsel %vm1399, %v1408, %v1407
        %vm1410 = vcmp.lt.s32.totalorder %v910, 0
        %v1411 = vsub.s32 0, %v910
        %v1412 = vsel %vm1410, %v1411, %v910
        %v1413 = vmul.u32.u64.compose %v1412, 2290649225
        %v1414 = vextract.low.u32 %v1413
        %v1415 = vextract.high.u32 %v1413
        %v1416 = vshrl.u32 %v1415, 3
        %v1417 = vmul.u32 %v1416, 15
        %v1418 = vsub.s32 %v1412, %v1417
        %v1419 = vsub.s32 0, %v1418
        %v1420 = vsel %vm1410, %v1419, %v1418
        %vm1421 = vcmp.lt.s32.totalorder %v911, 0
        %v1422 = vsub.s32 0, %v911
        %v1423 = vsel %vm1421, %v1422, %v911
        %v1424 = vmul.u32.u64.compose %v1423, 2290649225
        %v1425 = vextract.low.u32 %v1424
        %v1426 = vextract.high.u32 %v1424
        %v1427 = vshrl.u32 %v1426, 3
        %v1428 = vmul.u32 %v1427, 15
        %v1429 = vsub.s32 %v1423, %v1428
        %v1430 = vsub.s32 0, %v1429
        %v1431 = vsel %vm1421, %v1430, %v1429
        %vm1432 = vcmp.lt.s32.totalorder %v912, 0
        %v1433 = vsub.s32 0, %v912
        %v1434 = vsel %vm1432, %v1433, %v912
        %v1435 = vmul.u32.u64.compose %v1434, 2290649225
        %v1436 = vextract.low.u32 %v1435
        %v1437 = vextract.high.u32 %v1435
        %v1438 = vshrl.u32 %v1437, 3
        %v1439 = vmul.u32 %v1438, 15
        %v1440 = vsub.s32 %v1434, %v1439
        %v1441 = vsub.s32 0, %v1440
        %v1442 = vsel %vm1432, %v1441, %v1440
        %vm1443 = vcmp.lt.s32.totalorder %v913, 0
        %v1444 = vsub.s32 0, %v913
        %v1445 = vsel %vm1443, %v1444, %v913
        %v1446 = vmul.u32.u64.compose %v1445, 2290649225
        %v1447 = vextract.low.u32 %v1446
        %v1448 = vextract.high.u32 %v1446
        %v1449 = vshrl.u32 %v1448, 3
        %v1450 = vmul.u32 %v1449, 15
        %v1451 = vsub.s32 %v1445, %v1450
        %v1452 = vsub.s32 0, %v1451
        %v1453 = vsel %vm1443, %v1452, %v1451
        %vm1454 = vcmp.lt.s32.totalorder %v914, 0
        %v1455 = vsub.s32 0, %v914
        %v1456 = vsel %vm1454, %v1455, %v914
        %v1457 = vmul.u32.u64.compose %v1456, 2290649225
        %v1458 = vextract.low.u32 %v1457
        %v1459 = vextract.high.u32 %v1457
        %v1460 = vshrl.u32 %v1459, 3
        %v1461 = vmul.u32 %v1460, 15
        %v1462 = vsub.s32 %v1456, %v1461
        %v1463 = vsub.s32 0, %v1462
        %v1464 = vsel %vm1454, %v1463, %v1462
        %vm1465 = vcmp.lt.s32.totalorder %v915, 0
        %v1466 = vsub.s32 0, %v915
        %v1467 = vsel %vm1465, %v1466, %v915
        %v1468 = vmul.u32.u64.compose %v1467, 2290649225
        %v1469 = vextract.low.u32 %v1468
        %v1470 = vextract.high.u32 %v1468
        %v1471 = vshrl.u32 %v1470, 3
        %v1472 = vmul.u32 %v1471, 15
        %v1473 = vsub.s32 %v1467, %v1472
        %v1474 = vsub.s32 0, %v1473
        %v1475 = vsel %vm1465, %v1474, %v1473
        %vm1476 = vcmp.lt.s32.totalorder %v916, 0
        %v1477 = vsub.s32 0, %v916
        %v1478 = vsel %vm1476, %v1477, %v916
        %v1479 = vmul.u32.u64.compose %v1478, 2290649225
        %v1480 = vextract.low.u32 %v1479
        %v1481 = vextract.high.u32 %v1479
        %v1482 = vshrl.u32 %v1481, 3
        %v1483 = vmul.u32 %v1482, 15
        %v1484 = vsub.s32 %v1478, %v1483
        %v1485 = vsub.s32 0, %v1484
        %v1486 = vsel %vm1476, %v1485, %v1484
        %vm1487 = vcmp.lt.s32.totalorder %v917, 0
        %v1488 = vsub.s32 0, %v917
        %v1489 = vsel %vm1487, %v1488, %v917
        %v1490 = vmul.u32.u64.compose %v1489, 2290649225
        %v1491 = vextract.low.u32 %v1490
        %v1492 = vextract.high.u32 %v1490
        %v1493 = vshrl.u32 %v1492, 3
        %v1494 = vmul.u32 %v1493, 15
        %v1495 = vsub.s32 %v1489, %v1494
        %v1496 = vsub.s32 0, %v1495
        %v1497 = vsel %vm1487, %v1496, %v1495
        %vm1498 = vcmp.lt.s32.totalorder %v918, 0
        %v1499 = vsub.s32 0, %v918
        %v1500 = vsel %vm1498, %v1499, %v918
        %v1501 = vmul.u32.u64.compose %v1500, 2290649225
        %v1502 = vextract.low.u32 %v1501
        %v1503 = vextract.high.u32 %v1501
        %v1504 = vshrl.u32 %v1503, 3
        %v1505 = vmul.u32 %v1504, 15
        %v1506 = vsub.s32 %v1500, %v1505
        %v1507 = vsub.s32 0, %v1506
        %v1508 = vsel %vm1498, %v1507, %v1506
        %vm1509 = vcmp.lt.s32.totalorder %v919, 0
        %v1510 = vsub.s32 0, %v919
        %v1511 = vsel %vm1509, %v1510, %v919
        %v1512 = vmul.u32.u64.compose %v1511, 2290649225
        %v1513 = vextract.low.u32 %v1512
        %v1514 = vextract.high.u32 %v1512
        %v1515 = vshrl.u32 %v1514, 3
        %v1516 = vmul.u32 %v1515, 15
        %v1517 = vsub.s32 %v1511, %v1516
        %v1518 = vsub.s32 0, %v1517
        %v1519 = vsel %vm1509, %v1518, %v1517
        %vm1520 = vcmp.lt.s32.totalorder %v920, 0
        %v1521 = vsub.s32 0, %v920
        %v1522 = vsel %vm1520, %v1521, %v920
        %v1523 = vmul.u32.u64.compose %v1522, 2290649225
        %v1524 = vextract.low.u32 %v1523
        %v1525 = vextract.high.u32 %v1523
        %v1526 = vshrl.u32 %v1525, 3
        %v1527 = vmul.u32 %v1526, 15
        %v1528 = vsub.s32 %v1522, %v1527
        %v1529 = vsub.s32 0, %v1528
        %v1530 = vsel %vm1520, %v1529, %v1528
        %vm1531 = vcmp.lt.s32.totalorder %v921, 0
        %v1532 = vsub.s32 0, %v921
        %v1533 = vsel %vm1531, %v1532, %v921
        %v1534 = vmul.u32.u64.compose %v1533, 2290649225
        %v1535 = vextract.low.u32 %v1534
        %v1536 = vextract.high.u32 %v1534
        %v1537 = vshrl.u32 %v1536, 3
        %v1538 = vmul.u32 %v1537, 15
        %v1539 = vsub.s32 %v1533, %v1538
        %v1540 = vsub.s32 0, %v1539
        %v1541 = vsel %vm1531, %v1540, %v1539
        %vm1542 = vcmp.lt.s32.totalorder %v922, 0
        %v1543 = vsub.s32 0, %v922
        %v1544 = vsel %vm1542, %v1543, %v922
        %v1545 = vmul.u32.u64.compose %v1544, 2290649225
        %v1546 = vextract.low.u32 %v1545
        %v1547 = vextract.high.u32 %v1545
        %v1548 = vshrl.u32 %v1547, 3
        %v1549 = vmul.u32 %v1548, 15
        %v1550 = vsub.s32 %v1544, %v1549
        %v1551 = vsub.s32 0, %v1550
        %v1552 = vsel %vm1542, %v1551, %v1550
        %vm1553 = vcmp.lt.s32.totalorder %v923, 0
        %v1554 = vsub.s32 0, %v923
        %v1555 = vsel %vm1553, %v1554, %v923
        %v1556 = vmul.u32.u64.compose %v1555, 2290649225
        %v1557 = vextract.low.u32 %v1556
        %v1558 = vextract.high.u32 %v1556
        %v1559 = vshrl.u32 %v1558, 3
        %v1560 = vmul.u32 %v1559, 15
        %v1561 = vsub.s32 %v1555, %v1560
        %v1562 = vsub.s32 0, %v1561
        %v1563 = vsel %vm1553, %v1562, %v1561
        %vm1564 = vcmp.lt.s32.totalorder %v924, 0
        %v1565 = vsub.s32 0, %v924
        %v1566 = vsel %vm1564, %v1565, %v924
        %v1567 = vmul.u32.u64.compose %v1566, 2290649225
        %v1568 = vextract.low.u32 %v1567
        %v1569 = vextract.high.u32 %v1567
        %v1570 = vshrl.u32 %v1569, 3
        %v1571 = vmul.u32 %v1570, 15
        %v1572 = vsub.s32 %v1566, %v1571
        %v1573 = vsub.s32 0, %v1572
        %v1574 = vsel %vm1564, %v1573, %v1572
        %vm1575 = vcmp.lt.s32.totalorder %v925, 0
        %v1576 = vsub.s32 0, %v925
        %v1577 = vsel %vm1575, %v1576, %v925
        %v1578 = vmul.u32.u64.compose %v1577, 2290649225
        %v1579 = vextract.low.u32 %v1578
        %v1580 = vextract.high.u32 %v1578
        %v1581 = vshrl.u32 %v1580, 3
        %v1582 = vmul.u32 %v1581, 15
        %v1583 = vsub.s32 %v1577, %v1582
        %v1584 = vsub.s32 0, %v1583
        %v1585 = vsel %vm1575, %v1584, %v1583
        %vm1586 = vcmp.lt.s32.totalorder %v926, 0
        %v1587 = vsub.s32 0, %v926
        %v1588 = vsel %vm1586, %v1587, %v926
        %v1589 = vmul.u32.u64.compose %v1588, 2290649225
        %v1590 = vextract.low.u32 %v1589
        %v1591 = vextract.high.u32 %v1589
        %v1592 = vshrl.u32 %v1591, 3
        %v1593 = vmul.u32 %v1592, 15
        %v1594 = vsub.s32 %v1588, %v1593
        %v1595 = vsub.s32 0, %v1594
        %v1596 = vsel %vm1586, %v1595, %v1594
        %vm1597 = vcmp.lt.s32.totalorder %v927, 0
        %v1598 = vsub.s32 0, %v927
        %v1599 = vsel %vm1597, %v1598, %v927
        %v1600 = vmul.u32.u64.compose %v1599, 2290649225
        %v1601 = vextract.low.u32 %v1600
        %v1602 = vextract.high.u32 %v1600
        %v1603 = vshrl.u32 %v1602, 3
        %v1604 = vmul.u32 %v1603, 15
        %v1605 = vsub.s32 %v1599, %v1604
        %v1606 = vsub.s32 0, %v1605
        %v1607 = vsel %vm1597, %v1606, %v1605
        %vm1608 = vcmp.lt.s32.totalorder %v928, 0
        %v1609 = vsub.s32 0, %v928
        %v1610 = vsel %vm1608, %v1609, %v928
        %v1611 = vmul.u32.u64.compose %v1610, 2290649225
        %v1612 = vextract.low.u32 %v1611
        %v1613 = vextract.high.u32 %v1611
        %v1614 = vshrl.u32 %v1613, 3
        %v1615 = vmul.u32 %v1614, 15
        %v1616 = vsub.s32 %v1610, %v1615
        %v1617 = vsub.s32 0, %v1616
        %v1618 = vsel %vm1608, %v1617, %v1616
        %vm1619 = vcmp.lt.s32.totalorder %v929, 0
        %v1620 = vsub.s32 0, %v929
        %v1621 = vsel %vm1619, %v1620, %v929
        %v1622 = vmul.u32.u64.compose %v1621, 2290649225
        %v1623 = vextract.low.u32 %v1622
        %v1624 = vextract.high.u32 %v1622
        %v1625 = vshrl.u32 %v1624, 3
        %v1626 = vmul.u32 %v1625, 15
        %v1627 = vsub.s32 %v1621, %v1626
        %v1628 = vsub.s32 0, %v1627
        %v1629 = vsel %vm1619, %v1628, %v1627
        %vm1630 = vcmp.lt.s32.totalorder %v930, 0
        %v1631 = vsub.s32 0, %v930
        %v1632 = vsel %vm1630, %v1631, %v930
        %v1633 = vmul.u32.u64.compose %v1632, 2290649225
        %v1634 = vextract.low.u32 %v1633
        %v1635 = vextract.high.u32 %v1633
        %v1636 = vshrl.u32 %v1635, 3
        %v1637 = vmul.u32 %v1636, 15
        %v1638 = vsub.s32 %v1632, %v1637
        %v1639 = vsub.s32 0, %v1638
        %v1640 = vsel %vm1630, %v1639, %v1638
        %vm1641 = vcmp.lt.s32.totalorder %v931, 0
        %v1642 = vsub.s32 0, %v931
        %v1643 = vsel %vm1641, %v1642, %v931
        %v1644 = vmul.u32.u64.compose %v1643, 2290649225
        %v1645 = vextract.low.u32 %v1644
        %v1646 = vextract.high.u32 %v1644
        %v1647 = vshrl.u32 %v1646, 3
        %v1648 = vmul.u32 %v1647, 15
        %v1649 = vsub.s32 %v1643, %v1648
        %v1650 = vsub.s32 0, %v1649
        %v1651 = vsel %vm1641, %v1650, %v1649
        %vm1652 = vcmp.lt.s32.totalorder %v932, 0
        %v1653 = vsub.s32 0, %v932
        %v1654 = vsel %vm1652, %v1653, %v932
        %v1655 = vmul.u32.u64.compose %v1654, 2290649225
        %v1656 = vextract.low.u32 %v1655
        %v1657 = vextract.high.u32 %v1655
        %v1658 = vshrl.u32 %v1657, 3
        %v1659 = vmul.u32 %v1658, 15
        %v1660 = vsub.s32 %v1654, %v1659
        %v1661 = vsub.s32 0, %v1660
        %v1662 = vsel %vm1652, %v1661, %v1660
        %vm1663 = vcmp.lt.s32.totalorder %v933, 0
        %v1664 = vsub.s32 0, %v933
        %v1665 = vsel %vm1663, %v1664, %v933
        %v1666 = vmul.u32.u64.compose %v1665, 2290649225
        %v1667 = vextract.low.u32 %v1666
        %v1668 = vextract.high.u32 %v1666
        %v1669 = vshrl.u32 %v1668, 3
        %v1670 = vmul.u32 %v1669, 15
        %v1671 = vsub.s32 %v1665, %v1670
        %v1672 = vsub.s32 0, %v1671
        %v1673 = vsel %vm1663, %v1672, %v1671
        %vm1674 = vcmp.lt.s32.totalorder %v934, 0
        %v1675 = vsub.s32 0, %v934
        %v1676 = vsel %vm1674, %v1675, %v934
        %v1677 = vmul.u32.u64.compose %v1676, 2290649225
        %v1678 = vextract.low.u32 %v1677
        %v1679 = vextract.high.u32 %v1677
        %v1680 = vshrl.u32 %v1679, 3
        %v1681 = vmul.u32 %v1680, 15
        %v1682 = vsub.s32 %v1676, %v1681
        %v1683 = vsub.s32 0, %v1682
        %v1684 = vsel %vm1674, %v1683, %v1682
        %vm1685 = vcmp.lt.s32.totalorder %v935, 0
        %v1686 = vsub.s32 0, %v935
        %v1687 = vsel %vm1685, %v1686, %v935
        %v1688 = vmul.u32.u64.compose %v1687, 2290649225
        %v1689 = vextract.low.u32 %v1688
        %v1690 = vextract.high.u32 %v1688
        %v1691 = vshrl.u32 %v1690, 3
        %v1692 = vmul.u32 %v1691, 15
        %v1693 = vsub.s32 %v1687, %v1692
        %v1694 = vsub.s32 0, %v1693
        %v1695 = vsel %vm1685, %v1694, %v1693
        %vm1696 = vcmp.lt.s32.totalorder %v936, 0
        %v1697 = vsub.s32 0, %v936
        %v1698 = vsel %vm1696, %v1697, %v936
        %v1699 = vmul.u32.u64.compose %v1698, 2290649225
        %v1700 = vextract.low.u32 %v1699
        %v1701 = vextract.high.u32 %v1699
        %v1702 = vshrl.u32 %v1701, 3
        %v1703 = vmul.u32 %v1702, 15
        %v1704 = vsub.s32 %v1698, %v1703
        %v1705 = vsub.s32 0, %v1704
        %v1706 = vsel %vm1696, %v1705, %v1704
        %vm1707 = vcmp.lt.s32.totalorder %v937, 0
        %v1708 = vsub.s32 0, %v937
        %v1709 = vsel %vm1707, %v1708, %v937
        %v1710 = vmul.u32.u64.compose %v1709, 2290649225
        %v1711 = vextract.low.u32 %v1710
        %v1712 = vextract.high.u32 %v1710
        %v1713 = vshrl.u32 %v1712, 3
        %v1714 = vmul.u32 %v1713, 15
        %v1715 = vsub.s32 %v1709, %v1714
        %v1716 = vsub.s32 0, %v1715
        %v1717 = vsel %vm1707, %v1716, %v1715
        %vm1718 = vcmp.lt.s32.totalorder %v938, 0
        %v1719 = vsub.s32 0, %v938
        %v1720 = vsel %vm1718, %v1719, %v938
        %v1721 = vmul.u32.u64.compose %v1720, 2290649225
        %v1722 = vextract.low.u32 %v1721
        %v1723 = vextract.high.u32 %v1721
        %v1724 = vshrl.u32 %v1723, 3
        %v1725 = vmul.u32 %v1724, 15
        %v1726 = vsub.s32 %v1720, %v1725
        %v1727 = vsub.s32 0, %v1726
        %v1728 = vsel %vm1718, %v1727, %v1726
        %vm1729 = vcmp.lt.s32.totalorder %v939, 0
        %v1730 = vsub.s32 0, %v939
        %v1731 = vsel %vm1729, %v1730, %v939
        %v1732 = vmul.u32.u64.compose %v1731, 2290649225
        %v1733 = vextract.low.u32 %v1732
        %v1734 = vextract.high.u32 %v1732
        %v1735 = vshrl.u32 %v1734, 3
        %v1736 = vmul.u32 %v1735, 15
        %v1737 = vsub.s32 %v1731, %v1736
        %v1738 = vsub.s32 0, %v1737
        %v1739 = vsel %vm1729, %v1738, %v1737
        %vm1740 = vcmp.lt.s32.totalorder %v940, 0
        %v1741 = vsub.s32 0, %v940
        %v1742 = vsel %vm1740, %v1741, %v940
        %v1743 = vmul.u32.u64.compose %v1742, 2290649225
        %v1744 = vextract.low.u32 %v1743
        %v1745 = vextract.high.u32 %v1743
        %v1746 = vshrl.u32 %v1745, 3
        %v1747 = vmul.u32 %v1746, 15
        %v1748 = vsub.s32 %v1742, %v1747
        %v1749 = vsub.s32 0, %v1748
        %v1750 = vsel %vm1740, %v1749, %v1748
        %vm1751 = vcmp.lt.s32.totalorder %v941, 0
        %v1752 = vsub.s32 0, %v941
        %v1753 = vsel %vm1751, %v1752, %v941
        %v1754 = vmul.u32.u64.compose %v1753, 2290649225
        %v1755 = vextract.low.u32 %v1754
        %v1756 = vextract.high.u32 %v1754
        %v1757 = vshrl.u32 %v1756, 3
        %v1758 = vmul.u32 %v1757, 15
        %v1759 = vsub.s32 %v1753, %v1758
        %v1760 = vsub.s32 0, %v1759
        %v1761 = vsel %vm1751, %v1760, %v1759
        %vm1762 = vcmp.lt.s32.totalorder %v942, 0
        %v1763 = vsub.s32 0, %v942
        %v1764 = vsel %vm1762, %v1763, %v942
        %v1765 = vmul.u32.u64.compose %v1764, 2290649225
        %v1766 = vextract.low.u32 %v1765
        %v1767 = vextract.high.u32 %v1765
        %v1768 = vshrl.u32 %v1767, 3
        %v1769 = vmul.u32 %v1768, 15
        %v1770 = vsub.s32 %v1764, %v1769
        %v1771 = vsub.s32 0, %v1770
        %v1772 = vsel %vm1762, %v1771, %v1770
        %vm1773 = vcmp.lt.s32.totalorder %v943, 0
        %v1774 = vsub.s32 0, %v943
        %v1775 = vsel %vm1773, %v1774, %v943
        %v1776 = vmul.u32.u64.compose %v1775, 2290649225
        %v1777 = vextract.low.u32 %v1776
        %v1778 = vextract.high.u32 %v1776
        %v1779 = vshrl.u32 %v1778, 3
        %v1780 = vmul.u32 %v1779, 15
        %v1781 = vsub.s32 %v1775, %v1780
        %v1782 = vsub.s32 0, %v1781
        %v1783 = vsel %vm1773, %v1782, %v1781
        %vm1784 = vcmp.lt.s32.totalorder %v944, 0
        %v1785 = vsub.s32 0, %v944
        %v1786 = vsel %vm1784, %v1785, %v944
        %v1787 = vmul.u32.u64.compose %v1786, 2290649225
        %v1788 = vextract.low.u32 %v1787
        %v1789 = vextract.high.u32 %v1787
        %v1790 = vshrl.u32 %v1789, 3
        %v1791 = vmul.u32 %v1790, 15
        %v1792 = vsub.s32 %v1786, %v1791
        %v1793 = vsub.s32 0, %v1792
        %v1794 = vsel %vm1784, %v1793, %v1792
        %vm1795 = vcmp.lt.s32.totalorder %v945, 0
        %v1796 = vsub.s32 0, %v945
        %v1797 = vsel %vm1795, %v1796, %v945
        %v1798 = vmul.u32.u64.compose %v1797, 2290649225
        %v1799 = vextract.low.u32 %v1798
        %v1800 = vextract.high.u32 %v1798
        %v1801 = vshrl.u32 %v1800, 3
        %v1802 = vmul.u32 %v1801, 15
        %v1803 = vsub.s32 %v1797, %v1802
        %v1804 = vsub.s32 0, %v1803
        %v1805 = vsel %vm1795, %v1804, %v1803
        %vm1806 = vcmp.lt.s32.totalorder %v946, 0
        %v1807 = vsub.s32 0, %v946
        %v1808 = vsel %vm1806, %v1807, %v946
        %v1809 = vmul.u32.u64.compose %v1808, 2290649225
        %v1810 = vextract.low.u32 %v1809
        %v1811 = vextract.high.u32 %v1809
        %v1812 = vshrl.u32 %v1811, 3
        %v1813 = vmul.u32 %v1812, 15
        %v1814 = vsub.s32 %v1808, %v1813
        %v1815 = vsub.s32 0, %v1814
        %v1816 = vsel %vm1806, %v1815, %v1814
        %vm1817 = vcmp.lt.s32.totalorder %v947, 0
        %v1818 = vsub.s32 0, %v947
        %v1819 = vsel %vm1817, %v1818, %v947
        %v1820 = vmul.u32.u64.compose %v1819, 2290649225
        %v1821 = vextract.low.u32 %v1820
        %v1822 = vextract.high.u32 %v1820
        %v1823 = vshrl.u32 %v1822, 3
        %v1824 = vmul.u32 %v1823, 15
        %v1825 = vsub.s32 %v1819, %v1824
        %v1826 = vsub.s32 0, %v1825
        %v1827 = vsel %vm1817, %v1826, %v1825
        %vm1828 = vcmp.lt.s32.totalorder %v948, 0
        %v1829 = vsub.s32 0, %v948
        %v1830 = vsel %vm1828, %v1829, %v948
        %v1831 = vmul.u32.u64.compose %v1830, 2290649225
        %v1832 = vextract.low.u32 %v1831
        %v1833 = vextract.high.u32 %v1831
        %v1834 = vshrl.u32 %v1833, 3
        %v1835 = vmul.u32 %v1834, 15
        %v1836 = vsub.s32 %v1830, %v1835
        %v1837 = vsub.s32 0, %v1836
        %v1838 = vsel %vm1828, %v1837, %v1836
        %vm1839 = vcmp.lt.s32.totalorder %v949, 0
        %v1840 = vsub.s32 0, %v949
        %v1841 = vsel %vm1839, %v1840, %v949
        %v1842 = vmul.u32.u64.compose %v1841, 2290649225
        %v1843 = vextract.low.u32 %v1842
        %v1844 = vextract.high.u32 %v1842
        %v1845 = vshrl.u32 %v1844, 3
        %v1846 = vmul.u32 %v1845, 15
        %v1847 = vsub.s32 %v1841, %v1846
        %v1848 = vsub.s32 0, %v1847
        %v1849 = vsel %vm1839, %v1848, %v1847
        %vm1850 = vcmp.lt.s32.totalorder %v950, 0
        %v1851 = vsub.s32 0, %v950
        %v1852 = vsel %vm1850, %v1851, %v950
        %v1853 = vmul.u32.u64.compose %v1852, 2290649225
        %v1854 = vextract.low.u32 %v1853
        %v1855 = vextract.high.u32 %v1853
        %v1856 = vshrl.u32 %v1855, 3
        %v1857 = vmul.u32 %v1856, 15
        %v1858 = vsub.s32 %v1852, %v1857
        %v1859 = vsub.s32 0, %v1858
        %v1860 = vsel %vm1850, %v1859, %v1858
        %vm1861 = vcmp.lt.s32.totalorder %v951, 0
        %v1862 = vsub.s32 0, %v951
        %v1863 = vsel %vm1861, %v1862, %v951
        %v1864 = vmul.u32.u64.compose %v1863, 2290649225
        %v1865 = vextract.low.u32 %v1864
        %v1866 = vextract.high.u32 %v1864
        %v1867 = vshrl.u32 %v1866, 3
        %v1868 = vmul.u32 %v1867, 15
        %v1869 = vsub.s32 %v1863, %v1868
        %v1870 = vsub.s32 0, %v1869
        %v1871 = vsel %vm1861, %v1870, %v1869
        %vm1872 = vcmp.lt.s32.totalorder %v952, 0
        %v1873 = vsub.s32 0, %v952
        %v1874 = vsel %vm1872, %v1873, %v952
        %v1875 = vmul.u32.u64.compose %v1874, 2290649225
        %v1876 = vextract.low.u32 %v1875
        %v1877 = vextract.high.u32 %v1875
        %v1878 = vshrl.u32 %v1877, 3
        %v1879 = vmul.u32 %v1878, 15
        %v1880 = vsub.s32 %v1874, %v1879
        %v1881 = vsub.s32 0, %v1880
        %v1882 = vsel %vm1872, %v1881, %v1880
        %vm1883 = vcmp.lt.s32.totalorder %v953, 0
        %v1884 = vsub.s32 0, %v953
        %v1885 = vsel %vm1883, %v1884, %v953
        %v1886 = vmul.u32.u64.compose %v1885, 2290649225
        %v1887 = vextract.low.u32 %v1886
        %v1888 = vextract.high.u32 %v1886
        %v1889 = vshrl.u32 %v1888, 3
        %v1890 = vmul.u32 %v1889, 15
        %v1891 = vsub.s32 %v1885, %v1890
        %v1892 = vsub.s32 0, %v1891
        %v1893 = vsel %vm1883, %v1892, %v1891
        %vm1894 = vcmp.lt.s32.totalorder %v954, 0
        %v1895 = vsub.s32 0, %v954
        %v1896 = vsel %vm1894, %v1895, %v954
        %v1897 = vmul.u32.u64.compose %v1896, 2290649225
        %v1898 = vextract.low.u32 %v1897
        %v1899 = vextract.high.u32 %v1897
        %v1900 = vshrl.u32 %v1899, 3
        %v1901 = vmul.u32 %v1900, 15
        %v1902 = vsub.s32 %v1896, %v1901
        %v1903 = vsub.s32 0, %v1902
        %v1904 = vsel %vm1894, %v1903, %v1902
        %vm1905 = vcmp.lt.s32.totalorder %v955, 0
        %v1906 = vsub.s32 0, %v955
        %v1907 = vsel %vm1905, %v1906, %v955
        %v1908 = vmul.u32.u64.compose %v1907, 2290649225
        %v1909 = vextract.low.u32 %v1908
        %v1910 = vextract.high.u32 %v1908
        %v1911 = vshrl.u32 %v1910, 3
        %v1912 = vmul.u32 %v1911, 15
        %v1913 = vsub.s32 %v1907, %v1912
        %v1914 = vsub.s32 0, %v1913
        %v1915 = vsel %vm1905, %v1914, %v1913
        %vm1916 = vcmp.lt.s32.totalorder %v956, 0
        %v1917 = vsub.s32 0, %v956
        %v1918 = vsel %vm1916, %v1917, %v956
        %v1919 = vmul.u32.u64.compose %v1918, 2290649225
        %v1920 = vextract.low.u32 %v1919
        %v1921 = vextract.high.u32 %v1919
        %v1922 = vshrl.u32 %v1921, 3
        %v1923 = vmul.u32 %v1922, 15
        %v1924 = vsub.s32 %v1918, %v1923
        %v1925 = vsub.s32 0, %v1924
        %v1926 = vsel %vm1916, %v1925, %v1924
        %vm1927 = vcmp.lt.s32.totalorder %v957, 0
        %v1928 = vsub.s32 0, %v957
        %v1929 = vsel %vm1927, %v1928, %v957
        %v1930 = vmul.u32.u64.compose %v1929, 2290649225
        %v1931 = vextract.low.u32 %v1930
        %v1932 = vextract.high.u32 %v1930
        %v1933 = vshrl.u32 %v1932, 3
        %v1934 = vmul.u32 %v1933, 15
        %v1935 = vsub.s32 %v1929, %v1934
        %v1936 = vsub.s32 0, %v1935
        %v1937 = vsel %vm1927, %v1936, %v1935
        %vm1938 = vcmp.lt.s32.totalorder %v958, 0
        %v1939 = vsub.s32 0, %v958
        %v1940 = vsel %vm1938, %v1939, %v958
        %v1941 = vmul.u32.u64.compose %v1940, 2290649225
        %v1942 = vextract.low.u32 %v1941
        %v1943 = vextract.high.u32 %v1941
        %v1944 = vshrl.u32 %v1943, 3
        %v1945 = vmul.u32 %v1944, 15
        %v1946 = vsub.s32 %v1940, %v1945
        %v1947 = vsub.s32 0, %v1946
        %v1948 = vsel %vm1938, %v1947, %v1946
        %vm1949 = vcmp.lt.s32.totalorder %v959, 0
        %v1950 = vsub.s32 0, %v959
        %v1951 = vsel %vm1949, %v1950, %v959
        %v1952 = vmul.u32.u64.compose %v1951, 2290649225
        %v1953 = vextract.low.u32 %v1952
        %v1954 = vextract.high.u32 %v1952
        %v1955 = vshrl.u32 %v1954, 3
        %v1956 = vmul.u32 %v1955, 15
        %v1957 = vsub.s32 %v1951, %v1956
        %v1958 = vsub.s32 0, %v1957
        %v1959 = vsel %vm1949, %v1958, %v1957
        %vm1960 = vcmp.lt.s32.totalorder %v960, 0
        %v1961 = vsub.s32 0, %v960
        %v1962 = vsel %vm1960, %v1961, %v960
        %v1963 = vmul.u32.u64.compose %v1962, 2290649225
        %v1964 = vextract.low.u32 %v1963
        %v1965 = vextract.high.u32 %v1963
        %v1966 = vshrl.u32 %v1965, 3
        %v1967 = vmul.u32 %v1966, 15
        %v1968 = vsub.s32 %v1962, %v1967
        %v1969 = vsub.s32 0, %v1968
        %v1970 = vsel %vm1960, %v1969, %v1968
        %vm1971 = vcmp.lt.s32.totalorder %v961, 0
        %v1972 = vsub.s32 0, %v961
        %v1973 = vsel %vm1971, %v1972, %v961
        %v1974 = vmul.u32.u64.compose %v1973, 2290649225
        %v1975 = vextract.low.u32 %v1974
        %v1976 = vextract.high.u32 %v1974
        %v1977 = vshrl.u32 %v1976, 3
        %v1978 = vmul.u32 %v1977, 15
        %v1979 = vsub.s32 %v1973, %v1978
        %v1980 = vsub.s32 0, %v1979
        %v1981 = vsel %vm1971, %v1980, %v1979
        %vm1982 = vcmp.lt.s32.totalorder %v962, 0
        %v1983 = vsub.s32 0, %v962
        %v1984 = vsel %vm1982, %v1983, %v962
        %v1985 = vmul.u32.u64.compose %v1984, 2290649225
        %v1986 = vextract.low.u32 %v1985
        %v1987 = vextract.high.u32 %v1985
        %v1988 = vshrl.u32 %v1987, 3
        %v1989 = vmul.u32 %v1988, 15
        %v1990 = vsub.s32 %v1984, %v1989
        %v1991 = vsub.s32 0, %v1990
        %v1992 = vsel %vm1982, %v1991, %v1990
        %vm1993 = vcmp.lt.s32.totalorder %v963, 0
        %v1994 = vsub.s32 0, %v963
        %v1995 = vsel %vm1993, %v1994, %v963
        %v1996 = vmul.u32.u64.compose %v1995, 2290649225
        %v1997 = vextract.low.u32 %v1996
        %v1998 = vextract.high.u32 %v1996
        %v1999 = vshrl.u32 %v1998, 3
        %v2000 = vmul.u32 %v1999, 15
        %v2001 = vsub.s32 %v1995, %v2000
        %v2002 = vsub.s32 0, %v2001
        %v2003 = vsel %vm1993, %v2002, %v2001
        %vm2004 = vcmp.lt.s32.totalorder %v964, 0
        %v2005 = vsub.s32 0, %v964
        %v2006 = vsel %vm2004, %v2005, %v964
        %v2007 = vmul.u32.u64.compose %v2006, 2290649225
        %v2008 = vextract.low.u32 %v2007
        %v2009 = vextract.high.u32 %v2007
        %v2010 = vshrl.u32 %v2009, 3
        %v2011 = vmul.u32 %v2010, 15
        %v2012 = vsub.s32 %v2006, %v2011
        %v2013 = vsub.s32 0, %v2012
        %v2014 = vsel %vm2004, %v2013, %v2012
        %vm2015 = vcmp.lt.s32.totalorder %v965, 0
        %v2016 = vsub.s32 0, %v965
        %v2017 = vsel %vm2015, %v2016, %v965
        %v2018 = vmul.u32.u64.compose %v2017, 2290649225
        %v2019 = vextract.low.u32 %v2018
        %v2020 = vextract.high.u32 %v2018
        %v2021 = vshrl.u32 %v2020, 3
        %v2022 = vmul.u32 %v2021, 15
        %v2023 = vsub.s32 %v2017, %v2022
        %v2024 = vsub.s32 0, %v2023
        %v2025 = vsel %vm2015, %v2024, %v2023
        %vm2026 = vcmp.lt.s32.totalorder %v966, 0
        %v2027 = vsub.s32 0, %v966
        %v2028 = vsel %vm2026, %v2027, %v966
        %v2029 = vmul.u32.u64.compose %v2028, 2290649225
        %v2030 = vextract.low.u32 %v2029
        %v2031 = vextract.high.u32 %v2029
        %v2032 = vshrl.u32 %v2031, 3
        %v2033 = vmul.u32 %v2032, 15
        %v2034 = vsub.s32 %v2028, %v2033
        %v2035 = vsub.s32 0, %v2034
        %v2036 = vsel %vm2026, %v2035, %v2034
        %vm2037 = vcmp.lt.s32.totalorder %v967, 0
        %v2038 = vsub.s32 0, %v967
        %v2039 = vsel %vm2037, %v2038, %v967
        %v2040 = vmul.u32.u64.compose %v2039, 2290649225
        %v2041 = vextract.low.u32 %v2040
        %v2042 = vextract.high.u32 %v2040
        %v2043 = vshrl.u32 %v2042, 3
        %v2044 = vmul.u32 %v2043, 15
        %v2045 = vsub.s32 %v2039, %v2044
        %v2046 = vsub.s32 0, %v2045
        %v2047 = vsel %vm2037, %v2046, %v2045
        %vm2048 = vcmp.lt.s32.totalorder %v968, 0
        %v2049 = vsub.s32 0, %v968
        %v2050 = vsel %vm2048, %v2049, %v968
        %v2051 = vmul.u32.u64.compose %v2050, 2290649225
        %v2052 = vextract.low.u32 %v2051
        %v2053 = vextract.high.u32 %v2051
        %v2054 = vshrl.u32 %v2053, 3
        %v2055 = vmul.u32 %v2054, 15
        %v2056 = vsub.s32 %v2050, %v2055
        %v2057 = vsub.s32 0, %v2056
        %v2058 = vsel %vm2048, %v2057, %v2056
        %vm2059 = vcmp.lt.s32.totalorder %v969, 0
        %v2060 = vsub.s32 0, %v969
        %v2061 = vsel %vm2059, %v2060, %v969
        %v2062 = vmul.u32.u64.compose %v2061, 2290649225
        %v2063 = vextract.low.u32 %v2062
        %v2064 = vextract.high.u32 %v2062
        %v2065 = vshrl.u32 %v2064, 3
        %v2066 = vmul.u32 %v2065, 15
        %v2067 = vsub.s32 %v2061, %v2066
        %v2068 = vsub.s32 0, %v2067
        %v2069 = vsel %vm2059, %v2068, %v2067
        %vm2070 = vcmp.lt.s32.totalorder %v970, 0
        %v2071 = vsub.s32 0, %v970
        %v2072 = vsel %vm2070, %v2071, %v970
        %v2073 = vmul.u32.u64.compose %v2072, 2290649225
        %v2074 = vextract.low.u32 %v2073
        %v2075 = vextract.high.u32 %v2073
        %v2076 = vshrl.u32 %v2075, 3
        %v2077 = vmul.u32 %v2076, 15
        %v2078 = vsub.s32 %v2072, %v2077
        %v2079 = vsub.s32 0, %v2078
        %v2080 = vsel %vm2070, %v2079, %v2078
        %vm2081 = vcmp.lt.s32.totalorder %v971, 0
        %v2082 = vsub.s32 0, %v971
        %v2083 = vsel %vm2081, %v2082, %v971
        %v2084 = vmul.u32.u64.compose %v2083, 2290649225
        %v2085 = vextract.low.u32 %v2084
        %v2086 = vextract.high.u32 %v2084
        %v2087 = vshrl.u32 %v2086, 3
        %v2088 = vmul.u32 %v2087, 15
        %v2089 = vsub.s32 %v2083, %v2088
        %v2090 = vsub.s32 0, %v2089
        %v2091 = vsel %vm2081, %v2090, %v2089
        %vm2092 = vcmp.lt.s32.totalorder %v972, 0
        %v2093 = vsub.s32 0, %v972
        %v2094 = vsel %vm2092, %v2093, %v972
        %v2095 = vmul.u32.u64.compose %v2094, 2290649225
        %v2096 = vextract.low.u32 %v2095
        %v2097 = vextract.high.u32 %v2095
        %v2098 = vshrl.u32 %v2097, 3
        %v2099 = vmul.u32 %v2098, 15
        %v2100 = vsub.s32 %v2094, %v2099
        %v2101 = vsub.s32 0, %v2100
        %v2102 = vsel %vm2092, %v2101, %v2100
        %vm2103 = vcmp.lt.s32.totalorder %v973, 0
        %v2104 = vsub.s32 0, %v973
        %v2105 = vsel %vm2103, %v2104, %v973
        %v2106 = vmul.u32.u64.compose %v2105, 2290649225
        %v2107 = vextract.low.u32 %v2106
        %v2108 = vextract.high.u32 %v2106
        %v2109 = vshrl.u32 %v2108, 3
        %v2110 = vmul.u32 %v2109, 15
        %v2111 = vsub.s32 %v2105, %v2110
        %v2112 = vsub.s32 0, %v2111
        %v2113 = vsel %vm2103, %v2112, %v2111
        %vm2114 = vcmp.lt.s32.totalorder %v974, 0
        %v2115 = vsub.s32 0, %v974
        %v2116 = vsel %vm2114, %v2115, %v974
        %v2117 = vmul.u32.u64.compose %v2116, 2290649225
        %v2118 = vextract.low.u32 %v2117
        %v2119 = vextract.high.u32 %v2117
        %v2120 = vshrl.u32 %v2119, 3
        %v2121 = vmul.u32 %v2120, 15
        %v2122 = vsub.s32 %v2116, %v2121
        %v2123 = vsub.s32 0, %v2122
        %v2124 = vsel %vm2114, %v2123, %v2122
        %vm2125 = vcmp.lt.s32.totalorder %v975, 0
        %v2126 = vsub.s32 0, %v975
        %v2127 = vsel %vm2125, %v2126, %v975
        %v2128 = vmul.u32.u64.compose %v2127, 2290649225
        %v2129 = vextract.low.u32 %v2128
        %v2130 = vextract.high.u32 %v2128
        %v2131 = vshrl.u32 %v2130, 3
        %v2132 = vmul.u32 %v2131, 15
        %v2133 = vsub.s32 %v2127, %v2132
        %v2134 = vsub.s32 0, %v2133
        %v2135 = vsel %vm2125, %v2134, %v2133
        %vm2136 = vcmp.lt.s32.totalorder %v976, 0
        %v2137 = vsub.s32 0, %v976
        %v2138 = vsel %vm2136, %v2137, %v976
        %v2139 = vmul.u32.u64.compose %v2138, 2290649225
        %v2140 = vextract.low.u32 %v2139
        %v2141 = vextract.high.u32 %v2139
        %v2142 = vshrl.u32 %v2141, 3
        %v2143 = vmul.u32 %v2142, 15
        %v2144 = vsub.s32 %v2138, %v2143
        %v2145 = vsub.s32 0, %v2144
        %v2146 = vsel %vm2136, %v2145, %v2144
        %vm2147 = vcmp.lt.s32.totalorder %v977, 0
        %v2148 = vsub.s32 0, %v977
        %v2149 = vsel %vm2147, %v2148, %v977
        %v2150 = vmul.u32.u64.compose %v2149, 2290649225
        %v2151 = vextract.low.u32 %v2150
        %v2152 = vextract.high.u32 %v2150
        %v2153 = vshrl.u32 %v2152, 3
        %v2154 = vmul.u32 %v2153, 15
        %v2155 = vsub.s32 %v2149, %v2154
        %v2156 = vsub.s32 0, %v2155
        %v2157 = vsel %vm2147, %v2156, %v2155
        %vm2158 = vcmp.lt.s32.totalorder %v978, 0
        %v2159 = vsub.s32 0, %v978
        %v2160 = vsel %vm2158, %v2159, %v978
        %v2161 = vmul.u32.u64.compose %v2160, 2290649225
        %v2162 = vextract.low.u32 %v2161
        %v2163 = vextract.high.u32 %v2161
        %v2164 = vshrl.u32 %v2163, 3
        %v2165 = vmul.u32 %v2164, 15
        %v2166 = vsub.s32 %v2160, %v2165
        %v2167 = vsub.s32 0, %v2166
        %v2168 = vsel %vm2158, %v2167, %v2166
        %vm2169 = vcmp.lt.s32.totalorder %v979, 0
        %v2170 = vsub.s32 0, %v979
        %v2171 = vsel %vm2169, %v2170, %v979
        %v2172 = vmul.u32.u64.compose %v2171, 2290649225
        %v2173 = vextract.low.u32 %v2172
        %v2174 = vextract.high.u32 %v2172
        %v2175 = vshrl.u32 %v2174, 3
        %v2176 = vmul.u32 %v2175, 15
        %v2177 = vsub.s32 %v2171, %v2176
        %v2178 = vsub.s32 0, %v2177
        %v2179 = vsel %vm2169, %v2178, %v2177
        %vm2180 = vcmp.lt.s32.totalorder %v980, 0
        %v2181 = vsub.s32 0, %v980
        %v2182 = vsel %vm2180, %v2181, %v980
        %v2183 = vmul.u32.u64.compose %v2182, 2290649225
        %v2184 = vextract.low.u32 %v2183
        %v2185 = vextract.high.u32 %v2183
        %v2186 = vshrl.u32 %v2185, 3
        %v2187 = vmul.u32 %v2186, 15
        %v2188 = vsub.s32 %v2182, %v2187
        %v2189 = vsub.s32 0, %v2188
        %v2190 = vsel %vm2180, %v2189, %v2188
        %vm2191 = vcmp.lt.s32.totalorder %v981, 0
        %v2192 = vsub.s32 0, %v981
        %v2193 = vsel %vm2191, %v2192, %v981
        %v2194 = vmul.u32.u64.compose %v2193, 2290649225
        %v2195 = vextract.low.u32 %v2194
        %v2196 = vextract.high.u32 %v2194
        %v2197 = vshrl.u32 %v2196, 3
        %v2198 = vmul.u32 %v2197, 15
        %v2199 = vsub.s32 %v2193, %v2198
        %v2200 = vsub.s32 0, %v2199
        %v2201 = vsel %vm2191, %v2200, %v2199
        %vm2202 = vcmp.lt.s32.totalorder %v982, 0
        %v2203 = vsub.s32 0, %v982
        %v2204 = vsel %vm2202, %v2203, %v982
        %v2205 = vmul.u32.u64.compose %v2204, 2290649225
        %v2206 = vextract.low.u32 %v2205
        %v2207 = vextract.high.u32 %v2205
        %v2208 = vshrl.u32 %v2207, 3
        %v2209 = vmul.u32 %v2208, 15
        %v2210 = vsub.s32 %v2204, %v2209
        %v2211 = vsub.s32 0, %v2210
        %v2212 = vsel %vm2202, %v2211, %v2210
        %vm2213 = vcmp.lt.s32.totalorder %v983, 0
        %v2214 = vsub.s32 0, %v983
        %v2215 = vsel %vm2213, %v2214, %v983
        %v2216 = vmul.u32.u64.compose %v2215, 2290649225
        %v2217 = vextract.low.u32 %v2216
        %v2218 = vextract.high.u32 %v2216
        %v2219 = vshrl.u32 %v2218, 3
        %v2220 = vmul.u32 %v2219, 15
        %v2221 = vsub.s32 %v2215, %v2220
        %v2222 = vsub.s32 0, %v2221
        %v2223 = vsel %vm2213, %v2222, %v2221
        %vm2224 = vcmp.lt.s32.totalorder %v984, 0
        %v2225 = vsub.s32 0, %v984
        %v2226 = vsel %vm2224, %v2225, %v984
        %v2227 = vmul.u32.u64.compose %v2226, 2290649225
        %v2228 = vextract.low.u32 %v2227
        %v2229 = vextract.high.u32 %v2227
        %v2230 = vshrl.u32 %v2229, 3
        %v2231 = vmul.u32 %v2230, 15
        %v2232 = vsub.s32 %v2226, %v2231
        %v2233 = vsub.s32 0, %v2232
        %v2234 = vsel %vm2224, %v2233, %v2232
        %vm2235 = vcmp.lt.s32.totalorder %v985, 0
        %v2236 = vsub.s32 0, %v985
        %v2237 = vsel %vm2235, %v2236, %v985
        %v2238 = vmul.u32.u64.compose %v2237, 2290649225
        %v2239 = vextract.low.u32 %v2238
        %v2240 = vextract.high.u32 %v2238
        %v2241 = vshrl.u32 %v2240, 3
        %v2242 = vmul.u32 %v2241, 15
        %v2243 = vsub.s32 %v2237, %v2242
        %v2244 = vsub.s32 0, %v2243
        %v2245 = vsel %vm2235, %v2244, %v2243
        %vm2246 = vcmp.lt.s32.totalorder %v986, 0
        %v2247 = vsub.s32 0, %v986
        %v2248 = vsel %vm2246, %v2247, %v986
        %v2249 = vmul.u32.u64.compose %v2248, 2290649225
        %v2250 = vextract.low.u32 %v2249
        %v2251 = vextract.high.u32 %v2249
        %v2252 = vshrl.u32 %v2251, 3
        %v2253 = vmul.u32 %v2252, 15
        %v2254 = vsub.s32 %v2248, %v2253
        %v2255 = vsub.s32 0, %v2254
        %v2256 = vsel %vm2246, %v2255, %v2254
        %vm2257 = vcmp.lt.s32.totalorder %v987, 0
        %v2258 = vsub.s32 0, %v987
        %v2259 = vsel %vm2257, %v2258, %v987
        %v2260 = vmul.u32.u64.compose %v2259, 2290649225
        %v2261 = vextract.low.u32 %v2260
        %v2262 = vextract.high.u32 %v2260
        %v2263 = vshrl.u32 %v2262, 3
        %v2264 = vmul.u32 %v2263, 15
        %v2265 = vsub.s32 %v2259, %v2264
        %v2266 = vsub.s32 0, %v2265
        %v2267 = vsel %vm2257, %v2266, %v2265
        %vm2268 = vcmp.lt.s32.totalorder %v988, 0
        %v2269 = vsub.s32 0, %v988
        %v2270 = vsel %vm2268, %v2269, %v988
        %v2271 = vmul.u32.u64.compose %v2270, 2290649225
        %v2272 = vextract.low.u32 %v2271
        %v2273 = vextract.high.u32 %v2271
        %v2274 = vshrl.u32 %v2273, 3
        %v2275 = vmul.u32 %v2274, 15
        %v2276 = vsub.s32 %v2270, %v2275
        %v2277 = vsub.s32 0, %v2276
        %v2278 = vsel %vm2268, %v2277, %v2276
        %vm2279 = vcmp.lt.s32.totalorder %v989, 0
        %v2280 = vsub.s32 0, %v989
        %v2281 = vsel %vm2279, %v2280, %v989
        %v2282 = vmul.u32.u64.compose %v2281, 2290649225
        %v2283 = vextract.low.u32 %v2282
        %v2284 = vextract.high.u32 %v2282
        %v2285 = vshrl.u32 %v2284, 3
        %v2286 = vmul.u32 %v2285, 15
        %v2287 = vsub.s32 %v2281, %v2286
        %v2288 = vsub.s32 0, %v2287
        %v2289 = vsel %vm2279, %v2288, %v2287
        %vm2290 = vcmp.lt.s32.totalorder %v990, 0
        %v2291 = vsub.s32 0, %v990
        %v2292 = vsel %vm2290, %v2291, %v990
        %v2293 = vmul.u32.u64.compose %v2292, 2290649225
        %v2294 = vextract.low.u32 %v2293
        %v2295 = vextract.high.u32 %v2293
        %v2296 = vshrl.u32 %v2295, 3
        %v2297 = vmul.u32 %v2296, 15
        %v2298 = vsub.s32 %v2292, %v2297
        %v2299 = vsub.s32 0, %v2298
        %v2300 = vsel %vm2290, %v2299, %v2298
        %vm2301 = vcmp.lt.s32.totalorder %v991, 0
        %v2302 = vsub.s32 0, %v991
        %v2303 = vsel %vm2301, %v2302, %v991
        %v2304 = vmul.u32.u64.compose %v2303, 2290649225
        %v2305 = vextract.low.u32 %v2304
        %v2306 = vextract.high.u32 %v2304
        %v2307 = vshrl.u32 %v2306, 3
        %v2308 = vmul.u32 %v2307, 15
        %v2309 = vsub.s32 %v2303, %v2308
        %v2310 = vsub.s32 0, %v2309
        %v2311 = vsel %vm2301, %v2310, %v2309
        %vm2312 = vcmp.lt.s32.totalorder %v992, 0
        %v2313 = vsub.s32 0, %v992
        %v2314 = vsel %vm2312, %v2313, %v992
        %v2315 = vmul.u32.u64.compose %v2314, 2290649225
        %v2316 = vextract.low.u32 %v2315
        %v2317 = vextract.high.u32 %v2315
        %v2318 = vshrl.u32 %v2317, 3
        %v2319 = vmul.u32 %v2318, 15
        %v2320 = vsub.s32 %v2314, %v2319
        %v2321 = vsub.s32 0, %v2320
        %v2322 = vsel %vm2312, %v2321, %v2320
        %vm2323 = vcmp.lt.s32.totalorder %v993, 0
        %v2324 = vsub.s32 0, %v993
        %v2325 = vsel %vm2323, %v2324, %v993
        %v2326 = vmul.u32.u64.compose %v2325, 2290649225
        %v2327 = vextract.low.u32 %v2326
        %v2328 = vextract.high.u32 %v2326
        %v2329 = vshrl.u32 %v2328, 3
        %v2330 = vmul.u32 %v2329, 15
        %v2331 = vsub.s32 %v2325, %v2330
        %v2332 = vsub.s32 0, %v2331
        %v2333 = vsel %vm2323, %v2332, %v2331
        %vm2334 = vcmp.lt.s32.totalorder %v994, 0
        %v2335 = vsub.s32 0, %v994
        %v2336 = vsel %vm2334, %v2335, %v994
        %v2337 = vmul.u32.u64.compose %v2336, 2290649225
        %v2338 = vextract.low.u32 %v2337
        %v2339 = vextract.high.u32 %v2337
        %v2340 = vshrl.u32 %v2339, 3
        %v2341 = vmul.u32 %v2340, 15
        %v2342 = vsub.s32 %v2336, %v2341
        %v2343 = vsub.s32 0, %v2342
        %v2344 = vsel %vm2334, %v2343, %v2342
        %vm2345 = vcmp.lt.s32.totalorder %v995, 0
        %v2346 = vsub.s32 0, %v995
        %v2347 = vsel %vm2345, %v2346, %v995
        %v2348 = vmul.u32.u64.compose %v2347, 2290649225
        %v2349 = vextract.low.u32 %v2348
        %v2350 = vextract.high.u32 %v2348
        %v2351 = vshrl.u32 %v2350, 3
        %v2352 = vmul.u32 %v2351, 15
        %v2353 = vsub.s32 %v2347, %v2352
        %v2354 = vsub.s32 0, %v2353
        %v2355 = vsel %vm2345, %v2354, %v2353
        %vm2356 = vcmp.lt.s32.totalorder %v996, 0
        %v2357 = vsub.s32 0, %v996
        %v2358 = vsel %vm2356, %v2357, %v996
        %v2359 = vmul.u32.u64.compose %v2358, 2290649225
        %v2360 = vextract.low.u32 %v2359
        %v2361 = vextract.high.u32 %v2359
        %v2362 = vshrl.u32 %v2361, 3
        %v2363 = vmul.u32 %v2362, 15
        %v2364 = vsub.s32 %v2358, %v2363
        %v2365 = vsub.s32 0, %v2364
        %v2366 = vsel %vm2356, %v2365, %v2364
        %vm2367 = vcmp.lt.s32.totalorder %v997, 0
        %v2368 = vsub.s32 0, %v997
        %v2369 = vsel %vm2367, %v2368, %v997
        %v2370 = vmul.u32.u64.compose %v2369, 2290649225
        %v2371 = vextract.low.u32 %v2370
        %v2372 = vextract.high.u32 %v2370
        %v2373 = vshrl.u32 %v2372, 3
        %v2374 = vmul.u32 %v2373, 15
        %v2375 = vsub.s32 %v2369, %v2374
        %v2376 = vsub.s32 0, %v2375
        %v2377 = vsel %vm2367, %v2376, %v2375
        %vm2378 = vcmp.lt.s32.totalorder %v998, 0
        %v2379 = vsub.s32 0, %v998
        %v2380 = vsel %vm2378, %v2379, %v998
        %v2381 = vmul.u32.u64.compose %v2380, 2290649225
        %v2382 = vextract.low.u32 %v2381
        %v2383 = vextract.high.u32 %v2381
        %v2384 = vshrl.u32 %v2383, 3
        %v2385 = vmul.u32 %v2384, 15
        %v2386 = vsub.s32 %v2380, %v2385
        %v2387 = vsub.s32 0, %v2386
        %v2388 = vsel %vm2378, %v2387, %v2386
        %vm2389 = vcmp.lt.s32.totalorder %v999, 0
        %v2390 = vsub.s32 0, %v999
        %v2391 = vsel %vm2389, %v2390, %v999
        %v2392 = vmul.u32.u64.compose %v2391, 2290649225
        %v2393 = vextract.low.u32 %v2392
        %v2394 = vextract.high.u32 %v2392
        %v2395 = vshrl.u32 %v2394, 3
        %v2396 = vmul.u32 %v2395, 15
        %v2397 = vsub.s32 %v2391, %v2396
        %v2398 = vsub.s32 0, %v2397
        %v2399 = vsel %vm2389, %v2398, %v2397
        %vm2400 = vcmp.lt.s32.totalorder %v1000, 0
        %v2401 = vsub.s32 0, %v1000
        %v2402 = vsel %vm2400, %v2401, %v1000
        %v2403 = vmul.u32.u64.compose %v2402, 2290649225
        %v2404 = vextract.low.u32 %v2403
        %v2405 = vextract.high.u32 %v2403
        %v2406 = vshrl.u32 %v2405, 3
        %v2407 = vmul.u32 %v2406, 15
        %v2408 = vsub.s32 %v2402, %v2407
        %v2409 = vsub.s32 0, %v2408
        %v2410 = vsel %vm2400, %v2409, %v2408
        %vm2411 = vcmp.lt.s32.totalorder %v1001, 0
        %v2412 = vsub.s32 0, %v1001
        %v2413 = vsel %vm2411, %v2412, %v1001
        %v2414 = vmul.u32.u64.compose %v2413, 2290649225
        %v2415 = vextract.low.u32 %v2414
        %v2416 = vextract.high.u32 %v2414
        %v2417 = vshrl.u32 %v2416, 3
        %v2418 = vmul.u32 %v2417, 15
        %v2419 = vsub.s32 %v2413, %v2418
        %v2420 = vsub.s32 0, %v2419
        %v2421 = vsel %vm2411, %v2420, %v2419
        %vm2422 = vcmp.lt.s32.totalorder %v1002, 0
        %v2423 = vsub.s32 0, %v1002
        %v2424 = vsel %vm2422, %v2423, %v1002
        %v2425 = vmul.u32.u64.compose %v2424, 2290649225
        %v2426 = vextract.low.u32 %v2425
        %v2427 = vextract.high.u32 %v2425
        %v2428 = vshrl.u32 %v2427, 3
        %v2429 = vmul.u32 %v2428, 15
        %v2430 = vsub.s32 %v2424, %v2429
        %v2431 = vsub.s32 0, %v2430
        %v2432 = vsel %vm2422, %v2431, %v2430
        %vm2433 = vcmp.lt.s32.totalorder %v1003, 0
        %v2434 = vsub.s32 0, %v1003
        %v2435 = vsel %vm2433, %v2434, %v1003
        %v2436 = vmul.u32.u64.compose %v2435, 2290649225
        %v2437 = vextract.low.u32 %v2436
        %v2438 = vextract.high.u32 %v2436
        %v2439 = vshrl.u32 %v2438, 3
        %v2440 = vmul.u32 %v2439, 15
        %v2441 = vsub.s32 %v2435, %v2440
        %v2442 = vsub.s32 0, %v2441
        %v2443 = vsel %vm2433, %v2442, %v2441
        %vm2444 = vcmp.lt.s32.totalorder %v1004, 0
        %v2445 = vsub.s32 0, %v1004
        %v2446 = vsel %vm2444, %v2445, %v1004
        %v2447 = vmul.u32.u64.compose %v2446, 2290649225
        %v2448 = vextract.low.u32 %v2447
        %v2449 = vextract.high.u32 %v2447
        %v2450 = vshrl.u32 %v2449, 3
        %v2451 = vmul.u32 %v2450, 15
        %v2452 = vsub.s32 %v2446, %v2451
        %v2453 = vsub.s32 0, %v2452
        %v2454 = vsel %vm2444, %v2453, %v2452
        %vm2455 = vcmp.lt.s32.totalorder %v1005, 0
        %v2456 = vsub.s32 0, %v1005
        %v2457 = vsel %vm2455, %v2456, %v1005
        %v2458 = vmul.u32.u64.compose %v2457, 2290649225
        %v2459 = vextract.low.u32 %v2458
        %v2460 = vextract.high.u32 %v2458
        %v2461 = vshrl.u32 %v2460, 3
        %v2462 = vmul.u32 %v2461, 15
        %v2463 = vsub.s32 %v2457, %v2462
        %v2464 = vsub.s32 0, %v2463
        %v2465 = vsel %vm2455, %v2464, %v2463
        %vm2466 = vcmp.lt.s32.totalorder %v1006, 0
        %v2467 = vsub.s32 0, %v1006
        %v2468 = vsel %vm2466, %v2467, %v1006
        %v2469 = vmul.u32.u64.compose %v2468, 2290649225
        %v2470 = vextract.low.u32 %v2469
        %v2471 = vextract.high.u32 %v2469
        %v2472 = vshrl.u32 %v2471, 3
        %v2473 = vmul.u32 %v2472, 15
        %v2474 = vsub.s32 %v2468, %v2473
        %v2475 = vsub.s32 0, %v2474
        %v2476 = vsel %vm2466, %v2475, %v2474
        %vm2477 = vcmp.lt.s32.totalorder %v1007, 0
        %v2478 = vsub.s32 0, %v1007
        %v2479 = vsel %vm2477, %v2478, %v1007
        %v2480 = vmul.u32.u64.compose %v2479, 2290649225
        %v2481 = vextract.low.u32 %v2480
        %v2482 = vextract.high.u32 %v2480
        %v2483 = vshrl.u32 %v2482, 3
        %v2484 = vmul.u32 %v2483, 15
        %v2485 = vsub.s32 %v2479, %v2484
        %v2486 = vsub.s32 0, %v2485
        %v2487 = vsel %vm2477, %v2486, %v2485
        %vm2488 = vcmp.lt.s32.totalorder %v1008, 0
        %v2489 = vsub.s32 0, %v1008
        %v2490 = vsel %vm2488, %v2489, %v1008
        %v2491 = vmul.u32.u64.compose %v2490, 2290649225
        %v2492 = vextract.low.u32 %v2491
        %v2493 = vextract.high.u32 %v2491
        %v2494 = vshrl.u32 %v2493, 3
        %v2495 = vmul.u32 %v2494, 15
        %v2496 = vsub.s32 %v2490, %v2495
        %v2497 = vsub.s32 0, %v2496
        %v2498 = vsel %vm2488, %v2497, %v2496
        %vm2499 = vcmp.lt.s32.totalorder %v1009, 0
        %v2500 = vsub.s32 0, %v1009
        %v2501 = vsel %vm2499, %v2500, %v1009
        %v2502 = vmul.u32.u64.compose %v2501, 2290649225
        %v2503 = vextract.low.u32 %v2502
        %v2504 = vextract.high.u32 %v2502
        %v2505 = vshrl.u32 %v2504, 3
        %v2506 = vmul.u32 %v2505, 15
        %v2507 = vsub.s32 %v2501, %v2506
        %v2508 = vsub.s32 0, %v2507
        %v2509 = vsel %vm2499, %v2508, %v2507
        %vm2510 = vcmp.lt.s32.totalorder %v1010, 0
        %v2511 = vsub.s32 0, %v1010
        %v2512 = vsel %vm2510, %v2511, %v1010
        %v2513 = vmul.u32.u64.compose %v2512, 2290649225
        %v2514 = vextract.low.u32 %v2513
        %v2515 = vextract.high.u32 %v2513
        %v2516 = vshrl.u32 %v2515, 3
        %v2517 = vmul.u32 %v2516, 15
        %v2518 = vsub.s32 %v2512, %v2517
        %v2519 = vsub.s32 0, %v2518
        %v2520 = vsel %vm2510, %v2519, %v2518
        %vm2521 = vcmp.lt.s32.totalorder %v1011, 0
        %v2522 = vsub.s32 0, %v1011
        %v2523 = vsel %vm2521, %v2522, %v1011
        %v2524 = vmul.u32.u64.compose %v2523, 2290649225
        %v2525 = vextract.low.u32 %v2524
        %v2526 = vextract.high.u32 %v2524
        %v2527 = vshrl.u32 %v2526, 3
        %v2528 = vmul.u32 %v2527, 15
        %v2529 = vsub.s32 %v2523, %v2528
        %v2530 = vsub.s32 0, %v2529
        %v2531 = vsel %vm2521, %v2530, %v2529
        %vm2532 = vcmp.lt.s32.totalorder %v1012, 0
        %v2533 = vsub.s32 0, %v1012
        %v2534 = vsel %vm2532, %v2533, %v1012
        %v2535 = vmul.u32.u64.compose %v2534, 2290649225
        %v2536 = vextract.low.u32 %v2535
        %v2537 = vextract.high.u32 %v2535
        %v2538 = vshrl.u32 %v2537, 3
        %v2539 = vmul.u32 %v2538, 15
        %v2540 = vsub.s32 %v2534, %v2539
        %v2541 = vsub.s32 0, %v2540
        %v2542 = vsel %vm2532, %v2541, %v2540
        %vm2543 = vcmp.lt.s32.totalorder %v1013, 0
        %v2544 = vsub.s32 0, %v1013
        %v2545 = vsel %vm2543, %v2544, %v1013
        %v2546 = vmul.u32.u64.compose %v2545, 2290649225
        %v2547 = vextract.low.u32 %v2546
        %v2548 = vextract.high.u32 %v2546
        %v2549 = vshrl.u32 %v2548, 3
        %v2550 = vmul.u32 %v2549, 15
        %v2551 = vsub.s32 %v2545, %v2550
        %v2552 = vsub.s32 0, %v2551
        %v2553 = vsel %vm2543, %v2552, %v2551
        %vm2554 = vcmp.lt.s32.totalorder %v1014, 0
        %v2555 = vsub.s32 0, %v1014
        %v2556 = vsel %vm2554, %v2555, %v1014
        %v2557 = vmul.u32.u64.compose %v2556, 2290649225
        %v2558 = vextract.low.u32 %v2557
        %v2559 = vextract.high.u32 %v2557
        %v2560 = vshrl.u32 %v2559, 3
        %v2561 = vmul.u32 %v2560, 15
        %v2562 = vsub.s32 %v2556, %v2561
        %v2563 = vsub.s32 0, %v2562
        %v2564 = vsel %vm2554, %v2563, %v2562
        %vm2565 = vcmp.lt.s32.totalorder %v1015, 0
        %v2566 = vsub.s32 0, %v1015
        %v2567 = vsel %vm2565, %v2566, %v1015
        %v2568 = vmul.u32.u64.compose %v2567, 2290649225
        %v2569 = vextract.low.u32 %v2568
        %v2570 = vextract.high.u32 %v2568
        %v2571 = vshrl.u32 %v2570, 3
        %v2572 = vmul.u32 %v2571, 15
        %v2573 = vsub.s32 %v2567, %v2572
        %v2574 = vsub.s32 0, %v2573
        %v2575 = vsel %vm2565, %v2574, %v2573
        %vm2576 = vcmp.lt.s32.totalorder %v1016, 0
        %v2577 = vsub.s32 0, %v1016
        %v2578 = vsel %vm2576, %v2577, %v1016
        %v2579 = vmul.u32.u64.compose %v2578, 2290649225
        %v2580 = vextract.low.u32 %v2579
        %v2581 = vextract.high.u32 %v2579
        %v2582 = vshrl.u32 %v2581, 3
        %v2583 = vmul.u32 %v2582, 15
        %v2584 = vsub.s32 %v2578, %v2583
        %v2585 = vsub.s32 0, %v2584
        %v2586 = vsel %vm2576, %v2585, %v2584
        %vm2587 = vcmp.lt.s32.totalorder %v1017, 0
        %v2588 = vsub.s32 0, %v1017
        %v2589 = vsel %vm2587, %v2588, %v1017
        %v2590 = vmul.u32.u64.compose %v2589, 2290649225
        %v2591 = vextract.low.u32 %v2590
        %v2592 = vextract.high.u32 %v2590
        %v2593 = vshrl.u32 %v2592, 3
        %v2594 = vmul.u32 %v2593, 15
        %v2595 = vsub.s32 %v2589, %v2594
        %v2596 = vsub.s32 0, %v2595
        %v2597 = vsel %vm2587, %v2596, %v2595
        %vm2598 = vcmp.lt.s32.totalorder %v1018, 0
        %v2599 = vsub.s32 0, %v1018
        %v2600 = vsel %vm2598, %v2599, %v1018
        %v2601 = vmul.u32.u64.compose %v2600, 2290649225
        %v2602 = vextract.low.u32 %v2601
        %v2603 = vextract.high.u32 %v2601
        %v2604 = vshrl.u32 %v2603, 3
        %v2605 = vmul.u32 %v2604, 15
        %v2606 = vsub.s32 %v2600, %v2605
        %v2607 = vsub.s32 0, %v2606
        %v2608 = vsel %vm2598, %v2607, %v2606
        %vm2609 = vcmp.lt.s32.totalorder %v1019, 0
        %v2610 = vsub.s32 0, %v1019
        %v2611 = vsel %vm2609, %v2610, %v1019
        %v2612 = vmul.u32.u64.compose %v2611, 2290649225
        %v2613 = vextract.low.u32 %v2612
        %v2614 = vextract.high.u32 %v2612
        %v2615 = vshrl.u32 %v2614, 3
        %v2616 = vmul.u32 %v2615, 15
        %v2617 = vsub.s32 %v2611, %v2616
        %v2618 = vsub.s32 0, %v2617
        %v2619 = vsel %vm2609, %v2618, %v2617
        %vm2620 = vcmp.lt.s32.totalorder %v1020, 0
        %v2621 = vsub.s32 0, %v1020
        %v2622 = vsel %vm2620, %v2621, %v1020
        %v2623 = vmul.u32.u64.compose %v2622, 2290649225
        %v2624 = vextract.low.u32 %v2623
        %v2625 = vextract.high.u32 %v2623
        %v2626 = vshrl.u32 %v2625, 3
        %v2627 = vmul.u32 %v2626, 15
        %v2628 = vsub.s32 %v2622, %v2627
        %v2629 = vsub.s32 0, %v2628
        %v2630 = vsel %vm2620, %v2629, %v2628
        %vm2631 = vcmp.lt.s32.totalorder %v1021, 0
        %v2632 = vsub.s32 0, %v1021
        %v2633 = vsel %vm2631, %v2632, %v1021
        %v2634 = vmul.u32.u64.compose %v2633, 2290649225
        %v2635 = vextract.low.u32 %v2634
        %v2636 = vextract.high.u32 %v2634
        %v2637 = vshrl.u32 %v2636, 3
        %v2638 = vmul.u32 %v2637, 15
        %v2639 = vsub.s32 %v2633, %v2638
        %v2640 = vsub.s32 0, %v2639
        %v2641 = vsel %vm2631, %v2640, %v2639
        %vm2642 = vcmp.lt.s32.totalorder %v1022, 0
        %v2643 = vsub.s32 0, %v1022
        %v2644 = vsel %vm2642, %v2643, %v1022
        %v2645 = vmul.u32.u64.compose %v2644, 2290649225
        %v2646 = vextract.low.u32 %v2645
        %v2647 = vextract.high.u32 %v2645
        %v2648 = vshrl.u32 %v2647, 3
        %v2649 = vmul.u32 %v2648, 15
        %v2650 = vsub.s32 %v2644, %v2649
        %v2651 = vsub.s32 0, %v2650
        %v2652 = vsel %vm2642, %v2651, %v2650
        %vm2653 = vcmp.lt.s32.totalorder %v1023, 0
        %v2654 = vsub.s32 0, %v1023
        %v2655 = vsel %vm2653, %v2654, %v1023
        %v2656 = vmul.u32.u64.compose %v2655, 2290649225
        %v2657 = vextract.low.u32 %v2656
        %v2658 = vextract.high.u32 %v2656
        %v2659 = vshrl.u32 %v2658, 3
        %v2660 = vmul.u32 %v2659, 15
        %v2661 = vsub.s32 %v2655, %v2660
        %v2662 = vsub.s32 0, %v2661
        %v2663 = vsel %vm2653, %v2662, %v2661
        %vm2664 = vcmp.lt.s32.totalorder %v1024, 0
        %v2665 = vsub.s32 0, %v1024
        %v2666 = vsel %vm2664, %v2665, %v1024
        %v2667 = vmul.u32.u64.compose %v2666, 2290649225
        %v2668 = vextract.low.u32 %v2667
        %v2669 = vextract.high.u32 %v2667
        %v2670 = vshrl.u32 %v2669, 3
        %v2671 = vmul.u32 %v2670, 15
        %v2672 = vsub.s32 %v2666, %v2671
        %v2673 = vsub.s32 0, %v2672
        %v2674 = vsel %vm2664, %v2673, %v2672
        %vm2675 = vcmp.lt.s32.totalorder %v1025, 0
        %v2676 = vsub.s32 0, %v1025
        %v2677 = vsel %vm2675, %v2676, %v1025
        %v2678 = vmul.u32.u64.compose %v2677, 2290649225
        %v2679 = vextract.low.u32 %v2678
        %v2680 = vextract.high.u32 %v2678
        %v2681 = vshrl.u32 %v2680, 3
        %v2682 = vmul.u32 %v2681, 15
        %v2683 = vsub.s32 %v2677, %v2682
        %v2684 = vsub.s32 0, %v2683
        %v2685 = vsel %vm2675, %v2684, %v2683
        %vm2686 = vcmp.lt.s32.totalorder %v1026, 0
        %v2687 = vsub.s32 0, %v1026
        %v2688 = vsel %vm2686, %v2687, %v1026
        %v2689 = vmul.u32.u64.compose %v2688, 2290649225
        %v2690 = vextract.low.u32 %v2689
        %v2691 = vextract.high.u32 %v2689
        %v2692 = vshrl.u32 %v2691, 3
        %v2693 = vmul.u32 %v2692, 15
        %v2694 = vsub.s32 %v2688, %v2693
        %v2695 = vsub.s32 0, %v2694
        %v2696 = vsel %vm2686, %v2695, %v2694
        %vm2697 = vcmp.lt.s32.totalorder %v1027, 0
        %v2698 = vsub.s32 0, %v1027
        %v2699 = vsel %vm2697, %v2698, %v1027
        %v2700 = vmul.u32.u64.compose %v2699, 2290649225
        %v2701 = vextract.low.u32 %v2700
        %v2702 = vextract.high.u32 %v2700
        %v2703 = vshrl.u32 %v2702, 3
        %v2704 = vmul.u32 %v2703, 15
        %v2705 = vsub.s32 %v2699, %v2704
        %v2706 = vsub.s32 0, %v2705
        %v2707 = vsel %vm2697, %v2706, %v2705
        %vm2708 = vcmp.lt.s32.totalorder %v1028, 0
        %v2709 = vsub.s32 0, %v1028
        %v2710 = vsel %vm2708, %v2709, %v1028
        %v2711 = vmul.u32.u64.compose %v2710, 2290649225
        %v2712 = vextract.low.u32 %v2711
        %v2713 = vextract.high.u32 %v2711
        %v2714 = vshrl.u32 %v2713, 3
        %v2715 = vmul.u32 %v2714, 15
        %v2716 = vsub.s32 %v2710, %v2715
        %v2717 = vsub.s32 0, %v2716
        %v2718 = vsel %vm2708, %v2717, %v2716
        %vm2719 = vcmp.lt.s32.totalorder %v1029, 0
        %v2720 = vsub.s32 0, %v1029
        %v2721 = vsel %vm2719, %v2720, %v1029
        %v2722 = vmul.u32.u64.compose %v2721, 2290649225
        %v2723 = vextract.low.u32 %v2722
        %v2724 = vextract.high.u32 %v2722
        %v2725 = vshrl.u32 %v2724, 3
        %v2726 = vmul.u32 %v2725, 15
        %v2727 = vsub.s32 %v2721, %v2726
        %v2728 = vsub.s32 0, %v2727
        %v2729 = vsel %vm2719, %v2728, %v2727
        %vm2730 = vcmp.lt.s32.totalorder %v1030, 0
        %v2731 = vsub.s32 0, %v1030
        %v2732 = vsel %vm2730, %v2731, %v1030
        %v2733 = vmul.u32.u64.compose %v2732, 2290649225
        %v2734 = vextract.low.u32 %v2733
        %v2735 = vextract.high.u32 %v2733
        %v2736 = vshrl.u32 %v2735, 3
        %v2737 = vmul.u32 %v2736, 15
        %v2738 = vsub.s32 %v2732, %v2737
        %v2739 = vsub.s32 0, %v2738
        %v2740 = vsel %vm2730, %v2739, %v2738
        %vm2741 = vcmp.lt.s32.totalorder %v1031, 0
        %v2742 = vsub.s32 0, %v1031
        %v2743 = vsel %vm2741, %v2742, %v1031
        %v2744 = vmul.u32.u64.compose %v2743, 2290649225
        %v2745 = vextract.low.u32 %v2744
        %v2746 = vextract.high.u32 %v2744
        %v2747 = vshrl.u32 %v2746, 3
        %v2748 = vmul.u32 %v2747, 15
        %v2749 = vsub.s32 %v2743, %v2748
        %v2750 = vsub.s32 0, %v2749
        %v2751 = vsel %vm2741, %v2750, %v2749
        %vm2752 = vcmp.lt.s32.totalorder %v1032, 0
        %v2753 = vsub.s32 0, %v1032
        %v2754 = vsel %vm2752, %v2753, %v1032
        %v2755 = vmul.u32.u64.compose %v2754, 2290649225
        %v2756 = vextract.low.u32 %v2755
        %v2757 = vextract.high.u32 %v2755
        %v2758 = vshrl.u32 %v2757, 3
        %v2759 = vmul.u32 %v2758, 15
        %v2760 = vsub.s32 %v2754, %v2759
        %v2761 = vsub.s32 0, %v2760
        %v2762 = vsel %vm2752, %v2761, %v2760
        %vm2763 = vcmp.lt.s32.totalorder %v1033, 0
        %v2764 = vsub.s32 0, %v1033
        %v2765 = vsel %vm2763, %v2764, %v1033
        %v2766 = vmul.u32.u64.compose %v2765, 2290649225
        %v2767 = vextract.low.u32 %v2766
        %v2768 = vextract.high.u32 %v2766
        %v2769 = vshrl.u32 %v2768, 3
        %v2770 = vmul.u32 %v2769, 15
        %v2771 = vsub.s32 %v2765, %v2770
        %v2772 = vsub.s32 0, %v2771
        %v2773 = vsel %vm2763, %v2772, %v2771
        %vm2774 = vcmp.lt.s32.totalorder %v1034, 0
        %v2775 = vsub.s32 0, %v1034
        %v2776 = vsel %vm2774, %v2775, %v1034
        %v2777 = vmul.u32.u64.compose %v2776, 2290649225
        %v2778 = vextract.low.u32 %v2777
        %v2779 = vextract.high.u32 %v2777
        %v2780 = vshrl.u32 %v2779, 3
        %v2781 = vmul.u32 %v2780, 15
        %v2782 = vsub.s32 %v2776, %v2781
        %v2783 = vsub.s32 0, %v2782
        %v2784 = vsel %vm2774, %v2783, %v2782
        %vm2785 = vcmp.lt.s32.totalorder %v1035, 0
        %v2786 = vsub.s32 0, %v1035
        %v2787 = vsel %vm2785, %v2786, %v1035
        %v2788 = vmul.u32.u64.compose %v2787, 2290649225
        %v2789 = vextract.low.u32 %v2788
        %v2790 = vextract.high.u32 %v2788
        %v2791 = vshrl.u32 %v2790, 3
        %v2792 = vmul.u32 %v2791, 15
        %v2793 = vsub.s32 %v2787, %v2792
        %v2794 = vsub.s32 0, %v2793
        %v2795 = vsel %vm2785, %v2794, %v2793
        %vm2796 = vcmp.lt.s32.totalorder %v1036, 0
        %v2797 = vsub.s32 0, %v1036
        %v2798 = vsel %vm2796, %v2797, %v1036
        %v2799 = vmul.u32.u64.compose %v2798, 2290649225
        %v2800 = vextract.low.u32 %v2799
        %v2801 = vextract.high.u32 %v2799
        %v2802 = vshrl.u32 %v2801, 3
        %v2803 = vmul.u32 %v2802, 15
        %v2804 = vsub.s32 %v2798, %v2803
        %v2805 = vsub.s32 0, %v2804
        %v2806 = vsel %vm2796, %v2805, %v2804
        %vm2807 = vcmp.lt.s32.totalorder %v1037, 0
        %v2808 = vsub.s32 0, %v1037
        %v2809 = vsel %vm2807, %v2808, %v1037
        %v2810 = vmul.u32.u64.compose %v2809, 2290649225
        %v2811 = vextract.low.u32 %v2810
        %v2812 = vextract.high.u32 %v2810
        %v2813 = vshrl.u32 %v2812, 3
        %v2814 = vmul.u32 %v2813, 15
        %v2815 = vsub.s32 %v2809, %v2814
        %v2816 = vsub.s32 0, %v2815
        %v2817 = vsel %vm2807, %v2816, %v2815
        %vm2818 = vcmp.lt.s32.totalorder %v1038, 0
        %v2819 = vsub.s32 0, %v1038
        %v2820 = vsel %vm2818, %v2819, %v1038
        %v2821 = vmul.u32.u64.compose %v2820, 2290649225
        %v2822 = vextract.low.u32 %v2821
        %v2823 = vextract.high.u32 %v2821
        %v2824 = vshrl.u32 %v2823, 3
        %v2825 = vmul.u32 %v2824, 15
        %v2826 = vsub.s32 %v2820, %v2825
        %v2827 = vsub.s32 0, %v2826
        %v2828 = vsel %vm2818, %v2827, %v2826
        %vm2829 = vcmp.lt.s32.totalorder %v1039, 0
        %v2830 = vsub.s32 0, %v1039
        %v2831 = vsel %vm2829, %v2830, %v1039
        %v2832 = vmul.u32.u64.compose %v2831, 2290649225
        %v2833 = vextract.low.u32 %v2832
        %v2834 = vextract.high.u32 %v2832
        %v2835 = vshrl.u32 %v2834, 3
        %v2836 = vmul.u32 %v2835, 15
        %v2837 = vsub.s32 %v2831, %v2836
        %v2838 = vsub.s32 0, %v2837
        %v2839 = vsel %vm2829, %v2838, %v2837
        %vm2840 = vcmp.lt.s32.totalorder %v1040, 0
        %v2841 = vsub.s32 0, %v1040
        %v2842 = vsel %vm2840, %v2841, %v1040
        %v2843 = vmul.u32.u64.compose %v2842, 2290649225
        %v2844 = vextract.low.u32 %v2843
        %v2845 = vextract.high.u32 %v2843
        %v2846 = vshrl.u32 %v2845, 3
        %v2847 = vmul.u32 %v2846, 15
        %v2848 = vsub.s32 %v2842, %v2847
        %v2849 = vsub.s32 0, %v2848
        %v2850 = vsel %vm2840, %v2849, %v2848
        %vm2851 = vcmp.lt.s32.totalorder %v1041, 0
        %v2852 = vsub.s32 0, %v1041
        %v2853 = vsel %vm2851, %v2852, %v1041
        %v2854 = vmul.u32.u64.compose %v2853, 2290649225
        %v2855 = vextract.low.u32 %v2854
        %v2856 = vextract.high.u32 %v2854
        %v2857 = vshrl.u32 %v2856, 3
        %v2858 = vmul.u32 %v2857, 15
        %v2859 = vsub.s32 %v2853, %v2858
        %v2860 = vsub.s32 0, %v2859
        %v2861 = vsel %vm2851, %v2860, %v2859
        %vm2862 = vcmp.lt.s32.totalorder %v1042, 0
        %v2863 = vsub.s32 0, %v1042
        %v2864 = vsel %vm2862, %v2863, %v1042
        %v2865 = vmul.u32.u64.compose %v2864, 2290649225
        %v2866 = vextract.low.u32 %v2865
        %v2867 = vextract.high.u32 %v2865
        %v2868 = vshrl.u32 %v2867, 3
        %v2869 = vmul.u32 %v2868, 15
        %v2870 = vsub.s32 %v2864, %v2869
        %v2871 = vsub.s32 0, %v2870
        %v2872 = vsel %vm2862, %v2871, %v2870
        %vm2873 = vcmp.lt.s32.totalorder %v1043, 0
        %v2874 = vsub.s32 0, %v1043
        %v2875 = vsel %vm2873, %v2874, %v1043
        %v2876 = vmul.u32.u64.compose %v2875, 2290649225
        %v2877 = vextract.low.u32 %v2876
        %v2878 = vextract.high.u32 %v2876
        %v2879 = vshrl.u32 %v2878, 3
        %v2880 = vmul.u32 %v2879, 15
        %v2881 = vsub.s32 %v2875, %v2880
        %v2882 = vsub.s32 0, %v2881
        %v2883 = vsel %vm2873, %v2882, %v2881
        %vm2884 = vcmp.lt.s32.totalorder %v1044, 0
        %v2885 = vsub.s32 0, %v1044
        %v2886 = vsel %vm2884, %v2885, %v1044
        %v2887 = vmul.u32.u64.compose %v2886, 2290649225
        %v2888 = vextract.low.u32 %v2887
        %v2889 = vextract.high.u32 %v2887
        %v2890 = vshrl.u32 %v2889, 3
        %v2891 = vmul.u32 %v2890, 15
        %v2892 = vsub.s32 %v2886, %v2891
        %v2893 = vsub.s32 0, %v2892
        %v2894 = vsel %vm2884, %v2893, %v2892
        %vm2895 = vcmp.lt.s32.totalorder %v1045, 0
        %v2896 = vsub.s32 0, %v1045
        %v2897 = vsel %vm2895, %v2896, %v1045
        %v2898 = vmul.u32.u64.compose %v2897, 2290649225
        %v2899 = vextract.low.u32 %v2898
        %v2900 = vextract.high.u32 %v2898
        %v2901 = vshrl.u32 %v2900, 3
        %v2902 = vmul.u32 %v2901, 15
        %v2903 = vsub.s32 %v2897, %v2902
        %v2904 = vsub.s32 0, %v2903
        %v2905 = vsel %vm2895, %v2904, %v2903
        %vm2906 = vcmp.lt.s32.totalorder %v1046, 0
        %v2907 = vsub.s32 0, %v1046
        %v2908 = vsel %vm2906, %v2907, %v1046
        %v2909 = vmul.u32.u64.compose %v2908, 2290649225
        %v2910 = vextract.low.u32 %v2909
        %v2911 = vextract.high.u32 %v2909
        %v2912 = vshrl.u32 %v2911, 3
        %v2913 = vmul.u32 %v2912, 15
        %v2914 = vsub.s32 %v2908, %v2913
        %v2915 = vsub.s32 0, %v2914
        %v2916 = vsel %vm2906, %v2915, %v2914
        %vm2917 = vcmp.lt.s32.totalorder %v1047, 0
        %v2918 = vsub.s32 0, %v1047
        %v2919 = vsel %vm2917, %v2918, %v1047
        %v2920 = vmul.u32.u64.compose %v2919, 2290649225
        %v2921 = vextract.low.u32 %v2920
        %v2922 = vextract.high.u32 %v2920
        %v2923 = vshrl.u32 %v2922, 3
        %v2924 = vmul.u32 %v2923, 15
        %v2925 = vsub.s32 %v2919, %v2924
        %v2926 = vsub.s32 0, %v2925
        %v2927 = vsel %vm2917, %v2926, %v2925
        %vm2928 = vcmp.lt.s32.totalorder %v1048, 0
        %v2929 = vsub.s32 0, %v1048
        %v2930 = vsel %vm2928, %v2929, %v1048
        %v2931 = vmul.u32.u64.compose %v2930, 2290649225
        %v2932 = vextract.low.u32 %v2931
        %v2933 = vextract.high.u32 %v2931
        %v2934 = vshrl.u32 %v2933, 3
        %v2935 = vmul.u32 %v2934, 15
        %v2936 = vsub.s32 %v2930, %v2935
        %v2937 = vsub.s32 0, %v2936
        %v2938 = vsel %vm2928, %v2937, %v2936
        %vm2939 = vcmp.lt.s32.totalorder %v1049, 0
        %v2940 = vsub.s32 0, %v1049
        %v2941 = vsel %vm2939, %v2940, %v1049
        %v2942 = vmul.u32.u64.compose %v2941, 2290649225
        %v2943 = vextract.low.u32 %v2942
        %v2944 = vextract.high.u32 %v2942
        %v2945 = vshrl.u32 %v2944, 3
        %v2946 = vmul.u32 %v2945, 15
        %v2947 = vsub.s32 %v2941, %v2946
        %v2948 = vsub.s32 0, %v2947
        %v2949 = vsel %vm2939, %v2948, %v2947
        %vm2950 = vcmp.lt.s32.totalorder %v1050, 0
        %v2951 = vsub.s32 0, %v1050
        %v2952 = vsel %vm2950, %v2951, %v1050
        %v2953 = vmul.u32.u64.compose %v2952, 2290649225
        %v2954 = vextract.low.u32 %v2953
        %v2955 = vextract.high.u32 %v2953
        %v2956 = vshrl.u32 %v2955, 3
        %v2957 = vmul.u32 %v2956, 15
        %v2958 = vsub.s32 %v2952, %v2957
        %v2959 = vsub.s32 0, %v2958
        %v2960 = vsel %vm2950, %v2959, %v2958
        %vm2961 = vcmp.lt.s32.totalorder %v1051, 0
        %v2962 = vsub.s32 0, %v1051
        %v2963 = vsel %vm2961, %v2962, %v1051
        %v2964 = vmul.u32.u64.compose %v2963, 2290649225
        %v2965 = vextract.low.u32 %v2964
        %v2966 = vextract.high.u32 %v2964
        %v2967 = vshrl.u32 %v2966, 3
        %v2968 = vmul.u32 %v2967, 15
        %v2969 = vsub.s32 %v2963, %v2968
        %v2970 = vsub.s32 0, %v2969
        %v2971 = vsel %vm2961, %v2970, %v2969
        %vm2972 = vcmp.lt.s32.totalorder %v1052, 0
        %v2973 = vsub.s32 0, %v1052
        %v2974 = vsel %vm2972, %v2973, %v1052
        %v2975 = vmul.u32.u64.compose %v2974, 2290649225
        %v2976 = vextract.low.u32 %v2975
        %v2977 = vextract.high.u32 %v2975
        %v2978 = vshrl.u32 %v2977, 3
        %v2979 = vmul.u32 %v2978, 15
        %v2980 = vsub.s32 %v2974, %v2979
        %v2981 = vsub.s32 0, %v2980
        %v2982 = vsel %vm2972, %v2981, %v2980
        %vm2983 = vcmp.lt.s32.totalorder %v1053, 0
        %v2984 = vsub.s32 0, %v1053
        %v2985 = vsel %vm2983, %v2984, %v1053
        %v2986 = vmul.u32.u64.compose %v2985, 2290649225
        %v2987 = vextract.low.u32 %v2986
        %v2988 = vextract.high.u32 %v2986
        %v2989 = vshrl.u32 %v2988, 3
        %v2990 = vmul.u32 %v2989, 15
        %v2991 = vsub.s32 %v2985, %v2990
        %v2992 = vsub.s32 0, %v2991
        %v2993 = vsel %vm2983, %v2992, %v2991
        %vm2994 = vcmp.lt.s32.totalorder %v1054, 0
        %v2995 = vsub.s32 0, %v1054
        %v2996 = vsel %vm2994, %v2995, %v1054
        %v2997 = vmul.u32.u64.compose %v2996, 2290649225
        %v2998 = vextract.low.u32 %v2997
        %v2999 = vextract.high.u32 %v2997
        %v3000 = vshrl.u32 %v2999, 3
        %v3001 = vmul.u32 %v3000, 15
        %v3002 = vsub.s32 %v2996, %v3001
        %v3003 = vsub.s32 0, %v3002
        %v3004 = vsel %vm2994, %v3003, %v3002
        %vm3005 = vcmp.lt.s32.totalorder %v1055, 0
        %v3006 = vsub.s32 0, %v1055
        %v3007 = vsel %vm3005, %v3006, %v1055
        %v3008 = vmul.u32.u64.compose %v3007, 2290649225
        %v3009 = vextract.low.u32 %v3008
        %v3010 = vextract.high.u32 %v3008
        %v3011 = vshrl.u32 %v3010, 3
        %v3012 = vmul.u32 %v3011, 15
        %v3013 = vsub.s32 %v3007, %v3012
        %v3014 = vsub.s32 0, %v3013
        %v3015 = vsel %vm3005, %v3014, %v3013
        %vm3016 = vcmp.lt.s32.totalorder %v1056, 0
        %v3017 = vsub.s32 0, %v1056
        %v3018 = vsel %vm3016, %v3017, %v1056
        %v3019 = vmul.u32.u64.compose %v3018, 2290649225
        %v3020 = vextract.low.u32 %v3019
        %v3021 = vextract.high.u32 %v3019
        %v3022 = vshrl.u32 %v3021, 3
        %v3023 = vmul.u32 %v3022, 15
        %v3024 = vsub.s32 %v3018, %v3023
        %v3025 = vsub.s32 0, %v3024
        %v3026 = vsel %vm3016, %v3025, %v3024
        %vm3027 = vcmp.lt.s32.totalorder %v1057, 0
        %v3028 = vsub.s32 0, %v1057
        %v3029 = vsel %vm3027, %v3028, %v1057
        %v3030 = vmul.u32.u64.compose %v3029, 2290649225
        %v3031 = vextract.low.u32 %v3030
        %v3032 = vextract.high.u32 %v3030
        %v3033 = vshrl.u32 %v3032, 3
        %v3034 = vmul.u32 %v3033, 15
        %v3035 = vsub.s32 %v3029, %v3034
        %v3036 = vsub.s32 0, %v3035
        %v3037 = vsel %vm3027, %v3036, %v3035
        %vm3038 = vcmp.lt.s32.totalorder %v1058, 0
        %v3039 = vsub.s32 0, %v1058
        %v3040 = vsel %vm3038, %v3039, %v1058
        %v3041 = vmul.u32.u64.compose %v3040, 2290649225
        %v3042 = vextract.low.u32 %v3041
        %v3043 = vextract.high.u32 %v3041
        %v3044 = vshrl.u32 %v3043, 3
        %v3045 = vmul.u32 %v3044, 15
        %v3046 = vsub.s32 %v3040, %v3045
        %v3047 = vsub.s32 0, %v3046
        %v3048 = vsel %vm3038, %v3047, %v3046
        %vm3049 = vcmp.lt.s32.totalorder %v1059, 0
        %v3050 = vsub.s32 0, %v1059
        %v3051 = vsel %vm3049, %v3050, %v1059
        %v3052 = vmul.u32.u64.compose %v3051, 2290649225
        %v3053 = vextract.low.u32 %v3052
        %v3054 = vextract.high.u32 %v3052
        %v3055 = vshrl.u32 %v3054, 3
        %v3056 = vmul.u32 %v3055, 15
        %v3057 = vsub.s32 %v3051, %v3056
        %v3058 = vsub.s32 0, %v3057
        %v3059 = vsel %vm3049, %v3058, %v3057
        %vm3060 = vcmp.lt.s32.totalorder %v1060, 0
        %v3061 = vsub.s32 0, %v1060
        %v3062 = vsel %vm3060, %v3061, %v1060
        %v3063 = vmul.u32.u64.compose %v3062, 2290649225
        %v3064 = vextract.low.u32 %v3063
        %v3065 = vextract.high.u32 %v3063
        %v3066 = vshrl.u32 %v3065, 3
        %v3067 = vmul.u32 %v3066, 15
        %v3068 = vsub.s32 %v3062, %v3067
        %v3069 = vsub.s32 0, %v3068
        %v3070 = vsel %vm3060, %v3069, %v3068
        %vm3071 = vcmp.lt.s32.totalorder %v1061, 0
        %v3072 = vsub.s32 0, %v1061
        %v3073 = vsel %vm3071, %v3072, %v1061
        %v3074 = vmul.u32.u64.compose %v3073, 2290649225
        %v3075 = vextract.low.u32 %v3074
        %v3076 = vextract.high.u32 %v3074
        %v3077 = vshrl.u32 %v3076, 3
        %v3078 = vmul.u32 %v3077, 15
        %v3079 = vsub.s32 %v3073, %v3078
        %v3080 = vsub.s32 0, %v3079
        %v3081 = vsel %vm3071, %v3080, %v3079
        %vm3082 = vcmp.lt.s32.totalorder %v1062, 0
        %v3083 = vsub.s32 0, %v1062
        %v3084 = vsel %vm3082, %v3083, %v1062
        %v3085 = vmul.u32.u64.compose %v3084, 2290649225
        %v3086 = vextract.low.u32 %v3085
        %v3087 = vextract.high.u32 %v3085
        %v3088 = vshrl.u32 %v3087, 3
        %v3089 = vmul.u32 %v3088, 15
        %v3090 = vsub.s32 %v3084, %v3089
        %v3091 = vsub.s32 0, %v3090
        %v3092 = vsel %vm3082, %v3091, %v3090
        %vm3093 = vcmp.lt.s32.totalorder %v1063, 0
        %v3094 = vsub.s32 0, %v1063
        %v3095 = vsel %vm3093, %v3094, %v1063
        %v3096 = vmul.u32.u64.compose %v3095, 2290649225
        %v3097 = vextract.low.u32 %v3096
        %v3098 = vextract.high.u32 %v3096
        %v3099 = vshrl.u32 %v3098, 3
        %v3100 = vmul.u32 %v3099, 15
        %v3101 = vsub.s32 %v3095, %v3100
        %v3102 = vsub.s32 0, %v3101
        %v3103 = vsel %vm3093, %v3102, %v3101
        %vm3104 = vcmp.lt.s32.totalorder %v1064, 0
        %v3105 = vsub.s32 0, %v1064
        %v3106 = vsel %vm3104, %v3105, %v1064
        %v3107 = vmul.u32.u64.compose %v3106, 2290649225
        %v3108 = vextract.low.u32 %v3107
        %v3109 = vextract.high.u32 %v3107
        %v3110 = vshrl.u32 %v3109, 3
        %v3111 = vmul.u32 %v3110, 15
        %v3112 = vsub.s32 %v3106, %v3111
        %v3113 = vsub.s32 0, %v3112
        %v3114 = vsel %vm3104, %v3113, %v3112
        %vm3115 = vcmp.lt.s32.totalorder %v1065, 0
        %v3116 = vsub.s32 0, %v1065
        %v3117 = vsel %vm3115, %v3116, %v1065
        %v3118 = vmul.u32.u64.compose %v3117, 2290649225
        %v3119 = vextract.low.u32 %v3118
        %v3120 = vextract.high.u32 %v3118
        %v3121 = vshrl.u32 %v3120, 3
        %v3122 = vmul.u32 %v3121, 15
        %v3123 = vsub.s32 %v3117, %v3122
        %v3124 = vsub.s32 0, %v3123
        %v3125 = vsel %vm3115, %v3124, %v3123
        %vm3126 = vcmp.lt.s32.totalorder %v1066, 0
        %v3127 = vsub.s32 0, %v1066
        %v3128 = vsel %vm3126, %v3127, %v1066
        %v3129 = vmul.u32.u64.compose %v3128, 2290649225
        %v3130 = vextract.low.u32 %v3129
        %v3131 = vextract.high.u32 %v3129
        %v3132 = vshrl.u32 %v3131, 3
        %v3133 = vmul.u32 %v3132, 15
        %v3134 = vsub.s32 %v3128, %v3133
        %v3135 = vsub.s32 0, %v3134
        %v3136 = vsel %vm3126, %v3135, %v3134
        %vm3137 = vcmp.lt.s32.totalorder %v1067, 0
        %v3138 = vsub.s32 0, %v1067
        %v3139 = vsel %vm3137, %v3138, %v1067
        %v3140 = vmul.u32.u64.compose %v3139, 2290649225
        %v3141 = vextract.low.u32 %v3140
        %v3142 = vextract.high.u32 %v3140
        %v3143 = vshrl.u32 %v3142, 3
        %v3144 = vmul.u32 %v3143, 15
        %v3145 = vsub.s32 %v3139, %v3144
        %v3146 = vsub.s32 0, %v3145
        %v3147 = vsel %vm3137, %v3146, %v3145
        %vm3148 = vcmp.lt.s32.totalorder %v1068, 0
        %v3149 = vsub.s32 0, %v1068
        %v3150 = vsel %vm3148, %v3149, %v1068
        %v3151 = vmul.u32.u64.compose %v3150, 2290649225
        %v3152 = vextract.low.u32 %v3151
        %v3153 = vextract.high.u32 %v3151
        %v3154 = vshrl.u32 %v3153, 3
        %v3155 = vmul.u32 %v3154, 15
        %v3156 = vsub.s32 %v3150, %v3155
        %v3157 = vsub.s32 0, %v3156
        %v3158 = vsel %vm3148, %v3157, %v3156
        %vm3159 = vcmp.lt.s32.totalorder %v1069, 0
        %v3160 = vsub.s32 0, %v1069
        %v3161 = vsel %vm3159, %v3160, %v1069
        %v3162 = vmul.u32.u64.compose %v3161, 2290649225
        %v3163 = vextract.low.u32 %v3162
        %v3164 = vextract.high.u32 %v3162
        %v3165 = vshrl.u32 %v3164, 3
        %v3166 = vmul.u32 %v3165, 15
        %v3167 = vsub.s32 %v3161, %v3166
        %v3168 = vsub.s32 0, %v3167
        %v3169 = vsel %vm3159, %v3168, %v3167
        %vm3170 = vcmp.lt.s32.totalorder %v1070, 0
        %v3171 = vsub.s32 0, %v1070
        %v3172 = vsel %vm3170, %v3171, %v1070
        %v3173 = vmul.u32.u64.compose %v3172, 2290649225
        %v3174 = vextract.low.u32 %v3173
        %v3175 = vextract.high.u32 %v3173
        %v3176 = vshrl.u32 %v3175, 3
        %v3177 = vmul.u32 %v3176, 15
        %v3178 = vsub.s32 %v3172, %v3177
        %v3179 = vsub.s32 0, %v3178
        %v3180 = vsel %vm3170, %v3179, %v3178
        %vm3181 = vcmp.lt.s32.totalorder %v1071, 0
        %v3182 = vsub.s32 0, %v1071
        %v3183 = vsel %vm3181, %v3182, %v1071
        %v3184 = vmul.u32.u64.compose %v3183, 2290649225
        %v3185 = vextract.low.u32 %v3184
        %v3186 = vextract.high.u32 %v3184
        %v3187 = vshrl.u32 %v3186, 3
        %v3188 = vmul.u32 %v3187, 15
        %v3189 = vsub.s32 %v3183, %v3188
        %v3190 = vsub.s32 0, %v3189
        %v3191 = vsel %vm3181, %v3190, %v3189
        %vm3192 = vcmp.lt.s32.totalorder %v1072, 0
        %v3193 = vsub.s32 0, %v1072
        %v3194 = vsel %vm3192, %v3193, %v1072
        %v3195 = vmul.u32.u64.compose %v3194, 2290649225
        %v3196 = vextract.low.u32 %v3195
        %v3197 = vextract.high.u32 %v3195
        %v3198 = vshrl.u32 %v3197, 3
        %v3199 = vmul.u32 %v3198, 15
        %v3200 = vsub.s32 %v3194, %v3199
        %v3201 = vsub.s32 0, %v3200
        %v3202 = vsel %vm3192, %v3201, %v3200
        %vm3203 = vcmp.lt.s32.totalorder %v1073, 0
        %v3204 = vsub.s32 0, %v1073
        %v3205 = vsel %vm3203, %v3204, %v1073
        %v3206 = vmul.u32.u64.compose %v3205, 2290649225
        %v3207 = vextract.low.u32 %v3206
        %v3208 = vextract.high.u32 %v3206
        %v3209 = vshrl.u32 %v3208, 3
        %v3210 = vmul.u32 %v3209, 15
        %v3211 = vsub.s32 %v3205, %v3210
        %v3212 = vsub.s32 0, %v3211
        %v3213 = vsel %vm3203, %v3212, %v3211
        %vm3214 = vcmp.lt.s32.totalorder %v1074, 0
        %v3215 = vsub.s32 0, %v1074
        %v3216 = vsel %vm3214, %v3215, %v1074
        %v3217 = vmul.u32.u64.compose %v3216, 2290649225
        %v3218 = vextract.low.u32 %v3217
        %v3219 = vextract.high.u32 %v3217
        %v3220 = vshrl.u32 %v3219, 3
        %v3221 = vmul.u32 %v3220, 15
        %v3222 = vsub.s32 %v3216, %v3221
        %v3223 = vsub.s32 0, %v3222
        %v3224 = vsel %vm3214, %v3223, %v3222
        %vm3225 = vcmp.lt.s32.totalorder %v1075, 0
        %v3226 = vsub.s32 0, %v1075
        %v3227 = vsel %vm3225, %v3226, %v1075
        %v3228 = vmul.u32.u64.compose %v3227, 2290649225
        %v3229 = vextract.low.u32 %v3228
        %v3230 = vextract.high.u32 %v3228
        %v3231 = vshrl.u32 %v3230, 3
        %v3232 = vmul.u32 %v3231, 15
        %v3233 = vsub.s32 %v3227, %v3232
        %v3234 = vsub.s32 0, %v3233
        %v3235 = vsel %vm3225, %v3234, %v3233
        %vm3236 = vcmp.lt.s32.totalorder %v1076, 0
        %v3237 = vsub.s32 0, %v1076
        %v3238 = vsel %vm3236, %v3237, %v1076
        %v3239 = vmul.u32.u64.compose %v3238, 2290649225
        %v3240 = vextract.low.u32 %v3239
        %v3241 = vextract.high.u32 %v3239
        %v3242 = vshrl.u32 %v3241, 3
        %v3243 = vmul.u32 %v3242, 15
        %v3244 = vsub.s32 %v3238, %v3243
        %v3245 = vsub.s32 0, %v3244
        %v3246 = vsel %vm3236, %v3245, %v3244
        %vm3247 = vcmp.lt.s32.totalorder %v1077, 0
        %v3248 = vsub.s32 0, %v1077
        %v3249 = vsel %vm3247, %v3248, %v1077
        %v3250 = vmul.u32.u64.compose %v3249, 2290649225
        %v3251 = vextract.low.u32 %v3250
        %v3252 = vextract.high.u32 %v3250
        %v3253 = vshrl.u32 %v3252, 3
        %v3254 = vmul.u32 %v3253, 15
        %v3255 = vsub.s32 %v3249, %v3254
        %v3256 = vsub.s32 0, %v3255
        %v3257 = vsel %vm3247, %v3256, %v3255
        %vm3258 = vcmp.lt.s32.totalorder %v1078, 0
        %v3259 = vsub.s32 0, %v1078
        %v3260 = vsel %vm3258, %v3259, %v1078
        %v3261 = vmul.u32.u64.compose %v3260, 2290649225
        %v3262 = vextract.low.u32 %v3261
        %v3263 = vextract.high.u32 %v3261
        %v3264 = vshrl.u32 %v3263, 3
        %v3265 = vmul.u32 %v3264, 15
        %v3266 = vsub.s32 %v3260, %v3265
        %v3267 = vsub.s32 0, %v3266
        %v3268 = vsel %vm3258, %v3267, %v3266
        %vm3269 = vcmp.lt.s32.totalorder %v1079, 0
        %v3270 = vsub.s32 0, %v1079
        %v3271 = vsel %vm3269, %v3270, %v1079
        %v3272 = vmul.u32.u64.compose %v3271, 2290649225
        %v3273 = vextract.low.u32 %v3272
        %v3274 = vextract.high.u32 %v3272
        %v3275 = vshrl.u32 %v3274, 3
        %v3276 = vmul.u32 %v3275, 15
        %v3277 = vsub.s32 %v3271, %v3276
        %v3278 = vsub.s32 0, %v3277
        %v3279 = vsel %vm3269, %v3278, %v3277
        %vm3280 = vcmp.lt.s32.totalorder %v1080, 0
        %v3281 = vsub.s32 0, %v1080
        %v3282 = vsel %vm3280, %v3281, %v1080
        %v3283 = vmul.u32.u64.compose %v3282, 2290649225
        %v3284 = vextract.low.u32 %v3283
        %v3285 = vextract.high.u32 %v3283
        %v3286 = vshrl.u32 %v3285, 3
        %v3287 = vmul.u32 %v3286, 15
        %v3288 = vsub.s32 %v3282, %v3287
        %v3289 = vsub.s32 0, %v3288
        %v3290 = vsel %vm3280, %v3289, %v3288
        %vm3291 = vcmp.lt.s32.totalorder %v1081, 0
        %v3292 = vsub.s32 0, %v1081
        %v3293 = vsel %vm3291, %v3292, %v1081
        %v3294 = vmul.u32.u64.compose %v3293, 2290649225
        %v3295 = vextract.low.u32 %v3294
        %v3296 = vextract.high.u32 %v3294
        %v3297 = vshrl.u32 %v3296, 3
        %v3298 = vmul.u32 %v3297, 15
        %v3299 = vsub.s32 %v3293, %v3298
        %v3300 = vsub.s32 0, %v3299
        %v3301 = vsel %vm3291, %v3300, %v3299
        %vm3302 = vcmp.lt.s32.totalorder %v1082, 0
        %v3303 = vsub.s32 0, %v1082
        %v3304 = vsel %vm3302, %v3303, %v1082
        %v3305 = vmul.u32.u64.compose %v3304, 2290649225
        %v3306 = vextract.low.u32 %v3305
        %v3307 = vextract.high.u32 %v3305
        %v3308 = vshrl.u32 %v3307, 3
        %v3309 = vmul.u32 %v3308, 15
        %v3310 = vsub.s32 %v3304, %v3309
        %v3311 = vsub.s32 0, %v3310
        %v3312 = vsel %vm3302, %v3311, %v3310
        %vm3313 = vcmp.lt.s32.totalorder %v1083, 0
        %v3314 = vsub.s32 0, %v1083
        %v3315 = vsel %vm3313, %v3314, %v1083
        %v3316 = vmul.u32.u64.compose %v3315, 2290649225
        %v3317 = vextract.low.u32 %v3316
        %v3318 = vextract.high.u32 %v3316
        %v3319 = vshrl.u32 %v3318, 3
        %v3320 = vmul.u32 %v3319, 15
        %v3321 = vsub.s32 %v3315, %v3320
        %v3322 = vsub.s32 0, %v3321
        %v3323 = vsel %vm3313, %v3322, %v3321
        %vm3324 = vcmp.lt.s32.totalorder %v1084, 0
        %v3325 = vsub.s32 0, %v1084
        %v3326 = vsel %vm3324, %v3325, %v1084
        %v3327 = vmul.u32.u64.compose %v3326, 2290649225
        %v3328 = vextract.low.u32 %v3327
        %v3329 = vextract.high.u32 %v3327
        %v3330 = vshrl.u32 %v3329, 3
        %v3331 = vmul.u32 %v3330, 15
        %v3332 = vsub.s32 %v3326, %v3331
        %v3333 = vsub.s32 0, %v3332
        %v3334 = vsel %vm3324, %v3333, %v3332
        %vm3335 = vcmp.lt.s32.totalorder %v1085, 0
        %v3336 = vsub.s32 0, %v1085
        %v3337 = vsel %vm3335, %v3336, %v1085
        %v3338 = vmul.u32.u64.compose %v3337, 2290649225
        %v3339 = vextract.low.u32 %v3338
        %v3340 = vextract.high.u32 %v3338
        %v3341 = vshrl.u32 %v3340, 3
        %v3342 = vmul.u32 %v3341, 15
        %v3343 = vsub.s32 %v3337, %v3342
        %v3344 = vsub.s32 0, %v3343
        %v3345 = vsel %vm3335, %v3344, %v3343
        %vm3346 = vcmp.lt.s32.totalorder %v1086, 0
        %v3347 = vsub.s32 0, %v1086
        %v3348 = vsel %vm3346, %v3347, %v1086
        %v3349 = vmul.u32.u64.compose %v3348, 2290649225
        %v3350 = vextract.low.u32 %v3349
        %v3351 = vextract.high.u32 %v3349
        %v3352 = vshrl.u32 %v3351, 3
        %v3353 = vmul.u32 %v3352, 15
        %v3354 = vsub.s32 %v3348, %v3353
        %v3355 = vsub.s32 0, %v3354
        %v3356 = vsel %vm3346, %v3355, %v3354
        %vm3357 = vcmp.lt.s32.totalorder %v1087, 0
        %v3358 = vsub.s32 0, %v1087
        %v3359 = vsel %vm3357, %v3358, %v1087
        %v3360 = vmul.u32.u64.compose %v3359, 2290649225
        %v3361 = vextract.low.u32 %v3360
        %v3362 = vextract.high.u32 %v3360
        %v3363 = vshrl.u32 %v3362, 3
        %v3364 = vmul.u32 %v3363, 15
        %v3365 = vsub.s32 %v3359, %v3364
        %v3366 = vsub.s32 0, %v3365
        %v3367 = vsel %vm3357, %v3366, %v3365
        %vm3368 = vcmp.lt.s32.totalorder %v1088, 0
        %v3369 = vsub.s32 0, %v1088
        %v3370 = vsel %vm3368, %v3369, %v1088
        %v3371 = vmul.u32.u64.compose %v3370, 2290649225
        %v3372 = vextract.low.u32 %v3371
        %v3373 = vextract.high.u32 %v3371
        %v3374 = vshrl.u32 %v3373, 3
        %v3375 = vmul.u32 %v3374, 15
        %v3376 = vsub.s32 %v3370, %v3375
        %v3377 = vsub.s32 0, %v3376
        %v3378 = vsel %vm3368, %v3377, %v3376
        %vm3379 = vcmp.lt.s32.totalorder %v1089, 0
        %v3380 = vsub.s32 0, %v1089
        %v3381 = vsel %vm3379, %v3380, %v1089
        %v3382 = vmul.u32.u64.compose %v3381, 2290649225
        %v3383 = vextract.low.u32 %v3382
        %v3384 = vextract.high.u32 %v3382
        %v3385 = vshrl.u32 %v3384, 3
        %v3386 = vmul.u32 %v3385, 15
        %v3387 = vsub.s32 %v3381, %v3386
        %v3388 = vsub.s32 0, %v3387
        %v3389 = vsel %vm3379, %v3388, %v3387
        %vm3390 = vcmp.lt.s32.totalorder %v1090, 0
        %v3391 = vsub.s32 0, %v1090
        %v3392 = vsel %vm3390, %v3391, %v1090
        %v3393 = vmul.u32.u64.compose %v3392, 2290649225
        %v3394 = vextract.low.u32 %v3393
        %v3395 = vextract.high.u32 %v3393
        %v3396 = vshrl.u32 %v3395, 3
        %v3397 = vmul.u32 %v3396, 15
        %v3398 = vsub.s32 %v3392, %v3397
        %v3399 = vsub.s32 0, %v3398
        %v3400 = vsel %vm3390, %v3399, %v3398
        %vm3401 = vcmp.lt.s32.totalorder %v1091, 0
        %v3402 = vsub.s32 0, %v1091
        %v3403 = vsel %vm3401, %v3402, %v1091
        %v3404 = vmul.u32.u64.compose %v3403, 2290649225
        %v3405 = vextract.low.u32 %v3404
        %v3406 = vextract.high.u32 %v3404
        %v3407 = vshrl.u32 %v3406, 3
        %v3408 = vmul.u32 %v3407, 15
        %v3409 = vsub.s32 %v3403, %v3408
        %v3410 = vsub.s32 0, %v3409
        %v3411 = vsel %vm3401, %v3410, %v3409
        %vm3412 = vcmp.lt.s32.totalorder %v1092, 0
        %v3413 = vsub.s32 0, %v1092
        %v3414 = vsel %vm3412, %v3413, %v1092
        %v3415 = vmul.u32.u64.compose %v3414, 2290649225
        %v3416 = vextract.low.u32 %v3415
        %v3417 = vextract.high.u32 %v3415
        %v3418 = vshrl.u32 %v3417, 3
        %v3419 = vmul.u32 %v3418, 15
        %v3420 = vsub.s32 %v3414, %v3419
        %v3421 = vsub.s32 0, %v3420
        %v3422 = vsel %vm3412, %v3421, %v3420
        %vm3423 = vcmp.lt.s32.totalorder %v1093, 0
        %v3424 = vsub.s32 0, %v1093
        %v3425 = vsel %vm3423, %v3424, %v1093
        %v3426 = vmul.u32.u64.compose %v3425, 2290649225
        %v3427 = vextract.low.u32 %v3426
        %v3428 = vextract.high.u32 %v3426
        %v3429 = vshrl.u32 %v3428, 3
        %v3430 = vmul.u32 %v3429, 15
        %v3431 = vsub.s32 %v3425, %v3430
        %v3432 = vsub.s32 0, %v3431
        %v3433 = vsel %vm3423, %v3432, %v3431
        %vm3434 = vcmp.lt.s32.totalorder %v1094, 0
        %v3435 = vsub.s32 0, %v1094
        %v3436 = vsel %vm3434, %v3435, %v1094
        %v3437 = vmul.u32.u64.compose %v3436, 2290649225
        %v3438 = vextract.low.u32 %v3437
        %v3439 = vextract.high.u32 %v3437
        %v3440 = vshrl.u32 %v3439, 3
        %v3441 = vmul.u32 %v3440, 15
        %v3442 = vsub.s32 %v3436, %v3441
        %v3443 = vsub.s32 0, %v3442
        %v3444 = vsel %vm3434, %v3443, %v3442
        %vm3445 = vcmp.lt.s32.totalorder %v1095, 0
        %v3446 = vsub.s32 0, %v1095
        %v3447 = vsel %vm3445, %v3446, %v1095
        %v3448 = vmul.u32.u64.compose %v3447, 2290649225
        %v3449 = vextract.low.u32 %v3448
        %v3450 = vextract.high.u32 %v3448
        %v3451 = vshrl.u32 %v3450, 3
        %v3452 = vmul.u32 %v3451, 15
        %v3453 = vsub.s32 %v3447, %v3452
        %v3454 = vsub.s32 0, %v3453
        %v3455 = vsel %vm3445, %v3454, %v3453
        %vm3456 = vcmp.lt.s32.totalorder %v1096, 0
        %v3457 = vsub.s32 0, %v1096
        %v3458 = vsel %vm3456, %v3457, %v1096
        %v3459 = vmul.u32.u64.compose %v3458, 2290649225
        %v3460 = vextract.low.u32 %v3459
        %v3461 = vextract.high.u32 %v3459
        %v3462 = vshrl.u32 %v3461, 3
        %v3463 = vmul.u32 %v3462, 15
        %v3464 = vsub.s32 %v3458, %v3463
        %v3465 = vsub.s32 0, %v3464
        %v3466 = vsel %vm3456, %v3465, %v3464
        %vm3467 = vcmp.lt.s32.totalorder %v1097, 0
        %v3468 = vsub.s32 0, %v1097
        %v3469 = vsel %vm3467, %v3468, %v1097
        %v3470 = vmul.u32.u64.compose %v3469, 2290649225
        %v3471 = vextract.low.u32 %v3470
        %v3472 = vextract.high.u32 %v3470
        %v3473 = vshrl.u32 %v3472, 3
        %v3474 = vmul.u32 %v3473, 15
        %v3475 = vsub.s32 %v3469, %v3474
        %v3476 = vsub.s32 0, %v3475
        %v3477 = vsel %vm3467, %v3476, %v3475
        %vm3478 = vcmp.lt.s32.totalorder %v1098, 0
        %v3479 = vsub.s32 0, %v1098
        %v3480 = vsel %vm3478, %v3479, %v1098
        %v3481 = vmul.u32.u64.compose %v3480, 2290649225
        %v3482 = vextract.low.u32 %v3481
        %v3483 = vextract.high.u32 %v3481
        %v3484 = vshrl.u32 %v3483, 3
        %v3485 = vmul.u32 %v3484, 15
        %v3486 = vsub.s32 %v3480, %v3485
        %v3487 = vsub.s32 0, %v3486
        %v3488 = vsel %vm3478, %v3487, %v3486
        %vm3489 = vcmp.lt.s32.totalorder %v1099, 0
        %v3490 = vsub.s32 0, %v1099
        %v3491 = vsel %vm3489, %v3490, %v1099
        %v3492 = vmul.u32.u64.compose %v3491, 2290649225
        %v3493 = vextract.low.u32 %v3492
        %v3494 = vextract.high.u32 %v3492
        %v3495 = vshrl.u32 %v3494, 3
        %v3496 = vmul.u32 %v3495, 15
        %v3497 = vsub.s32 %v3491, %v3496
        %v3498 = vsub.s32 0, %v3497
        %v3499 = vsel %vm3489, %v3498, %v3497
        %vm3500 = vcmp.lt.s32.totalorder %v1100, 0
        %v3501 = vsub.s32 0, %v1100
        %v3502 = vsel %vm3500, %v3501, %v1100
        %v3503 = vmul.u32.u64.compose %v3502, 2290649225
        %v3504 = vextract.low.u32 %v3503
        %v3505 = vextract.high.u32 %v3503
        %v3506 = vshrl.u32 %v3505, 3
        %v3507 = vmul.u32 %v3506, 15
        %v3508 = vsub.s32 %v3502, %v3507
        %v3509 = vsub.s32 0, %v3508
        %v3510 = vsel %vm3500, %v3509, %v3508
        %vm3511 = vcmp.lt.s32.totalorder %v1101, 0
        %v3512 = vsub.s32 0, %v1101
        %v3513 = vsel %vm3511, %v3512, %v1101
        %v3514 = vmul.u32.u64.compose %v3513, 2290649225
        %v3515 = vextract.low.u32 %v3514
        %v3516 = vextract.high.u32 %v3514
        %v3517 = vshrl.u32 %v3516, 3
        %v3518 = vmul.u32 %v3517, 15
        %v3519 = vsub.s32 %v3513, %v3518
        %v3520 = vsub.s32 0, %v3519
        %v3521 = vsel %vm3511, %v3520, %v3519
        %vm3522 = vcmp.lt.s32.totalorder %v1102, 0
        %v3523 = vsub.s32 0, %v1102
        %v3524 = vsel %vm3522, %v3523, %v1102
        %v3525 = vmul.u32.u64.compose %v3524, 2290649225
        %v3526 = vextract.low.u32 %v3525
        %v3527 = vextract.high.u32 %v3525
        %v3528 = vshrl.u32 %v3527, 3
        %v3529 = vmul.u32 %v3528, 15
        %v3530 = vsub.s32 %v3524, %v3529
        %v3531 = vsub.s32 0, %v3530
        %v3532 = vsel %vm3522, %v3531, %v3530
        %vm3533 = vcmp.lt.s32.totalorder %v1103, 0
        %v3534 = vsub.s32 0, %v1103
        %v3535 = vsel %vm3533, %v3534, %v1103
        %v3536 = vmul.u32.u64.compose %v3535, 2290649225
        %v3537 = vextract.low.u32 %v3536
        %v3538 = vextract.high.u32 %v3536
        %v3539 = vshrl.u32 %v3538, 3
        %v3540 = vmul.u32 %v3539, 15
        %v3541 = vsub.s32 %v3535, %v3540
        %v3542 = vsub.s32 0, %v3541
        %v3543 = vsel %vm3533, %v3542, %v3541
        %vm3544 = vcmp.lt.s32.totalorder %v1104, 0
        %v3545 = vsub.s32 0, %v1104
        %v3546 = vsel %vm3544, %v3545, %v1104
        %v3547 = vmul.u32.u64.compose %v3546, 2290649225
        %v3548 = vextract.low.u32 %v3547
        %v3549 = vextract.high.u32 %v3547
        %v3550 = vshrl.u32 %v3549, 3
        %v3551 = vmul.u32 %v3550, 15
        %v3552 = vsub.s32 %v3546, %v3551
        %v3553 = vsub.s32 0, %v3552
        %v3554 = vsel %vm3544, %v3553, %v3552
        %vm3555 = vcmp.lt.s32.totalorder %v1105, 0
        %v3556 = vsub.s32 0, %v1105
        %v3557 = vsel %vm3555, %v3556, %v1105
        %v3558 = vmul.u32.u64.compose %v3557, 2290649225
        %v3559 = vextract.low.u32 %v3558
        %v3560 = vextract.high.u32 %v3558
        %v3561 = vshrl.u32 %v3560, 3
        %v3562 = vmul.u32 %v3561, 15
        %v3563 = vsub.s32 %v3557, %v3562
        %v3564 = vsub.s32 0, %v3563
        %v3565 = vsel %vm3555, %v3564, %v3563
        %vm3566 = vcmp.lt.s32.totalorder %v1106, 0
        %v3567 = vsub.s32 0, %v1106
        %v3568 = vsel %vm3566, %v3567, %v1106
        %v3569 = vmul.u32.u64.compose %v3568, 2290649225
        %v3570 = vextract.low.u32 %v3569
        %v3571 = vextract.high.u32 %v3569
        %v3572 = vshrl.u32 %v3571, 3
        %v3573 = vmul.u32 %v3572, 15
        %v3574 = vsub.s32 %v3568, %v3573
        %v3575 = vsub.s32 0, %v3574
        %v3576 = vsel %vm3566, %v3575, %v3574
        %vm3577 = vcmp.lt.s32.totalorder %v1107, 0
        %v3578 = vsub.s32 0, %v1107
        %v3579 = vsel %vm3577, %v3578, %v1107
        %v3580 = vmul.u32.u64.compose %v3579, 2290649225
        %v3581 = vextract.low.u32 %v3580
        %v3582 = vextract.high.u32 %v3580
        %v3583 = vshrl.u32 %v3582, 3
        %v3584 = vmul.u32 %v3583, 15
        %v3585 = vsub.s32 %v3579, %v3584
        %v3586 = vsub.s32 0, %v3585
        %v3587 = vsel %vm3577, %v3586, %v3585
        %vm3588 = vcmp.lt.s32.totalorder %v1108, 0
        %v3589 = vsub.s32 0, %v1108
        %v3590 = vsel %vm3588, %v3589, %v1108
        %v3591 = vmul.u32.u64.compose %v3590, 2290649225
        %v3592 = vextract.low.u32 %v3591
        %v3593 = vextract.high.u32 %v3591
        %v3594 = vshrl.u32 %v3593, 3
        %v3595 = vmul.u32 %v3594, 15
        %v3596 = vsub.s32 %v3590, %v3595
        %v3597 = vsub.s32 0, %v3596
        %v3598 = vsel %vm3588, %v3597, %v3596
        %vm3599 = vcmp.lt.s32.totalorder %v1109, 0
        %v3600 = vsub.s32 0, %v1109
        %v3601 = vsel %vm3599, %v3600, %v1109
        %v3602 = vmul.u32.u64.compose %v3601, 2290649225
        %v3603 = vextract.low.u32 %v3602
        %v3604 = vextract.high.u32 %v3602
        %v3605 = vshrl.u32 %v3604, 3
        %v3606 = vmul.u32 %v3605, 15
        %v3607 = vsub.s32 %v3601, %v3606
        %v3608 = vsub.s32 0, %v3607
        %v3609 = vsel %vm3599, %v3608, %v3607
        %vm3610 = vcmp.lt.s32.totalorder %v1110, 0
        %v3611 = vsub.s32 0, %v1110
        %v3612 = vsel %vm3610, %v3611, %v1110
        %v3613 = vmul.u32.u64.compose %v3612, 2290649225
        %v3614 = vextract.low.u32 %v3613
        %v3615 = vextract.high.u32 %v3613
        %v3616 = vshrl.u32 %v3615, 3
        %v3617 = vmul.u32 %v3616, 15
        %v3618 = vsub.s32 %v3612, %v3617
        %v3619 = vsub.s32 0, %v3618
        %v3620 = vsel %vm3610, %v3619, %v3618
        %vm3621 = vcmp.lt.s32.totalorder %v1111, 0
        %v3622 = vsub.s32 0, %v1111
        %v3623 = vsel %vm3621, %v3622, %v1111
        %v3624 = vmul.u32.u64.compose %v3623, 2290649225
        %v3625 = vextract.low.u32 %v3624
        %v3626 = vextract.high.u32 %v3624
        %v3627 = vshrl.u32 %v3626, 3
        %v3628 = vmul.u32 %v3627, 15
        %v3629 = vsub.s32 %v3623, %v3628
        %v3630 = vsub.s32 0, %v3629
        %v3631 = vsel %vm3621, %v3630, %v3629
        %vm3632 = vcmp.lt.s32.totalorder %v1112, 0
        %v3633 = vsub.s32 0, %v1112
        %v3634 = vsel %vm3632, %v3633, %v1112
        %v3635 = vmul.u32.u64.compose %v3634, 2290649225
        %v3636 = vextract.low.u32 %v3635
        %v3637 = vextract.high.u32 %v3635
        %v3638 = vshrl.u32 %v3637, 3
        %v3639 = vmul.u32 %v3638, 15
        %v3640 = vsub.s32 %v3634, %v3639
        %v3641 = vsub.s32 0, %v3640
        %v3642 = vsel %vm3632, %v3641, %v3640
        %vm3643 = vcmp.lt.s32.totalorder %v1113, 0
        %v3644 = vsub.s32 0, %v1113
        %v3645 = vsel %vm3643, %v3644, %v1113
        %v3646 = vmul.u32.u64.compose %v3645, 2290649225
        %v3647 = vextract.low.u32 %v3646
        %v3648 = vextract.high.u32 %v3646
        %v3649 = vshrl.u32 %v3648, 3
        %v3650 = vmul.u32 %v3649, 15
        %v3651 = vsub.s32 %v3645, %v3650
        %v3652 = vsub.s32 0, %v3651
        %v3653 = vsel %vm3643, %v3652, %v3651
        %vm3654 = vcmp.lt.s32.totalorder %v1114, 0
        %v3655 = vsub.s32 0, %v1114
        %v3656 = vsel %vm3654, %v3655, %v1114
        %v3657 = vmul.u32.u64.compose %v3656, 2290649225
        %v3658 = vextract.low.u32 %v3657
        %v3659 = vextract.high.u32 %v3657
        %v3660 = vshrl.u32 %v3659, 3
        %v3661 = vmul.u32 %v3660, 15
        %v3662 = vsub.s32 %v3656, %v3661
        %v3663 = vsub.s32 0, %v3662
        %v3664 = vsel %vm3654, %v3663, %v3662
        %vm3665 = vcmp.lt.s32.totalorder %v1115, 0
        %v3666 = vsub.s32 0, %v1115
        %v3667 = vsel %vm3665, %v3666, %v1115
        %v3668 = vmul.u32.u64.compose %v3667, 2290649225
        %v3669 = vextract.low.u32 %v3668
        %v3670 = vextract.high.u32 %v3668
        %v3671 = vshrl.u32 %v3670, 3
        %v3672 = vmul.u32 %v3671, 15
        %v3673 = vsub.s32 %v3667, %v3672
        %v3674 = vsub.s32 0, %v3673
        %v3675 = vsel %vm3665, %v3674, %v3673
        %vm3676 = vcmp.lt.s32.totalorder %v1116, 0
        %v3677 = vsub.s32 0, %v1116
        %v3678 = vsel %vm3676, %v3677, %v1116
        %v3679 = vmul.u32.u64.compose %v3678, 2290649225
        %v3680 = vextract.low.u32 %v3679
        %v3681 = vextract.high.u32 %v3679
        %v3682 = vshrl.u32 %v3681, 3
        %v3683 = vmul.u32 %v3682, 15
        %v3684 = vsub.s32 %v3678, %v3683
        %v3685 = vsub.s32 0, %v3684
        %v3686 = vsel %vm3676, %v3685, %v3684
        %vm3687 = vcmp.lt.s32.totalorder %v1117, 0
        %v3688 = vsub.s32 0, %v1117
        %v3689 = vsel %vm3687, %v3688, %v1117
        %v3690 = vmul.u32.u64.compose %v3689, 2290649225
        %v3691 = vextract.low.u32 %v3690
        %v3692 = vextract.high.u32 %v3690
        %v3693 = vshrl.u32 %v3692, 3
        %v3694 = vmul.u32 %v3693, 15
        %v3695 = vsub.s32 %v3689, %v3694
        %v3696 = vsub.s32 0, %v3695
        %v3697 = vsel %vm3687, %v3696, %v3695
        %vm3698 = vcmp.lt.s32.totalorder %v1118, 0
        %v3699 = vsub.s32 0, %v1118
        %v3700 = vsel %vm3698, %v3699, %v1118
        %v3701 = vmul.u32.u64.compose %v3700, 2290649225
        %v3702 = vextract.low.u32 %v3701
        %v3703 = vextract.high.u32 %v3701
        %v3704 = vshrl.u32 %v3703, 3
        %v3705 = vmul.u32 %v3704, 15
        %v3706 = vsub.s32 %v3700, %v3705
        %v3707 = vsub.s32 0, %v3706
        %v3708 = vsel %vm3698, %v3707, %v3706
        %vm3709 = vcmp.lt.s32.totalorder %v1119, 0
        %v3710 = vsub.s32 0, %v1119
        %v3711 = vsel %vm3709, %v3710, %v1119
        %v3712 = vmul.u32.u64.compose %v3711, 2290649225
        %v3713 = vextract.low.u32 %v3712
        %v3714 = vextract.high.u32 %v3712
        %v3715 = vshrl.u32 %v3714, 3
        %v3716 = vmul.u32 %v3715, 15
        %v3717 = vsub.s32 %v3711, %v3716
        %v3718 = vsub.s32 0, %v3717
        %v3719 = vsel %vm3709, %v3718, %v3717
        %vm3720 = vcmp.lt.s32.totalorder %v1120, 0
        %v3721 = vsub.s32 0, %v1120
        %v3722 = vsel %vm3720, %v3721, %v1120
        %v3723 = vmul.u32.u64.compose %v3722, 2290649225
        %v3724 = vextract.low.u32 %v3723
        %v3725 = vextract.high.u32 %v3723
        %v3726 = vshrl.u32 %v3725, 3
        %v3727 = vmul.u32 %v3726, 15
        %v3728 = vsub.s32 %v3722, %v3727
        %v3729 = vsub.s32 0, %v3728
        %v3730 = vsel %vm3720, %v3729, %v3728
        %vm3731 = vcmp.lt.s32.totalorder %v1121, 0
        %v3732 = vsub.s32 0, %v1121
        %v3733 = vsel %vm3731, %v3732, %v1121
        %v3734 = vmul.u32.u64.compose %v3733, 2290649225
        %v3735 = vextract.low.u32 %v3734
        %v3736 = vextract.high.u32 %v3734
        %v3737 = vshrl.u32 %v3736, 3
        %v3738 = vmul.u32 %v3737, 15
        %v3739 = vsub.s32 %v3733, %v3738
        %v3740 = vsub.s32 0, %v3739
        %v3741 = vsel %vm3731, %v3740, %v3739
        %vm3742 = vcmp.lt.s32.totalorder %v1122, 0
        %v3743 = vsub.s32 0, %v1122
        %v3744 = vsel %vm3742, %v3743, %v1122
        %v3745 = vmul.u32.u64.compose %v3744, 2290649225
        %v3746 = vextract.low.u32 %v3745
        %v3747 = vextract.high.u32 %v3745
        %v3748 = vshrl.u32 %v3747, 3
        %v3749 = vmul.u32 %v3748, 15
        %v3750 = vsub.s32 %v3744, %v3749
        %v3751 = vsub.s32 0, %v3750
        %v3752 = vsel %vm3742, %v3751, %v3750
        %vm3753 = vcmp.lt.s32.totalorder %v1123, 0
        %v3754 = vsub.s32 0, %v1123
        %v3755 = vsel %vm3753, %v3754, %v1123
        %v3756 = vmul.u32.u64.compose %v3755, 2290649225
        %v3757 = vextract.low.u32 %v3756
        %v3758 = vextract.high.u32 %v3756
        %v3759 = vshrl.u32 %v3758, 3
        %v3760 = vmul.u32 %v3759, 15
        %v3761 = vsub.s32 %v3755, %v3760
        %v3762 = vsub.s32 0, %v3761
        %v3763 = vsel %vm3753, %v3762, %v3761
        %vm3764 = vcmp.ne.s32.totalorder %v1134, 0
        %vm3765 = vcmp.ne.s32.totalorder %v1145, 0
        %vm3766 = vcmp.ne.s32.totalorder %v1156, 0
        %vm3767 = vcmp.ne.s32.totalorder %v1167, 0
        %vm3768 = vcmp.ne.s32.totalorder %v1178, 0
        %vm3769 = vcmp.ne.s32.totalorder %v1189, 0
        %vm3770 = vcmp.ne.s32.totalorder %v1200, 0
        %vm3771 = vcmp.ne.s32.totalorder %v1211, 0
        %vm3772 = vcmp.ne.s32.totalorder %v1222, 0
        %vm3773 = vcmp.ne.s32.totalorder %v1233, 0
        %vm3774 = vcmp.ne.s32.totalorder %v1244, 0
        %vm3775 = vcmp.ne.s32.totalorder %v1255, 0
        %vm3776 = vcmp.ne.s32.totalorder %v1266, 0
        %vm3777 = vcmp.ne.s32.totalorder %v1277, 0
        %vm3778 = vcmp.ne.s32.totalorder %v1288, 0
        %vm3779 = vcmp.ne.s32.totalorder %v1299, 0
        %vm3780 = vcmp.ne.s32.totalorder %v1310, 0
        %vm3781 = vcmp.ne.s32.totalorder %v1321, 0
        %vm3782 = vcmp.ne.s32.totalorder %v1332, 0
        %vm3783 = vcmp.ne.s32.totalorder %v1343, 0
        %vm3784 = vcmp.ne.s32.totalorder %v1354, 0
        %vm3785 = vcmp.ne.s32.totalorder %v1365, 0
        %vm3786 = vcmp.ne.s32.totalorder %v1376, 0
        %vm3787 = vcmp.ne.s32.totalorder %v1387, 0
        %vm3788 = vcmp.ne.s32.totalorder %v1398, 0
        %vm3789 = vcmp.ne.s32.totalorder %v1409, 0
        %vm3790 = vcmp.ne.s32.totalorder %v1420, 0
        %vm3791 = vcmp.ne.s32.totalorder %v1431, 0
        %vm3792 = vcmp.ne.s32.totalorder %v1442, 0
        %vm3793 = vcmp.ne.s32.totalorder %v1453, 0
        %vm3794 = vcmp.ne.s32.totalorder %v1464, 0
        %vm3795 = vcmp.ne.s32.totalorder %v1475, 0
        %vm3796 = vcmp.ne.s32.totalorder %v1486, 0
        %vm3797 = vcmp.ne.s32.totalorder %v1497, 0
        %vm3798 = vcmp.ne.s32.totalorder %v1508, 0
        %vm3799 = vcmp.ne.s32.totalorder %v1519, 0
        %vm3800 = vcmp.ne.s32.totalorder %v1530, 0
        %vm3801 = vcmp.ne.s32.totalorder %v1541, 0
        %vm3802 = vcmp.ne.s32.totalorder %v1552, 0
        %vm3803 = vcmp.ne.s32.totalorder %v1563, 0
        %vm3804 = vcmp.ne.s32.totalorder %v1574, 0
        %vm3805 = vcmp.ne.s32.totalorder %v1585, 0
        %vm3806 = vcmp.ne.s32.totalorder %v1596, 0
        %vm3807 = vcmp.ne.s32.totalorder %v1607, 0
        %vm3808 = vcmp.ne.s32.totalorder %v1618, 0
        %vm3809 = vcmp.ne.s32.totalorder %v1629, 0
        %vm3810 = vcmp.ne.s32.totalorder %v1640, 0
        %vm3811 = vcmp.ne.s32.totalorder %v1651, 0
        %vm3812 = vcmp.ne.s32.totalorder %v1662, 0
        %vm3813 = vcmp.ne.s32.totalorder %v1673, 0
        %vm3814 = vcmp.ne.s32.totalorder %v1684, 0
        %vm3815 = vcmp.ne.s32.totalorder %v1695, 0
        %vm3816 = vcmp.ne.s32.totalorder %v1706, 0
        %vm3817 = vcmp.ne.s32.totalorder %v1717, 0
        %vm3818 = vcmp.ne.s32.totalorder %v1728, 0
        %vm3819 = vcmp.ne.s32.totalorder %v1739, 0
        %vm3820 = vcmp.ne.s32.totalorder %v1750, 0
        %vm3821 = vcmp.ne.s32.totalorder %v1761, 0
        %vm3822 = vcmp.ne.s32.totalorder %v1772, 0
        %vm3823 = vcmp.ne.s32.totalorder %v1783, 0
        %vm3824 = vcmp.ne.s32.totalorder %v1794, 0
        %vm3825 = vcmp.ne.s32.totalorder %v1805, 0
        %vm3826 = vcmp.ne.s32.totalorder %v1816, 0
        %vm3827 = vcmp.ne.s32.totalorder %v1827, 0
        %vm3828 = vcmp.ne.s32.totalorder %v1838, 0
        %vm3829 = vcmp.ne.s32.totalorder %v1849, 0
        %vm3830 = vcmp.ne.s32.totalorder %v1860, 0
        %vm3831 = vcmp.ne.s32.totalorder %v1871, 0
        %vm3832 = vcmp.ne.s32.totalorder %v1882, 0
        %vm3833 = vcmp.ne.s32.totalorder %v1893, 0
        %vm3834 = vcmp.ne.s32.totalorder %v1904, 0
        %vm3835 = vcmp.ne.s32.totalorder %v1915, 0
        %vm3836 = vcmp.ne.s32.totalorder %v1926, 0
        %vm3837 = vcmp.ne.s32.totalorder %v1937, 0
        %vm3838 = vcmp.ne.s32.totalorder %v1948, 0
        %vm3839 = vcmp.ne.s32.totalorder %v1959, 0
        %vm3840 = vcmp.ne.s32.totalorder %v1970, 0
        %vm3841 = vcmp.ne.s32.totalorder %v1981, 0
        %vm3842 = vcmp.ne.s32.totalorder %v1992, 0
        %vm3843 = vcmp.ne.s32.totalorder %v2003, 0
        %vm3844 = vcmp.ne.s32.totalorder %v2014, 0
        %vm3845 = vcmp.ne.s32.totalorder %v2025, 0
        %vm3846 = vcmp.ne.s32.totalorder %v2036, 0
        %vm3847 = vcmp.ne.s32.totalorder %v2047, 0
        %vm3848 = vcmp.ne.s32.totalorder %v2058, 0
        %vm3849 = vcmp.ne.s32.totalorder %v2069, 0
        %vm3850 = vcmp.ne.s32.totalorder %v2080, 0
        %vm3851 = vcmp.ne.s32.totalorder %v2091, 0
        %vm3852 = vcmp.ne.s32.totalorder %v2102, 0
        %vm3853 = vcmp.ne.s32.totalorder %v2113, 0
        %vm3854 = vcmp.ne.s32.totalorder %v2124, 0
        %vm3855 = vcmp.ne.s32.totalorder %v2135, 0
        %vm3856 = vcmp.ne.s32.totalorder %v2146, 0
        %vm3857 = vcmp.ne.s32.totalorder %v2157, 0
        %vm3858 = vcmp.ne.s32.totalorder %v2168, 0
        %vm3859 = vcmp.ne.s32.totalorder %v2179, 0
        %vm3860 = vcmp.ne.s32.totalorder %v2190, 0
        %vm3861 = vcmp.ne.s32.totalorder %v2201, 0
        %vm3862 = vcmp.ne.s32.totalorder %v2212, 0
        %vm3863 = vcmp.ne.s32.totalorder %v2223, 0
        %vm3864 = vcmp.ne.s32.totalorder %v2234, 0
        %vm3865 = vcmp.ne.s32.totalorder %v2245, 0
        %vm3866 = vcmp.ne.s32.totalorder %v2256, 0
        %vm3867 = vcmp.ne.s32.totalorder %v2267, 0
        %vm3868 = vcmp.ne.s32.totalorder %v2278, 0
        %vm3869 = vcmp.ne.s32.totalorder %v2289, 0
        %vm3870 = vcmp.ne.s32.totalorder %v2300, 0
        %vm3871 = vcmp.ne.s32.totalorder %v2311, 0
        %vm3872 = vcmp.ne.s32.totalorder %v2322, 0
        %vm3873 = vcmp.ne.s32.totalorder %v2333, 0
        %vm3874 = vcmp.ne.s32.totalorder %v2344, 0
        %vm3875 = vcmp.ne.s32.totalorder %v2355, 0
        %vm3876 = vcmp.ne.s32.totalorder %v2366, 0
        %vm3877 = vcmp.ne.s32.totalorder %v2377, 0
        %vm3878 = vcmp.ne.s32.totalorder %v2388, 0
        %vm3879 = vcmp.ne.s32.totalorder %v2399, 0
        %vm3880 = vcmp.ne.s32.totalorder %v2410, 0
        %vm3881 = vcmp.ne.s32.totalorder %v2421, 0
        %vm3882 = vcmp.ne.s32.totalorder %v2432, 0
        %vm3883 = vcmp.ne.s32.totalorder %v2443, 0
        %vm3884 = vcmp.ne.s32.totalorder %v2454, 0
        %vm3885 = vcmp.ne.s32.totalorder %v2465, 0
        %vm3886 = vcmp.ne.s32.totalorder %v2476, 0
        %vm3887 = vcmp.ne.s32.totalorder %v2487, 0
        %vm3888 = vcmp.ne.s32.totalorder %v2498, 0
        %vm3889 = vcmp.ne.s32.totalorder %v2509, 0
        %vm3890 = vcmp.ne.s32.totalorder %v2520, 0
        %vm3891 = vcmp.ne.s32.totalorder %v2531, 0
        %vm3892 = vcmp.ne.s32.totalorder %v2542, 0
        %vm3893 = vcmp.ne.s32.totalorder %v2553, 0
        %vm3894 = vcmp.ne.s32.totalorder %v2564, 0
        %vm3895 = vcmp.ne.s32.totalorder %v2575, 0
        %vm3896 = vcmp.ne.s32.totalorder %v2586, 0
        %vm3897 = vcmp.ne.s32.totalorder %v2597, 0
        %vm3898 = vcmp.ne.s32.totalorder %v2608, 0
        %vm3899 = vcmp.ne.s32.totalorder %v2619, 0
        %vm3900 = vcmp.ne.s32.totalorder %v2630, 0
        %vm3901 = vcmp.ne.s32.totalorder %v2641, 0
        %vm3902 = vcmp.ne.s32.totalorder %v2652, 0
        %vm3903 = vcmp.ne.s32.totalorder %v2663, 0
        %vm3904 = vcmp.ne.s32.totalorder %v2674, 0
        %vm3905 = vcmp.ne.s32.totalorder %v2685, 0
        %vm3906 = vcmp.ne.s32.totalorder %v2696, 0
        %vm3907 = vcmp.ne.s32.totalorder %v2707, 0
        %vm3908 = vcmp.ne.s32.totalorder %v2718, 0
        %vm3909 = vcmp.ne.s32.totalorder %v2729, 0
        %vm3910 = vcmp.ne.s32.totalorder %v2740, 0
        %vm3911 = vcmp.ne.s32.totalorder %v2751, 0
        %vm3912 = vcmp.ne.s32.totalorder %v2762, 0
        %vm3913 = vcmp.ne.s32.totalorder %v2773, 0
        %vm3914 = vcmp.ne.s32.totalorder %v2784, 0
        %vm3915 = vcmp.ne.s32.totalorder %v2795, 0
        %vm3916 = vcmp.ne.s32.totalorder %v2806, 0
        %vm3917 = vcmp.ne.s32.totalorder %v2817, 0
        %vm3918 = vcmp.ne.s32.totalorder %v2828, 0
        %vm3919 = vcmp.ne.s32.totalorder %v2839, 0
        %vm3920 = vcmp.ne.s32.totalorder %v2850, 0
        %vm3921 = vcmp.ne.s32.totalorder %v2861, 0
        %vm3922 = vcmp.ne.s32.totalorder %v2872, 0
        %vm3923 = vcmp.ne.s32.totalorder %v2883, 0
        %vm3924 = vcmp.ne.s32.totalorder %v2894, 0
        %vm3925 = vcmp.ne.s32.totalorder %v2905, 0
        %vm3926 = vcmp.ne.s32.totalorder %v2916, 0
        %vm3927 = vcmp.ne.s32.totalorder %v2927, 0
        %vm3928 = vcmp.ne.s32.totalorder %v2938, 0
        %vm3929 = vcmp.ne.s32.totalorder %v2949, 0
        %vm3930 = vcmp.ne.s32.totalorder %v2960, 0
        %vm3931 = vcmp.ne.s32.totalorder %v2971, 0
        %vm3932 = vcmp.ne.s32.totalorder %v2982, 0
        %vm3933 = vcmp.ne.s32.totalorder %v2993, 0
        %vm3934 = vcmp.ne.s32.totalorder %v3004, 0
        %vm3935 = vcmp.ne.s32.totalorder %v3015, 0
        %vm3936 = vcmp.ne.s32.totalorder %v3026, 0
        %vm3937 = vcmp.ne.s32.totalorder %v3037, 0
        %vm3938 = vcmp.ne.s32.totalorder %v3048, 0
        %vm3939 = vcmp.ne.s32.totalorder %v3059, 0
        %vm3940 = vcmp.ne.s32.totalorder %v3070, 0
        %vm3941 = vcmp.ne.s32.totalorder %v3081, 0
        %vm3942 = vcmp.ne.s32.totalorder %v3092, 0
        %vm3943 = vcmp.ne.s32.totalorder %v3103, 0
        %vm3944 = vcmp.ne.s32.totalorder %v3114, 0
        %vm3945 = vcmp.ne.s32.totalorder %v3125, 0
        %vm3946 = vcmp.ne.s32.totalorder %v3136, 0
        %vm3947 = vcmp.ne.s32.totalorder %v3147, 0
        %vm3948 = vcmp.ne.s32.totalorder %v3158, 0
        %vm3949 = vcmp.ne.s32.totalorder %v3169, 0
        %vm3950 = vcmp.ne.s32.totalorder %v3180, 0
        %vm3951 = vcmp.ne.s32.totalorder %v3191, 0
        %vm3952 = vcmp.ne.s32.totalorder %v3202, 0
        %vm3953 = vcmp.ne.s32.totalorder %v3213, 0
        %vm3954 = vcmp.ne.s32.totalorder %v3224, 0
        %vm3955 = vcmp.ne.s32.totalorder %v3235, 0
        %vm3956 = vcmp.ne.s32.totalorder %v3246, 0
        %vm3957 = vcmp.ne.s32.totalorder %v3257, 0
        %vm3958 = vcmp.ne.s32.totalorder %v3268, 0
        %vm3959 = vcmp.ne.s32.totalorder %v3279, 0
        %vm3960 = vcmp.ne.s32.totalorder %v3290, 0
        %vm3961 = vcmp.ne.s32.totalorder %v3301, 0
        %vm3962 = vcmp.ne.s32.totalorder %v3312, 0
        %vm3963 = vcmp.ne.s32.totalorder %v3323, 0
        %vm3964 = vcmp.ne.s32.totalorder %v3334, 0
        %vm3965 = vcmp.ne.s32.totalorder %v3345, 0
        %vm3966 = vcmp.ne.s32.totalorder %v3356, 0
        %vm3967 = vcmp.ne.s32.totalorder %v3367, 0
        %vm3968 = vcmp.ne.s32.totalorder %v3378, 0
        %vm3969 = vcmp.ne.s32.totalorder %v3389, 0
        %vm3970 = vcmp.ne.s32.totalorder %v3400, 0
        %vm3971 = vcmp.ne.s32.totalorder %v3411, 0
        %vm3972 = vcmp.ne.s32.totalorder %v3422, 0
        %vm3973 = vcmp.ne.s32.totalorder %v3433, 0
        %vm3974 = vcmp.ne.s32.totalorder %v3444, 0
        %vm3975 = vcmp.ne.s32.totalorder %v3455, 0
        %vm3976 = vcmp.ne.s32.totalorder %v3466, 0
        %vm3977 = vcmp.ne.s32.totalorder %v3477, 0
        %vm3978 = vcmp.ne.s32.totalorder %v3488, 0
        %vm3979 = vcmp.ne.s32.totalorder %v3499, 0
        %vm3980 = vcmp.ne.s32.totalorder %v3510, 0
        %vm3981 = vcmp.ne.s32.totalorder %v3521, 0
        %vm3982 = vcmp.ne.s32.totalorder %v3532, 0
        %vm3983 = vcmp.ne.s32.totalorder %v3543, 0
        %vm3984 = vcmp.ne.s32.totalorder %v3554, 0
        %vm3985 = vcmp.ne.s32.totalorder %v3565, 0
        %vm3986 = vcmp.ne.s32.totalorder %v3576, 0
        %vm3987 = vcmp.ne.s32.totalorder %v3587, 0
        %vm3988 = vcmp.ne.s32.totalorder %v3598, 0
        %vm3989 = vcmp.ne.s32.totalorder %v3609, 0
        %vm3990 = vcmp.ne.s32.totalorder %v3620, 0
        %vm3991 = vcmp.ne.s32.totalorder %v3631, 0
        %vm3992 = vcmp.ne.s32.totalorder %v3642, 0
        %vm3993 = vcmp.ne.s32.totalorder %v3653, 0
        %vm3994 = vcmp.ne.s32.totalorder %v3664, 0
        %vm3995 = vcmp.ne.s32.totalorder %v3675, 0
        %vm3996 = vcmp.ne.s32.totalorder %v3686, 0
        %vm3997 = vcmp.ne.s32.totalorder %v3697, 0
        %vm3998 = vcmp.ne.s32.totalorder %v3708, 0
        %vm3999 = vcmp.ne.s32.totalorder %v3719, 0
        %vm4000 = vcmp.ne.s32.totalorder %v3730, 0
        %vm4001 = vcmp.ne.s32.totalorder %v3741, 0
        %vm4002 = vcmp.ne.s32.totalorder %v3752, 0
        %vm4003 = vcmp.ne.s32.totalorder %v3763, 0
        %vm4004 = vcmp.lt.s32.totalorder %v1134, 0
        %vm4005 = vcmp.lt.s32.totalorder %v1145, 0
        %vm4006 = vcmp.lt.s32.totalorder %v1156, 0
        %vm4007 = vcmp.lt.s32.totalorder %v1167, 0
        %vm4008 = vcmp.lt.s32.totalorder %v1178, 0
        %vm4009 = vcmp.lt.s32.totalorder %v1189, 0
        %vm4010 = vcmp.lt.s32.totalorder %v1200, 0
        %vm4011 = vcmp.lt.s32.totalorder %v1211, 0
        %vm4012 = vcmp.lt.s32.totalorder %v1222, 0
        %vm4013 = vcmp.lt.s32.totalorder %v1233, 0
        %vm4014 = vcmp.lt.s32.totalorder %v1244, 0
        %vm4015 = vcmp.lt.s32.totalorder %v1255, 0
        %vm4016 = vcmp.lt.s32.totalorder %v1266, 0
        %vm4017 = vcmp.lt.s32.totalorder %v1277, 0
        %vm4018 = vcmp.lt.s32.totalorder %v1288, 0
        %vm4019 = vcmp.lt.s32.totalorder %v1299, 0
        %vm4020 = vcmp.lt.s32.totalorder %v1310, 0
        %vm4021 = vcmp.lt.s32.totalorder %v1321, 0
        %vm4022 = vcmp.lt.s32.totalorder %v1332, 0
        %vm4023 = vcmp.lt.s32.totalorder %v1343, 0
        %vm4024 = vcmp.lt.s32.totalorder %v1354, 0
        %vm4025 = vcmp.lt.s32.totalorder %v1365, 0
        %vm4026 = vcmp.lt.s32.totalorder %v1376, 0
        %vm4027 = vcmp.lt.s32.totalorder %v1387, 0
        %vm4028 = vcmp.lt.s32.totalorder %v1398, 0
        %vm4029 = vcmp.lt.s32.totalorder %v1409, 0
        %vm4030 = vcmp.lt.s32.totalorder %v1420, 0
        %vm4031 = vcmp.lt.s32.totalorder %v1431, 0
        %vm4032 = vcmp.lt.s32.totalorder %v1442, 0
        %vm4033 = vcmp.lt.s32.totalorder %v1453, 0
        %vm4034 = vcmp.lt.s32.totalorder %v1464, 0
        %vm4035 = vcmp.lt.s32.totalorder %v1475, 0
        %vm4036 = vcmp.lt.s32.totalorder %v1486, 0
        %vm4037 = vcmp.lt.s32.totalorder %v1497, 0
        %vm4038 = vcmp.lt.s32.totalorder %v1508, 0
        %vm4039 = vcmp.lt.s32.totalorder %v1519, 0
        %vm4040 = vcmp.lt.s32.totalorder %v1530, 0
        %vm4041 = vcmp.lt.s32.totalorder %v1541, 0
        %vm4042 = vcmp.lt.s32.totalorder %v1552, 0
        %vm4043 = vcmp.lt.s32.totalorder %v1563, 0
        %vm4044 = vcmp.lt.s32.totalorder %v1574, 0
        %vm4045 = vcmp.lt.s32.totalorder %v1585, 0
        %vm4046 = vcmp.lt.s32.totalorder %v1596, 0
        %vm4047 = vcmp.lt.s32.totalorder %v1607, 0
        %vm4048 = vcmp.lt.s32.totalorder %v1618, 0
        %vm4049 = vcmp.lt.s32.totalorder %v1629, 0
        %vm4050 = vcmp.lt.s32.totalorder %v1640, 0
        %vm4051 = vcmp.lt.s32.totalorder %v1651, 0
        %vm4052 = vcmp.lt.s32.totalorder %v1662, 0
        %vm4053 = vcmp.lt.s32.totalorder %v1673, 0
        %vm4054 = vcmp.lt.s32.totalorder %v1684, 0
        %vm4055 = vcmp.lt.s32.totalorder %v1695, 0
        %vm4056 = vcmp.lt.s32.totalorder %v1706, 0
        %vm4057 = vcmp.lt.s32.totalorder %v1717, 0
        %vm4058 = vcmp.lt.s32.totalorder %v1728, 0
        %vm4059 = vcmp.lt.s32.totalorder %v1739, 0
        %vm4060 = vcmp.lt.s32.totalorder %v1750, 0
        %vm4061 = vcmp.lt.s32.totalorder %v1761, 0
        %vm4062 = vcmp.lt.s32.totalorder %v1772, 0
        %vm4063 = vcmp.lt.s32.totalorder %v1783, 0
        %vm4064 = vcmp.lt.s32.totalorder %v1794, 0
        %vm4065 = vcmp.lt.s32.totalorder %v1805, 0
        %vm4066 = vcmp.lt.s32.totalorder %v1816, 0
        %vm4067 = vcmp.lt.s32.totalorder %v1827, 0
        %vm4068 = vcmp.lt.s32.totalorder %v1838, 0
        %vm4069 = vcmp.lt.s32.totalorder %v1849, 0
        %vm4070 = vcmp.lt.s32.totalorder %v1860, 0
        %vm4071 = vcmp.lt.s32.totalorder %v1871, 0
        %vm4072 = vcmp.lt.s32.totalorder %v1882, 0
        %vm4073 = vcmp.lt.s32.totalorder %v1893, 0
        %vm4074 = vcmp.lt.s32.totalorder %v1904, 0
        %vm4075 = vcmp.lt.s32.totalorder %v1915, 0
        %vm4076 = vcmp.lt.s32.totalorder %v1926, 0
        %vm4077 = vcmp.lt.s32.totalorder %v1937, 0
        %vm4078 = vcmp.lt.s32.totalorder %v1948, 0
        %vm4079 = vcmp.lt.s32.totalorder %v1959, 0
        %vm4080 = vcmp.lt.s32.totalorder %v1970, 0
        %vm4081 = vcmp.lt.s32.totalorder %v1981, 0
        %vm4082 = vcmp.lt.s32.totalorder %v1992, 0
        %vm4083 = vcmp.lt.s32.totalorder %v2003, 0
        %vm4084 = vcmp.lt.s32.totalorder %v2014, 0
        %vm4085 = vcmp.lt.s32.totalorder %v2025, 0
        %vm4086 = vcmp.lt.s32.totalorder %v2036, 0
        %vm4087 = vcmp.lt.s32.totalorder %v2047, 0
        %vm4088 = vcmp.lt.s32.totalorder %v2058, 0
        %vm4089 = vcmp.lt.s32.totalorder %v2069, 0
        %vm4090 = vcmp.lt.s32.totalorder %v2080, 0
        %vm4091 = vcmp.lt.s32.totalorder %v2091, 0
        %vm4092 = vcmp.lt.s32.totalorder %v2102, 0
        %vm4093 = vcmp.lt.s32.totalorder %v2113, 0
        %vm4094 = vcmp.lt.s32.totalorder %v2124, 0
        %vm4095 = vcmp.lt.s32.totalorder %v2135, 0
        %vm4096 = vcmp.lt.s32.totalorder %v2146, 0
        %vm4097 = vcmp.lt.s32.totalorder %v2157, 0
        %vm4098 = vcmp.lt.s32.totalorder %v2168, 0
        %vm4099 = vcmp.lt.s32.totalorder %v2179, 0
        %vm4100 = vcmp.lt.s32.totalorder %v2190, 0
        %vm4101 = vcmp.lt.s32.totalorder %v2201, 0
        %vm4102 = vcmp.lt.s32.totalorder %v2212, 0
        %vm4103 = vcmp.lt.s32.totalorder %v2223, 0
        %vm4104 = vcmp.lt.s32.totalorder %v2234, 0
        %vm4105 = vcmp.lt.s32.totalorder %v2245, 0
        %vm4106 = vcmp.lt.s32.totalorder %v2256, 0
        %vm4107 = vcmp.lt.s32.totalorder %v2267, 0
        %vm4108 = vcmp.lt.s32.totalorder %v2278, 0
        %vm4109 = vcmp.lt.s32.totalorder %v2289, 0
        %vm4110 = vcmp.lt.s32.totalorder %v2300, 0
        %vm4111 = vcmp.lt.s32.totalorder %v2311, 0
        %vm4112 = vcmp.lt.s32.totalorder %v2322, 0
        %vm4113 = vcmp.lt.s32.totalorder %v2333, 0
        %vm4114 = vcmp.lt.s32.totalorder %v2344, 0
        %vm4115 = vcmp.lt.s32.totalorder %v2355, 0
        %vm4116 = vcmp.lt.s32.totalorder %v2366, 0
        %vm4117 = vcmp.lt.s32.totalorder %v2377, 0
        %vm4118 = vcmp.lt.s32.totalorder %v2388, 0
        %vm4119 = vcmp.lt.s32.totalorder %v2399, 0
        %vm4120 = vcmp.lt.s32.totalorder %v2410, 0
        %vm4121 = vcmp.lt.s32.totalorder %v2421, 0
        %vm4122 = vcmp.lt.s32.totalorder %v2432, 0
        %vm4123 = vcmp.lt.s32.totalorder %v2443, 0
        %vm4124 = vcmp.lt.s32.totalorder %v2454, 0
        %vm4125 = vcmp.lt.s32.totalorder %v2465, 0
        %vm4126 = vcmp.lt.s32.totalorder %v2476, 0
        %vm4127 = vcmp.lt.s32.totalorder %v2487, 0
        %vm4128 = vcmp.lt.s32.totalorder %v2498, 0
        %vm4129 = vcmp.lt.s32.totalorder %v2509, 0
        %vm4130 = vcmp.lt.s32.totalorder %v2520, 0
        %vm4131 = vcmp.lt.s32.totalorder %v2531, 0
        %vm4132 = vcmp.lt.s32.totalorder %v2542, 0
        %vm4133 = vcmp.lt.s32.totalorder %v2553, 0
        %vm4134 = vcmp.lt.s32.totalorder %v2564, 0
        %vm4135 = vcmp.lt.s32.totalorder %v2575, 0
        %vm4136 = vcmp.lt.s32.totalorder %v2586, 0
        %vm4137 = vcmp.lt.s32.totalorder %v2597, 0
        %vm4138 = vcmp.lt.s32.totalorder %v2608, 0
        %vm4139 = vcmp.lt.s32.totalorder %v2619, 0
        %vm4140 = vcmp.lt.s32.totalorder %v2630, 0
        %vm4141 = vcmp.lt.s32.totalorder %v2641, 0
        %vm4142 = vcmp.lt.s32.totalorder %v2652, 0
        %vm4143 = vcmp.lt.s32.totalorder %v2663, 0
        %vm4144 = vcmp.lt.s32.totalorder %v2674, 0
        %vm4145 = vcmp.lt.s32.totalorder %v2685, 0
        %vm4146 = vcmp.lt.s32.totalorder %v2696, 0
        %vm4147 = vcmp.lt.s32.totalorder %v2707, 0
        %vm4148 = vcmp.lt.s32.totalorder %v2718, 0
        %vm4149 = vcmp.lt.s32.totalorder %v2729, 0
        %vm4150 = vcmp.lt.s32.totalorder %v2740, 0
        %vm4151 = vcmp.lt.s32.totalorder %v2751, 0
        %vm4152 = vcmp.lt.s32.totalorder %v2762, 0
        %vm4153 = vcmp.lt.s32.totalorder %v2773, 0
        %vm4154 = vcmp.lt.s32.totalorder %v2784, 0
        %vm4155 = vcmp.lt.s32.totalorder %v2795, 0
        %vm4156 = vcmp.lt.s32.totalorder %v2806, 0
        %vm4157 = vcmp.lt.s32.totalorder %v2817, 0
        %vm4158 = vcmp.lt.s32.totalorder %v2828, 0
        %vm4159 = vcmp.lt.s32.totalorder %v2839, 0
        %vm4160 = vcmp.lt.s32.totalorder %v2850, 0
        %vm4161 = vcmp.lt.s32.totalorder %v2861, 0
        %vm4162 = vcmp.lt.s32.totalorder %v2872, 0
        %vm4163 = vcmp.lt.s32.totalorder %v2883, 0
        %vm4164 = vcmp.lt.s32.totalorder %v2894, 0
        %vm4165 = vcmp.lt.s32.totalorder %v2905, 0
        %vm4166 = vcmp.lt.s32.totalorder %v2916, 0
        %vm4167 = vcmp.lt.s32.totalorder %v2927, 0
        %vm4168 = vcmp.lt.s32.totalorder %v2938, 0
        %vm4169 = vcmp.lt.s32.totalorder %v2949, 0
        %vm4170 = vcmp.lt.s32.totalorder %v2960, 0
        %vm4171 = vcmp.lt.s32.totalorder %v2971, 0
        %vm4172 = vcmp.lt.s32.totalorder %v2982, 0
        %vm4173 = vcmp.lt.s32.totalorder %v2993, 0
        %vm4174 = vcmp.lt.s32.totalorder %v3004, 0
        %vm4175 = vcmp.lt.s32.totalorder %v3015, 0
        %vm4176 = vcmp.lt.s32.totalorder %v3026, 0
        %vm4177 = vcmp.lt.s32.totalorder %v3037, 0
        %vm4178 = vcmp.lt.s32.totalorder %v3048, 0
        %vm4179 = vcmp.lt.s32.totalorder %v3059, 0
        %vm4180 = vcmp.lt.s32.totalorder %v3070, 0
        %vm4181 = vcmp.lt.s32.totalorder %v3081, 0
        %vm4182 = vcmp.lt.s32.totalorder %v3092, 0
        %vm4183 = vcmp.lt.s32.totalorder %v3103, 0
        %vm4184 = vcmp.lt.s32.totalorder %v3114, 0
        %vm4185 = vcmp.lt.s32.totalorder %v3125, 0
        %vm4186 = vcmp.lt.s32.totalorder %v3136, 0
        %vm4187 = vcmp.lt.s32.totalorder %v3147, 0
        %vm4188 = vcmp.lt.s32.totalorder %v3158, 0
        %vm4189 = vcmp.lt.s32.totalorder %v3169, 0
        %vm4190 = vcmp.lt.s32.totalorder %v3180, 0
        %vm4191 = vcmp.lt.s32.totalorder %v3191, 0
        %vm4192 = vcmp.lt.s32.totalorder %v3202, 0
        %vm4193 = vcmp.lt.s32.totalorder %v3213, 0
        %vm4194 = vcmp.lt.s32.totalorder %v3224, 0
        %vm4195 = vcmp.lt.s32.totalorder %v3235, 0
        %vm4196 = vcmp.lt.s32.totalorder %v3246, 0
        %vm4197 = vcmp.lt.s32.totalorder %v3257, 0
        %vm4198 = vcmp.lt.s32.totalorder %v3268, 0
        %vm4199 = vcmp.lt.s32.totalorder %v3279, 0
        %vm4200 = vcmp.lt.s32.totalorder %v3290, 0
        %vm4201 = vcmp.lt.s32.totalorder %v3301, 0
        %vm4202 = vcmp.lt.s32.totalorder %v3312, 0
        %vm4203 = vcmp.lt.s32.totalorder %v3323, 0
        %vm4204 = vcmp.lt.s32.totalorder %v3334, 0
        %vm4205 = vcmp.lt.s32.totalorder %v3345, 0
        %vm4206 = vcmp.lt.s32.totalorder %v3356, 0
        %vm4207 = vcmp.lt.s32.totalorder %v3367, 0
        %vm4208 = vcmp.lt.s32.totalorder %v3378, 0
        %vm4209 = vcmp.lt.s32.totalorder %v3389, 0
        %vm4210 = vcmp.lt.s32.totalorder %v3400, 0
        %vm4211 = vcmp.lt.s32.totalorder %v3411, 0
        %vm4212 = vcmp.lt.s32.totalorder %v3422, 0
        %vm4213 = vcmp.lt.s32.totalorder %v3433, 0
        %vm4214 = vcmp.lt.s32.totalorder %v3444, 0
        %vm4215 = vcmp.lt.s32.totalorder %v3455, 0
        %vm4216 = vcmp.lt.s32.totalorder %v3466, 0
        %vm4217 = vcmp.lt.s32.totalorder %v3477, 0
        %vm4218 = vcmp.lt.s32.totalorder %v3488, 0
        %vm4219 = vcmp.lt.s32.totalorder %v3499, 0
        %vm4220 = vcmp.lt.s32.totalorder %v3510, 0
        %vm4221 = vcmp.lt.s32.totalorder %v3521, 0
        %vm4222 = vcmp.lt.s32.totalorder %v3532, 0
        %vm4223 = vcmp.lt.s32.totalorder %v3543, 0
        %vm4224 = vcmp.lt.s32.totalorder %v3554, 0
        %vm4225 = vcmp.lt.s32.totalorder %v3565, 0
        %vm4226 = vcmp.lt.s32.totalorder %v3576, 0
        %vm4227 = vcmp.lt.s32.totalorder %v3587, 0
        %vm4228 = vcmp.lt.s32.totalorder %v3598, 0
        %vm4229 = vcmp.lt.s32.totalorder %v3609, 0
        %vm4230 = vcmp.lt.s32.totalorder %v3620, 0
        %vm4231 = vcmp.lt.s32.totalorder %v3631, 0
        %vm4232 = vcmp.lt.s32.totalorder %v3642, 0
        %vm4233 = vcmp.lt.s32.totalorder %v3653, 0
        %vm4234 = vcmp.lt.s32.totalorder %v3664, 0
        %vm4235 = vcmp.lt.s32.totalorder %v3675, 0
        %vm4236 = vcmp.lt.s32.totalorder %v3686, 0
        %vm4237 = vcmp.lt.s32.totalorder %v3697, 0
        %vm4238 = vcmp.lt.s32.totalorder %v3708, 0
        %vm4239 = vcmp.lt.s32.totalorder %v3719, 0
        %vm4240 = vcmp.lt.s32.totalorder %v3730, 0
        %vm4241 = vcmp.lt.s32.totalorder %v3741, 0
        %vm4242 = vcmp.lt.s32.totalorder %v3752, 0
        %vm4243 = vcmp.lt.s32.totalorder %v3763, 0
        %vm4244 = vmand %vm4004, %vm3764
        %vm4245 = vmand %vm4005, %vm3765
        %vm4246 = vmand %vm4006, %vm3766
        %vm4247 = vmand %vm4007, %vm3767
        %vm4248 = vmand %vm4008, %vm3768
        %vm4249 = vmand %vm4009, %vm3769
        %vm4250 = vmand %vm4010, %vm3770
        %vm4251 = vmand %vm4011, %vm3771
        %vm4252 = vmand %vm4012, %vm3772
        %vm4253 = vmand %vm4013, %vm3773
        %vm4254 = vmand %vm4014, %vm3774
        %vm4255 = vmand %vm4015, %vm3775
        %vm4256 = vmand %vm4016, %vm3776
        %vm4257 = vmand %vm4017, %vm3777
        %vm4258 = vmand %vm4018, %vm3778
        %vm4259 = vmand %vm4019, %vm3779
        %vm4260 = vmand %vm4020, %vm3780
        %vm4261 = vmand %vm4021, %vm3781
        %vm4262 = vmand %vm4022, %vm3782
        %vm4263 = vmand %vm4023, %vm3783
        %vm4264 = vmand %vm4024, %vm3784
        %vm4265 = vmand %vm4025, %vm3785
        %vm4266 = vmand %vm4026, %vm3786
        %vm4267 = vmand %vm4027, %vm3787
        %vm4268 = vmand %vm4028, %vm3788
        %vm4269 = vmand %vm4029, %vm3789
        %vm4270 = vmand %vm4030, %vm3790
        %vm4271 = vmand %vm4031, %vm3791
        %vm4272 = vmand %vm4032, %vm3792
        %vm4273 = vmand %vm4033, %vm3793
        %vm4274 = vmand %vm4034, %vm3794
        %vm4275 = vmand %vm4035, %vm3795
        %vm4276 = vmand %vm4036, %vm3796
        %vm4277 = vmand %vm4037, %vm3797
        %vm4278 = vmand %vm4038, %vm3798
        %vm4279 = vmand %vm4039, %vm3799
        %vm4280 = vmand %vm4040, %vm3800
        %vm4281 = vmand %vm4041, %vm3801
        %vm4282 = vmand %vm4042, %vm3802
        %vm4283 = vmand %vm4043, %vm3803
        %vm4284 = vmand %vm4044, %vm3804
        %vm4285 = vmand %vm4045, %vm3805
        %vm4286 = vmand %vm4046, %vm3806
        %vm4287 = vmand %vm4047, %vm3807
        %vm4288 = vmand %vm4048, %vm3808
        %vm4289 = vmand %vm4049, %vm3809
        %vm4290 = vmand %vm4050, %vm3810
        %vm4291 = vmand %vm4051, %vm3811
        %vm4292 = vmand %vm4052, %vm3812
        %vm4293 = vmand %vm4053, %vm3813
        %vm4294 = vmand %vm4054, %vm3814
        %vm4295 = vmand %vm4055, %vm3815
        %vm4296 = vmand %vm4056, %vm3816
        %vm4297 = vmand %vm4057, %vm3817
        %vm4298 = vmand %vm4058, %vm3818
        %vm4299 = vmand %vm4059, %vm3819
        %vm4300 = vmand %vm4060, %vm3820
        %vm4301 = vmand %vm4061, %vm3821
        %vm4302 = vmand %vm4062, %vm3822
        %vm4303 = vmand %vm4063, %vm3823
        %vm4304 = vmand %vm4064, %vm3824
        %vm4305 = vmand %vm4065, %vm3825
        %vm4306 = vmand %vm4066, %vm3826
        %vm4307 = vmand %vm4067, %vm3827
        %vm4308 = vmand %vm4068, %vm3828
        %vm4309 = vmand %vm4069, %vm3829
        %vm4310 = vmand %vm4070, %vm3830
        %vm4311 = vmand %vm4071, %vm3831
        %vm4312 = vmand %vm4072, %vm3832
        %vm4313 = vmand %vm4073, %vm3833
        %vm4314 = vmand %vm4074, %vm3834
        %vm4315 = vmand %vm4075, %vm3835
        %vm4316 = vmand %vm4076, %vm3836
        %vm4317 = vmand %vm4077, %vm3837
        %vm4318 = vmand %vm4078, %vm3838
        %vm4319 = vmand %vm4079, %vm3839
        %vm4320 = vmand %vm4080, %vm3840
        %vm4321 = vmand %vm4081, %vm3841
        %vm4322 = vmand %vm4082, %vm3842
        %vm4323 = vmand %vm4083, %vm3843
        %vm4324 = vmand %vm4084, %vm3844
        %vm4325 = vmand %vm4085, %vm3845
        %vm4326 = vmand %vm4086, %vm3846
        %vm4327 = vmand %vm4087, %vm3847
        %vm4328 = vmand %vm4088, %vm3848
        %vm4329 = vmand %vm4089, %vm3849
        %vm4330 = vmand %vm4090, %vm3850
        %vm4331 = vmand %vm4091, %vm3851
        %vm4332 = vmand %vm4092, %vm3852
        %vm4333 = vmand %vm4093, %vm3853
        %vm4334 = vmand %vm4094, %vm3854
        %vm4335 = vmand %vm4095, %vm3855
        %vm4336 = vmand %vm4096, %vm3856
        %vm4337 = vmand %vm4097, %vm3857
        %vm4338 = vmand %vm4098, %vm3858
        %vm4339 = vmand %vm4099, %vm3859
        %vm4340 = vmand %vm4100, %vm3860
        %vm4341 = vmand %vm4101, %vm3861
        %vm4342 = vmand %vm4102, %vm3862
        %vm4343 = vmand %vm4103, %vm3863
        %vm4344 = vmand %vm4104, %vm3864
        %vm4345 = vmand %vm4105, %vm3865
        %vm4346 = vmand %vm4106, %vm3866
        %vm4347 = vmand %vm4107, %vm3867
        %vm4348 = vmand %vm4108, %vm3868
        %vm4349 = vmand %vm4109, %vm3869
        %vm4350 = vmand %vm4110, %vm3870
        %vm4351 = vmand %vm4111, %vm3871
        %vm4352 = vmand %vm4112, %vm3872
        %vm4353 = vmand %vm4113, %vm3873
        %vm4354 = vmand %vm4114, %vm3874
        %vm4355 = vmand %vm4115, %vm3875
        %vm4356 = vmand %vm4116, %vm3876
        %vm4357 = vmand %vm4117, %vm3877
        %vm4358 = vmand %vm4118, %vm3878
        %vm4359 = vmand %vm4119, %vm3879
        %vm4360 = vmand %vm4120, %vm3880
        %vm4361 = vmand %vm4121, %vm3881
        %vm4362 = vmand %vm4122, %vm3882
        %vm4363 = vmand %vm4123, %vm3883
        %vm4364 = vmand %vm4124, %vm3884
        %vm4365 = vmand %vm4125, %vm3885
        %vm4366 = vmand %vm4126, %vm3886
        %vm4367 = vmand %vm4127, %vm3887
        %vm4368 = vmand %vm4128, %vm3888
        %vm4369 = vmand %vm4129, %vm3889
        %vm4370 = vmand %vm4130, %vm3890
        %vm4371 = vmand %vm4131, %vm3891
        %vm4372 = vmand %vm4132, %vm3892
        %vm4373 = vmand %vm4133, %vm3893
        %vm4374 = vmand %vm4134, %vm3894
        %vm4375 = vmand %vm4135, %vm3895
        %vm4376 = vmand %vm4136, %vm3896
        %vm4377 = vmand %vm4137, %vm3897
        %vm4378 = vmand %vm4138, %vm3898
        %vm4379 = vmand %vm4139, %vm3899
        %vm4380 = vmand %vm4140, %vm3900
        %vm4381 = vmand %vm4141, %vm3901
        %vm4382 = vmand %vm4142, %vm3902
        %vm4383 = vmand %vm4143, %vm3903
        %vm4384 = vmand %vm4144, %vm3904
        %vm4385 = vmand %vm4145, %vm3905
        %vm4386 = vmand %vm4146, %vm3906
        %vm4387 = vmand %vm4147, %vm3907
        %vm4388 = vmand %vm4148, %vm3908
        %vm4389 = vmand %vm4149, %vm3909
        %vm4390 = vmand %vm4150, %vm3910
        %vm4391 = vmand %vm4151, %vm3911
        %vm4392 = vmand %vm4152, %vm3912
        %vm4393 = vmand %vm4153, %vm3913
        %vm4394 = vmand %vm4154, %vm3914
        %vm4395 = vmand %vm4155, %vm3915
        %vm4396 = vmand %vm4156, %vm3916
        %vm4397 = vmand %vm4157, %vm3917
        %vm4398 = vmand %vm4158, %vm3918
        %vm4399 = vmand %vm4159, %vm3919
        %vm4400 = vmand %vm4160, %vm3920
        %vm4401 = vmand %vm4161, %vm3921
        %vm4402 = vmand %vm4162, %vm3922
        %vm4403 = vmand %vm4163, %vm3923
        %vm4404 = vmand %vm4164, %vm3924
        %vm4405 = vmand %vm4165, %vm3925
        %vm4406 = vmand %vm4166, %vm3926
        %vm4407 = vmand %vm4167, %vm3927
        %vm4408 = vmand %vm4168, %vm3928
        %vm4409 = vmand %vm4169, %vm3929
        %vm4410 = vmand %vm4170, %vm3930
        %vm4411 = vmand %vm4171, %vm3931
        %vm4412 = vmand %vm4172, %vm3932
        %vm4413 = vmand %vm4173, %vm3933
        %vm4414 = vmand %vm4174, %vm3934
        %vm4415 = vmand %vm4175, %vm3935
        %vm4416 = vmand %vm4176, %vm3936
        %vm4417 = vmand %vm4177, %vm3937
        %vm4418 = vmand %vm4178, %vm3938
        %vm4419 = vmand %vm4179, %vm3939
        %vm4420 = vmand %vm4180, %vm3940
        %vm4421 = vmand %vm4181, %vm3941
        %vm4422 = vmand %vm4182, %vm3942
        %vm4423 = vmand %vm4183, %vm3943
        %vm4424 = vmand %vm4184, %vm3944
        %vm4425 = vmand %vm4185, %vm3945
        %vm4426 = vmand %vm4186, %vm3946
        %vm4427 = vmand %vm4187, %vm3947
        %vm4428 = vmand %vm4188, %vm3948
        %vm4429 = vmand %vm4189, %vm3949
        %vm4430 = vmand %vm4190, %vm3950
        %vm4431 = vmand %vm4191, %vm3951
        %vm4432 = vmand %vm4192, %vm3952
        %vm4433 = vmand %vm4193, %vm3953
        %vm4434 = vmand %vm4194, %vm3954
        %vm4435 = vmand %vm4195, %vm3955
        %vm4436 = vmand %vm4196, %vm3956
        %vm4437 = vmand %vm4197, %vm3957
        %vm4438 = vmand %vm4198, %vm3958
        %vm4439 = vmand %vm4199, %vm3959
        %vm4440 = vmand %vm4200, %vm3960
        %vm4441 = vmand %vm4201, %vm3961
        %vm4442 = vmand %vm4202, %vm3962
        %vm4443 = vmand %vm4203, %vm3963
        %vm4444 = vmand %vm4204, %vm3964
        %vm4445 = vmand %vm4205, %vm3965
        %vm4446 = vmand %vm4206, %vm3966
        %vm4447 = vmand %vm4207, %vm3967
        %vm4448 = vmand %vm4208, %vm3968
        %vm4449 = vmand %vm4209, %vm3969
        %vm4450 = vmand %vm4210, %vm3970
        %vm4451 = vmand %vm4211, %vm3971
        %vm4452 = vmand %vm4212, %vm3972
        %vm4453 = vmand %vm4213, %vm3973
        %vm4454 = vmand %vm4214, %vm3974
        %vm4455 = vmand %vm4215, %vm3975
        %vm4456 = vmand %vm4216, %vm3976
        %vm4457 = vmand %vm4217, %vm3977
        %vm4458 = vmand %vm4218, %vm3978
        %vm4459 = vmand %vm4219, %vm3979
        %vm4460 = vmand %vm4220, %vm3980
        %vm4461 = vmand %vm4221, %vm3981
        %vm4462 = vmand %vm4222, %vm3982
        %vm4463 = vmand %vm4223, %vm3983
        %vm4464 = vmand %vm4224, %vm3984
        %vm4465 = vmand %vm4225, %vm3985
        %vm4466 = vmand %vm4226, %vm3986
        %vm4467 = vmand %vm4227, %vm3987
        %vm4468 = vmand %vm4228, %vm3988
        %vm4469 = vmand %vm4229, %vm3989
        %vm4470 = vmand %vm4230, %vm3990
        %vm4471 = vmand %vm4231, %vm3991
        %vm4472 = vmand %vm4232, %vm3992
        %vm4473 = vmand %vm4233, %vm3993
        %vm4474 = vmand %vm4234, %vm3994
        %vm4475 = vmand %vm4235, %vm3995
        %vm4476 = vmand %vm4236, %vm3996
        %vm4477 = vmand %vm4237, %vm3997
        %vm4478 = vmand %vm4238, %vm3998
        %vm4479 = vmand %vm4239, %vm3999
        %vm4480 = vmand %vm4240, %vm4000
        %vm4481 = vmand %vm4241, %vm4001
        %vm4482 = vmand %vm4242, %vm4002
        %vm4483 = vmand %vm4243, %vm4003
        %v4484 = vadd.s32 %v1134, 15
        %v4485 = vadd.s32 %v1145, 15
        %v4486 = vadd.s32 %v1156, 15
        %v4487 = vadd.s32 %v1167, 15
        %v4488 = vadd.s32 %v1178, 15
        %v4489 = vadd.s32 %v1189, 15
        %v4490 = vadd.s32 %v1200, 15
        %v4491 = vadd.s32 %v1211, 15
        %v4492 = vadd.s32 %v1222, 15
        %v4493 = vadd.s32 %v1233, 15
        %v4494 = vadd.s32 %v1244, 15
        %v4495 = vadd.s32 %v1255, 15
        %v4496 = vadd.s32 %v1266, 15
        %v4497 = vadd.s32 %v1277, 15
        %v4498 = vadd.s32 %v1288, 15
        %v4499 = vadd.s32 %v1299, 15
        %v4500 = vadd.s32 %v1310, 15
        %v4501 = vadd.s32 %v1321, 15
        %v4502 = vadd.s32 %v1332, 15
        %v4503 = vadd.s32 %v1343, 15
        %v4504 = vadd.s32 %v1354, 15
        %v4505 = vadd.s32 %v1365, 15
        %v4506 = vadd.s32 %v1376, 15
        %v4507 = vadd.s32 %v1387, 15
        %v4508 = vadd.s32 %v1398, 15
        %v4509 = vadd.s32 %v1409, 15
        %v4510 = vadd.s32 %v1420, 15
        %v4511 = vadd.s32 %v1431, 15
        %v4512 = vadd.s32 %v1442, 15
        %v4513 = vadd.s32 %v1453, 15
        %v4514 = vadd.s32 %v1464, 15
        %v4515 = vadd.s32 %v1475, 15
        %v4516 = vadd.s32 %v1486, 15
        %v4517 = vadd.s32 %v1497, 15
        %v4518 = vadd.s32 %v1508, 15
        %v4519 = vadd.s32 %v1519, 15
        %v4520 = vadd.s32 %v1530, 15
        %v4521 = vadd.s32 %v1541, 15
        %v4522 = vadd.s32 %v1552, 15
        %v4523 = vadd.s32 %v1563, 15
        %v4524 = vadd.s32 %v1574, 15
        %v4525 = vadd.s32 %v1585, 15
        %v4526 = vadd.s32 %v1596, 15
        %v4527 = vadd.s32 %v1607, 15
        %v4528 = vadd.s32 %v1618, 15
        %v4529 = vadd.s32 %v1629, 15
        %v4530 = vadd.s32 %v1640, 15
        %v4531 = vadd.s32 %v1651, 15
        %v4532 = vadd.s32 %v1662, 15
        %v4533 = vadd.s32 %v1673, 15
        %v4534 = vadd.s32 %v1684, 15
        %v4535 = vadd.s32 %v1695, 15
        %v4536 = vadd.s32 %v1706, 15
        %v4537 = vadd.s32 %v1717, 15
        %v4538 = vadd.s32 %v1728, 15
        %v4539 = vadd.s32 %v1739, 15
        %v4540 = vadd.s32 %v1750, 15
        %v4541 = vadd.s32 %v1761, 15
        %v4542 = vadd.s32 %v1772, 15
        %v4543 = vadd.s32 %v1783, 15
        %v4544 = vadd.s32 %v1794, 15
        %v4545 = vadd.s32 %v1805, 15
        %v4546 = vadd.s32 %v1816, 15
        %v4547 = vadd.s32 %v1827, 15
        %v4548 = vadd.s32 %v1838, 15
        %v4549 = vadd.s32 %v1849, 15
        %v4550 = vadd.s32 %v1860, 15
        %v4551 = vadd.s32 %v1871, 15
        %v4552 = vadd.s32 %v1882, 15
        %v4553 = vadd.s32 %v1893, 15
        %v4554 = vadd.s32 %v1904, 15
        %v4555 = vadd.s32 %v1915, 15
        %v4556 = vadd.s32 %v1926, 15
        %v4557 = vadd.s32 %v1937, 15
        %v4558 = vadd.s32 %v1948, 15
        %v4559 = vadd.s32 %v1959, 15
        %v4560 = vadd.s32 %v1970, 15
        %v4561 = vadd.s32 %v1981, 15
        %v4562 = vadd.s32 %v1992, 15
        %v4563 = vadd.s32 %v2003, 15
        %v4564 = vadd.s32 %v2014, 15
        %v4565 = vadd.s32 %v2025, 15
        %v4566 = vadd.s32 %v2036, 15
        %v4567 = vadd.s32 %v2047, 15
        %v4568 = vadd.s32 %v2058, 15
        %v4569 = vadd.s32 %v2069, 15
        %v4570 = vadd.s32 %v2080, 15
        %v4571 = vadd.s32 %v2091, 15
        %v4572 = vadd.s32 %v2102, 15
        %v4573 = vadd.s32 %v2113, 15
        %v4574 = vadd.s32 %v2124, 15
        %v4575 = vadd.s32 %v2135, 15
        %v4576 = vadd.s32 %v2146, 15
        %v4577 = vadd.s32 %v2157, 15
        %v4578 = vadd.s32 %v2168, 15
        %v4579 = vadd.s32 %v2179, 15
        %v4580 = vadd.s32 %v2190, 15
        %v4581 = vadd.s32 %v2201, 15
        %v4582 = vadd.s32 %v2212, 15
        %v4583 = vadd.s32 %v2223, 15
        %v4584 = vadd.s32 %v2234, 15
        %v4585 = vadd.s32 %v2245, 15
        %v4586 = vadd.s32 %v2256, 15
        %v4587 = vadd.s32 %v2267, 15
        %v4588 = vadd.s32 %v2278, 15
        %v4589 = vadd.s32 %v2289, 15
        %v4590 = vadd.s32 %v2300, 15
        %v4591 = vadd.s32 %v2311, 15
        %v4592 = vadd.s32 %v2322, 15
        %v4593 = vadd.s32 %v2333, 15
        %v4594 = vadd.s32 %v2344, 15
        %v4595 = vadd.s32 %v2355, 15
        %v4596 = vadd.s32 %v2366, 15
        %v4597 = vadd.s32 %v2377, 15
        %v4598 = vadd.s32 %v2388, 15
        %v4599 = vadd.s32 %v2399, 15
        %v4600 = vadd.s32 %v2410, 15
        %v4601 = vadd.s32 %v2421, 15
        %v4602 = vadd.s32 %v2432, 15
        %v4603 = vadd.s32 %v2443, 15
        %v4604 = vadd.s32 %v2454, 15
        %v4605 = vadd.s32 %v2465, 15
        %v4606 = vadd.s32 %v2476, 15
        %v4607 = vadd.s32 %v2487, 15
        %v4608 = vadd.s32 %v2498, 15
        %v4609 = vadd.s32 %v2509, 15
        %v4610 = vadd.s32 %v2520, 15
        %v4611 = vadd.s32 %v2531, 15
        %v4612 = vadd.s32 %v2542, 15
        %v4613 = vadd.s32 %v2553, 15
        %v4614 = vadd.s32 %v2564, 15
        %v4615 = vadd.s32 %v2575, 15
        %v4616 = vadd.s32 %v2586, 15
        %v4617 = vadd.s32 %v2597, 15
        %v4618 = vadd.s32 %v2608, 15
        %v4619 = vadd.s32 %v2619, 15
        %v4620 = vadd.s32 %v2630, 15
        %v4621 = vadd.s32 %v2641, 15
        %v4622 = vadd.s32 %v2652, 15
        %v4623 = vadd.s32 %v2663, 15
        %v4624 = vadd.s32 %v2674, 15
        %v4625 = vadd.s32 %v2685, 15
        %v4626 = vadd.s32 %v2696, 15
        %v4627 = vadd.s32 %v2707, 15
        %v4628 = vadd.s32 %v2718, 15
        %v4629 = vadd.s32 %v2729, 15
        %v4630 = vadd.s32 %v2740, 15
        %v4631 = vadd.s32 %v2751, 15
        %v4632 = vadd.s32 %v2762, 15
        %v4633 = vadd.s32 %v2773, 15
        %v4634 = vadd.s32 %v2784, 15
        %v4635 = vadd.s32 %v2795, 15
        %v4636 = vadd.s32 %v2806, 15
        %v4637 = vadd.s32 %v2817, 15
        %v4638 = vadd.s32 %v2828, 15
        %v4639 = vadd.s32 %v2839, 15
        %v4640 = vadd.s32 %v2850, 15
        %v4641 = vadd.s32 %v2861, 15
        %v4642 = vadd.s32 %v2872, 15
        %v4643 = vadd.s32 %v2883, 15
        %v4644 = vadd.s32 %v2894, 15
        %v4645 = vadd.s32 %v2905, 15
        %v4646 = vadd.s32 %v2916, 15
        %v4647 = vadd.s32 %v2927, 15
        %v4648 = vadd.s32 %v2938, 15
        %v4649 = vadd.s32 %v2949, 15
        %v4650 = vadd.s32 %v2960, 15
        %v4651 = vadd.s32 %v2971, 15
        %v4652 = vadd.s32 %v2982, 15
        %v4653 = vadd.s32 %v2993, 15
        %v4654 = vadd.s32 %v3004, 15
        %v4655 = vadd.s32 %v3015, 15
        %v4656 = vadd.s32 %v3026, 15
        %v4657 = vadd.s32 %v3037, 15
        %v4658 = vadd.s32 %v3048, 15
        %v4659 = vadd.s32 %v3059, 15
        %v4660 = vadd.s32 %v3070, 15
        %v4661 = vadd.s32 %v3081, 15
        %v4662 = vadd.s32 %v3092, 15
        %v4663 = vadd.s32 %v3103, 15
        %v4664 = vadd.s32 %v3114, 15
        %v4665 = vadd.s32 %v3125, 15
        %v4666 = vadd.s32 %v3136, 15
        %v4667 = vadd.s32 %v3147, 15
        %v4668 = vadd.s32 %v3158, 15
        %v4669 = vadd.s32 %v3169, 15
        %v4670 = vadd.s32 %v3180, 15
        %v4671 = vadd.s32 %v3191, 15
        %v4672 = vadd.s32 %v3202, 15
        %v4673 = vadd.s32 %v3213, 15
        %v4674 = vadd.s32 %v3224, 15
        %v4675 = vadd.s32 %v3235, 15
        %v4676 = vadd.s32 %v3246, 15
        %v4677 = vadd.s32 %v3257, 15
        %v4678 = vadd.s32 %v3268, 15
        %v4679 = vadd.s32 %v3279, 15
        %v4680 = vadd.s32 %v3290, 15
        %v4681 = vadd.s32 %v3301, 15
        %v4682 = vadd.s32 %v3312, 15
        %v4683 = vadd.s32 %v3323, 15
        %v4684 = vadd.s32 %v3334, 15
        %v4685 = vadd.s32 %v3345, 15
        %v4686 = vadd.s32 %v3356, 15
        %v4687 = vadd.s32 %v3367, 15
        %v4688 = vadd.s32 %v3378, 15
        %v4689 = vadd.s32 %v3389, 15
        %v4690 = vadd.s32 %v3400, 15
        %v4691 = vadd.s32 %v3411, 15
        %v4692 = vadd.s32 %v3422, 15
        %v4693 = vadd.s32 %v3433, 15
        %v4694 = vadd.s32 %v3444, 15
        %v4695 = vadd.s32 %v3455, 15
        %v4696 = vadd.s32 %v3466, 15
        %v4697 = vadd.s32 %v3477, 15
        %v4698 = vadd.s32 %v3488, 15
        %v4699 = vadd.s32 %v3499, 15
        %v4700 = vadd.s32 %v3510, 15
        %v4701 = vadd.s32 %v3521, 15
        %v4702 = vadd.s32 %v3532, 15
        %v4703 = vadd.s32 %v3543, 15
        %v4704 = vadd.s32 %v3554, 15
        %v4705 = vadd.s32 %v3565, 15
        %v4706 = vadd.s32 %v3576, 15
        %v4707 = vadd.s32 %v3587, 15
        %v4708 = vadd.s32 %v3598, 15
        %v4709 = vadd.s32 %v3609, 15
        %v4710 = vadd.s32 %v3620, 15
        %v4711 = vadd.s32 %v3631, 15
        %v4712 = vadd.s32 %v3642, 15
        %v4713 = vadd.s32 %v3653, 15
        %v4714 = vadd.s32 %v3664, 15
        %v4715 = vadd.s32 %v3675, 15
        %v4716 = vadd.s32 %v3686, 15
        %v4717 = vadd.s32 %v3697, 15
        %v4718 = vadd.s32 %v3708, 15
        %v4719 = vadd.s32 %v3719, 15
        %v4720 = vadd.s32 %v3730, 15
        %v4721 = vadd.s32 %v3741, 15
        %v4722 = vadd.s32 %v3752, 15
        %v4723 = vadd.s32 %v3763, 15
        %v4724 = vsel %vm4244, %v4484, %v1134
        %v4725 = vsel %vm4245, %v4485, %v1145
        %v4726 = vsel %vm4246, %v4486, %v1156
        %v4727 = vsel %vm4247, %v4487, %v1167
        %v4728 = vsel %vm4248, %v4488, %v1178
        %v4729 = vsel %vm4249, %v4489, %v1189
        %v4730 = vsel %vm4250, %v4490, %v1200
        %v4731 = vsel %vm4251, %v4491, %v1211
        %v4732 = vsel %vm4252, %v4492, %v1222
        %v4733 = vsel %vm4253, %v4493, %v1233
        %v4734 = vsel %vm4254, %v4494, %v1244
        %v4735 = vsel %vm4255, %v4495, %v1255
        %v4736 = vsel %vm4256, %v4496, %v1266
        %v4737 = vsel %vm4257, %v4497, %v1277
        %v4738 = vsel %vm4258, %v4498, %v1288
        %v4739 = vsel %vm4259, %v4499, %v1299
        %v4740 = vsel %vm4260, %v4500, %v1310
        %v4741 = vsel %vm4261, %v4501, %v1321
        %v4742 = vsel %vm4262, %v4502, %v1332
        %v4743 = vsel %vm4263, %v4503, %v1343
        %v4744 = vsel %vm4264, %v4504, %v1354
        %v4745 = vsel %vm4265, %v4505, %v1365
        %v4746 = vsel %vm4266, %v4506, %v1376
        %v4747 = vsel %vm4267, %v4507, %v1387
        %v4748 = vsel %vm4268, %v4508, %v1398
        %v4749 = vsel %vm4269, %v4509, %v1409
        %v4750 = vsel %vm4270, %v4510, %v1420
        %v4751 = vsel %vm4271, %v4511, %v1431
        %v4752 = vsel %vm4272, %v4512, %v1442
        %v4753 = vsel %vm4273, %v4513, %v1453
        %v4754 = vsel %vm4274, %v4514, %v1464
        %v4755 = vsel %vm4275, %v4515, %v1475
        %v4756 = vsel %vm4276, %v4516, %v1486
        %v4757 = vsel %vm4277, %v4517, %v1497
        %v4758 = vsel %vm4278, %v4518, %v1508
        %v4759 = vsel %vm4279, %v4519, %v1519
        %v4760 = vsel %vm4280, %v4520, %v1530
        %v4761 = vsel %vm4281, %v4521, %v1541
        %v4762 = vsel %vm4282, %v4522, %v1552
        %v4763 = vsel %vm4283, %v4523, %v1563
        %v4764 = vsel %vm4284, %v4524, %v1574
        %v4765 = vsel %vm4285, %v4525, %v1585
        %v4766 = vsel %vm4286, %v4526, %v1596
        %v4767 = vsel %vm4287, %v4527, %v1607
        %v4768 = vsel %vm4288, %v4528, %v1618
        %v4769 = vsel %vm4289, %v4529, %v1629
        %v4770 = vsel %vm4290, %v4530, %v1640
        %v4771 = vsel %vm4291, %v4531, %v1651
        %v4772 = vsel %vm4292, %v4532, %v1662
        %v4773 = vsel %vm4293, %v4533, %v1673
        %v4774 = vsel %vm4294, %v4534, %v1684
        %v4775 = vsel %vm4295, %v4535, %v1695
        %v4776 = vsel %vm4296, %v4536, %v1706
        %v4777 = vsel %vm4297, %v4537, %v1717
        %v4778 = vsel %vm4298, %v4538, %v1728
        %v4779 = vsel %vm4299, %v4539, %v1739
        %v4780 = vsel %vm4300, %v4540, %v1750
        %v4781 = vsel %vm4301, %v4541, %v1761
        %v4782 = vsel %vm4302, %v4542, %v1772
        %v4783 = vsel %vm4303, %v4543, %v1783
        %v4784 = vsel %vm4304, %v4544, %v1794
        %v4785 = vsel %vm4305, %v4545, %v1805
        %v4786 = vsel %vm4306, %v4546, %v1816
        %v4787 = vsel %vm4307, %v4547, %v1827
        %v4788 = vsel %vm4308, %v4548, %v1838
        %v4789 = vsel %vm4309, %v4549, %v1849
        %v4790 = vsel %vm4310, %v4550, %v1860
        %v4791 = vsel %vm4311, %v4551, %v1871
        %v4792 = vsel %vm4312, %v4552, %v1882
        %v4793 = vsel %vm4313, %v4553, %v1893
        %v4794 = vsel %vm4314, %v4554, %v1904
        %v4795 = vsel %vm4315, %v4555, %v1915
        %v4796 = vsel %vm4316, %v4556, %v1926
        %v4797 = vsel %vm4317, %v4557, %v1937
        %v4798 = vsel %vm4318, %v4558, %v1948
        %v4799 = vsel %vm4319, %v4559, %v1959
        %v4800 = vsel %vm4320, %v4560, %v1970
        %v4801 = vsel %vm4321, %v4561, %v1981
        %v4802 = vsel %vm4322, %v4562, %v1992
        %v4803 = vsel %vm4323, %v4563, %v2003
        %v4804 = vsel %vm4324, %v4564, %v2014
        %v4805 = vsel %vm4325, %v4565, %v2025
        %v4806 = vsel %vm4326, %v4566, %v2036
        %v4807 = vsel %vm4327, %v4567, %v2047
        %v4808 = vsel %vm4328, %v4568, %v2058
        %v4809 = vsel %vm4329, %v4569, %v2069
        %v4810 = vsel %vm4330, %v4570, %v2080
        %v4811 = vsel %vm4331, %v4571, %v2091
        %v4812 = vsel %vm4332, %v4572, %v2102
        %v4813 = vsel %vm4333, %v4573, %v2113
        %v4814 = vsel %vm4334, %v4574, %v2124
        %v4815 = vsel %vm4335, %v4575, %v2135
        %v4816 = vsel %vm4336, %v4576, %v2146
        %v4817 = vsel %vm4337, %v4577, %v2157
        %v4818 = vsel %vm4338, %v4578, %v2168
        %v4819 = vsel %vm4339, %v4579, %v2179
        %v4820 = vsel %vm4340, %v4580, %v2190
        %v4821 = vsel %vm4341, %v4581, %v2201
        %v4822 = vsel %vm4342, %v4582, %v2212
        %v4823 = vsel %vm4343, %v4583, %v2223
        %v4824 = vsel %vm4344, %v4584, %v2234
        %v4825 = vsel %vm4345, %v4585, %v2245
        %v4826 = vsel %vm4346, %v4586, %v2256
        %v4827 = vsel %vm4347, %v4587, %v2267
        %v4828 = vsel %vm4348, %v4588, %v2278
        %v4829 = vsel %vm4349, %v4589, %v2289
        %v4830 = vsel %vm4350, %v4590, %v2300
        %v4831 = vsel %vm4351, %v4591, %v2311
        %v4832 = vsel %vm4352, %v4592, %v2322
        %v4833 = vsel %vm4353, %v4593, %v2333
        %v4834 = vsel %vm4354, %v4594, %v2344
        %v4835 = vsel %vm4355, %v4595, %v2355
        %v4836 = vsel %vm4356, %v4596, %v2366
        %v4837 = vsel %vm4357, %v4597, %v2377
        %v4838 = vsel %vm4358, %v4598, %v2388
        %v4839 = vsel %vm4359, %v4599, %v2399
        %v4840 = vsel %vm4360, %v4600, %v2410
        %v4841 = vsel %vm4361, %v4601, %v2421
        %v4842 = vsel %vm4362, %v4602, %v2432
        %v4843 = vsel %vm4363, %v4603, %v2443
        %v4844 = vsel %vm4364, %v4604, %v2454
        %v4845 = vsel %vm4365, %v4605, %v2465
        %v4846 = vsel %vm4366, %v4606, %v2476
        %v4847 = vsel %vm4367, %v4607, %v2487
        %v4848 = vsel %vm4368, %v4608, %v2498
        %v4849 = vsel %vm4369, %v4609, %v2509
        %v4850 = vsel %vm4370, %v4610, %v2520
        %v4851 = vsel %vm4371, %v4611, %v2531
        %v4852 = vsel %vm4372, %v4612, %v2542
        %v4853 = vsel %vm4373, %v4613, %v2553
        %v4854 = vsel %vm4374, %v4614, %v2564
        %v4855 = vsel %vm4375, %v4615, %v2575
        %v4856 = vsel %vm4376, %v4616, %v2586
        %v4857 = vsel %vm4377, %v4617, %v2597
        %v4858 = vsel %vm4378, %v4618, %v2608
        %v4859 = vsel %vm4379, %v4619, %v2619
        %v4860 = vsel %vm4380, %v4620, %v2630
        %v4861 = vsel %vm4381, %v4621, %v2641
        %v4862 = vsel %vm4382, %v4622, %v2652
        %v4863 = vsel %vm4383, %v4623, %v2663
        %v4864 = vsel %vm4384, %v4624, %v2674
        %v4865 = vsel %vm4385, %v4625, %v2685
        %v4866 = vsel %vm4386, %v4626, %v2696
        %v4867 = vsel %vm4387, %v4627, %v2707
        %v4868 = vsel %vm4388, %v4628, %v2718
        %v4869 = vsel %vm4389, %v4629, %v2729
        %v4870 = vsel %vm4390, %v4630, %v2740
        %v4871 = vsel %vm4391, %v4631, %v2751
        %v4872 = vsel %vm4392, %v4632, %v2762
        %v4873 = vsel %vm4393, %v4633, %v2773
        %v4874 = vsel %vm4394, %v4634, %v2784
        %v4875 = vsel %vm4395, %v4635, %v2795
        %v4876 = vsel %vm4396, %v4636, %v2806
        %v4877 = vsel %vm4397, %v4637, %v2817
        %v4878 = vsel %vm4398, %v4638, %v2828
        %v4879 = vsel %vm4399, %v4639, %v2839
        %v4880 = vsel %vm4400, %v4640, %v2850
        %v4881 = vsel %vm4401, %v4641, %v2861
        %v4882 = vsel %vm4402, %v4642, %v2872
        %v4883 = vsel %vm4403, %v4643, %v2883
        %v4884 = vsel %vm4404, %v4644, %v2894
        %v4885 = vsel %vm4405, %v4645, %v2905
        %v4886 = vsel %vm4406, %v4646, %v2916
        %v4887 = vsel %vm4407, %v4647, %v2927
        %v4888 = vsel %vm4408, %v4648, %v2938
        %v4889 = vsel %vm4409, %v4649, %v2949
        %v4890 = vsel %vm4410, %v4650, %v2960
        %v4891 = vsel %vm4411, %v4651, %v2971
        %v4892 = vsel %vm4412, %v4652, %v2982
        %v4893 = vsel %vm4413, %v4653, %v2993
        %v4894 = vsel %vm4414, %v4654, %v3004
        %v4895 = vsel %vm4415, %v4655, %v3015
        %v4896 = vsel %vm4416, %v4656, %v3026
        %v4897 = vsel %vm4417, %v4657, %v3037
        %v4898 = vsel %vm4418, %v4658, %v3048
        %v4899 = vsel %vm4419, %v4659, %v3059
        %v4900 = vsel %vm4420, %v4660, %v3070
        %v4901 = vsel %vm4421, %v4661, %v3081
        %v4902 = vsel %vm4422, %v4662, %v3092
        %v4903 = vsel %vm4423, %v4663, %v3103
        %v4904 = vsel %vm4424, %v4664, %v3114
        %v4905 = vsel %vm4425, %v4665, %v3125
        %v4906 = vsel %vm4426, %v4666, %v3136
        %v4907 = vsel %vm4427, %v4667, %v3147
        %v4908 = vsel %vm4428, %v4668, %v3158
        %v4909 = vsel %vm4429, %v4669, %v3169
        %v4910 = vsel %vm4430, %v4670, %v3180
        %v4911 = vsel %vm4431, %v4671, %v3191
        %v4912 = vsel %vm4432, %v4672, %v3202
        %v4913 = vsel %vm4433, %v4673, %v3213
        %v4914 = vsel %vm4434, %v4674, %v3224
        %v4915 = vsel %vm4435, %v4675, %v3235
        %v4916 = vsel %vm4436, %v4676, %v3246
        %v4917 = vsel %vm4437, %v4677, %v3257
        %v4918 = vsel %vm4438, %v4678, %v3268
        %v4919 = vsel %vm4439, %v4679, %v3279
        %v4920 = vsel %vm4440, %v4680, %v3290
        %v4921 = vsel %vm4441, %v4681, %v3301
        %v4922 = vsel %vm4442, %v4682, %v3312
        %v4923 = vsel %vm4443, %v4683, %v3323
        %v4924 = vsel %vm4444, %v4684, %v3334
        %v4925 = vsel %vm4445, %v4685, %v3345
        %v4926 = vsel %vm4446, %v4686, %v3356
        %v4927 = vsel %vm4447, %v4687, %v3367
        %v4928 = vsel %vm4448, %v4688, %v3378
        %v4929 = vsel %vm4449, %v4689, %v3389
        %v4930 = vsel %vm4450, %v4690, %v3400
        %v4931 = vsel %vm4451, %v4691, %v3411
        %v4932 = vsel %vm4452, %v4692, %v3422
        %v4933 = vsel %vm4453, %v4693, %v3433
        %v4934 = vsel %vm4454, %v4694, %v3444
        %v4935 = vsel %vm4455, %v4695, %v3455
        %v4936 = vsel %vm4456, %v4696, %v3466
        %v4937 = vsel %vm4457, %v4697, %v3477
        %v4938 = vsel %vm4458, %v4698, %v3488
        %v4939 = vsel %vm4459, %v4699, %v3499
        %v4940 = vsel %vm4460, %v4700, %v3510
        %v4941 = vsel %vm4461, %v4701, %v3521
        %v4942 = vsel %vm4462, %v4702, %v3532
        %v4943 = vsel %vm4463, %v4703, %v3543
        %v4944 = vsel %vm4464, %v4704, %v3554
        %v4945 = vsel %vm4465, %v4705, %v3565
        %v4946 = vsel %vm4466, %v4706, %v3576
        %v4947 = vsel %vm4467, %v4707, %v3587
        %v4948 = vsel %vm4468, %v4708, %v3598
        %v4949 = vsel %vm4469, %v4709, %v3609
        %v4950 = vsel %vm4470, %v4710, %v3620
        %v4951 = vsel %vm4471, %v4711, %v3631
        %v4952 = vsel %vm4472, %v4712, %v3642
        %v4953 = vsel %vm4473, %v4713, %v3653
        %v4954 = vsel %vm4474, %v4714, %v3664
        %v4955 = vsel %vm4475, %v4715, %v3675
        %v4956 = vsel %vm4476, %v4716, %v3686
        %v4957 = vsel %vm4477, %v4717, %v3697
        %v4958 = vsel %vm4478, %v4718, %v3708
        %v4959 = vsel %vm4479, %v4719, %v3719
        %v4960 = vsel %vm4480, %v4720, %v3730
        %v4961 = vsel %vm4481, %v4721, %v3741
        %v4962 = vsel %vm4482, %v4722, %v3752
        %v4963 = vsel %vm4483, %v4723, %v3763
        %v4964 = vlaneseq
        %v4965 = vand.u32 %v4964, 127
        %vm4966 = vcmp.eq.s32.totalorder %v4724, %v4965
        %vm4967 = vcmp.eq.s32.totalorder %v4725, %v4965
        %vm4968 = vcmp.eq.s32.totalorder %v4726, %v4965
        %vm4969 = vcmp.eq.s32.totalorder %v4727, %v4965
        %vm4970 = vcmp.eq.s32.totalorder %v4728, %v4965
        %vm4971 = vcmp.eq.s32.totalorder %v4729, %v4965
        %vm4972 = vcmp.eq.s32.totalorder %v4730, %v4965
        %vm4973 = vcmp.eq.s32.totalorder %v4731, %v4965
        %vm4974 = vcmp.eq.s32.totalorder %v4732, %v4965
        %vm4975 = vcmp.eq.s32.totalorder %v4733, %v4965
        %vm4976 = vcmp.eq.s32.totalorder %v4734, %v4965
        %vm4977 = vcmp.eq.s32.totalorder %v4735, %v4965
        %vm4978 = vcmp.eq.s32.totalorder %v4736, %v4965
        %vm4979 = vcmp.eq.s32.totalorder %v4737, %v4965
        %vm4980 = vcmp.eq.s32.totalorder %v4738, %v4965
        %vm4981 = vcmp.eq.s32.totalorder %v4739, %v4965
        %vm4982 = vcmp.eq.s32.totalorder %v4740, %v4965
        %vm4983 = vcmp.eq.s32.totalorder %v4741, %v4965
        %vm4984 = vcmp.eq.s32.totalorder %v4742, %v4965
        %vm4985 = vcmp.eq.s32.totalorder %v4743, %v4965
        %vm4986 = vcmp.eq.s32.totalorder %v4744, %v4965
        %vm4987 = vcmp.eq.s32.totalorder %v4745, %v4965
        %vm4988 = vcmp.eq.s32.totalorder %v4746, %v4965
        %vm4989 = vcmp.eq.s32.totalorder %v4747, %v4965
        %vm4990 = vcmp.eq.s32.totalorder %v4748, %v4965
        %vm4991 = vcmp.eq.s32.totalorder %v4749, %v4965
        %vm4992 = vcmp.eq.s32.totalorder %v4750, %v4965
        %vm4993 = vcmp.eq.s32.totalorder %v4751, %v4965
        %vm4994 = vcmp.eq.s32.totalorder %v4752, %v4965
        %vm4995 = vcmp.eq.s32.totalorder %v4753, %v4965
        %vm4996 = vcmp.eq.s32.totalorder %v4754, %v4965
        %vm4997 = vcmp.eq.s32.totalorder %v4755, %v4965
        %vm4998 = vcmp.eq.s32.totalorder %v4756, %v4965
        %vm4999 = vcmp.eq.s32.totalorder %v4757, %v4965
        %vm5000 = vcmp.eq.s32.totalorder %v4758, %v4965
        %vm5001 = vcmp.eq.s32.totalorder %v4759, %v4965
        %vm5002 = vcmp.eq.s32.totalorder %v4760, %v4965
        %vm5003 = vcmp.eq.s32.totalorder %v4761, %v4965
        %vm5004 = vcmp.eq.s32.totalorder %v4762, %v4965
        %vm5005 = vcmp.eq.s32.totalorder %v4763, %v4965
        %vm5006 = vcmp.eq.s32.totalorder %v4764, %v4965
        %vm5007 = vcmp.eq.s32.totalorder %v4765, %v4965
        %vm5008 = vcmp.eq.s32.totalorder %v4766, %v4965
        %vm5009 = vcmp.eq.s32.totalorder %v4767, %v4965
        %vm5010 = vcmp.eq.s32.totalorder %v4768, %v4965
        %vm5011 = vcmp.eq.s32.totalorder %v4769, %v4965
        %vm5012 = vcmp.eq.s32.totalorder %v4770, %v4965
        %vm5013 = vcmp.eq.s32.totalorder %v4771, %v4965
        %vm5014 = vcmp.eq.s32.totalorder %v4772, %v4965
        %vm5015 = vcmp.eq.s32.totalorder %v4773, %v4965
        %vm5016 = vcmp.eq.s32.totalorder %v4774, %v4965
        %vm5017 = vcmp.eq.s32.totalorder %v4775, %v4965
        %vm5018 = vcmp.eq.s32.totalorder %v4776, %v4965
        %vm5019 = vcmp.eq.s32.totalorder %v4777, %v4965
        %vm5020 = vcmp.eq.s32.totalorder %v4778, %v4965
        %vm5021 = vcmp.eq.s32.totalorder %v4779, %v4965
        %vm5022 = vcmp.eq.s32.totalorder %v4780, %v4965
        %vm5023 = vcmp.eq.s32.totalorder %v4781, %v4965
        %vm5024 = vcmp.eq.s32.totalorder %v4782, %v4965
        %vm5025 = vcmp.eq.s32.totalorder %v4783, %v4965
        %vm5026 = vcmp.eq.s32.totalorder %v4784, %v4965
        %vm5027 = vcmp.eq.s32.totalorder %v4785, %v4965
        %vm5028 = vcmp.eq.s32.totalorder %v4786, %v4965
        %vm5029 = vcmp.eq.s32.totalorder %v4787, %v4965
        %vm5030 = vcmp.eq.s32.totalorder %v4788, %v4965
        %vm5031 = vcmp.eq.s32.totalorder %v4789, %v4965
        %vm5032 = vcmp.eq.s32.totalorder %v4790, %v4965
        %vm5033 = vcmp.eq.s32.totalorder %v4791, %v4965
        %vm5034 = vcmp.eq.s32.totalorder %v4792, %v4965
        %vm5035 = vcmp.eq.s32.totalorder %v4793, %v4965
        %vm5036 = vcmp.eq.s32.totalorder %v4794, %v4965
        %vm5037 = vcmp.eq.s32.totalorder %v4795, %v4965
        %vm5038 = vcmp.eq.s32.totalorder %v4796, %v4965
        %vm5039 = vcmp.eq.s32.totalorder %v4797, %v4965
        %vm5040 = vcmp.eq.s32.totalorder %v4798, %v4965
        %vm5041 = vcmp.eq.s32.totalorder %v4799, %v4965
        %vm5042 = vcmp.eq.s32.totalorder %v4800, %v4965
        %vm5043 = vcmp.eq.s32.totalorder %v4801, %v4965
        %vm5044 = vcmp.eq.s32.totalorder %v4802, %v4965
        %vm5045 = vcmp.eq.s32.totalorder %v4803, %v4965
        %vm5046 = vcmp.eq.s32.totalorder %v4804, %v4965
        %vm5047 = vcmp.eq.s32.totalorder %v4805, %v4965
        %vm5048 = vcmp.eq.s32.totalorder %v4806, %v4965
        %vm5049 = vcmp.eq.s32.totalorder %v4807, %v4965
        %vm5050 = vcmp.eq.s32.totalorder %v4808, %v4965
        %vm5051 = vcmp.eq.s32.totalorder %v4809, %v4965
        %vm5052 = vcmp.eq.s32.totalorder %v4810, %v4965
        %vm5053 = vcmp.eq.s32.totalorder %v4811, %v4965
        %vm5054 = vcmp.eq.s32.totalorder %v4812, %v4965
        %vm5055 = vcmp.eq.s32.totalorder %v4813, %v4965
        %vm5056 = vcmp.eq.s32.totalorder %v4814, %v4965
        %vm5057 = vcmp.eq.s32.totalorder %v4815, %v4965
        %vm5058 = vcmp.eq.s32.totalorder %v4816, %v4965
        %vm5059 = vcmp.eq.s32.totalorder %v4817, %v4965
        %vm5060 = vcmp.eq.s32.totalorder %v4818, %v4965
        %vm5061 = vcmp.eq.s32.totalorder %v4819, %v4965
        %vm5062 = vcmp.eq.s32.totalorder %v4820, %v4965
        %vm5063 = vcmp.eq.s32.totalorder %v4821, %v4965
        %vm5064 = vcmp.eq.s32.totalorder %v4822, %v4965
        %vm5065 = vcmp.eq.s32.totalorder %v4823, %v4965
        %vm5066 = vcmp.eq.s32.totalorder %v4824, %v4965
        %vm5067 = vcmp.eq.s32.totalorder %v4825, %v4965
        %vm5068 = vcmp.eq.s32.totalorder %v4826, %v4965
        %vm5069 = vcmp.eq.s32.totalorder %v4827, %v4965
        %vm5070 = vcmp.eq.s32.totalorder %v4828, %v4965
        %vm5071 = vcmp.eq.s32.totalorder %v4829, %v4965
        %vm5072 = vcmp.eq.s32.totalorder %v4830, %v4965
        %vm5073 = vcmp.eq.s32.totalorder %v4831, %v4965
        %vm5074 = vcmp.eq.s32.totalorder %v4832, %v4965
        %vm5075 = vcmp.eq.s32.totalorder %v4833, %v4965
        %vm5076 = vcmp.eq.s32.totalorder %v4834, %v4965
        %vm5077 = vcmp.eq.s32.totalorder %v4835, %v4965
        %vm5078 = vcmp.eq.s32.totalorder %v4836, %v4965
        %vm5079 = vcmp.eq.s32.totalorder %v4837, %v4965
        %vm5080 = vcmp.eq.s32.totalorder %v4838, %v4965
        %vm5081 = vcmp.eq.s32.totalorder %v4839, %v4965
        %vm5082 = vcmp.eq.s32.totalorder %v4840, %v4965
        %vm5083 = vcmp.eq.s32.totalorder %v4841, %v4965
        %vm5084 = vcmp.eq.s32.totalorder %v4842, %v4965
        %vm5085 = vcmp.eq.s32.totalorder %v4843, %v4965
        %vm5086 = vcmp.eq.s32.totalorder %v4844, %v4965
        %vm5087 = vcmp.eq.s32.totalorder %v4845, %v4965
        %vm5088 = vcmp.eq.s32.totalorder %v4846, %v4965
        %vm5089 = vcmp.eq.s32.totalorder %v4847, %v4965
        %vm5090 = vcmp.eq.s32.totalorder %v4848, %v4965
        %vm5091 = vcmp.eq.s32.totalorder %v4849, %v4965
        %vm5092 = vcmp.eq.s32.totalorder %v4850, %v4965
        %vm5093 = vcmp.eq.s32.totalorder %v4851, %v4965
        %vm5094 = vcmp.eq.s32.totalorder %v4852, %v4965
        %vm5095 = vcmp.eq.s32.totalorder %v4853, %v4965
        %vm5096 = vcmp.eq.s32.totalorder %v4854, %v4965
        %vm5097 = vcmp.eq.s32.totalorder %v4855, %v4965
        %vm5098 = vcmp.eq.s32.totalorder %v4856, %v4965
        %vm5099 = vcmp.eq.s32.totalorder %v4857, %v4965
        %vm5100 = vcmp.eq.s32.totalorder %v4858, %v4965
        %vm5101 = vcmp.eq.s32.totalorder %v4859, %v4965
        %vm5102 = vcmp.eq.s32.totalorder %v4860, %v4965
        %vm5103 = vcmp.eq.s32.totalorder %v4861, %v4965
        %vm5104 = vcmp.eq.s32.totalorder %v4862, %v4965
        %vm5105 = vcmp.eq.s32.totalorder %v4863, %v4965
        %vm5106 = vcmp.eq.s32.totalorder %v4864, %v4965
        %vm5107 = vcmp.eq.s32.totalorder %v4865, %v4965
        %vm5108 = vcmp.eq.s32.totalorder %v4866, %v4965
        %vm5109 = vcmp.eq.s32.totalorder %v4867, %v4965
        %vm5110 = vcmp.eq.s32.totalorder %v4868, %v4965
        %vm5111 = vcmp.eq.s32.totalorder %v4869, %v4965
        %vm5112 = vcmp.eq.s32.totalorder %v4870, %v4965
        %vm5113 = vcmp.eq.s32.totalorder %v4871, %v4965
        %vm5114 = vcmp.eq.s32.totalorder %v4872, %v4965
        %vm5115 = vcmp.eq.s32.totalorder %v4873, %v4965
        %vm5116 = vcmp.eq.s32.totalorder %v4874, %v4965
        %vm5117 = vcmp.eq.s32.totalorder %v4875, %v4965
        %vm5118 = vcmp.eq.s32.totalorder %v4876, %v4965
        %vm5119 = vcmp.eq.s32.totalorder %v4877, %v4965
        %vm5120 = vcmp.eq.s32.totalorder %v4878, %v4965
        %vm5121 = vcmp.eq.s32.totalorder %v4879, %v4965
        %vm5122 = vcmp.eq.s32.totalorder %v4880, %v4965
        %vm5123 = vcmp.eq.s32.totalorder %v4881, %v4965
        %vm5124 = vcmp.eq.s32.totalorder %v4882, %v4965
        %vm5125 = vcmp.eq.s32.totalorder %v4883, %v4965
        %vm5126 = vcmp.eq.s32.totalorder %v4884, %v4965
        %vm5127 = vcmp.eq.s32.totalorder %v4885, %v4965
        %vm5128 = vcmp.eq.s32.totalorder %v4886, %v4965
        %vm5129 = vcmp.eq.s32.totalorder %v4887, %v4965
        %vm5130 = vcmp.eq.s32.totalorder %v4888, %v4965
        %vm5131 = vcmp.eq.s32.totalorder %v4889, %v4965
        %vm5132 = vcmp.eq.s32.totalorder %v4890, %v4965
        %vm5133 = vcmp.eq.s32.totalorder %v4891, %v4965
        %vm5134 = vcmp.eq.s32.totalorder %v4892, %v4965
        %vm5135 = vcmp.eq.s32.totalorder %v4893, %v4965
        %vm5136 = vcmp.eq.s32.totalorder %v4894, %v4965
        %vm5137 = vcmp.eq.s32.totalorder %v4895, %v4965
        %vm5138 = vcmp.eq.s32.totalorder %v4896, %v4965
        %vm5139 = vcmp.eq.s32.totalorder %v4897, %v4965
        %vm5140 = vcmp.eq.s32.totalorder %v4898, %v4965
        %vm5141 = vcmp.eq.s32.totalorder %v4899, %v4965
        %vm5142 = vcmp.eq.s32.totalorder %v4900, %v4965
        %vm5143 = vcmp.eq.s32.totalorder %v4901, %v4965
        %vm5144 = vcmp.eq.s32.totalorder %v4902, %v4965
        %vm5145 = vcmp.eq.s32.totalorder %v4903, %v4965
        %vm5146 = vcmp.eq.s32.totalorder %v4904, %v4965
        %vm5147 = vcmp.eq.s32.totalorder %v4905, %v4965
        %vm5148 = vcmp.eq.s32.totalorder %v4906, %v4965
        %vm5149 = vcmp.eq.s32.totalorder %v4907, %v4965
        %vm5150 = vcmp.eq.s32.totalorder %v4908, %v4965
        %vm5151 = vcmp.eq.s32.totalorder %v4909, %v4965
        %vm5152 = vcmp.eq.s32.totalorder %v4910, %v4965
        %vm5153 = vcmp.eq.s32.totalorder %v4911, %v4965
        %vm5154 = vcmp.eq.s32.totalorder %v4912, %v4965
        %vm5155 = vcmp.eq.s32.totalorder %v4913, %v4965
        %vm5156 = vcmp.eq.s32.totalorder %v4914, %v4965
        %vm5157 = vcmp.eq.s32.totalorder %v4915, %v4965
        %vm5158 = vcmp.eq.s32.totalorder %v4916, %v4965
        %vm5159 = vcmp.eq.s32.totalorder %v4917, %v4965
        %vm5160 = vcmp.eq.s32.totalorder %v4918, %v4965
        %vm5161 = vcmp.eq.s32.totalorder %v4919, %v4965
        %vm5162 = vcmp.eq.s32.totalorder %v4920, %v4965
        %vm5163 = vcmp.eq.s32.totalorder %v4921, %v4965
        %vm5164 = vcmp.eq.s32.totalorder %v4922, %v4965
        %vm5165 = vcmp.eq.s32.totalorder %v4923, %v4965
        %vm5166 = vcmp.eq.s32.totalorder %v4924, %v4965
        %vm5167 = vcmp.eq.s32.totalorder %v4925, %v4965
        %vm5168 = vcmp.eq.s32.totalorder %v4926, %v4965
        %vm5169 = vcmp.eq.s32.totalorder %v4927, %v4965
        %vm5170 = vcmp.eq.s32.totalorder %v4928, %v4965
        %vm5171 = vcmp.eq.s32.totalorder %v4929, %v4965
        %vm5172 = vcmp.eq.s32.totalorder %v4930, %v4965
        %vm5173 = vcmp.eq.s32.totalorder %v4931, %v4965
        %vm5174 = vcmp.eq.s32.totalorder %v4932, %v4965
        %vm5175 = vcmp.eq.s32.totalorder %v4933, %v4965
        %vm5176 = vcmp.eq.s32.totalorder %v4934, %v4965
        %vm5177 = vcmp.eq.s32.totalorder %v4935, %v4965
        %vm5178 = vcmp.eq.s32.totalorder %v4936, %v4965
        %vm5179 = vcmp.eq.s32.totalorder %v4937, %v4965
        %vm5180 = vcmp.eq.s32.totalorder %v4938, %v4965
        %vm5181 = vcmp.eq.s32.totalorder %v4939, %v4965
        %vm5182 = vcmp.eq.s32.totalorder %v4940, %v4965
        %vm5183 = vcmp.eq.s32.totalorder %v4941, %v4965
        %vm5184 = vcmp.eq.s32.totalorder %v4942, %v4965
        %vm5185 = vcmp.eq.s32.totalorder %v4943, %v4965
        %vm5186 = vcmp.eq.s32.totalorder %v4944, %v4965
        %vm5187 = vcmp.eq.s32.totalorder %v4945, %v4965
        %vm5188 = vcmp.eq.s32.totalorder %v4946, %v4965
        %vm5189 = vcmp.eq.s32.totalorder %v4947, %v4965
        %vm5190 = vcmp.eq.s32.totalorder %v4948, %v4965
        %vm5191 = vcmp.eq.s32.totalorder %v4949, %v4965
        %vm5192 = vcmp.eq.s32.totalorder %v4950, %v4965
        %vm5193 = vcmp.eq.s32.totalorder %v4951, %v4965
        %vm5194 = vcmp.eq.s32.totalorder %v4952, %v4965
        %vm5195 = vcmp.eq.s32.totalorder %v4953, %v4965
        %vm5196 = vcmp.eq.s32.totalorder %v4954, %v4965
        %vm5197 = vcmp.eq.s32.totalorder %v4955, %v4965
        %vm5198 = vcmp.eq.s32.totalorder %v4956, %v4965
        %vm5199 = vcmp.eq.s32.totalorder %v4957, %v4965
        %vm5200 = vcmp.eq.s32.totalorder %v4958, %v4965
        %vm5201 = vcmp.eq.s32.totalorder %v4959, %v4965
        %vm5202 = vcmp.eq.s32.totalorder %v4960, %v4965
        %vm5203 = vcmp.eq.s32.totalorder %v4961, %v4965
        %vm5204 = vcmp.eq.s32.totalorder %v4962, %v4965
        %vm5205 = vcmp.eq.s32.totalorder %v4963, %v4965
        %v5206 = vsel %vm4966, 1, 0
        %v5207 = vsel %vm4967, 1, 0
        %v5208 = vsel %vm4968, 1, 0
        %v5209 = vsel %vm4969, 1, 0
        %v5210 = vsel %vm4970, 1, 0
        %v5211 = vsel %vm4971, 1, 0
        %v5212 = vsel %vm4972, 1, 0
        %v5213 = vsel %vm4973, 1, 0
        %v5214 = vsel %vm4974, 1, 0
        %v5215 = vsel %vm4975, 1, 0
        %v5216 = vsel %vm4976, 1, 0
        %v5217 = vsel %vm4977, 1, 0
        %v5218 = vsel %vm4978, 1, 0
        %v5219 = vsel %vm4979, 1, 0
        %v5220 = vsel %vm4980, 1, 0
        %v5221 = vsel %vm4981, 1, 0
        %v5222 = vsel %vm4982, 1, 0
        %v5223 = vsel %vm4983, 1, 0
        %v5224 = vsel %vm4984, 1, 0
        %v5225 = vsel %vm4985, 1, 0
        %v5226 = vsel %vm4986, 1, 0
        %v5227 = vsel %vm4987, 1, 0
        %v5228 = vsel %vm4988, 1, 0
        %v5229 = vsel %vm4989, 1, 0
        %v5230 = vsel %vm4990, 1, 0
        %v5231 = vsel %vm4991, 1, 0
        %v5232 = vsel %vm4992, 1, 0
        %v5233 = vsel %vm4993, 1, 0
        %v5234 = vsel %vm4994, 1, 0
        %v5235 = vsel %vm4995, 1, 0
        %v5236 = vsel %vm4996, 1, 0
        %v5237 = vsel %vm4997, 1, 0
        %v5238 = vsel %vm4998, 1, 0
        %v5239 = vsel %vm4999, 1, 0
        %v5240 = vsel %vm5000, 1, 0
        %v5241 = vsel %vm5001, 1, 0
        %v5242 = vsel %vm5002, 1, 0
        %v5243 = vsel %vm5003, 1, 0
        %v5244 = vsel %vm5004, 1, 0
        %v5245 = vsel %vm5005, 1, 0
        %v5246 = vsel %vm5006, 1, 0
        %v5247 = vsel %vm5007, 1, 0
        %v5248 = vsel %vm5008, 1, 0
        %v5249 = vsel %vm5009, 1, 0
        %v5250 = vsel %vm5010, 1, 0
        %v5251 = vsel %vm5011, 1, 0
        %v5252 = vsel %vm5012, 1, 0
        %v5253 = vsel %vm5013, 1, 0
        %v5254 = vsel %vm5014, 1, 0
        %v5255 = vsel %vm5015, 1, 0
        %v5256 = vsel %vm5016, 1, 0
        %v5257 = vsel %vm5017, 1, 0
        %v5258 = vsel %vm5018, 1, 0
        %v5259 = vsel %vm5019, 1, 0
        %v5260 = vsel %vm5020, 1, 0
        %v5261 = vsel %vm5021, 1, 0
        %v5262 = vsel %vm5022, 1, 0
        %v5263 = vsel %vm5023, 1, 0
        %v5264 = vsel %vm5024, 1, 0
        %v5265 = vsel %vm5025, 1, 0
        %v5266 = vsel %vm5026, 1, 0
        %v5267 = vsel %vm5027, 1, 0
        %v5268 = vsel %vm5028, 1, 0
        %v5269 = vsel %vm5029, 1, 0
        %v5270 = vsel %vm5030, 1, 0
        %v5271 = vsel %vm5031, 1, 0
        %v5272 = vsel %vm5032, 1, 0
        %v5273 = vsel %vm5033, 1, 0
        %v5274 = vsel %vm5034, 1, 0
        %v5275 = vsel %vm5035, 1, 0
        %v5276 = vsel %vm5036, 1, 0
        %v5277 = vsel %vm5037, 1, 0
        %v5278 = vsel %vm5038, 1, 0
        %v5279 = vsel %vm5039, 1, 0
        %v5280 = vsel %vm5040, 1, 0
        %v5281 = vsel %vm5041, 1, 0
        %v5282 = vsel %vm5042, 1, 0
        %v5283 = vsel %vm5043, 1, 0
        %v5284 = vsel %vm5044, 1, 0
        %v5285 = vsel %vm5045, 1, 0
        %v5286 = vsel %vm5046, 1, 0
        %v5287 = vsel %vm5047, 1, 0
        %v5288 = vsel %vm5048, 1, 0
        %v5289 = vsel %vm5049, 1, 0
        %v5290 = vsel %vm5050, 1, 0
        %v5291 = vsel %vm5051, 1, 0
        %v5292 = vsel %vm5052, 1, 0
        %v5293 = vsel %vm5053, 1, 0
        %v5294 = vsel %vm5054, 1, 0
        %v5295 = vsel %vm5055, 1, 0
        %v5296 = vsel %vm5056, 1, 0
        %v5297 = vsel %vm5057, 1, 0
        %v5298 = vsel %vm5058, 1, 0
        %v5299 = vsel %vm5059, 1, 0
        %v5300 = vsel %vm5060, 1, 0
        %v5301 = vsel %vm5061, 1, 0
        %v5302 = vsel %vm5062, 1, 0
        %v5303 = vsel %vm5063, 1, 0
        %v5304 = vsel %vm5064, 1, 0
        %v5305 = vsel %vm5065, 1, 0
        %v5306 = vsel %vm5066, 1, 0
        %v5307 = vsel %vm5067, 1, 0
        %v5308 = vsel %vm5068, 1, 0
        %v5309 = vsel %vm5069, 1, 0
        %v5310 = vsel %vm5070, 1, 0
        %v5311 = vsel %vm5071, 1, 0
        %v5312 = vsel %vm5072, 1, 0
        %v5313 = vsel %vm5073, 1, 0
        %v5314 = vsel %vm5074, 1, 0
        %v5315 = vsel %vm5075, 1, 0
        %v5316 = vsel %vm5076, 1, 0
        %v5317 = vsel %vm5077, 1, 0
        %v5318 = vsel %vm5078, 1, 0
        %v5319 = vsel %vm5079, 1, 0
        %v5320 = vsel %vm5080, 1, 0
        %v5321 = vsel %vm5081, 1, 0
        %v5322 = vsel %vm5082, 1, 0
        %v5323 = vsel %vm5083, 1, 0
        %v5324 = vsel %vm5084, 1, 0
        %v5325 = vsel %vm5085, 1, 0
        %v5326 = vsel %vm5086, 1, 0
        %v5327 = vsel %vm5087, 1, 0
        %v5328 = vsel %vm5088, 1, 0
        %v5329 = vsel %vm5089, 1, 0
        %v5330 = vsel %vm5090, 1, 0
        %v5331 = vsel %vm5091, 1, 0
        %v5332 = vsel %vm5092, 1, 0
        %v5333 = vsel %vm5093, 1, 0
        %v5334 = vsel %vm5094, 1, 0
        %v5335 = vsel %vm5095, 1, 0
        %v5336 = vsel %vm5096, 1, 0
        %v5337 = vsel %vm5097, 1, 0
        %v5338 = vsel %vm5098, 1, 0
        %v5339 = vsel %vm5099, 1, 0
        %v5340 = vsel %vm5100, 1, 0
        %v5341 = vsel %vm5101, 1, 0
        %v5342 = vsel %vm5102, 1, 0
        %v5343 = vsel %vm5103, 1, 0
        %v5344 = vsel %vm5104, 1, 0
        %v5345 = vsel %vm5105, 1, 0
        %v5346 = vsel %vm5106, 1, 0
        %v5347 = vsel %vm5107, 1, 0
        %v5348 = vsel %vm5108, 1, 0
        %v5349 = vsel %vm5109, 1, 0
        %v5350 = vsel %vm5110, 1, 0
        %v5351 = vsel %vm5111, 1, 0
        %v5352 = vsel %vm5112, 1, 0
        %v5353 = vsel %vm5113, 1, 0
        %v5354 = vsel %vm5114, 1, 0
        %v5355 = vsel %vm5115, 1, 0
        %v5356 = vsel %vm5116, 1, 0
        %v5357 = vsel %vm5117, 1, 0
        %v5358 = vsel %vm5118, 1, 0
        %v5359 = vsel %vm5119, 1, 0
        %v5360 = vsel %vm5120, 1, 0
        %v5361 = vsel %vm5121, 1, 0
        %v5362 = vsel %vm5122, 1, 0
        %v5363 = vsel %vm5123, 1, 0
        %v5364 = vsel %vm5124, 1, 0
        %v5365 = vsel %vm5125, 1, 0
        %v5366 = vsel %vm5126, 1, 0
        %v5367 = vsel %vm5127, 1, 0
        %v5368 = vsel %vm5128, 1, 0
        %v5369 = vsel %vm5129, 1, 0
        %v5370 = vsel %vm5130, 1, 0
        %v5371 = vsel %vm5131, 1, 0
        %v5372 = vsel %vm5132, 1, 0
        %v5373 = vsel %vm5133, 1, 0
        %v5374 = vsel %vm5134, 1, 0
        %v5375 = vsel %vm5135, 1, 0
        %v5376 = vsel %vm5136, 1, 0
        %v5377 = vsel %vm5137, 1, 0
        %v5378 = vsel %vm5138, 1, 0
        %v5379 = vsel %vm5139, 1, 0
        %v5380 = vsel %vm5140, 1, 0
        %v5381 = vsel %vm5141, 1, 0
        %v5382 = vsel %vm5142, 1, 0
        %v5383 = vsel %vm5143, 1, 0
        %v5384 = vsel %vm5144, 1, 0
        %v5385 = vsel %vm5145, 1, 0
        %v5386 = vsel %vm5146, 1, 0
        %v5387 = vsel %vm5147, 1, 0
        %v5388 = vsel %vm5148, 1, 0
        %v5389 = vsel %vm5149, 1, 0
        %v5390 = vsel %vm5150, 1, 0
        %v5391 = vsel %vm5151, 1, 0
        %v5392 = vsel %vm5152, 1, 0
        %v5393 = vsel %vm5153, 1, 0
        %v5394 = vsel %vm5154, 1, 0
        %v5395 = vsel %vm5155, 1, 0
        %v5396 = vsel %vm5156, 1, 0
        %v5397 = vsel %vm5157, 1, 0
        %v5398 = vsel %vm5158, 1, 0
        %v5399 = vsel %vm5159, 1, 0
        %v5400 = vsel %vm5160, 1, 0
        %v5401 = vsel %vm5161, 1, 0
        %v5402 = vsel %vm5162, 1, 0
        %v5403 = vsel %vm5163, 1, 0
        %v5404 = vsel %vm5164, 1, 0
        %v5405 = vsel %vm5165, 1, 0
        %v5406 = vsel %vm5166, 1, 0
        %v5407 = vsel %vm5167, 1, 0
        %v5408 = vsel %vm5168, 1, 0
        %v5409 = vsel %vm5169, 1, 0
        %v5410 = vsel %vm5170, 1, 0
        %v5411 = vsel %vm5171, 1, 0
        %v5412 = vsel %vm5172, 1, 0
        %v5413 = vsel %vm5173, 1, 0
        %v5414 = vsel %vm5174, 1, 0
        %v5415 = vsel %vm5175, 1, 0
        %v5416 = vsel %vm5176, 1, 0
        %v5417 = vsel %vm5177, 1, 0
        %v5418 = vsel %vm5178, 1, 0
        %v5419 = vsel %vm5179, 1, 0
        %v5420 = vsel %vm5180, 1, 0
        %v5421 = vsel %vm5181, 1, 0
        %v5422 = vsel %vm5182, 1, 0
        %v5423 = vsel %vm5183, 1, 0
        %v5424 = vsel %vm5184, 1, 0
        %v5425 = vsel %vm5185, 1, 0
        %v5426 = vsel %vm5186, 1, 0
        %v5427 = vsel %vm5187, 1, 0
        %v5428 = vsel %vm5188, 1, 0
        %v5429 = vsel %vm5189, 1, 0
        %v5430 = vsel %vm5190, 1, 0
        %v5431 = vsel %vm5191, 1, 0
        %v5432 = vsel %vm5192, 1, 0
        %v5433 = vsel %vm5193, 1, 0
        %v5434 = vsel %vm5194, 1, 0
        %v5435 = vsel %vm5195, 1, 0
        %v5436 = vsel %vm5196, 1, 0
        %v5437 = vsel %vm5197, 1, 0
        %v5438 = vsel %vm5198, 1, 0
        %v5439 = vsel %vm5199, 1, 0
        %v5440 = vsel %vm5200, 1, 0
        %v5441 = vsel %vm5201, 1, 0
        %v5442 = vsel %vm5202, 1, 0
        %v5443 = vsel %vm5203, 1, 0
        %v5444 = vsel %vm5204, 1, 0
        %v5445 = vsel %vm5205, 1, 0
        %v5446 = vcvt.s32.f32 %v5206
        %v5447 = vcvt.s32.f32 %v5207
        %v5448 = vcvt.s32.f32 %v5208
        %v5449 = vcvt.s32.f32 %v5209
        %v5450 = vcvt.s32.f32 %v5210
        %v5451 = vcvt.s32.f32 %v5211
        %v5452 = vcvt.s32.f32 %v5212
        %v5453 = vcvt.s32.f32 %v5213
        %v5454 = vcvt.s32.f32 %v5214
        %v5455 = vcvt.s32.f32 %v5215
        %v5456 = vcvt.s32.f32 %v5216
        %v5457 = vcvt.s32.f32 %v5217
        %v5458 = vcvt.s32.f32 %v5218
        %v5459 = vcvt.s32.f32 %v5219
        %v5460 = vcvt.s32.f32 %v5220
        %v5461 = vcvt.s32.f32 %v5221
        %v5462 = vcvt.s32.f32 %v5222
        %v5463 = vcvt.s32.f32 %v5223
        %v5464 = vcvt.s32.f32 %v5224
        %v5465 = vcvt.s32.f32 %v5225
        %v5466 = vcvt.s32.f32 %v5226
        %v5467 = vcvt.s32.f32 %v5227
        %v5468 = vcvt.s32.f32 %v5228
        %v5469 = vcvt.s32.f32 %v5229
        %v5470 = vcvt.s32.f32 %v5230
        %v5471 = vcvt.s32.f32 %v5231
        %v5472 = vcvt.s32.f32 %v5232
        %v5473 = vcvt.s32.f32 %v5233
        %v5474 = vcvt.s32.f32 %v5234
        %v5475 = vcvt.s32.f32 %v5235
        %v5476 = vcvt.s32.f32 %v5236
        %v5477 = vcvt.s32.f32 %v5237
        %v5478 = vcvt.s32.f32 %v5238
        %v5479 = vcvt.s32.f32 %v5239
        %v5480 = vcvt.s32.f32 %v5240
        %v5481 = vcvt.s32.f32 %v5241
        %v5482 = vcvt.s32.f32 %v5242
        %v5483 = vcvt.s32.f32 %v5243
        %v5484 = vcvt.s32.f32 %v5244
        %v5485 = vcvt.s32.f32 %v5245
        %v5486 = vcvt.s32.f32 %v5246
        %v5487 = vcvt.s32.f32 %v5247
        %v5488 = vcvt.s32.f32 %v5248
        %v5489 = vcvt.s32.f32 %v5249
        %v5490 = vcvt.s32.f32 %v5250
        %v5491 = vcvt.s32.f32 %v5251
        %v5492 = vcvt.s32.f32 %v5252
        %v5493 = vcvt.s32.f32 %v5253
        %v5494 = vcvt.s32.f32 %v5254
        %v5495 = vcvt.s32.f32 %v5255
        %v5496 = vcvt.s32.f32 %v5256
        %v5497 = vcvt.s32.f32 %v5257
        %v5498 = vcvt.s32.f32 %v5258
        %v5499 = vcvt.s32.f32 %v5259
        %v5500 = vcvt.s32.f32 %v5260
        %v5501 = vcvt.s32.f32 %v5261
        %v5502 = vcvt.s32.f32 %v5262
        %v5503 = vcvt.s32.f32 %v5263
        %v5504 = vcvt.s32.f32 %v5264
        %v5505 = vcvt.s32.f32 %v5265
        %v5506 = vcvt.s32.f32 %v5266
        %v5507 = vcvt.s32.f32 %v5267
        %v5508 = vcvt.s32.f32 %v5268
        %v5509 = vcvt.s32.f32 %v5269
        %v5510 = vcvt.s32.f32 %v5270
        %v5511 = vcvt.s32.f32 %v5271
        %v5512 = vcvt.s32.f32 %v5272
        %v5513 = vcvt.s32.f32 %v5273
        %v5514 = vcvt.s32.f32 %v5274
        %v5515 = vcvt.s32.f32 %v5275
        %v5516 = vcvt.s32.f32 %v5276
        %v5517 = vcvt.s32.f32 %v5277
        %v5518 = vcvt.s32.f32 %v5278
        %v5519 = vcvt.s32.f32 %v5279
        %v5520 = vcvt.s32.f32 %v5280
        %v5521 = vcvt.s32.f32 %v5281
        %v5522 = vcvt.s32.f32 %v5282
        %v5523 = vcvt.s32.f32 %v5283
        %v5524 = vcvt.s32.f32 %v5284
        %v5525 = vcvt.s32.f32 %v5285
        %v5526 = vcvt.s32.f32 %v5286
        %v5527 = vcvt.s32.f32 %v5287
        %v5528 = vcvt.s32.f32 %v5288
        %v5529 = vcvt.s32.f32 %v5289
        %v5530 = vcvt.s32.f32 %v5290
        %v5531 = vcvt.s32.f32 %v5291
        %v5532 = vcvt.s32.f32 %v5292
        %v5533 = vcvt.s32.f32 %v5293
        %v5534 = vcvt.s32.f32 %v5294
        %v5535 = vcvt.s32.f32 %v5295
        %v5536 = vcvt.s32.f32 %v5296
        %v5537 = vcvt.s32.f32 %v5297
        %v5538 = vcvt.s32.f32 %v5298
        %v5539 = vcvt.s32.f32 %v5299
        %v5540 = vcvt.s32.f32 %v5300
        %v5541 = vcvt.s32.f32 %v5301
        %v5542 = vcvt.s32.f32 %v5302
        %v5543 = vcvt.s32.f32 %v5303
        %v5544 = vcvt.s32.f32 %v5304
        %v5545 = vcvt.s32.f32 %v5305
        %v5546 = vcvt.s32.f32 %v5306
        %v5547 = vcvt.s32.f32 %v5307
        %v5548 = vcvt.s32.f32 %v5308
        %v5549 = vcvt.s32.f32 %v5309
        %v5550 = vcvt.s32.f32 %v5310
        %v5551 = vcvt.s32.f32 %v5311
        %v5552 = vcvt.s32.f32 %v5312
        %v5553 = vcvt.s32.f32 %v5313
        %v5554 = vcvt.s32.f32 %v5314
        %v5555 = vcvt.s32.f32 %v5315
        %v5556 = vcvt.s32.f32 %v5316
        %v5557 = vcvt.s32.f32 %v5317
        %v5558 = vcvt.s32.f32 %v5318
        %v5559 = vcvt.s32.f32 %v5319
        %v5560 = vcvt.s32.f32 %v5320
        %v5561 = vcvt.s32.f32 %v5321
        %v5562 = vcvt.s32.f32 %v5322
        %v5563 = vcvt.s32.f32 %v5323
        %v5564 = vcvt.s32.f32 %v5324
        %v5565 = vcvt.s32.f32 %v5325
        %v5566 = vcvt.s32.f32 %v5326
        %v5567 = vcvt.s32.f32 %v5327
        %v5568 = vcvt.s32.f32 %v5328
        %v5569 = vcvt.s32.f32 %v5329
        %v5570 = vcvt.s32.f32 %v5330
        %v5571 = vcvt.s32.f32 %v5331
        %v5572 = vcvt.s32.f32 %v5332
        %v5573 = vcvt.s32.f32 %v5333
        %v5574 = vcvt.s32.f32 %v5334
        %v5575 = vcvt.s32.f32 %v5335
        %v5576 = vcvt.s32.f32 %v5336
        %v5577 = vcvt.s32.f32 %v5337
        %v5578 = vcvt.s32.f32 %v5338
        %v5579 = vcvt.s32.f32 %v5339
        %v5580 = vcvt.s32.f32 %v5340
        %v5581 = vcvt.s32.f32 %v5341
        %v5582 = vcvt.s32.f32 %v5342
        %v5583 = vcvt.s32.f32 %v5343
        %v5584 = vcvt.s32.f32 %v5344
        %v5585 = vcvt.s32.f32 %v5345
        %v5586 = vcvt.s32.f32 %v5346
        %v5587 = vcvt.s32.f32 %v5347
        %v5588 = vcvt.s32.f32 %v5348
        %v5589 = vcvt.s32.f32 %v5349
        %v5590 = vcvt.s32.f32 %v5350
        %v5591 = vcvt.s32.f32 %v5351
        %v5592 = vcvt.s32.f32 %v5352
        %v5593 = vcvt.s32.f32 %v5353
        %v5594 = vcvt.s32.f32 %v5354
        %v5595 = vcvt.s32.f32 %v5355
        %v5596 = vcvt.s32.f32 %v5356
        %v5597 = vcvt.s32.f32 %v5357
        %v5598 = vcvt.s32.f32 %v5358
        %v5599 = vcvt.s32.f32 %v5359
        %v5600 = vcvt.s32.f32 %v5360
        %v5601 = vcvt.s32.f32 %v5361
        %v5602 = vcvt.s32.f32 %v5362
        %v5603 = vcvt.s32.f32 %v5363
        %v5604 = vcvt.s32.f32 %v5364
        %v5605 = vcvt.s32.f32 %v5365
        %v5606 = vcvt.s32.f32 %v5366
        %v5607 = vcvt.s32.f32 %v5367
        %v5608 = vcvt.s32.f32 %v5368
        %v5609 = vcvt.s32.f32 %v5369
        %v5610 = vcvt.s32.f32 %v5370
        %v5611 = vcvt.s32.f32 %v5371
        %v5612 = vcvt.s32.f32 %v5372
        %v5613 = vcvt.s32.f32 %v5373
        %v5614 = vcvt.s32.f32 %v5374
        %v5615 = vcvt.s32.f32 %v5375
        %v5616 = vcvt.s32.f32 %v5376
        %v5617 = vcvt.s32.f32 %v5377
        %v5618 = vcvt.s32.f32 %v5378
        %v5619 = vcvt.s32.f32 %v5379
        %v5620 = vcvt.s32.f32 %v5380
        %v5621 = vcvt.s32.f32 %v5381
        %v5622 = vcvt.s32.f32 %v5382
        %v5623 = vcvt.s32.f32 %v5383
        %v5624 = vcvt.s32.f32 %v5384
        %v5625 = vcvt.s32.f32 %v5385
        %v5626 = vcvt.s32.f32 %v5386
        %v5627 = vcvt.s32.f32 %v5387
        %v5628 = vcvt.s32.f32 %v5388
        %v5629 = vcvt.s32.f32 %v5389
        %v5630 = vcvt.s32.f32 %v5390
        %v5631 = vcvt.s32.f32 %v5391
        %v5632 = vcvt.s32.f32 %v5392
        %v5633 = vcvt.s32.f32 %v5393
        %v5634 = vcvt.s32.f32 %v5394
        %v5635 = vcvt.s32.f32 %v5395
        %v5636 = vcvt.s32.f32 %v5396
        %v5637 = vcvt.s32.f32 %v5397
        %v5638 = vcvt.s32.f32 %v5398
        %v5639 = vcvt.s32.f32 %v5399
        %v5640 = vcvt.s32.f32 %v5400
        %v5641 = vcvt.s32.f32 %v5401
        %v5642 = vcvt.s32.f32 %v5402
        %v5643 = vcvt.s32.f32 %v5403
        %v5644 = vcvt.s32.f32 %v5404
        %v5645 = vcvt.s32.f32 %v5405
        %v5646 = vcvt.s32.f32 %v5406
        %v5647 = vcvt.s32.f32 %v5407
        %v5648 = vcvt.s32.f32 %v5408
        %v5649 = vcvt.s32.f32 %v5409
        %v5650 = vcvt.s32.f32 %v5410
        %v5651 = vcvt.s32.f32 %v5411
        %v5652 = vcvt.s32.f32 %v5412
        %v5653 = vcvt.s32.f32 %v5413
        %v5654 = vcvt.s32.f32 %v5414
        %v5655 = vcvt.s32.f32 %v5415
        %v5656 = vcvt.s32.f32 %v5416
        %v5657 = vcvt.s32.f32 %v5417
        %v5658 = vcvt.s32.f32 %v5418
        %v5659 = vcvt.s32.f32 %v5419
        %v5660 = vcvt.s32.f32 %v5420
        %v5661 = vcvt.s32.f32 %v5421
        %v5662 = vcvt.s32.f32 %v5422
        %v5663 = vcvt.s32.f32 %v5423
        %v5664 = vcvt.s32.f32 %v5424
        %v5665 = vcvt.s32.f32 %v5425
        %v5666 = vcvt.s32.f32 %v5426
        %v5667 = vcvt.s32.f32 %v5427
        %v5668 = vcvt.s32.f32 %v5428
        %v5669 = vcvt.s32.f32 %v5429
        %v5670 = vcvt.s32.f32 %v5430
        %v5671 = vcvt.s32.f32 %v5431
        %v5672 = vcvt.s32.f32 %v5432
        %v5673 = vcvt.s32.f32 %v5433
        %v5674 = vcvt.s32.f32 %v5434
        %v5675 = vcvt.s32.f32 %v5435
        %v5676 = vcvt.s32.f32 %v5436
        %v5677 = vcvt.s32.f32 %v5437
        %v5678 = vcvt.s32.f32 %v5438
        %v5679 = vcvt.s32.f32 %v5439
        %v5680 = vcvt.s32.f32 %v5440
        %v5681 = vcvt.s32.f32 %v5441
        %v5682 = vcvt.s32.f32 %v5442
        %v5683 = vcvt.s32.f32 %v5443
        %v5684 = vcvt.s32.f32 %v5444
        %v5685 = vcvt.s32.f32 %v5445
        %vm5686 = vcmask 1041408
        %v5687 = vsel %vm5686, %v460, 0.0
        %v5688 = vrot.slane %v5687, 4
        %v5689 = vadd.f32 %v5687, %v5688
        %v5690 = vrot.slane %v5689, 2
        %v5691 = vadd.f32 %v5689, %v5690
        %v5692 = vrot.slane %v5691, 1
        %v5693 = vadd.f32 %v5691, %v5692
        %v5694 = vsel %vm5686, %v462, 0.0
        %v5695 = vrot.slane %v5694, 4
        %v5696 = vadd.f32 %v5694, %v5695
        %v5697 = vrot.slane %v5696, 2
        %v5698 = vadd.f32 %v5696, %v5697
        %v5699 = vrot.slane %v5698, 1
        %v5700 = vadd.f32 %v5698, %v5699
        %v5701 = vsel %vm5686, %v501, 0.0
        %v5702 = vrot.slane %v5701, 4
        %v5703 = vadd.f32 %v5701, %v5702
        %v5704 = vrot.slane %v5703, 2
        %v5705 = vadd.f32 %v5703, %v5704
        %v5706 = vrot.slane %v5705, 1
        %v5707 = vadd.f32 %v5705, %v5706
        %v5708 = vsel %vm5686, %v503, 0.0
        %v5709 = vrot.slane %v5708, 4
        %v5710 = vadd.f32 %v5708, %v5709
        %v5711 = vrot.slane %v5710, 2
        %v5712 = vadd.f32 %v5710, %v5711
        %v5713 = vrot.slane %v5712, 1
        %v5714 = vadd.f32 %v5712, %v5713
        %v5715 = vsel %vm5686, %v542, 0.0
        %v5716 = vrot.slane %v5715, 4
        %v5717 = vadd.f32 %v5715, %v5716
        %v5718 = vrot.slane %v5717, 2
        %v5719 = vadd.f32 %v5717, %v5718
        %v5720 = vrot.slane %v5719, 1
        %v5721 = vadd.f32 %v5719, %v5720
        %v5722 = vsel %vm5686, %v544, 0.0
        %v5723 = vrot.slane %v5722, 4
        %v5724 = vadd.f32 %v5722, %v5723
        %v5725 = vrot.slane %v5724, 2
        %v5726 = vadd.f32 %v5724, %v5725
        %v5727 = vrot.slane %v5726, 1
        %v5728 = vadd.f32 %v5726, %v5727
        %v5729 = vsel %vm5686, %v583, 0.0
        %v5730 = vrot.slane %v5729, 4
        %v5731 = vadd.f32 %v5729, %v5730
        %v5732 = vrot.slane %v5731, 2
        %v5733 = vadd.f32 %v5731, %v5732
        %v5734 = vrot.slane %v5733, 1
        %v5735 = vadd.f32 %v5733, %v5734
        %v5736 = vsel %vm5686, %v585, 0.0
        %v5737 = vrot.slane %v5736, 4
        %v5738 = vadd.f32 %v5736, %v5737
        %v5739 = vrot.slane %v5738, 2
        %v5740 = vadd.f32 %v5738, %v5739
        %v5741 = vrot.slane %v5740, 1
        %v5742 = vadd.f32 %v5740, %v5741
        %v5743 = vsel %vm5686, %v624, 0.0
        %v5744 = vrot.slane %v5743, 4
        %v5745 = vadd.f32 %v5743, %v5744
        %v5746 = vrot.slane %v5745, 2
        %v5747 = vadd.f32 %v5745, %v5746
        %v5748 = vrot.slane %v5747, 1
        %v5749 = vadd.f32 %v5747, %v5748
        %v5750 = vsel %vm5686, %v626, 0.0
        %v5751 = vrot.slane %v5750, 4
        %v5752 = vadd.f32 %v5750, %v5751
        %v5753 = vrot.slane %v5752, 2
        %v5754 = vadd.f32 %v5752, %v5753
        %v5755 = vrot.slane %v5754, 1
        %v5756 = vadd.f32 %v5754, %v5755
        %v5757 = vsel %vm5686, %v665, 0.0
        %v5758 = vrot.slane %v5757, 4
        %v5759 = vadd.f32 %v5757, %v5758
        %v5760 = vrot.slane %v5759, 2
        %v5761 = vadd.f32 %v5759, %v5760
        %v5762 = vrot.slane %v5761, 1
        %v5763 = vadd.f32 %v5761, %v5762
        %v5764 = vsel %vm5686, %v667, 0.0
        %v5765 = vrot.slane %v5764, 4
        %v5766 = vadd.f32 %v5764, %v5765
        %v5767 = vrot.slane %v5766, 2
        %v5768 = vadd.f32 %v5766, %v5767
        %v5769 = vrot.slane %v5768, 1
        %v5770 = vadd.f32 %v5768, %v5769
        %v5771 = vsel %vm5686, %v706, 0.0
        %v5772 = vrot.slane %v5771, 4
        %v5773 = vadd.f32 %v5771, %v5772
        %v5774 = vrot.slane %v5773, 2
        %v5775 = vadd.f32 %v5773, %v5774
        %v5776 = vrot.slane %v5775, 1
        %v5777 = vadd.f32 %v5775, %v5776
        %v5778 = vsel %vm5686, %v708, 0.0
        %v5779 = vrot.slane %v5778, 4
        %v5780 = vadd.f32 %v5778, %v5779
        %v5781 = vrot.slane %v5780, 2
        %v5782 = vadd.f32 %v5780, %v5781
        %v5783 = vrot.slane %v5782, 1
        %v5784 = vadd.f32 %v5782, %v5783
        %v5785 = vsel %vm5686, %v747, 0.0
        %v5786 = vrot.slane %v5785, 4
        %v5787 = vadd.f32 %v5785, %v5786
        %v5788 = vrot.slane %v5787, 2
        %v5789 = vadd.f32 %v5787, %v5788
        %v5790 = vrot.slane %v5789, 1
        %v5791 = vadd.f32 %v5789, %v5790
        %v5792 = vmul.f32 %v460, %v460
        %v5793 = vmul.f32 %v462, %v462
        %v5794 = vmul.f32 %v501, %v501
        %v5795 = vmul.f32 %v503, %v503
        %v5796 = vmul.f32 %v542, %v542
        %v5797 = vmul.f32 %v544, %v544
        %v5798 = vmul.f32 %v583, %v583
        %v5799 = vmul.f32 %v585, %v585
        %v5800 = vmul.f32 %v624, %v624
        %v5801 = vmul.f32 %v626, %v626
        %v5802 = vmul.f32 %v665, %v665
        %v5803 = vmul.f32 %v667, %v667
        %v5804 = vmul.f32 %v706, %v706
        %v5805 = vmul.f32 %v708, %v708
        %v5806 = vmul.f32 %v747, %v747
        %v5807 = vsel %vm5686, %v5792, 0.0
        %v5808 = vrot.slane %v5807, 4
        %v5809 = vadd.f32 %v5807, %v5808
        %v5810 = vrot.slane %v5809, 2
        %v5811 = vadd.f32 %v5809, %v5810
        %v5812 = vrot.slane %v5811, 1
        %v5813 = vadd.f32 %v5811, %v5812
        %v5814 = vsel %vm5686, %v5793, 0.0
        %v5815 = vrot.slane %v5814, 4
        %v5816 = vadd.f32 %v5814, %v5815
        %v5817 = vrot.slane %v5816, 2
        %v5818 = vadd.f32 %v5816, %v5817
        %v5819 = vrot.slane %v5818, 1
        %v5820 = vadd.f32 %v5818, %v5819
        %v5821 = vsel %vm5686, %v5794, 0.0
        %v5822 = vrot.slane %v5821, 4
        %v5823 = vadd.f32 %v5821, %v5822
        %v5824 = vrot.slane %v5823, 2
        %v5825 = vadd.f32 %v5823, %v5824
        %v5826 = vrot.slane %v5825, 1
        %v5827 = vadd.f32 %v5825, %v5826
        %v5828 = vsel %vm5686, %v5795, 0.0
        %v5829 = vrot.slane %v5828, 4
        %v5830 = vadd.f32 %v5828, %v5829
        %v5831 = vrot.slane %v5830, 2
        %v5832 = vadd.f32 %v5830, %v5831
        %v5833 = vrot.slane %v5832, 1
        %v5834 = vadd.f32 %v5832, %v5833
        %v5835 = vsel %vm5686, %v5796, 0.0
        %v5836 = vrot.slane %v5835, 4
        %v5837 = vadd.f32 %v5835, %v5836
        %v5838 = vrot.slane %v5837, 2
        %v5839 = vadd.f32 %v5837, %v5838
        %v5840 = vrot.slane %v5839, 1
        %v5841 = vadd.f32 %v5839, %v5840
        %v5842 = vsel %vm5686, %v5797, 0.0
        %v5843 = vrot.slane %v5842, 4
        %v5844 = vadd.f32 %v5842, %v5843
        %v5845 = vrot.slane %v5844, 2
        %v5846 = vadd.f32 %v5844, %v5845
        %v5847 = vrot.slane %v5846, 1
        %v5848 = vadd.f32 %v5846, %v5847
        %v5849 = vsel %vm5686, %v5798, 0.0
        %v5850 = vrot.slane %v5849, 4
        %v5851 = vadd.f32 %v5849, %v5850
        %v5852 = vrot.slane %v5851, 2
        %v5853 = vadd.f32 %v5851, %v5852
        %v5854 = vrot.slane %v5853, 1
        %v5855 = vadd.f32 %v5853, %v5854
        %v5856 = vsel %vm5686, %v5799, 0.0
        %v5857 = vrot.slane %v5856, 4
        %v5858 = vadd.f32 %v5856, %v5857
        %v5859 = vrot.slane %v5858, 2
        %v5860 = vadd.f32 %v5858, %v5859
        %v5861 = vrot.slane %v5860, 1
        %v5862 = vadd.f32 %v5860, %v5861
        %v5863 = vsel %vm5686, %v5800, 0.0
        %v5864 = vrot.slane %v5863, 4
        %v5865 = vadd.f32 %v5863, %v5864
        %v5866 = vrot.slane %v5865, 2
        %v5867 = vadd.f32 %v5865, %v5866
        %v5868 = vrot.slane %v5867, 1
        %v5869 = vadd.f32 %v5867, %v5868
        %v5870 = vsel %vm5686, %v5801, 0.0
        %v5871 = vrot.slane %v5870, 4
        %v5872 = vadd.f32 %v5870, %v5871
        %v5873 = vrot.slane %v5872, 2
        %v5874 = vadd.f32 %v5872, %v5873
        %v5875 = vrot.slane %v5874, 1
        %v5876 = vadd.f32 %v5874, %v5875
        %v5877 = vsel %vm5686, %v5802, 0.0
        %v5878 = vrot.slane %v5877, 4
        %v5879 = vadd.f32 %v5877, %v5878
        %v5880 = vrot.slane %v5879, 2
        %v5881 = vadd.f32 %v5879, %v5880
        %v5882 = vrot.slane %v5881, 1
        %v5883 = vadd.f32 %v5881, %v5882
        %v5884 = vsel %vm5686, %v5803, 0.0
        %v5885 = vrot.slane %v5884, 4
        %v5886 = vadd.f32 %v5884, %v5885
        %v5887 = vrot.slane %v5886, 2
        %v5888 = vadd.f32 %v5886, %v5887
        %v5889 = vrot.slane %v5888, 1
        %v5890 = vadd.f32 %v5888, %v5889
        %v5891 = vsel %vm5686, %v5804, 0.0
        %v5892 = vrot.slane %v5891, 4
        %v5893 = vadd.f32 %v5891, %v5892
        %v5894 = vrot.slane %v5893, 2
        %v5895 = vadd.f32 %v5893, %v5894
        %v5896 = vrot.slane %v5895, 1
        %v5897 = vadd.f32 %v5895, %v5896
        %v5898 = vsel %vm5686, %v5805, 0.0
        %v5899 = vrot.slane %v5898, 4
        %v5900 = vadd.f32 %v5898, %v5899
        %v5901 = vrot.slane %v5900, 2
        %v5902 = vadd.f32 %v5900, %v5901
        %v5903 = vrot.slane %v5902, 1
        %v5904 = vadd.f32 %v5902, %v5903
        %v5905 = vsel %vm5686, %v5806, 0.0
        %v5906 = vrot.slane %v5905, 4
        %v5907 = vadd.f32 %v5905, %v5906
        %v5908 = vrot.slane %v5907, 2
        %v5909 = vadd.f32 %v5907, %v5908
        %v5910 = vrot.slane %v5909, 1
        %v5911 = vadd.f32 %v5909, %v5910
        %vm5912 = vcmask 1040384
        %v5913 = vsel %vm5912, %v5693, %v5813
        %v5914 = vsel %vm5912, %v5700, %v5820
        %v5915 = vsel %vm5912, %v5707, %v5827
        %v5916 = vsel %vm5912, %v5714, %v5834
        %v5917 = vsel %vm5912, %v5721, %v5841
        %v5918 = vsel %vm5912, %v5728, %v5848
        %v5919 = vsel %vm5912, %v5735, %v5855
        %v5920 = vsel %vm5912, %v5742, %v5862
        %v5921 = vsel %vm5912, %v5749, %v5869
        %v5922 = vsel %vm5912, %v5756, %v5876
        %v5923 = vsel %vm5912, %v5763, %v5883
        %v5924 = vsel %vm5912, %v5770, %v5890
        %v5925 = vsel %vm5912, %v5777, %v5897
        %v5926 = vsel %vm5912, %v5784, %v5904
        %v5927 = vsel %vm5912, %v5791, %v5911
        %5928 = vmatprep.subr.mxu0 0.0
        %5929 = vmatpush1.msra.mxu0 %v5446
        %5930 = vmatprep.subr.mxu0 0.0
        %5931 = vmatpush1.msra.mxu0 %v5447
        %5932 = vmatprep.subr.mxu0 0.0
        %5933 = vmatpush1.msra.mxu0 %v5448
        %5934 = vmatprep.subr.mxu0 0.0
        %5935 = vmatpush1.msra.mxu0 %v5449
        %5936 = vmatprep.subr.mxu0 0.0
        %5937 = vmatpush1.msra.mxu0 %v5450
        %5938 = vmatprep.subr.mxu0 0.0
        %5939 = vmatpush1.msra.mxu0 %v5451
        %5940 = vmatprep.subr.mxu0 0.0
        %5941 = vmatpush1.msra.mxu0 %v5452
        %5942 = vmatprep.subr.mxu0 0.0
        %5943 = vmatpush1.msra.mxu0 %v5453
        %5944 = vmatprep.subr.mxu0 0.0
        %5945 = vmatpush1.msra.mxu0 %v5454
        %5946 = vmatprep.subr.mxu0 0.0
        %5947 = vmatpush1.msra.mxu0 %v5455
        %5948 = vmatprep.subr.mxu0 0.0
        %5949 = vmatpush1.msra.mxu0 %v5456
        %5950 = vmatprep.subr.mxu0 0.0
        %5951 = vmatpush1.msra.mxu0 %v5457
        %5952 = vmatprep.subr.mxu0 0.0
        %5953 = vmatpush1.msra.mxu0 %v5458
        %5954 = vmatprep.subr.mxu0 0.0
        %5955 = vmatpush1.msra.mxu0 %v5459
        %5956 = vmatprep.subr.mxu0 0.0
        %5957 = vmatpush1.msra.mxu0 %v5460
        %5958 = vmatprep.subr.mxu0 0.0
        %5959 = vmatpush1.msra.mxu0 %v5461
        %5960 = vmatprep.subr.mxu0 0.0
        %5961 = vmatpush1.msra.mxu0 %v5462
        %5962 = vmatprep.subr.mxu0 0.0
        %5963 = vmatpush1.msra.mxu0 %v5463
        %5964 = vmatprep.subr.mxu0 0.0
        %5965 = vmatpush1.msra.mxu0 %v5464
        %5966 = vmatprep.subr.mxu0 0.0
        %5967 = vmatpush1.msra.mxu0 %v5465
        %5968 = vmatprep.subr.mxu0 0.0
        %5969 = vmatpush1.msra.mxu0 %v5466
        %5970 = vmatprep.subr.mxu0 0.0
        %5971 = vmatpush1.msra.mxu0 %v5467
        %5972 = vmatprep.subr.mxu0 0.0
        %5973 = vmatpush1.msra.mxu0 %v5468
        %5974 = vmatprep.subr.mxu0 0.0
        %5975 = vmatpush1.msra.mxu0 %v5469
        %5976 = vmatprep.subr.mxu0 0.0
        %5977 = vmatpush1.msra.mxu0 %v5470
        %5978 = vmatprep.subr.mxu0 0.0
        %5979 = vmatpush1.msra.mxu0 %v5471
        %5980 = vmatprep.subr.mxu0 0.0
        %5981 = vmatpush1.msra.mxu0 %v5472
        %5982 = vmatprep.subr.mxu0 0.0
        %5983 = vmatpush1.msra.mxu0 %v5473
        %5984 = vmatprep.subr.mxu0 0.0
        %5985 = vmatpush1.msra.mxu0 %v5474
        %5986 = vmatprep.subr.mxu0 0.0
        %5987 = vmatpush1.msra.mxu0 %v5475
        %5988 = vmatprep.subr.mxu0 0.0
        %5989 = vmatpush1.msra.mxu0 %v5476
        %5990 = vmatprep.subr.mxu0 0.0
        %5991 = vmatpush1.msra.mxu0 %v5477
        %5992 = vmatprep.mubr.f32.mxu0 %v5914
        %5993 = vmatmul.mubr.f32.gmra.mrb[0].mxu0 %v5913
        %v5994 = vpop.f32.mrb[0].mxu0
        %v5995 = vadd.f32 0.0, %v5994
        %v5996 = vpop.f32.mrb[0].mxu0
        %5997 = vdwg.mxu0
        %5998 = vmatprep.subr.mxu0 0.0
        %5999 = vmatpush1.msra.mxu0 %v5478
        %6000 = vmatprep.subr.mxu0 0.0
        %6001 = vmatpush1.msra.mxu0 %v5479
        %6002 = vmatprep.subr.mxu0 0.0
        %6003 = vmatpush1.msra.mxu0 %v5480
        %6004 = vmatprep.subr.mxu0 0.0
        %6005 = vmatpush1.msra.mxu0 %v5481
        %6006 = vmatprep.subr.mxu0 0.0
        %6007 = vmatpush1.msra.mxu0 %v5482
        %6008 = vmatprep.subr.mxu0 0.0
        %6009 = vmatpush1.msra.mxu0 %v5483
        %6010 = vmatprep.subr.mxu0 0.0
        %6011 = vmatpush1.msra.mxu0 %v5484
        %6012 = vmatprep.subr.mxu0 0.0
        %6013 = vmatpush1.msra.mxu0 %v5485
        %6014 = vmatprep.subr.mxu0 0.0
        %6015 = vmatpush1.msra.mxu0 %v5486
        %6016 = vmatprep.subr.mxu0 0.0
        %6017 = vmatpush1.msra.mxu0 %v5487
        %6018 = vmatprep.subr.mxu0 0.0
        %6019 = vmatpush1.msra.mxu0 %v5488
        %6020 = vmatprep.subr.mxu0 0.0
        %6021 = vmatpush1.msra.mxu0 %v5489
        %6022 = vmatprep.subr.mxu0 0.0
        %6023 = vmatpush1.msra.mxu0 %v5490
        %6024 = vmatprep.subr.mxu0 0.0
        %6025 = vmatpush1.msra.mxu0 %v5491
        %6026 = vmatprep.subr.mxu0 0.0
        %6027 = vmatpush1.msra.mxu0 %v5492
        %6028 = vmatprep.subr.mxu0 0.0
        %6029 = vmatpush1.msra.mxu0 %v5493
        %6030 = vmatprep.subr.mxu0 0.0
        %6031 = vmatpush1.msra.mxu0 %v5494
        %6032 = vmatprep.subr.mxu0 0.0
        %6033 = vmatpush1.msra.mxu0 %v5495
        %6034 = vmatprep.subr.mxu0 0.0
        %6035 = vmatpush1.msra.mxu0 %v5496
        %6036 = vmatprep.subr.mxu0 0.0
        %6037 = vmatpush1.msra.mxu0 %v5497
        %6038 = vmatprep.subr.mxu0 0.0
        %6039 = vmatpush1.msra.mxu0 %v5498
        %6040 = vmatprep.subr.mxu0 0.0
        %6041 = vmatpush1.msra.mxu0 %v5499
        %6042 = vmatprep.subr.mxu0 0.0
        %6043 = vmatpush1.msra.mxu0 %v5500
        %6044 = vmatprep.subr.mxu0 0.0
        %6045 = vmatpush1.msra.mxu0 %v5501
        %6046 = vmatprep.subr.mxu0 0.0
        %6047 = vmatpush1.msra.mxu0 %v5502
        %6048 = vmatprep.subr.mxu0 0.0
        %6049 = vmatpush1.msra.mxu0 %v5503
        %6050 = vmatprep.subr.mxu0 0.0
        %6051 = vmatpush1.msra.mxu0 %v5504
        %6052 = vmatprep.subr.mxu0 0.0
        %6053 = vmatpush1.msra.mxu0 %v5505
        %6054 = vmatprep.subr.mxu0 0.0
        %6055 = vmatpush1.msra.mxu0 %v5506
        %6056 = vmatprep.subr.mxu0 0.0
        %6057 = vmatpush1.msra.mxu0 %v5507
        %6058 = vmatprep.subr.mxu0 0.0
        %6059 = vmatpush1.msra.mxu0 %v5508
        %6060 = vmatprep.subr.mxu0 0.0
        %6061 = vmatpush1.msra.mxu0 %v5509
        %6062 = vmatprep.mubr.f32.mxu0 %v5916
        %6063 = vmatmul.mubr.f32.gmra.mrb[0].mxu0 %v5915
        %v6064 = vpop.f32.mrb[0].mxu0
        %v6065 = vadd.f32 %v5995, %v6064
        %v6066 = vpop.f32.mrb[0].mxu0
        %6067 = vdwg.mxu0
        %6068 = vmatprep.subr.mxu0 0.0
        %6069 = vmatpush1.msra.mxu0 %v5510
        %6070 = vmatprep.subr.mxu0 0.0
        %6071 = vmatpush1.msra.mxu0 %v5511
        %6072 = vmatprep.subr.mxu0 0.0
        %6073 = vmatpush1.msra.mxu0 %v5512
        %6074 = vmatprep.subr.mxu0 0.0
        %6075 = vmatpush1.msra.mxu0 %v5513
        %6076 = vmatprep.subr.mxu0 0.0
        %6077 = vmatpush1.msra.mxu0 %v5514
        %6078 = vmatprep.subr.mxu0 0.0
        %6079 = vmatpush1.msra.mxu0 %v5515
        %6080 = vmatprep.subr.mxu0 0.0
        %6081 = vmatpush1.msra.mxu0 %v5516
        %6082 = vmatprep.subr.mxu0 0.0
        %6083 = vmatpush1.msra.mxu0 %v5517
        %6084 = vmatprep.subr.mxu0 0.0
        %6085 = vmatpush1.msra.mxu0 %v5518
        %6086 = vmatprep.subr.mxu0 0.0
        %6087 = vmatpush1.msra.mxu0 %v5519
        %6088 = vmatprep.subr.mxu0 0.0
        %6089 = vmatpush1.msra.mxu0 %v5520
        %6090 = vmatprep.subr.mxu0 0.0
        %6091 = vmatpush1.msra.mxu0 %v5521
        %6092 = vmatprep.subr.mxu0 0.0
        %6093 = vmatpush1.msra.mxu0 %v5522
        %6094 = vmatprep.subr.mxu0 0.0
        %6095 = vmatpush1.msra.mxu0 %v5523
        %6096 = vmatprep.subr.mxu0 0.0
        %6097 = vmatpush1.msra.mxu0 %v5524
        %6098 = vmatprep.subr.mxu0 0.0
        %6099 = vmatpush1.msra.mxu0 %v5525
        %6100 = vmatprep.subr.mxu0 0.0
        %6101 = vmatpush1.msra.mxu0 %v5526
        %6102 = vmatprep.subr.mxu0 0.0
        %6103 = vmatpush1.msra.mxu0 %v5527
        %6104 = vmatprep.subr.mxu0 0.0
        %6105 = vmatpush1.msra.mxu0 %v5528
        %6106 = vmatprep.subr.mxu0 0.0
        %6107 = vmatpush1.msra.mxu0 %v5529
        %6108 = vmatprep.subr.mxu0 0.0
        %6109 = vmatpush1.msra.mxu0 %v5530
        %6110 = vmatprep.subr.mxu0 0.0
        %6111 = vmatpush1.msra.mxu0 %v5531
        %6112 = vmatprep.subr.mxu0 0.0
        %6113 = vmatpush1.msra.mxu0 %v5532
        %6114 = vmatprep.subr.mxu0 0.0
        %6115 = vmatpush1.msra.mxu0 %v5533
        %6116 = vmatprep.subr.mxu0 0.0
        %6117 = vmatpush1.msra.mxu0 %v5534
        %6118 = vmatprep.subr.mxu0 0.0
        %6119 = vmatpush1.msra.mxu0 %v5535
        %6120 = vmatprep.subr.mxu0 0.0
        %6121 = vmatpush1.msra.mxu0 %v5536
        %6122 = vmatprep.subr.mxu0 0.0
        %6123 = vmatpush1.msra.mxu0 %v5537
        %6124 = vmatprep.subr.mxu0 0.0
        %6125 = vmatpush1.msra.mxu0 %v5538
        %6126 = vmatprep.subr.mxu0 0.0
        %6127 = vmatpush1.msra.mxu0 %v5539
        %6128 = vmatprep.subr.mxu0 0.0
        %6129 = vmatpush1.msra.mxu0 %v5540
        %6130 = vmatprep.subr.mxu0 0.0
        %6131 = vmatpush1.msra.mxu0 %v5541
        %6132 = vmatprep.mubr.f32.mxu0 %v5918
        %6133 = vmatmul.mubr.f32.gmra.mrb[0].mxu0 %v5917
        %v6134 = vpop.f32.mrb[0].mxu0
        %v6135 = vadd.f32 %v6065, %v6134
        %v6136 = vpop.f32.mrb[0].mxu0
        %6137 = vdwg.mxu0
        %6138 = vmatprep.subr.mxu0 0.0
        %6139 = vmatpush1.msra.mxu0 %v5542
        %6140 = vmatprep.subr.mxu0 0.0
        %6141 = vmatpush1.msra.mxu0 %v5543
        %6142 = vmatprep.subr.mxu0 0.0
        %6143 = vmatpush1.msra.mxu0 %v5544
        %6144 = vmatprep.subr.mxu0 0.0
        %6145 = vmatpush1.msra.mxu0 %v5545
        %6146 = vmatprep.subr.mxu0 0.0
        %6147 = vmatpush1.msra.mxu0 %v5546
        %6148 = vmatprep.subr.mxu0 0.0
        %6149 = vmatpush1.msra.mxu0 %v5547
        %6150 = vmatprep.subr.mxu0 0.0
        %6151 = vmatpush1.msra.mxu0 %v5548
        %6152 = vmatprep.subr.mxu0 0.0
        %6153 = vmatpush1.msra.mxu0 %v5549
        %6154 = vmatprep.subr.mxu0 0.0
        %6155 = vmatpush1.msra.mxu0 %v5550
        %6156 = vmatprep.subr.mxu0 0.0
        %6157 = vmatpush1.msra.mxu0 %v5551
        %6158 = vmatprep.subr.mxu0 0.0
        %6159 = vmatpush1.msra.mxu0 %v5552
        %6160 = vmatprep.subr.mxu0 0.0
        %6161 = vmatpush1.msra.mxu0 %v5553
        %6162 = vmatprep.subr.mxu0 0.0
        %6163 = vmatpush1.msra.mxu0 %v5554
        %6164 = vmatprep.subr.mxu0 0.0
        %6165 = vmatpush1.msra.mxu0 %v5555
        %6166 = vmatprep.subr.mxu0 0.0
        %6167 = vmatpush1.msra.mxu0 %v5556
        %6168 = vmatprep.subr.mxu0 0.0
        %6169 = vmatpush1.msra.mxu0 %v5557
        %6170 = vmatprep.subr.mxu0 0.0
        %6171 = vmatpush1.msra.mxu0 %v5558
        %6172 = vmatprep.subr.mxu0 0.0
        %6173 = vmatpush1.msra.mxu0 %v5559
        %6174 = vmatprep.subr.mxu0 0.0
        %6175 = vmatpush1.msra.mxu0 %v5560
        %6176 = vmatprep.subr.mxu0 0.0
        %6177 = vmatpush1.msra.mxu0 %v5561
        %6178 = vmatprep.subr.mxu0 0.0
        %6179 = vmatpush1.msra.mxu0 %v5562
        %6180 = vmatprep.subr.mxu0 0.0
        %6181 = vmatpush1.msra.mxu0 %v5563
        %6182 = vmatprep.subr.mxu0 0.0
        %6183 = vmatpush1.msra.mxu0 %v5564
        %6184 = vmatprep.subr.mxu0 0.0
        %6185 = vmatpush1.msra.mxu0 %v5565
        %6186 = vmatprep.subr.mxu0 0.0
        %6187 = vmatpush1.msra.mxu0 %v5566
        %6188 = vmatprep.subr.mxu0 0.0
        %6189 = vmatpush1.msra.mxu0 %v5567
        %6190 = vmatprep.subr.mxu0 0.0
        %6191 = vmatpush1.msra.mxu0 %v5568
        %6192 = vmatprep.subr.mxu0 0.0
        %6193 = vmatpush1.msra.mxu0 %v5569
        %6194 = vmatprep.subr.mxu0 0.0
        %6195 = vmatpush1.msra.mxu0 %v5570
        %6196 = vmatprep.subr.mxu0 0.0
        %6197 = vmatpush1.msra.mxu0 %v5571
        %6198 = vmatprep.subr.mxu0 0.0
        %6199 = vmatpush1.msra.mxu0 %v5572
        %6200 = vmatprep.subr.mxu0 0.0
        %6201 = vmatpush1.msra.mxu0 %v5573
        %6202 = vmatprep.mubr.f32.mxu0 %v5920
        %6203 = vmatmul.mubr.f32.gmra.mrb[0].mxu0 %v5919
        %v6204 = vpop.f32.mrb[0].mxu0
        %v6205 = vadd.f32 %v6135, %v6204
        %v6206 = vpop.f32.mrb[0].mxu0
        %6207 = vdwg.mxu0
        %6208 = vmatprep.subr.mxu0 0.0
        %6209 = vmatpush1.msra.mxu0 %v5574
        %6210 = vmatprep.subr.mxu0 0.0
        %6211 = vmatpush1.msra.mxu0 %v5575
        %6212 = vmatprep.subr.mxu0 0.0
        %6213 = vmatpush1.msra.mxu0 %v5576
        %6214 = vmatprep.subr.mxu0 0.0
        %6215 = vmatpush1.msra.mxu0 %v5577
        %6216 = vmatprep.subr.mxu0 0.0
        %6217 = vmatpush1.msra.mxu0 %v5578
        %6218 = vmatprep.subr.mxu0 0.0
        %6219 = vmatpush1.msra.mxu0 %v5579
        %6220 = vmatprep.subr.mxu0 0.0
        %6221 = vmatpush1.msra.mxu0 %v5580
        %6222 = vmatprep.subr.mxu0 0.0
        %6223 = vmatpush1.msra.mxu0 %v5581
        %6224 = vmatprep.subr.mxu0 0.0
        %6225 = vmatpush1.msra.mxu0 %v5582
        %6226 = vmatprep.subr.mxu0 0.0
        %6227 = vmatpush1.msra.mxu0 %v5583
        %6228 = vmatprep.subr.mxu0 0.0
        %6229 = vmatpush1.msra.mxu0 %v5584
        %6230 = vmatprep.subr.mxu0 0.0
        %6231 = vmatpush1.msra.mxu0 %v5585
        %6232 = vmatprep.subr.mxu0 0.0
        %6233 = vmatpush1.msra.mxu0 %v5586
        %6234 = vmatprep.subr.mxu0 0.0
        %6235 = vmatpush1.msra.mxu0 %v5587
        %6236 = vmatprep.subr.mxu0 0.0
        %6237 = vmatpush1.msra.mxu0 %v5588
        %6238 = vmatprep.subr.mxu0 0.0
        %6239 = vmatpush1.msra.mxu0 %v5589
        %6240 = vmatprep.subr.mxu0 0.0
        %6241 = vmatpush1.msra.mxu0 %v5590
        %6242 = vmatprep.subr.mxu0 0.0
        %6243 = vmatpush1.msra.mxu0 %v5591
        %6244 = vmatprep.subr.mxu0 0.0
        %6245 = vmatpush1.msra.mxu0 %v5592
        %6246 = vmatprep.subr.mxu0 0.0
        %6247 = vmatpush1.msra.mxu0 %v5593
        %6248 = vmatprep.subr.mxu0 0.0
        %6249 = vmatpush1.msra.mxu0 %v5594
        %6250 = vmatprep.subr.mxu0 0.0
        %6251 = vmatpush1.msra.mxu0 %v5595
        %6252 = vmatprep.subr.mxu0 0.0
        %6253 = vmatpush1.msra.mxu0 %v5596
        %6254 = vmatprep.subr.mxu0 0.0
        %6255 = vmatpush1.msra.mxu0 %v5597
        %6256 = vmatprep.subr.mxu0 0.0
        %6257 = vmatpush1.msra.mxu0 %v5598
        %6258 = vmatprep.subr.mxu0 0.0
        %6259 = vmatpush1.msra.mxu0 %v5599
        %6260 = vmatprep.subr.mxu0 0.0
        %6261 = vmatpush1.msra.mxu0 %v5600
        %6262 = vmatprep.subr.mxu0 0.0
        %6263 = vmatpush1.msra.mxu0 %v5601
        %6264 = vmatprep.subr.mxu0 0.0
        %6265 = vmatpush1.msra.mxu0 %v5602
        %6266 = vmatprep.subr.mxu0 0.0
        %6267 = vmatpush1.msra.mxu0 %v5603
        %6268 = vmatprep.subr.mxu0 0.0
        %6269 = vmatpush1.msra.mxu0 %v5604
        %6270 = vmatprep.subr.mxu0 0.0
        %6271 = vmatpush1.msra.mxu0 %v5605
        %6272 = vmatprep.mubr.f32.mxu0 %v5922
        %6273 = vmatmul.mubr.f32.gmra.mrb[0].mxu0 %v5921
        %v6274 = vpop.f32.mrb[0].mxu0
        %v6275 = vadd.f32 %v6205, %v6274
        %v6276 = vpop.f32.mrb[0].mxu0
        %6277 = vdwg.mxu0
        %6278 = vmatprep.subr.mxu0 0.0
        %6279 = vmatpush1.msra.mxu0 %v5606
        %6280 = vmatprep.subr.mxu0 0.0
        %6281 = vmatpush1.msra.mxu0 %v5607
        %6282 = vmatprep.subr.mxu0 0.0
        %6283 = vmatpush1.msra.mxu0 %v5608
        %6284 = vmatprep.subr.mxu0 0.0
        %6285 = vmatpush1.msra.mxu0 %v5609
        %6286 = vmatprep.subr.mxu0 0.0
        %6287 = vmatpush1.msra.mxu0 %v5610
        %6288 = vmatprep.subr.mxu0 0.0
        %6289 = vmatpush1.msra.mxu0 %v5611
        %6290 = vmatprep.subr.mxu0 0.0
        %6291 = vmatpush1.msra.mxu0 %v5612
        %6292 = vmatprep.subr.mxu0 0.0
        %6293 = vmatpush1.msra.mxu0 %v5613
        %6294 = vmatprep.subr.mxu0 0.0
        %6295 = vmatpush1.msra.mxu0 %v5614
        %6296 = vmatprep.subr.mxu0 0.0
        %6297 = vmatpush1.msra.mxu0 %v5615
        %6298 = vmatprep.subr.mxu0 0.0
        %6299 = vmatpush1.msra.mxu0 %v5616
        %6300 = vmatprep.subr.mxu0 0.0
        %6301 = vmatpush1.msra.mxu0 %v5617
        %6302 = vmatprep.subr.mxu0 0.0
        %6303 = vmatpush1.msra.mxu0 %v5618
        %6304 = vmatprep.subr.mxu0 0.0
        %6305 = vmatpush1.msra.mxu0 %v5619
        %6306 = vmatprep.subr.mxu0 0.0
        %6307 = vmatpush1.msra.mxu0 %v5620
        %6308 = vmatprep.subr.mxu0 0.0
        %6309 = vmatpush1.msra.mxu0 %v5621
        %6310 = vmatprep.subr.mxu0 0.0
        %6311 = vmatpush1.msra.mxu0 %v5622
        %6312 = vmatprep.subr.mxu0 0.0
        %6313 = vmatpush1.msra.mxu0 %v5623
        %6314 = vmatprep.subr.mxu0 0.0
        %6315 = vmatpush1.msra.mxu0 %v5624
        %6316 = vmatprep.subr.mxu0 0.0
        %6317 = vmatpush1.msra.mxu0 %v5625
        %6318 = vmatprep.subr.mxu0 0.0
        %6319 = vmatpush1.msra.mxu0 %v5626
        %6320 = vmatprep.subr.mxu0 0.0
        %6321 = vmatpush1.msra.mxu0 %v5627
        %6322 = vmatprep.subr.mxu0 0.0
        %6323 = vmatpush1.msra.mxu0 %v5628
        %6324 = vmatprep.subr.mxu0 0.0
        %6325 = vmatpush1.msra.mxu0 %v5629
        %6326 = vmatprep.subr.mxu0 0.0
        %6327 = vmatpush1.msra.mxu0 %v5630
        %6328 = vmatprep.subr.mxu0 0.0
        %6329 = vmatpush1.msra.mxu0 %v5631
        %6330 = vmatprep.subr.mxu0 0.0
        %6331 = vmatpush1.msra.mxu0 %v5632
        %6332 = vmatprep.subr.mxu0 0.0
        %6333 = vmatpush1.msra.mxu0 %v5633
        %6334 = vmatprep.subr.mxu0 0.0
        %6335 = vmatpush1.msra.mxu0 %v5634
        %6336 = vmatprep.subr.mxu0 0.0
        %6337 = vmatpush1.msra.mxu0 %v5635
        %6338 = vmatprep.subr.mxu0 0.0
        %6339 = vmatpush1.msra.mxu0 %v5636
        %6340 = vmatprep.subr.mxu0 0.0
        %6341 = vmatpush1.msra.mxu0 %v5637
        %6342 = vmatprep.mubr.f32.mxu0 %v5924
        %6343 = vmatmul.mubr.f32.gmra.mrb[0].mxu0 %v5923
        %v6344 = vpop.f32.mrb[0].mxu0
        %v6345 = vadd.f32 %v6275, %v6344
        %v6346 = vpop.f32.mrb[0].mxu0
        %6347 = vdwg.mxu0
        %6348 = vmatprep.subr.mxu0 0.0
        %6349 = vmatpush1.msra.mxu0 %v5638
        %6350 = vmatprep.subr.mxu0 0.0
        %6351 = vmatpush1.msra.mxu0 %v5639
        %6352 = vmatprep.subr.mxu0 0.0
        %6353 = vmatpush1.msra.mxu0 %v5640
        %6354 = vmatprep.subr.mxu0 0.0
        %6355 = vmatpush1.msra.mxu0 %v5641
        %6356 = vmatprep.subr.mxu0 0.0
        %6357 = vmatpush1.msra.mxu0 %v5642
        %6358 = vmatprep.subr.mxu0 0.0
        %6359 = vmatpush1.msra.mxu0 %v5643
        %6360 = vmatprep.subr.mxu0 0.0
        %6361 = vmatpush1.msra.mxu0 %v5644
        %6362 = vmatprep.subr.mxu0 0.0
        %6363 = vmatpush1.msra.mxu0 %v5645
        %6364 = vmatprep.subr.mxu0 0.0
        %6365 = vmatpush1.msra.mxu0 %v5646
        %6366 = vmatprep.subr.mxu0 0.0
        %6367 = vmatpush1.msra.mxu0 %v5647
        %6368 = vmatprep.subr.mxu0 0.0
        %6369 = vmatpush1.msra.mxu0 %v5648
        %6370 = vmatprep.subr.mxu0 0.0
        %6371 = vmatpush1.msra.mxu0 %v5649
        %6372 = vmatprep.subr.mxu0 0.0
        %6373 = vmatpush1.msra.mxu0 %v5650
        %6374 = vmatprep.subr.mxu0 0.0
        %6375 = vmatpush1.msra.mxu0 %v5651
        %6376 = vmatprep.subr.mxu0 0.0
        %6377 = vmatpush1.msra.mxu0 %v5652
        %6378 = vmatprep.subr.mxu0 0.0
        %6379 = vmatpush1.msra.mxu0 %v5653
        %6380 = vmatprep.subr.mxu0 0.0
        %6381 = vmatpush1.msra.mxu0 %v5654
        %6382 = vmatprep.subr.mxu0 0.0
        %6383 = vmatpush1.msra.mxu0 %v5655
        %6384 = vmatprep.subr.mxu0 0.0
        %6385 = vmatpush1.msra.mxu0 %v5656
        %6386 = vmatprep.subr.mxu0 0.0
        %6387 = vmatpush1.msra.mxu0 %v5657
        %6388 = vmatprep.subr.mxu0 0.0
        %6389 = vmatpush1.msra.mxu0 %v5658
        %6390 = vmatprep.subr.mxu0 0.0
        %6391 = vmatpush1.msra.mxu0 %v5659
        %6392 = vmatprep.subr.mxu0 0.0
        %6393 = vmatpush1.msra.mxu0 %v5660
        %6394 = vmatprep.subr.mxu0 0.0
        %6395 = vmatpush1.msra.mxu0 %v5661
        %6396 = vmatprep.subr.mxu0 0.0
        %6397 = vmatpush1.msra.mxu0 %v5662
        %6398 = vmatprep.subr.mxu0 0.0
        %6399 = vmatpush1.msra.mxu0 %v5663
        %6400 = vmatprep.subr.mxu0 0.0
        %6401 = vmatpush1.msra.mxu0 %v5664
        %6402 = vmatprep.subr.mxu0 0.0
        %6403 = vmatpush1.msra.mxu0 %v5665
        %6404 = vmatprep.subr.mxu0 0.0
        %6405 = vmatpush1.msra.mxu0 %v5666
        %6406 = vmatprep.subr.mxu0 0.0
        %6407 = vmatpush1.msra.mxu0 %v5667
        %6408 = vmatprep.subr.mxu0 0.0
        %6409 = vmatpush1.msra.mxu0 %v5668
        %6410 = vmatprep.subr.mxu0 0.0
        %6411 = vmatpush1.msra.mxu0 %v5669
        %6412 = vmatprep.mubr.f32.mxu0 %v5926
        %6413 = vmatmul.mubr.f32.gmra.mrb[0].mxu0 %v5925
        %v6414 = vpop.f32.mrb[0].mxu0
        %v6415 = vadd.f32 %v6345, %v6414
        %v6416 = vpop.f32.mrb[0].mxu0
        %6417 = vdwg.mxu0
        %6418 = vmatprep.subr.mxu0 0.0
        %6419 = vmatpush1.msra.mxu0 %v5670
        %6420 = vmatprep.subr.mxu0 0.0
        %6421 = vmatpush1.msra.mxu0 %v5671
        %6422 = vmatprep.subr.mxu0 0.0
        %6423 = vmatpush1.msra.mxu0 %v5672
        %6424 = vmatprep.subr.mxu0 0.0
        %6425 = vmatpush1.msra.mxu0 %v5673
        %6426 = vmatprep.subr.mxu0 0.0
        %6427 = vmatpush1.msra.mxu0 %v5674
        %6428 = vmatprep.subr.mxu0 0.0
        %6429 = vmatpush1.msra.mxu0 %v5675
        %6430 = vmatprep.subr.mxu0 0.0
        %6431 = vmatpush1.msra.mxu0 %v5676
        %6432 = vmatprep.subr.mxu0 0.0
        %6433 = vmatpush1.msra.mxu0 %v5677
        %6434 = vmatprep.subr.mxu0 0.0
        %6435 = vmatpush1.msra.mxu0 %v5678
        %6436 = vmatprep.subr.mxu0 0.0
        %6437 = vmatpush1.msra.mxu0 %v5679
        %6438 = vmatprep.subr.mxu0 0.0
        %6439 = vmatpush1.msra.mxu0 %v5680
        %6440 = vmatprep.subr.mxu0 0.0
        %6441 = vmatpush1.msra.mxu0 %v5681
        %6442 = vmatprep.subr.mxu0 0.0
        %6443 = vmatpush1.msra.mxu0 %v5682
        %6444 = vmatprep.subr.mxu0 0.0
        %6445 = vmatpush1.msra.mxu0 %v5683
        %6446 = vmatprep.subr.mxu0 0.0
        %6447 = vmatpush1.msra.mxu0 %v5684
        %6448 = vmatprep.subr.mxu0 0.0
        %6449 = vmatpush1.msra.mxu0 %v5685
        %6450 = vmatprep.subr.mxu0 0.0
        %6451 = vmatpush1.msra.mxu0 0.0
        %6452 = vmatprep.subr.mxu0 0.0
        %6453 = vmatpush1.msra.mxu0 0.0
        %6454 = vmatprep.subr.mxu0 0.0
        %6455 = vmatpush1.msra.mxu0 0.0
        %6456 = vmatprep.subr.mxu0 0.0
        %6457 = vmatpush1.msra.mxu0 0.0
        %6458 = vmatprep.subr.mxu0 0.0
        %6459 = vmatpush1.msra.mxu0 0.0
        %6460 = vmatprep.subr.mxu0 0.0
        %6461 = vmatpush1.msra.mxu0 0.0
        %6462 = vmatprep.subr.mxu0 0.0
        %6463 = vmatpush1.msra.mxu0 0.0
        %6464 = vmatprep.subr.mxu0 0.0
        %6465 = vmatpush1.msra.mxu0 0.0
        %6466 = vmatprep.subr.mxu0 0.0
        %6467 = vmatpush1.msra.mxu0 0.0
        %6468 = vmatprep.subr.mxu0 0.0
        %6469 = vmatpush1.msra.mxu0 0.0
        %6470 = vmatprep.subr.mxu0 0.0
        %6471 = vmatpush1.msra.mxu0 0.0
        %6472 = vmatprep.subr.mxu0 0.0
        %6473 = vmatpush1.msra.mxu0 0.0
        %6474 = vmatprep.subr.mxu0 0.0
        %6475 = vmatpush1.msra.mxu0 0.0
        %6476 = vmatprep.subr.mxu0 0.0
        %6477 = vmatpush1.msra.mxu0 0.0
        %6478 = vmatprep.subr.mxu0 0.0
        %6479 = vmatpush1.msra.mxu0 0.0
        %6480 = vmatprep.subr.mxu0 0.0
        %6481 = vmatpush1.msra.mxu0 0.0
        %6482 = vmatprep.mubr.f32.mxu0 0.0
        %6483 = vmatmul.mubr.f32.gmra.mrb[0].mxu0 %v5927
        %v6484 = vpop.f32.mrb[0].mxu0
        %v6485 = vadd.f32 %v6415, %v6484
        %v6486 = vpop.f32.mrb[0].mxu0
        %6487 = vdwg.mxu0
        %vm6488 = vcmp.eq.s32.totalorder %v884, 0
        %vm6489 = vcmp.eq.s32.totalorder %v884, 1
        %v6490 = vlaneseq
        %v6491 = vshrl.u32 %v6490, 7
        %v6492 = vsub.s32 1, %v6491
        %v6493 = vrot.slane %v6485, %v6492
        %v6494 = vsel %vm6489, %v6493, 0.0
        %v6495 = vlaneseq
        %v6496 = vshrl.u32 %v6495, 7
        %v6497 = vsub.s32 0, %v6496
        %v6498 = vrot.slane %v6485, %v6497
        %v6499 = vsel %vm6488, %v6498, %v6494
        %vm6500 = vcmask 121856
        %6501 = vst.msk [vmem:[%s247] sm:$0xff] %vm6500, %v6499
        %s6502 = smul.u32 15, %s19
        %p6503 = scmp.lt.s32.totalorder %s6502, 29
        %s6504 = scalar_select %p6503, %s6502, 29
        %s6505 = scalar_lea.vmem %s3, %s6504
        %p6506 = scmp.lt.s32.totalorder %s19, 1
        %s6507 = scalar_select %p6506, %s19, 1
        %s6508 = smul.addr %s6507, 8
        %s6509 = scalar_lea.vmem %s4, %s6508
        // Predicated region
        $region37: #{cnn_generator_forward.4} parent=31 // pred_check
          %p6510 = pneg %p110
        $region38: #{cnn_generator_forward.4} parent=31 // pred_check_branch
          %6512 = sbr.rel (%p6510) target = $region40
        $region39: #{cnn_generator_forward.4} parent=31 // pred_region
          %s6513 = smul.u32 15, %s19
        $region40: #{cnn_generator_forward.4} parent=31 // pred_fallthru
          _
        // Predicated region
        $region41: #{cnn_generator_forward.4} parent=31 // pred_check
          %p6514 = pneg %p136
        $region42: #{cnn_generator_forward.4} parent=31 // pred_check_branch
          %6516 = sbr.rel (%p6514) target = $region44
        $region43: #{cnn_generator_forward.4} parent=31 // pred_region
          _
        $region44: #{cnn_generator_forward.4} parent=31 // pred_fallthru
          _
      $region32: #{cnn_generator_forward.4} parent=5 // pred_fallthru
        _
      %p6517 = scmp.le.s32.totalorder 2, %s14
      // Predicated region
      $region45: #{cnn_generator_forward.4} parent=5 // pred_check
        %p6518 = pneg %p6517
      $region46: #{cnn_generator_forward.4} parent=5 // pred_check_branch
        %6520 = sbr.rel (%p6518) target = $region48
      $region47: #{cnn_generator_forward.4} parent=5 // pred_region
        %s6521 = ssub.s32 %s14, 2
        // Predicated region
        $region49: #{cnn_generator_forward.4} parent=47 // pred_check
          %p6522 = pneg %p116
        $region50: #{cnn_generator_forward.4} parent=47 // pred_check_branch
          %6524 = sbr.rel (%p6522) target = $region52
        $region51: #{cnn_generator_forward.4} parent=47 // pred_region
          %s6525 = smul.u32 15, %s20
          %p6526 = scmp.lt.s32.totalorder %s6525, 29
          %s6527 = scalar_select %p6526, %s6525, 29
          %s6528 = scalar_lea.vmem %s3, %s6527
        $region52: #{cnn_generator_forward.4} parent=47 // pred_fallthru
          _
        // Predicated region
        $region53: #{cnn_generator_forward.4} parent=47 // pred_check
          %p6529 = pneg %p142
        $region54: #{cnn_generator_forward.4} parent=47 // pred_check_branch
          %6531 = sbr.rel (%p6529) target = $region56
        $region55: #{cnn_generator_forward.4} parent=47 // pred_region
          %p6532 = scmp.lt.s32.totalorder %s20, 1
          %s6533 = scalar_select %p6532, %s20, 1
          %s6534 = smul.addr %s6533, 8
          %s6535 = scalar_lea.vmem %s4, %s6534
        $region56: #{cnn_generator_forward.4} parent=47 // pred_fallthru
          _
      $region48: #{cnn_generator_forward.4} parent=5 // pred_fallthru
        _
    $region6: #{cnn_generator_forward.4} parent=1 // loop_footer
      %s18 = sadd.s32 1, %s14
    $region7: #{cnn_generator_forward.4} parent=1 // loop_footer_branch
      %13 = sbr.rel target = $region3
    $region8: #{cnn_generator_forward.4} parent=1 // loop_exit
      _
    %6536 = vsyncpa [#allocation3], 1
    %s6537 = scalar_lea.sflag [#allocation3], 1
    %6538 = vsyncpa %s6537, 1

// kernel: cnn_generator_forward.6
$region0: #{cnn_generator_forward.6}
  #allocation0 [shape = 'u32[]', space=smem, size = 0x4, offset = 0x4, fixed_abs, tag = 'smem constant byte address 0x4 - core index']
  #allocation1 [shape = 'u32[144,128]{1,0:T(1,128)}', space=vmem, size = 0x12000, scoped, tag = 'internal scratch']
  #allocation2 [shape = 'bf16[10,16,150]{2,1,0:T(16,128)(2,1)}', space=vmem, size = 0x14000, scoped, tag = 'scratch operand']
  %s0 = inlined_call_operand.vmem [shape: bf16[2,256,50], index: 0, kind: input, shape index: {}, may-alias: {0,1,2}]
  %s1 = inlined_call_operand.vmem [shape: bf16[2,256,50], index: 1, kind: input, shape index: {}, may-alias: {0,1,2}]
  %s2 = inlined_call_operand.vmem [shape: bf16[2,256,50], index: 2, kind: input, shape index: {}, may-alias: {0,1,2}]
  %s3 = inlined_call_operand.vmem [shape: f32[1,50], index: 3, kind: input, shape index: {}]
  %s4 = inlined_call_operand.vmem [shape: f32[1,50], index: 4, kind: input, shape index: {}]
  %s5 = inlined_call_operand.vmem [shape: bf16[3,150,25], index: 5, kind: input, shape index: {}]
  %s6 = inlined_call_operand.vmem [shape: f32[1,25], index: 6, kind: input, shape index: {}]
  %s7 = inlined_call_operand.vmem [shape: bf16[2,256,25], index: 7, kind: output, shape index: {0}]
  %s8 = inlined_call_operand.vmem [shape: f32[2,2,8,25], index: 8, kind: output, shape index: {1}]
  %9 = xla_tuple %s7, %s8
  %s10 = sld [smem:[#allocation0]]
  $region69: #{cnn_generator_forward.6} parent=0
    _
  %s12 = ssub.s32 1, %s10
  %s13 = scalar_select 0, %s12, %s10
  loop: start=0, step=1, limit=6
  $region2: #{cnn_generator_forward.6} parent=0 // loop_pre_header
    _
  $region3: #{cnn_generator_forward.6} parent=0 // loop_header
    %s15 = sphi 0, %s19
    %p16 = scmp.ge.s32.totalorder %s15, 6
    %s22 = sphi 0, %s34
    %s23 = sphi 0, %s30
    %s24 = sphi 0, %s22
    %s25 = sphi 0, %s23
    %s26 = sphi 0, %s24
    %s27 = sphi 0, %s25
    %s39 = sphi 0, %s41
    %s42 = sphi 0, %s39
    %s43 = sphi 0, %s42
    %s59 = sphi 0, %s43
    %s75 = sphi 0, %s77
    %s78 = sphi 0, %s75
    %s79 = sphi 0, %s78
    %s95 = sphi 0, %s79
    %s111 = sphi 0, %s113
    %s114 = sphi 0, %s111
    %s115 = sphi 0, %s114
    %s131 = sphi 0, %s115
    %s135 = sphi 0, %s135
    %s137 = sphi 0, %s135
    %s138 = sphi 0, %s137
    %s152 = sphi 0, %s138
    %s156 = sphi 0, %s156
    %s158 = sphi 0, %s156
    %s159 = sphi 0, %s158
    %s173 = sphi 0, %s159
    %s177 = sphi 0, %s177
    %s179 = sphi 0, %s177
    %s180 = sphi 0, %s179
    %s194 = sphi 0, %s180
    %s198 = sphi 0, %s198
    %s200 = sphi 0, %s198
    %s201 = sphi 0, %s200
    %s215 = sphi 0, %s201
    %s223 = sphi 0, %s225
    %s226 = sphi 0, %s223
    %s227 = sphi 0, %s226
    %s243 = sphi 0, %s227
    %s251 = sphi 0, %s253
    %s254 = sphi 0, %s251
    %s255 = sphi 0, %s254
    %s271 = sphi 0, %s255
  $region4: #{cnn_generator_forward.6} parent=0 // loop_header_branch
    %18 = sbr.rel (%p16) target = $region8
  $region5: #{cnn_generator_forward.6} parent=0 // loop_body
    %s20 = ssub.s32 %s15, 1
    %s21 = ssub.s32 %s15, 2
    %s28 = sadd.s32 1, %s23
    %p29 = scmp.ge.s32.totalorder %s28, 2
    %s30 = scalar_select %p29, 0, %s28
    %s31 = sadd.s32 1, %s22
    %s32 = scalar_select %p29, %s31, %s22
    %p33 = scmp.ge.s32.totalorder %s32, 2
    %s34 = scalar_select %p33, 0, %s32
    %s35 = ssub.s32 %s22, %s34
    %s36 = ssub.s32 %s23, %s30
    %s37 = sor.u32 %s35, %s36
    %p38 = scmp.eq.s32.totalorder %s37, 0
    %s40 = sadd.s32 %s39, 1
    %s41 = scalar_select %p38, %s39, %s40
    %p44 = pneg %p38
    %p45 = scmp.eq.s32.totalorder %s15, 3
    %p46 = por %p44, %p45
    %p47 = scmp.ne.s32.totalorder %s39, %s42
    %p48 = scmp.eq.s32.totalorder %s15, 0
    %p49 = por %p47, %p48
    %p50 = scmp.ne.s32.totalorder %s39, %s42
    %p51 = scmp.eq.s32.totalorder %s20, 3
    %p52 = por %p50, %p51
    %p53 = scmp.ne.s32.totalorder %s42, %s43
    %p54 = scmp.eq.s32.totalorder %s20, 0
    %p55 = por %p53, %p54
    %p56 = scmp.ne.s32.totalorder %s42, %s43
    %p57 = scmp.eq.s32.totalorder %s21, 3
    %p58 = por %p56, %p57
    %p60 = scmp.ne.s32.totalorder %s43, %s59
    %p61 = scmp.eq.s32.totalorder %s21, 0
    %p62 = por %p60, %p61
    %s63 = smul.u32 %s23, 8
    %s64 = ssub.s32 %s63, 1
    %p65 = scmp.gt.s32.totalorder %s64, 0
    %s66 = scalar_select %p65, %s64, 0
    %s67 = smul.u32 %s30, 8
    %s68 = ssub.s32 %s67, 1
    %p69 = scmp.gt.s32.totalorder %s68, 0
    %s70 = scalar_select %p69, %s68, 0
    %s71 = ssub.s32 %s22, %s34
    %s72 = ssub.s32 %s66, %s70
    %s73 = sor.u32 %s71, %s72
    %p74 = scmp.eq.s32.totalorder %s73, 0
    %s76 = sadd.s32 %s75, 1
    %s77 = scalar_select %p74, %s75, %s76
    %p80 = pneg %p74
    %p81 = scmp.eq.s32.totalorder %s15, 3
    %p82 = por %p80, %p81
    %p83 = scmp.ne.s32.totalorder %s75, %s78
    %p84 = scmp.eq.s32.totalorder %s15, 0
    %p85 = por %p83, %p84
    %p86 = scmp.ne.s32.totalorder %s75, %s78
    %p87 = scmp.eq.s32.totalorder %s20, 3
    %p88 = por %p86, %p87
    %p89 = scmp.ne.s32.totalorder %s78, %s79
    %p90 = scmp.eq.s32.totalorder %s20, 0
    %p91 = por %p89, %p90
    %p92 = scmp.ne.s32.totalorder %s78, %s79
    %p93 = scmp.eq.s32.totalorder %s21, 3
    %p94 = por %p92, %p93
    %p96 = scmp.ne.s32.totalorder %s79, %s95
    %p97 = scmp.eq.s32.totalorder %s21, 0
    %p98 = por %p96, %p97
    %s99 = sadd.s32 %s23, 1
    %s100 = smul.u32 %s99, 8
    %p101 = scmp.lt.s32.totalorder %s100, 15
    %s102 = scalar_select %p101, %s100, 15
    %s103 = sadd.s32 %s30, 1
    %s104 = smul.u32 %s103, 8
    %p105 = scmp.lt.s32.totalorder %s104, 15
    %s106 = scalar_select %p105, %s104, 15
    %s107 = ssub.s32 %s22, %s34
    %s108 = ssub.s32 %s102, %s106
    %s109 = sor.u32 %s107, %s108
    %p110 = scmp.eq.s32.totalorder %s109, 0
    %s112 = sadd.s32 %s111, 1
    %s113 = scalar_select %p110, %s111, %s112
    %p116 = pneg %p110
    %p117 = scmp.eq.s32.totalorder %s15, 3
    %p118 = por %p116, %p117
    %p119 = scmp.ne.s32.totalorder %s111, %s114
    %p120 = scmp.eq.s32.totalorder %s15, 0
    %p121 = por %p119, %p120
    %p122 = scmp.ne.s32.totalorder %s111, %s114
    %p123 = scmp.eq.s32.totalorder %s20, 3
    %p124 = por %p122, %p123
    %p125 = scmp.ne.s32.totalorder %s114, %s115
    %p126 = scmp.eq.s32.totalorder %s20, 0
    %p127 = por %p125, %p126
    %p128 = scmp.ne.s32.totalorder %s114, %s115
    %p129 = scmp.eq.s32.totalorder %s21, 3
    %p130 = por %p128, %p129
    %p132 = scmp.ne.s32.totalorder %s115, %s131
    %p133 = scmp.eq.s32.totalorder %s21, 0
    %p134 = por %p132, %p133
    %s136 = sadd.s32 %s135, 1
    %p139 = scmp.eq.s32.totalorder %s15, 3
    %p140 = scmp.ne.s32.totalorder %s135, %s137
    %p141 = scmp.eq.s32.totalorder %s15, 0
    %p142 = por %p140, %p141
    %p143 = scmp.ne.s32.totalorder %s135, %s137
    %p144 = scmp.eq.s32.totalorder %s20, 3
    %p145 = por %p143, %p144
    %p146 = scmp.ne.s32.totalorder %s137, %s138
    %p147 = scmp.eq.s32.totalorder %s20, 0
    %p148 = por %p146, %p147
    %p149 = scmp.ne.s32.totalorder %s137, %s138
    %p150 = scmp.eq.s32.totalorder %s21, 3
    %p151 = por %p149, %p150
    %p153 = scmp.ne.s32.totalorder %s138, %s152
    %p154 = scmp.eq.s32.totalorder %s21, 0
    %p155 = por %p153, %p154
    %s157 = sadd.s32 %s156, 1
    %p160 = scmp.eq.s32.totalorder %s15, 3
    %p161 = scmp.ne.s32.totalorder %s156, %s158
    %p162 = scmp.eq.s32.totalorder %s15, 0
    %p163 = por %p161, %p162
    %p164 = scmp.ne.s32.totalorder %s156, %s158
    %p165 = scmp.eq.s32.totalorder %s20, 3
    %p166 = por %p164, %p165
    %p167 = scmp.ne.s32.totalorder %s158, %s159
    %p168 = scmp.eq.s32.totalorder %s20, 0
    %p169 = por %p167, %p168
    %p170 = scmp.ne.s32.totalorder %s158, %s159
    %p171 = scmp.eq.s32.totalorder %s21, 3
    %p172 = por %p170, %p171
    %p174 = scmp.ne.s32.totalorder %s159, %s173
    %p175 = scmp.eq.s32.totalorder %s21, 0
    %p176 = por %p174, %p175
    %s178 = sadd.s32 %s177, 1
    %p181 = scmp.eq.s32.totalorder %s15, 3
    %p182 = scmp.ne.s32.totalorder %s177, %s179
    %p183 = scmp.eq.s32.totalorder %s15, 0
    %p184 = por %p182, %p183
    %p185 = scmp.ne.s32.totalorder %s177, %s179
    %p186 = scmp.eq.s32.totalorder %s20, 3
    %p187 = por %p185, %p186
    %p188 = scmp.ne.s32.totalorder %s179, %s180
    %p189 = scmp.eq.s32.totalorder %s20, 0
    %p190 = por %p188, %p189
    %p191 = scmp.ne.s32.totalorder %s179, %s180
    %p192 = scmp.eq.s32.totalorder %s21, 3
    %p193 = por %p191, %p192
    %p195 = scmp.ne.s32.totalorder %s180, %s194
    %p196 = scmp.eq.s32.totalorder %s21, 0
    %p197 = por %p195, %p196
    %s199 = sadd.s32 %s198, 1
    %p202 = scmp.eq.s32.totalorder %s15, 3
    %p203 = scmp.ne.s32.totalorder %s198, %s200
    %p204 = scmp.eq.s32.totalorder %s15, 0
    %p205 = por %p203, %p204
    %p206 = scmp.ne.s32.totalorder %s198, %s200
    %p207 = scmp.eq.s32.totalorder %s20, 3
    %p208 = por %p206, %p207
    %p209 = scmp.ne.s32.totalorder %s200, %s201
    %p210 = scmp.eq.s32.totalorder %s20, 0
    %p211 = por %p209, %p210
    %p212 = scmp.ne.s32.totalorder %s200, %s201
    %p213 = scmp.eq.s32.totalorder %s21, 3
    %p214 = por %p212, %p213
    %p216 = scmp.ne.s32.totalorder %s201, %s215
    %p217 = scmp.eq.s32.totalorder %s21, 0
    %p218 = por %p216, %p217
    %s219 = ssub.s32 %s22, %s34
    %s220 = ssub.s32 %s23, %s30
    %s221 = sor.u32 %s219, %s220
    %p222 = scmp.eq.s32.totalorder %s221, 0
    %s224 = sadd.s32 %s223, 1
    %s225 = scalar_select %p222, %s223, %s224
    %p228 = pneg %p222
    %p229 = scmp.eq.s32.totalorder %s15, 3
    %p230 = por %p228, %p229
    %p231 = scmp.ne.s32.totalorder %s223, %s226
    %p232 = scmp.eq.s32.totalorder %s15, 0
    %p233 = por %p231, %p232
    %p234 = scmp.ne.s32.totalorder %s223, %s226
    %p235 = scmp.eq.s32.totalorder %s20, 3
    %p236 = por %p234, %p235
    %p237 = scmp.ne.s32.totalorder %s226, %s227
    %p238 = scmp.eq.s32.totalorder %s20, 0
    %p239 = por %p237, %p238
    %p240 = scmp.ne.s32.totalorder %s226, %s227
    %p241 = scmp.eq.s32.totalorder %s21, 3
    %p242 = por %p240, %p241
    %p244 = scmp.ne.s32.totalorder %s227, %s243
    %p245 = scmp.eq.s32.totalorder %s21, 0
    %p246 = por %p244, %p245
    %s247 = ssub.s32 %s22, %s34
    %s248 = ssub.s32 %s23, %s30
    %s249 = sor.u32 %s247, %s248
    %p250 = scmp.eq.s32.totalorder %s249, 0
    %s252 = sadd.s32 %s251, 1
    %s253 = scalar_select %p250, %s251, %s252
    %p256 = pneg %p250
    %p257 = scmp.eq.s32.totalorder %s15, 3
    %p258 = por %p256, %p257
    %p259 = scmp.ne.s32.totalorder %s251, %s254
    %p260 = scmp.eq.s32.totalorder %s15, 0
    %p261 = por %p259, %p260
    %p262 = scmp.ne.s32.totalorder %s251, %s254
    %p263 = scmp.eq.s32.totalorder %s20, 3
    %p264 = por %p262, %p263
    %p265 = scmp.ne.s32.totalorder %s254, %s255
    %p266 = scmp.eq.s32.totalorder %s20, 0
    %p267 = por %p265, %p266
    %p268 = scmp.ne.s32.totalorder %s254, %s255
    %p269 = scmp.eq.s32.totalorder %s21, 3
    %p270 = por %p268, %p269
    %p272 = scmp.ne.s32.totalorder %s255, %s271
    %p273 = scmp.eq.s32.totalorder %s21, 0
    %p274 = por %p272, %p273
    %p275 = scmp.le.s32.totalorder 1, %s15
    %p276 = scmp.lt.s32.totalorder %s15, 5
    %p277 = pnand %p275, %p276
    %p278 = pneg %p277
    // Predicated region
    $region9: #{cnn_generator_forward.6} parent=5 // pred_check
      _
    $region10: #{cnn_generator_forward.6} parent=5 // pred_check_branch
      %280 = sbr.rel (%p277) target = $region12
    $region11: #{cnn_generator_forward.6} parent=5 // pred_region
      %s281 = ssub.s32 %s15, 1
      // Predicated region
      $region13: #{cnn_generator_forward.6} parent=11 // pred_check
        %p282 = pneg %p148
      $region14: #{cnn_generator_forward.6} parent=11 // pred_check_branch
        %284 = sbr.rel (%p282) target = $region16
      $region15: #{cnn_generator_forward.6} parent=11 // pred_region
        _
      $region16: #{cnn_generator_forward.6} parent=11 // pred_fallthru
        _
      // Predicated region
      $region17: #{cnn_generator_forward.6} parent=11 // pred_check
        %p285 = pneg %p169
      $region18: #{cnn_generator_forward.6} parent=11 // pred_check_branch
        %287 = sbr.rel (%p285) target = $region20
      $region19: #{cnn_generator_forward.6} parent=11 // pred_region
        _
      $region20: #{cnn_generator_forward.6} parent=11 // pred_fallthru
        _
      // Predicated region
      $region21: #{cnn_generator_forward.6} parent=11 // pred_check
        %p288 = pneg %p190
      $region22: #{cnn_generator_forward.6} parent=11 // pred_check_branch
        %290 = sbr.rel (%p288) target = $region24
      $region23: #{cnn_generator_forward.6} parent=11 // pred_region
        _
      $region24: #{cnn_generator_forward.6} parent=11 // pred_fallthru
        _
      // Predicated region
      $region25: #{cnn_generator_forward.6} parent=11 // pred_check
        %p291 = pneg %p211
      $region26: #{cnn_generator_forward.6} parent=11 // pred_check_branch
        %293 = sbr.rel (%p291) target = $region28
      $region27: #{cnn_generator_forward.6} parent=11 // pred_region
        _
      $region28: #{cnn_generator_forward.6} parent=11 // pred_fallthru
        _
    $region12: #{cnn_generator_forward.6} parent=5 // pred_fallthru
      _
    %p294 = scmp.lt.s32.totalorder %s15, 4
    // Predicated region
    $region29: #{cnn_generator_forward.6} parent=5 // pred_check
      %p295 = pneg %p294
    $region30: #{cnn_generator_forward.6} parent=5 // pred_check_branch
      %297 = sbr.rel (%p295) target = $region32
    $region31: #{cnn_generator_forward.6} parent=5 // pred_region
      // Predicated region
      $region33: #{cnn_generator_forward.6} parent=31 // pred_check
        %p298 = pneg %p49
      $region34: #{cnn_generator_forward.6} parent=31 // pred_check_branch
        %300 = sbr.rel (%p298) target = $region36
      $region35: #{cnn_generator_forward.6} parent=31 // pred_region
        %s301 = smul.u32 16, %s23
        %p302 = scmp.lt.s32.totalorder %s22, 1
        %s303 = scalar_select %p302, %s22, 1
        %p304 = scmp.lt.s32.totalorder %s301, 31
        %s305 = scalar_select %p304, %s301, 31
        %s306 = smul.addr %s303, 32
        %s307 = sadd.s32 %s305, %s306
        %s308 = smul.addr %s307, 4
        %s309 = scalar_lea.vmem %s0, %s308
        %s310 = smul.u32 16, %s23
      $region36: #{cnn_generator_forward.6} parent=31 // pred_fallthru
        _
      // Predicated region
      $region37: #{cnn_generator_forward.6} parent=31 // pred_check
        %p311 = pneg %p85
      $region38: #{cnn_generator_forward.6} parent=31 // pred_check_branch
        %313 = sbr.rel (%p311) target = $region40
      $region39: #{cnn_generator_forward.6} parent=31 // pred_region
        %s314 = smul.u32 %s23, 8
        %s315 = ssub.s32 %s314, 1
        %p316 = scmp.gt.s32.totalorder %s315, 0
        %s317 = scalar_select %p316, %s315, 0
        %s318 = smul.u32 2, %s317
        %p319 = scmp.lt.s32.totalorder %s22, 1
        %s320 = scalar_select %p319, %s22, 1
        %p321 = scmp.lt.s32.totalorder %s318, 31
        %s322 = scalar_select %p321, %s318, 31
        %s323 = smul.addr %s320, 32
        %s324 = sadd.s32 %s322, %s323
        %s325 = smul.addr %s324, 4
        %s326 = scalar_lea.vmem %s1, %s325
        %s327 = smul.u32 %s23, 8
        %s328 = ssub.s32 %s327, 1
        %p329 = scmp.gt.s32.totalorder %s328, 0
        %s330 = scalar_select %p329, %s328, 0
        %s331 = smul.u32 2, %s330
      $region40: #{cnn_generator_forward.6} parent=31 // pred_fallthru
        _
      // Predicated region
      $region41: #{cnn_generator_forward.6} parent=31 // pred_check
        %p332 = pneg %p121
      $region42: #{cnn_generator_forward.6} parent=31 // pred_check_branch
        %334 = sbr.rel (%p332) target = $region44
      $region43: #{cnn_generator_forward.6} parent=31 // pred_region
        %s335 = sadd.s32 %s23, 1
        %s336 = smul.u32 %s335, 8
        %p337 = scmp.lt.s32.totalorder %s336, 15
        %s338 = scalar_select %p337, %s336, 15
        %s339 = smul.u32 2, %s338
        %p340 = scmp.lt.s32.totalorder %s22, 1
        %s341 = scalar_select %p340, %s22, 1
        %p342 = scmp.lt.s32.totalorder %s339, 31
        %s343 = scalar_select %p342, %s339, 31
        %s344 = smul.addr %s341, 32
        %s345 = sadd.s32 %s343, %s344
        %s346 = smul.addr %s345, 4
        %s347 = scalar_lea.vmem %s2, %s346
        %s348 = sadd.s32 %s23, 1
        %s349 = smul.u32 %s348, 8
        %p350 = scmp.lt.s32.totalorder %s349, 15
        %s351 = scalar_select %p350, %s349, 15
        %s352 = smul.u32 2, %s351
      $region44: #{cnn_generator_forward.6} parent=31 // pred_fallthru
        _
    $region32: #{cnn_generator_forward.6} parent=5 // pred_fallthru
      _
    %p353 = scmp.le.s32.totalorder 1, %s15
    %p354 = scmp.lt.s32.totalorder %s15, 5
    %p355 = pnand %p353, %p354
    %p356 = pneg %p355
    // Predicated region
    $region45: #{cnn_generator_forward.6} parent=5 // pred_check
      _
    $region46: #{cnn_generator_forward.6} parent=5 // pred_check_branch
      %358 = sbr.rel (%p355) target = $region48
    $region47: #{cnn_generator_forward.6} parent=5 // pred_region
      %s359 = ssub.s32 %s15, 1
      %s360 = smul.u32 16, %s25
      %p361 = scmp.lt.s32.totalorder %s24, 1
      %s362 = scalar_select %p361, %s24, 1
      %p363 = scmp.lt.s32.totalorder %s360, 31
      %s364 = scalar_select %p363, %s360, 31
      %s365 = smul.addr %s362, 32
      %s366 = sadd.s32 %s364, %s365
      %s367 = smul.addr %s366, 4
      %s368 = scalar_lea.vmem %s0, %s367
      %p369 = pneg %p55
      %p370 = pneg %p52
      %s371 = smul.u32 %s25, 8
      %s372 = ssub.s32 %s371, 1
      %p373 = scmp.gt.s32.totalorder %s372, 0
      %s374 = scalar_select %p373, %s372, 0
      %s375 = smul.u32 2, %s374
      %p376 = scmp.lt.s32.totalorder %s24, 1
      %s377 = scalar_select %p376, %s24, 1
      %p378 = scmp.lt.s32.totalorder %s375, 31
      %s379 = scalar_select %p378, %s375, 31
      %s380 = smul.addr %s377, 32
      %s381 = sadd.s32 %s379, %s380
      %s382 = smul.addr %s381, 4
      %s383 = scalar_lea.vmem %s1, %s382
      %p384 = pneg %p91
      %p385 = pneg %p88
      %s386 = sadd.s32 %s25, 1
      %s387 = smul.u32 %s386, 8
      %p388 = scmp.lt.s32.totalorder %s387, 15
      %s389 = scalar_select %p388, %s387, 15
      %s390 = smul.u32 2, %s389
      %p391 = scmp.lt.s32.totalorder %s24, 1
      %s392 = scalar_select %p391, %s24, 1
      %p393 = scmp.lt.s32.totalorder %s390, 31
      %s394 = scalar_select %p393, %s390, 31
      %s395 = smul.addr %s392, 32
      %s396 = sadd.s32 %s394, %s395
      %s397 = smul.addr %s396, 4
      %s398 = scalar_lea.vmem %s2, %s397
      %p399 = pneg %p127
      %p400 = pneg %p124
      %p401 = pneg %p148
      %p402 = pneg %p145
      %p403 = pneg %p169
      %p404 = pneg %p166
      %p405 = pneg %p190
      %p406 = pneg %p187
      %p407 = pneg %p211
      %p408 = pneg %p208
      %p409 = pneg %p239
      %p410 = pneg %p236
      %s411 = smul.u32 16, %s25
      %p412 = scmp.lt.s32.totalorder %s24, 1
      %s413 = scalar_select %p412, %s24, 1
      %p414 = scmp.lt.s32.totalorder %s411, 31
      %s415 = scalar_select %p414, %s411, 31
      %s416 = smul.addr %s413, 32
      %s417 = sadd.s32 %s415, %s416
      %s418 = smul.addr %s417, 4
      %s419 = scalar_lea.vmem %s7, %s418
      %p420 = pneg %p267
      %p421 = pneg %p264
      %p422 = scmp.lt.s32.totalorder %s24, 1
      %s423 = scalar_select %p422, %s24, 1
      %p424 = scmp.lt.s32.totalorder %s25, 1
      %s425 = scalar_select %p424, %s25, 1
      %s426 = smul.addr %s423, 2
      %s427 = sadd.s32 %s425, %s426
      %s428 = smul.addr %s427, 8
      %s429 = scalar_lea.vmem %s8, %s428
      %s430 = smul.u32 16, %s25
      %p431 = scmp.lt.s32.totalorder %s24, 1
      %s432 = scalar_select %p431, %s24, 1
      %p433 = scmp.lt.s32.totalorder %s430, 31
      %s434 = scalar_select %p433, %s430, 31
      %s435 = smul.addr %s432, 32
      %s436 = sadd.s32 %s434, %s435
      %s437 = smul.addr %s436, 4
      %s438 = scalar_lea.vmem %s0, %s437
      %s439 = smul.u32 16, %s25
      %s440 = smul.u32 %s25, 8
      %s441 = ssub.s32 %s440, 1
      %p442 = scmp.gt.s32.totalorder %s441, 0
      %s443 = scalar_select %p442, %s441, 0
      %s444 = smul.u32 2, %s443
      %p445 = scmp.lt.s32.totalorder %s24, 1
      %s446 = scalar_select %p445, %s24, 1
      %p447 = scmp.lt.s32.totalorder %s444, 31
      %s448 = scalar_select %p447, %s444, 31
      %s449 = smul.addr %s446, 32
      %s450 = sadd.s32 %s448, %s449
      %s451 = smul.addr %s450, 4
      %s452 = scalar_lea.vmem %s1, %s451
      %s453 = smul.u32 %s25, 8
      %s454 = ssub.s32 %s453, 1
      %p455 = scmp.gt.s32.totalorder %s454, 0
      %s456 = scalar_select %p455, %s454, 0
      %s457 = smul.u32 2, %s456
      %s458 = sadd.s32 %s25, 1
      %s459 = smul.u32 %s458, 8
      %p460 = scmp.lt.s32.totalorder %s459, 15
      %s461 = scalar_select %p460, %s459, 15
      %s462 = smul.u32 2, %s461
      %p463 = scmp.lt.s32.totalorder %s24, 1
      %s464 = scalar_select %p463, %s24, 1
      %p465 = scmp.lt.s32.totalorder %s462, 31
      %s466 = scalar_select %p465, %s462, 31
      %s467 = smul.addr %s464, 32
      %s468 = sadd.s32 %s466, %s467
      %s469 = smul.addr %s468, 4
      %s470 = scalar_lea.vmem %s2, %s469
      %s471 = sadd.s32 %s25, 1
      %s472 = smul.u32 %s471, 8
      %p473 = scmp.lt.s32.totalorder %s472, 15
      %s474 = scalar_select %p473, %s472, 15
      %s475 = smul.u32 2, %s474
      %s476 = smul.u32 16, %s25
      %p477 = scmp.lt.s32.totalorder %s24, 1
      %s478 = scalar_select %p477, %s24, 1
      %p479 = scmp.lt.s32.totalorder %s476, 31
      %s480 = scalar_select %p479, %s476, 31
      %s481 = smul.addr %s478, 32
      %s482 = sadd.s32 %s480, %s481
      %s483 = smul.addr %s482, 4
      %s484 = scalar_lea.vmem %s7, %s483
      %s485 = smul.u32 16, %s25
      %p486 = scmp.lt.s32.totalorder %s24, 1
      %s487 = scalar_select %p486, %s24, 1
      %p488 = scmp.lt.s32.totalorder %s25, 1
      %s489 = scalar_select %p488, %s25, 1
      %s490 = smul.addr %s487, 2
      %s491 = sadd.s32 %s489, %s490
      %s492 = smul.addr %s491, 8
      %s493 = scalar_lea.vmem %s8, %s492
      %v495 = vld [vmem:[%s3] sm:$0x1]
      %v496 = vld [vmem:[%s4] sm:$0x1]
      %p497 = scmp.gt.s32.totalorder %s25, 0
      %s498 = scalar_select %p497, 1, 0
      %s499 = scvt.s32.f32 %s498
      %p501 = scmp.ne.f32.partialorder %s499, %s499
      %s502 = sshrl.u32 %s499, 16
      %s503 = sand.u32 %s502, 1
      %s504 = sadd.s32 32767, %s503
      %s505 = sadd.s32 %s499, %s504
      %s506 = sand.u32 %s505, 4294901760
      %s507 = scalar_select %p501, 2143289344, %s506
      %s509 = sshrl.u32 %s507, 16
      %p510 = scmp.lt.s32.totalorder %s25, 1
      %s511 = scalar_select %p510, 1, 0
      %s512 = scvt.s32.f32 %s511
      %p514 = scmp.ne.f32.partialorder %s512, %s512
      %s515 = sshrl.u32 %s512, 16
      %s516 = sand.u32 %s515, 1
      %s517 = sadd.s32 32767, %s516
      %s518 = sadd.s32 %s512, %s517
      %s519 = sand.u32 %s518, 4294901760
      %s520 = scalar_select %p514, 2143289344, %s519
      %s522 = sshrl.u32 %s520, 16
      %v523 = vld [vmem:[%s452] sm:$0xf]
      %v524 = vld [vmem:[%s452 + $0x4] sm:$0xf]
      %v525 = vunpack.c.l.bf16 %v523
      %v526 = vunpack.c.l.bf16 %v524
      %v528 = vlaneseq
      %v529 = vshrl.u32 %v528, 7
      %v530 = vsub.s32 0, %v529
      %v531 = vrot.slane %v495, %v530
      %v533 = vmul.f32 %v525, %v531
      %v534 = vmul.f32 %v526, %v531
      %v536 = vlaneseq
      %v537 = vshrl.u32 %v536, 7
      %v538 = vsub.s32 0, %v537
      %v539 = vrot.slane %v496, %v538
      %v541 = vadd.f32 %v533, %v539
      %v542 = vadd.f32 %v534, %v539
      %v543 = vmax.f32 %v541, 0.0
      %v544 = vmax.f32 %v542, 0.0
      %v545 = vpack.c.bf16 %v544, %v543
      %s546 = sshll.u32 %s509, 16
      %s547 = sor.u32 %s509, %s546
      %v548 = vstv %s547
      %v550 = vmul.bf16 %v545, %v548
      %v551 = vld [vmem:[%s438] sm:$0xf]
      %v552 = vld [vmem:[%s438 + $0x4] sm:$0xf]
      %v553 = vld [vmem:[%s438 + $0x8] sm:$0xf]
      %v554 = vld [vmem:[%s438 + $0xc] sm:$0xf]
      %v555 = vld [vmem:[%s438 + $0x10] sm:$0xf]
      %v556 = vld [vmem:[%s438 + $0x14] sm:$0xf]
      %v557 = vld [vmem:[%s438 + $0x18] sm:$0xf]
      %v558 = vld [vmem:[%s438 + $0x1c] sm:$0xf]
      %v559 = vld [vmem:[%s438 + $0x20] sm:$0xf]
      %v560 = vld [vmem:[%s438 + $0x24] sm:$0xf]
      %v561 = vld [vmem:[%s438 + $0x28] sm:$0xf]
      %v562 = vld [vmem:[%s438 + $0x2c] sm:$0xf]
      %v563 = vld [vmem:[%s438 + $0x30] sm:$0xf]
      %v564 = vld [vmem:[%s438 + $0x34] sm:$0xf]
      %v565 = vld [vmem:[%s438 + $0x38] sm:$0xf]
      %v566 = vld [vmem:[%s438 + $0x3c] sm:$0xf]
      %v567 = vunpack.c.l.bf16 %v551
      %v568 = vunpack.c.l.bf16 %v552
      %v569 = vunpack.c.l.bf16 %v553
      %v570 = vunpack.c.l.bf16 %v554
      %v571 = vunpack.c.l.bf16 %v555
      %v572 = vunpack.c.l.bf16 %v556
      %v573 = vunpack.c.l.bf16 %v557
      %v574 = vunpack.c.l.bf16 %v558
      %v575 = vunpack.c.l.bf16 %v559
      %v576 = vunpack.c.l.bf16 %v560
      %v577 = vunpack.c.l.bf16 %v561
      %v578 = vunpack.c.l.bf16 %v562
      %v579 = vunpack.c.l.bf16 %v563
      %v580 = vunpack.c.l.bf16 %v564
      %v581 = vunpack.c.l.bf16 %v565
      %v582 = vunpack.c.l.bf16 %v566
      %v583 = vmul.f32 %v567, %v531
      %v584 = vmul.f32 %v568, %v531
      %v585 = vmul.f32 %v569, %v531
      %v586 = vmul.f32 %v570, %v531
      %v587 = vmul.f32 %v571, %v531
      %v588 = vmul.f32 %v572, %v531
      %v589 = vmul.f32 %v573, %v531
      %v590 = vmul.f32 %v574, %v531
      %v591 = vmul.f32 %v575, %v531
      %v592 = vmul.f32 %v576, %v531
      %v593 = vmul.f32 %v577, %v531
      %v594 = vmul.f32 %v578, %v531
      %v595 = vmul.f32 %v579, %v531
      %v596 = vmul.f32 %v580, %v531
      %v597 = vmul.f32 %v581, %v531
      %v598 = vmul.f32 %v582, %v531
      %v599 = vadd.f32 %v583, %v539
      %v600 = vadd.f32 %v584, %v539
      %v601 = vadd.f32 %v585, %v539
      %v602 = vadd.f32 %v586, %v539
      %v603 = vadd.f32 %v587, %v539
      %v604 = vadd.f32 %v588, %v539
      %v605 = vadd.f32 %v589, %v539
      %v606 = vadd.f32 %v590, %v539
      %v607 = vadd.f32 %v591, %v539
      %v608 = vadd.f32 %v592, %v539
      %v609 = vadd.f32 %v593, %v539
      %v610 = vadd.f32 %v594, %v539
      %v611 = vadd.f32 %v595, %v539
      %v612 = vadd.f32 %v596, %v539
      %v613 = vadd.f32 %v597, %v539
      %v614 = vadd.f32 %v598, %v539
      %v615 = vmax.f32 %v599, 0.0
      %v616 = vmax.f32 %v600, 0.0
      %v617 = vmax.f32 %v601, 0.0
      %v618 = vmax.f32 %v602, 0.0
      %v619 = vmax.f32 %v603, 0.0
      %v620 = vmax.f32 %v604, 0.0
      %v621 = vmax.f32 %v605, 0.0
      %v622 = vmax.f32 %v606, 0.0
      %v623 = vmax.f32 %v607, 0.0
      %v624 = vmax.f32 %v608, 0.0
      %v625 = vmax.f32 %v609, 0.0
      %v626 = vmax.f32 %v610, 0.0
      %v627 = vmax.f32 %v611, 0.0
      %v628 = vmax.f32 %v612, 0.0
      %v629 = vmax.f32 %v613, 0.0
      %v630 = vmax.f32 %v614, 0.0
      %v631 = vpack.c.bf16 %v616, %v615
      %v632 = vpack.c.bf16 %v618, %v617
      %v633 = vpack.c.bf16 %v620, %v619
      %v634 = vpack.c.bf16 %v622, %v621
      %v635 = vpack.c.bf16 %v624, %v623
      %v636 = vpack.c.bf16 %v626, %v625
      %v637 = vpack.c.bf16 %v628, %v627
      %v638 = vpack.c.bf16 %v630, %v629
      %v639 = vld [vmem:[%s470] sm:$0xf]
      %v640 = vld [vmem:[%s470 + $0x4] sm:$0xf]
      %v641 = vunpack.c.l.bf16 %v639
      %v642 = vunpack.c.l.bf16 %v640
      %v643 = vmul.f32 %v641, %v531
      %v644 = vmul.f32 %v642, %v531
      %v645 = vadd.f32 %v643, %v539
      %v646 = vadd.f32 %v644, %v539
      %v647 = vmax.f32 %v645, 0.0
      %v648 = vmax.f32 %v646, 0.0
      %v649 = vpack.c.bf16 %v648, %v647
      %s650 = sshll.u32 %s522, 16
      %s651 = sor.u32 %s522, %s650
      %v652 = vstv %s651
      %v654 = vmul.bf16 %v649, %v652
      %v656 = vshrl.u32 %v550, 16
      %v658 = vrot.slane %v656, 7
      %v659 = vshll.u32 %v550, 16
      %v661 = vor.u32 %v658, %v659
      %v663 = vshrl.u32 %v631, 16
      %v665 = vrot.slane %v663, 7
      %v666 = vshll.u32 %v631, 16
      %v668 = vor.u32 %v665, %v666
      %v670 = vshrl.u32 %v632, 16
      %v672 = vrot.slane %v670, 7
      %v673 = vshll.u32 %v632, 16
      %v675 = vor.u32 %v672, %v673
      %v677 = vshrl.u32 %v633, 16
      %v679 = vrot.slane %v677, 7
      %v680 = vshll.u32 %v633, 16
      %v682 = vor.u32 %v679, %v680
      %v684 = vshrl.u32 %v634, 16
      %v686 = vrot.slane %v684, 7
      %v687 = vshll.u32 %v634, 16
      %v689 = vor.u32 %v686, %v687
      %v691 = vshrl.u32 %v635, 16
      %v693 = vrot.slane %v691, 7
      %v694 = vshll.u32 %v635, 16
      %v696 = vor.u32 %v693, %v694
      %v698 = vshrl.u32 %v636, 16
      %v700 = vrot.slane %v698, 7
      %v701 = vshll.u32 %v636, 16
      %v703 = vor.u32 %v700, %v701
      %v705 = vshrl.u32 %v637, 16
      %v707 = vrot.slane %v705, 7
      %v708 = vshll.u32 %v637, 16
      %v710 = vor.u32 %v707, %v708
      %v712 = vshrl.u32 %v638, 16
      %v714 = vrot.slane %v712, 7
      %v715 = vshll.u32 %v638, 16
      %v717 = vor.u32 %v714, %v715
      %v719 = vshrl.u32 %v654, 16
      %v721 = vrot.slane %v719, 7
      %v722 = vshll.u32 %v654, 16
      %v724 = vor.u32 %v721, %v722
      %vm735 = vcmask 1040384
      %vm736 = vsmask.f32 256
      %vm737 = vmand %vm735, %vm736
      %v738 = vsel %vm737, 0, %v661
      %v739 = vsel %vm737, 0, %v668
      %v740 = vsel %vm737, 0, %v675
      %v741 = vsel %vm737, 0, %v682
      %v742 = vsel %vm737, 0, %v689
      %v743 = vsel %vm737, 0, %v696
      %v744 = vsel %vm737, 0, %v703
      %v745 = vsel %vm737, 0, %v710
      %v746 = vsel %vm737, 0, %v717
      %v747 = vsel %vm737, 0, %v724
      %v748 = vrot.slane %v659, 1
      %v749 = vor.u32 %v656, %v748
      %v750 = vrot.slane %v666, 1
      %v751 = vor.u32 %v663, %v750
      %v752 = vrot.slane %v673, 1
      %v753 = vor.u32 %v670, %v752
      %v754 = vrot.slane %v680, 1
      %v755 = vor.u32 %v677, %v754
      %v756 = vrot.slane %v687, 1
      %v757 = vor.u32 %v684, %v756
      %v758 = vrot.slane %v694, 1
      %v759 = vor.u32 %v691, %v758
      %v760 = vrot.slane %v701, 1
      %v761 = vor.u32 %v698, %v760
      %v762 = vrot.slane %v708, 1
      %v763 = vor.u32 %v705, %v762
      %v764 = vrot.slane %v715, 1
      %v765 = vor.u32 %v712, %v764
      %v766 = vrot.slane %v722, 1
      %v767 = vor.u32 %v719, %v766
      %vm778 = vcmask 1047552
      %vm779 = vsmask.f32 7424
      %vm780 = vmand %vm778, %vm779
      %v781 = vsel %vm780, %v749, 0
      %v782 = vsel %vm780, %v751, 0
      %v783 = vsel %vm780, %v753, 0
      %v784 = vsel %vm780, %v755, 0
      %v785 = vsel %vm780, %v757, 0
      %v786 = vsel %vm780, %v759, 0
      %v787 = vsel %vm780, %v761, 0
      %v788 = vsel %vm780, %v763, 0
      %v789 = vsel %vm780, %v765, 0
      %v790 = vsel %vm780, %v767, 0
      %801 = vrot.lane.b32.xlu0 %v550, 50
      %v802 = vpop.permute.xlu0 %801
      %803 = vrot.lane.b32.xlu0 %v631, 50
      %v804 = vpop.permute.xlu0 %803
      %805 = vrot.lane.b32.xlu0 %v632, 50
      %v806 = vpop.permute.xlu0 %805
      %807 = vrot.lane.b32.xlu0 %v633, 50
      %v808 = vpop.permute.xlu0 %807
      %809 = vrot.lane.b32.xlu0 %v634, 50
      %v810 = vpop.permute.xlu0 %809
      %811 = vrot.lane.b32.xlu0 %v635, 50
      %v812 = vpop.permute.xlu0 %811
      %813 = vrot.lane.b32.xlu0 %v636, 50
      %v814 = vpop.permute.xlu0 %813
      %815 = vrot.lane.b32.xlu0 %v637, 50
      %v816 = vpop.permute.xlu0 %815
      %817 = vrot.lane.b32.xlu0 %v638, 50
      %v818 = vpop.permute.xlu0 %817
      %819 = vrot.lane.b32.xlu0 %v654, 50
      %v820 = vpop.permute.xlu0 %819
      %831 = vrot.lane.b32.xlu0 %v781, 100
      %v832 = vpop.permute.xlu0 %831
      %833 = vrot.lane.b32.xlu0 %v782, 100
      %v834 = vpop.permute.xlu0 %833
      %835 = vrot.lane.b32.xlu0 %v783, 100
      %v836 = vpop.permute.xlu0 %835
      %837 = vrot.lane.b32.xlu0 %v784, 100
      %v838 = vpop.permute.xlu0 %837
      %839 = vrot.lane.b32.xlu0 %v785, 100
      %v840 = vpop.permute.xlu0 %839
      %841 = vrot.lane.b32.xlu0 %v786, 100
      %v842 = vpop.permute.xlu0 %841
      %843 = vrot.lane.b32.xlu0 %v787, 100
      %v844 = vpop.permute.xlu0 %843
      %845 = vrot.lane.b32.xlu0 %v788, 100
      %v846 = vpop.permute.xlu0 %845
      %847 = vrot.lane.b32.xlu0 %v789, 100
      %v848 = vpop.permute.xlu0 %847
      %849 = vrot.lane.b32.xlu0 %v790, 100
      %v850 = vpop.permute.xlu0 %849
      %vm861 = vcmask 408576
      %v864 = vsel %vm861, %v738, %v802
      %v867 = vsel %vm861, %v739, %v804
      %v870 = vsel %vm861, %v740, %v806
      %v873 = vsel %vm861, %v741, %v808
      %v876 = vsel %vm861, %v742, %v810
      %v879 = vsel %vm861, %v743, %v812
      %v882 = vsel %vm861, %v744, %v814
      %v885 = vsel %vm861, %v745, %v816
      %v888 = vsel %vm861, %v746, %v818
      %v891 = vsel %vm861, %v747, %v820
      %vm892 = vcmask 818176
      %v894 = vsel %vm892, %v864, %v832
      %v897 = vsel %vm892, %v867, %v834
      %v900 = vsel %vm892, %v870, %v836
      %v903 = vsel %vm892, %v873, %v838
      %v906 = vsel %vm892, %v876, %v840
      %v909 = vsel %vm892, %v879, %v842
      %v912 = vsel %vm892, %v882, %v844
      %v915 = vsel %vm892, %v885, %v846
      %v918 = vsel %vm892, %v888, %v848
      %v921 = vsel %vm892, %v891, %v850
      %923 = vst [vmem:[#allocation2] sm:$0xff] %v894
      %vm924 = vcmask 179200
      %925 = vst.msk [vmem:[#allocation2 + $0x8] sm:$0xff] %vm924, %v832
      %926 = vst [vmem:[#allocation2 + $0x10] sm:$0xff] %v897
      %927 = vst.msk [vmem:[#allocation2 + $0x18] sm:$0xff] %vm924, %v834
      %928 = vst [vmem:[#allocation2 + $0x20] sm:$0xff] %v900
      %929 = vst.msk [vmem:[#allocation2 + $0x28] sm:$0xff] %vm924, %v836
      %930 = vst [vmem:[#allocation2 + $0x30] sm:$0xff] %v903
      %931 = vst.msk [vmem:[#allocation2 + $0x38] sm:$0xff] %vm924, %v838
      %932 = vst [vmem:[#allocation2 + $0x40] sm:$0xff] %v906
      %933 = vst.msk [vmem:[#allocation2 + $0x48] sm:$0xff] %vm924, %v840
      %934 = vst [vmem:[#allocation2 + $0x50] sm:$0xff] %v909
      %935 = vst.msk [vmem:[#allocation2 + $0x58] sm:$0xff] %vm924, %v842
      %936 = vst [vmem:[#allocation2 + $0x60] sm:$0xff] %v912
      %937 = vst.msk [vmem:[#allocation2 + $0x68] sm:$0xff] %vm924, %v844
      %938 = vst [vmem:[#allocation2 + $0x70] sm:$0xff] %v915
      %939 = vst.msk [vmem:[#allocation2 + $0x78] sm:$0xff] %vm924, %v846
      %940 = vst [vmem:[#allocation2 + $0x80] sm:$0xff] %v918
      %941 = vst.msk [vmem:[#allocation2 + $0x88] sm:$0xff] %vm924, %v848
      %942 = vst [vmem:[#allocation2 + $0x90] sm:$0xff] %v921
      %943 = vst.msk [vmem:[#allocation2 + $0x98] sm:$0xff] %vm924, %v850
      %v944 = vld [vmem:[#allocation2] sm:$0xff]
      %v945 = vld [vmem:[#allocation2 + $0x8] sm:$0xff]
      %v946 = vld [vmem:[#allocation2 + $0x10] sm:$0xff]
      %v947 = vld [vmem:[#allocation2 + $0x18] sm:$0xff]
      %v948 = vld [vmem:[#allocation2 + $0x20] sm:$0xff]
      %v949 = vld [vmem:[#allocation2 + $0x28] sm:$0xff]
      %v950 = vld [vmem:[#allocation2 + $0x30] sm:$0xff]
      %v951 = vld [vmem:[#allocation2 + $0x38] sm:$0xff]
      %v952 = vld [vmem:[#allocation2 + $0x40] sm:$0xff]
      %v953 = vld [vmem:[#allocation2 + $0x48] sm:$0xff]
      %v954 = vld [vmem:[#allocation2 + $0x50] sm:$0xff]
      %v955 = vld [vmem:[#allocation2 + $0x58] sm:$0xff]
      %v956 = vld [vmem:[#allocation2 + $0x60] sm:$0xff]
      %v957 = vld [vmem:[#allocation2 + $0x68] sm:$0xff]
      %v958 = vld [vmem:[#allocation2 + $0x70] sm:$0xff]
      %v959 = vld [vmem:[#allocation2 + $0x78] sm:$0xff]
      %v960 = vld [vmem:[%s5] sm:$0xf]
      %v961 = vld [vmem:[%s5 + $0x4] sm:$0xf]
      %v962 = vld [vmem:[%s5 + $0x8] sm:$0xf]
      %v963 = vld [vmem:[%s5 + $0xc] sm:$0xf]
      %v964 = vld [vmem:[%s5 + $0x10] sm:$0xf]
      %v965 = vld [vmem:[%s5 + $0x14] sm:$0xf]
      %v966 = vld [vmem:[%s5 + $0x18] sm:$0xf]
      %v967 = vld [vmem:[%s5 + $0x1c] sm:$0xf]
      %v968 = vld [vmem:[%s5 + $0x20] sm:$0xf]
      %v969 = vld [vmem:[%s5 + $0x24] sm:$0xf]
      %v970 = vld [vmem:[%s5 + $0x28] sm:$0xf]
      %v971 = vld [vmem:[%s5 + $0x2c] sm:$0xf]
      %v972 = vld [vmem:[%s5 + $0x30] sm:$0xf]
      %v973 = vld [vmem:[%s5 + $0x34] sm:$0xf]
      %v974 = vld [vmem:[%s5 + $0x38] sm:$0xf]
      %v975 = vld [vmem:[%s5 + $0x3c] sm:$0xf]
      %v976 = vld [vmem:[%s5 + $0x40] sm:$0xf]
      %v977 = vld [vmem:[%s5 + $0x44] sm:$0xf]
      %v978 = vld [vmem:[%s5 + $0x48] sm:$0x7]
      %s979 = scalar_lea.vmem [#allocation2], 16
      %v980 = vld [vmem:[%s979] sm:$0xff]
      %v981 = vld [vmem:[%s979 + $0x8] sm:$0xff]
      %v982 = vld [vmem:[%s979 + $0x10] sm:$0xff]
      %v983 = vld [vmem:[%s979 + $0x18] sm:$0xff]
      %v984 = vld [vmem:[%s979 + $0x20] sm:$0xff]
      %v985 = vld [vmem:[%s979 + $0x28] sm:$0xff]
      %v986 = vld [vmem:[%s979 + $0x30] sm:$0xff]
      %v987 = vld [vmem:[%s979 + $0x38] sm:$0xff]
      %v988 = vld [vmem:[%s979 + $0x40] sm:$0xff]
      %v989 = vld [vmem:[%s979 + $0x48] sm:$0xff]
      %v990 = vld [vmem:[%s979 + $0x50] sm:$0xff]
      %v991 = vld [vmem:[%s979 + $0x58] sm:$0xff]
      %v992 = vld [vmem:[%s979 + $0x60] sm:$0xff]
      %v993 = vld [vmem:[%s979 + $0x68] sm:$0xff]
      %v994 = vld [vmem:[%s979 + $0x70] sm:$0xff]
      %v995 = vld [vmem:[%s979 + $0x78] sm:$0xff]
      %s996 = scalar_lea.vmem %s5, 76
      %v997 = vld [vmem:[%s996] sm:$0xf]
      %v998 = vld [vmem:[%s996 + $0x4] sm:$0xf]
      %v999 = vld [vmem:[%s996 + $0x8] sm:$0xf]
      %v1000 = vld [vmem:[%s996 + $0xc] sm:$0xf]
      %v1001 = vld [vmem:[%s996 + $0x10] sm:$0xf]
      %v1002 = vld [vmem:[%s996 + $0x14] sm:$0xf]
      %v1003 = vld [vmem:[%s996 + $0x18] sm:$0xf]
      %v1004 = vld [vmem:[%s996 + $0x1c] sm:$0xf]
      %v1005 = vld [vmem:[%s996 + $0x20] sm:$0xf]
      %v1006 = vld [vmem:[%s996 + $0x24] sm:$0xf]
      %v1007 = vld [vmem:[%s996 + $0x28] sm:$0xf]
      %v1008 = vld [vmem:[%s996 + $0x2c] sm:$0xf]
      %v1009 = vld [vmem:[%s996 + $0x30] sm:$0xf]
      %v1010 = vld [vmem:[%s996 + $0x34] sm:$0xf]
      %v1011 = vld [vmem:[%s996 + $0x38] sm:$0xf]
      %v1012 = vld [vmem:[%s996 + $0x3c] sm:$0xf]
      %v1013 = vld [vmem:[%s996 + $0x40] sm:$0xf]
      %v1014 = vld [vmem:[%s996 + $0x44] sm:$0xf]
      %v1015 = vld [vmem:[%s996 + $0x48] sm:$0x7]
      %v1035 = vunpack.c.l.b16 %v997
      %v1036 = vunpack.c.l.b16 %v998
      %v1037 = vunpack.c.l.b16 %v999
      %v1038 = vunpack.c.l.b16 %v1000
      %v1039 = vunpack.c.l.b16 %v1001
      %v1040 = vunpack.c.l.b16 %v1002
      %v1041 = vunpack.c.l.b16 %v1003
      %v1042 = vunpack.c.l.b16 %v1004
      %v1043 = vunpack.c.l.b16 %v1005
      %v1044 = vunpack.c.l.b16 %v1006
      %v1045 = vunpack.c.l.b16 %v1007
      %v1046 = vunpack.c.l.b16 %v1008
      %v1047 = vunpack.c.l.b16 %v1009
      %v1048 = vunpack.c.l.b16 %v1010
      %v1049 = vunpack.c.l.b16 %v1011
      %v1050 = vunpack.c.l.b16 %v1012
      %v1051 = vunpack.c.l.b16 %v1013
      %v1052 = vunpack.c.l.b16 %v1014
      %v1053 = vunpack.c.l.b16 %v1015
      %v1054 = vpack.c.b16 %v1036, %v1035
      %v1055 = vpack.c.b16 %v1038, %v1037
      %v1056 = vpack.c.b16 %v1040, %v1039
      %v1057 = vpack.c.b16 %v1042, %v1041
      %v1058 = vpack.c.b16 %v1044, %v1043
      %v1059 = vpack.c.b16 %v1046, %v1045
      %v1060 = vpack.c.b16 %v1048, %v1047
      %v1061 = vpack.c.b16 %v1050, %v1049
      %v1062 = vpack.c.b16 %v1052, %v1051
      %v1063 = vpack.c.b16 %v1053, %v1053
      %v1074 = vsel %vm924, %v981, 0
      %v1077 = vsel %vm924, %v983, 0
      %v1080 = vsel %vm924, %v985, 0
      %v1083 = vsel %vm924, %v987, 0
      %v1086 = vsel %vm924, %v989, 0
      %v1089 = vsel %vm924, %v991, 0
      %v1092 = vsel %vm924, %v993, 0
      %v1095 = vsel %vm924, %v995, 0
      %vm1097 = vcmask 1042432
      %v1099 = vsel %vm1097, %v1063, 0
      %1101 = vmatprep.subr.bf16.mxu0 0
      %1102 = vmatpush1.bf16.msra.mxu0 %v1054
      %1103 = vmatprep.subr.bf16.mxu0 0
      %1104 = vmatpush1.bf16.msra.mxu0 %v1055
      %1105 = vmatprep.subr.bf16.mxu0 0
      %1106 = vmatpush1.bf16.msra.mxu0 %v1056
      %1107 = vmatprep.subr.bf16.mxu0 0
      %1108 = vmatpush1.bf16.msra.mxu0 %v1057
      %1109 = vmatprep.subr.bf16.mxu0 0
      %1110 = vmatpush1.bf16.msra.mxu0 %v1058
      %1111 = vmatprep.subr.bf16.mxu0 0
      %1112 = vmatpush1.bf16.msra.mxu0 %v1059
      %1113 = vmatprep.subr.bf16.mxu0 0
      %1114 = vmatpush1.bf16.msra.mxu0 %v1060
      %1115 = vmatprep.subr.bf16.mxu0 0
      %1116 = vmatpush1.bf16.msra.mxu0 %v1061
      %1117 = vmatprep.subr.bf16.mxu0 0
      %1118 = vmatpush1.bf16.msra.mxu0 %v1062
      %1119 = vmatprep.subr.bf16.mxu0 0
      %1120 = vmatpush1.bf16.msra.mxu0 %v1099
      %1121 = vmatprep.subr.bf16.mxu0 0
      %1122 = vmatpush1.bf16.msra.mxu0 0
      %1123 = vmatprep.subr.bf16.mxu0 0
      %1124 = vmatpush1.bf16.msra.mxu0 0
      %1125 = vmatprep.subr.bf16.mxu0 0
      %1126 = vmatpush1.bf16.msra.mxu0 0
      %1127 = vmatprep.subr.bf16.mxu0 0
      %1128 = vmatpush1.bf16.msra.mxu0 0
      %1129 = vmatprep.subr.bf16.mxu0 0
      %1130 = vmatpush1.bf16.msra.mxu0 0
      %1131 = vmatprep.subr.bf16.mxu0 0
      %1132 = vmatpush1.bf16.msra.mxu0 0
      %1133 = vmatprep.mubr.bf16.mxu0 %v1074
      %1134 = vmatmul.mubr.bf16.gmra.mrb[0].mxu0 %v980
      %v1135 = vpop.f32.mrb[0].mxu0
      %v1136 = vadd.f32 0.0, %v1135
      %v1137 = vpop.f32.mrb[0].mxu0
      %v1138 = vpop.f32.mrb[0].mxu0
      %v1139 = vadd.f32 0.0, %v1138
      %v1140 = vpop.f32.mrb[0].mxu0
      %1141 = vmatprep.mubr.bf16.mxu0 %v1077
      %1142 = vmatmul.mubr.bf16.gmra.mrb[0].mxu0 %v982
      %v1143 = vpop.f32.mrb[0].mxu0
      %v1144 = vadd.f32 0.0, %v1143
      %v1145 = vpop.f32.mrb[0].mxu0
      %v1146 = vpop.f32.mrb[0].mxu0
      %v1147 = vadd.f32 0.0, %v1146
      %v1148 = vpop.f32.mrb[0].mxu0
      %1149 = vmatprep.mubr.bf16.mxu0 %v1080
      %1150 = vmatmul.mubr.bf16.gmra.mrb[0].mxu0 %v984
      %v1151 = vpop.f32.mrb[0].mxu0
      %v1152 = vadd.f32 0.0, %v1151
      %v1153 = vpop.f32.mrb[0].mxu0
      %v1154 = vpop.f32.mrb[0].mxu0
      %v1155 = vadd.f32 0.0, %v1154
      %v1156 = vpop.f32.mrb[0].mxu0
      %1157 = vmatprep.mubr.bf16.mxu0 %v1083
      %1158 = vmatmul.mubr.bf16.gmra.mrb[0].mxu0 %v986
      %v1159 = vpop.f32.mrb[0].mxu0
      %v1160 = vadd.f32 0.0, %v1159
      %v1161 = vpop.f32.mrb[0].mxu0
      %v1162 = vpop.f32.mrb[0].mxu0
      %v1163 = vadd.f32 0.0, %v1162
      %v1164 = vpop.f32.mrb[0].mxu0
      %1165 = vmatprep.mubr.bf16.mxu0 %v1086
      %1166 = vmatmul.mubr.bf16.gmra.mrb[0].mxu0 %v988
      %v1167 = vpop.f32.mrb[0].mxu0
      %v1168 = vadd.f32 0.0, %v1167
      %v1169 = vpop.f32.mrb[0].mxu0
      %v1170 = vpop.f32.mrb[0].mxu0
      %v1171 = vadd.f32 0.0, %v1170
      %v1172 = vpop.f32.mrb[0].mxu0
      %1173 = vmatprep.mubr.bf16.mxu0 %v1089
      %1174 = vmatmul.mubr.bf16.gmra.mrb[0].mxu0 %v990
      %v1175 = vpop.f32.mrb[0].mxu0
      %v1176 = vadd.f32 0.0, %v1175
      %v1177 = vpop.f32.mrb[0].mxu0
      %v1178 = vpop.f32.mrb[0].mxu0
      %v1179 = vadd.f32 0.0, %v1178
      %v1180 = vpop.f32.mrb[0].mxu0
      %1181 = vmatprep.mubr.bf16.mxu0 %v1092
      %1182 = vmatmul.mubr.bf16.gmra.mrb[0].mxu0 %v992
      %v1183 = vpop.f32.mrb[0].mxu0
      %v1184 = vadd.f32 0.0, %v1183
      %v1185 = vpop.f32.mrb[0].mxu0
      %v1186 = vpop.f32.mrb[0].mxu0
      %v1187 = vadd.f32 0.0, %v1186
      %v1188 = vpop.f32.mrb[0].mxu0
      %1189 = vmatprep.mubr.bf16.mxu0 %v1095
      %1190 = vmatmul.mubr.bf16.gmra.mrb[0].mxu0 %v994
      %v1191 = vpop.f32.mrb[0].mxu0
      %v1192 = vadd.f32 0.0, %v1191
      %v1193 = vpop.f32.mrb[0].mxu0
      %v1194 = vpop.f32.mrb[0].mxu0
      %v1195 = vadd.f32 0.0, %v1194
      %v1196 = vpop.f32.mrb[0].mxu0
      %1197 = vdwg.mxu0
      %v1217 = vunpack.c.l.b16 %v960
      %v1218 = vunpack.c.l.b16 %v961
      %v1219 = vunpack.c.l.b16 %v962
      %v1220 = vunpack.c.l.b16 %v963
      %v1221 = vunpack.c.l.b16 %v964
      %v1222 = vunpack.c.l.b16 %v965
      %v1223 = vunpack.c.l.b16 %v966
      %v1224 = vunpack.c.l.b16 %v967
      %v1225 = vunpack.c.l.b16 %v968
      %v1226 = vunpack.c.l.b16 %v969
      %v1227 = vunpack.c.l.b16 %v970
      %v1228 = vunpack.c.l.b16 %v971
      %v1229 = vunpack.c.l.b16 %v972
      %v1230 = vunpack.c.l.b16 %v973
      %v1231 = vunpack.c.l.b16 %v974
      %v1232 = vunpack.c.l.b16 %v975
      %v1233 = vunpack.c.l.b16 %v976
      %v1234 = vunpack.c.l.b16 %v977
      %v1235 = vunpack.c.l.b16 %v978
      %v1236 = vpack.c.b16 %v1218, %v1217
      %v1237 = vpack.c.b16 %v1220, %v1219
      %v1238 = vpack.c.b16 %v1222, %v1221
      %v1239 = vpack.c.b16 %v1224, %v1223
      %v1240 = vpack.c.b16 %v1226, %v1225
      %v1241 = vpack.c.b16 %v1228, %v1227
      %v1242 = vpack.c.b16 %v1230, %v1229
      %v1243 = vpack.c.b16 %v1232, %v1231
      %v1244 = vpack.c.b16 %v1234, %v1233
      %v1245 = vpack.c.b16 %v1235, %v1235
      %v1256 = vsel %vm924, %v945, 0
      %v1259 = vsel %vm924, %v947, 0
      %v1262 = vsel %vm924, %v949, 0
      %v1265 = vsel %vm924, %v951, 0
      %v1268 = vsel %vm924, %v953, 0
      %v1271 = vsel %vm924, %v955, 0
      %v1274 = vsel %vm924, %v957, 0
      %v1277 = vsel %vm924, %v959, 0
      %v1280 = vsel %vm1097, %v1245, 0
      %1282 = vmatprep.subr.bf16.mxu0 0
      %1283 = vmatpush1.bf16.msra.mxu0 %v1236
      %1284 = vmatprep.subr.bf16.mxu0 0
      %1285 = vmatpush1.bf16.msra.mxu0 %v1237
      %1286 = vmatprep.subr.bf16.mxu0 0
      %1287 = vmatpush1.bf16.msra.mxu0 %v1238
      %1288 = vmatprep.subr.bf16.mxu0 0
      %1289 = vmatpush1.bf16.msra.mxu0 %v1239
      %1290 = vmatprep.subr.bf16.mxu0 0
      %1291 = vmatpush1.bf16.msra.mxu0 %v1240
      %1292 = vmatprep.subr.bf16.mxu0 0
      %1293 = vmatpush1.bf16.msra.mxu0 %v1241
      %1294 = vmatprep.subr.bf16.mxu0 0
      %1295 = vmatpush1.bf16.msra.mxu0 %v1242
      %1296 = vmatprep.subr.bf16.mxu0 0
      %1297 = vmatpush1.bf16.msra.mxu0 %v1243
      %1298 = vmatprep.subr.bf16.mxu0 0
      %1299 = vmatpush1.bf16.msra.mxu0 %v1244
      %1300 = vmatprep.subr.bf16.mxu0 0
      %1301 = vmatpush1.bf16.msra.mxu0 %v1280
      %1302 = vmatprep.subr.bf16.mxu0 0
      %1303 = vmatpush1.bf16.msra.mxu0 0
      %1304 = vmatprep.subr.bf16.mxu0 0
      %1305 = vmatpush1.bf16.msra.mxu0 0
      %1306 = vmatprep.subr.bf16.mxu0 0
      %1307 = vmatpush1.bf16.msra.mxu0 0
      %1308 = vmatprep.subr.bf16.mxu0 0
      %1309 = vmatpush1.bf16.msra.mxu0 0
      %1310 = vmatprep.subr.bf16.mxu0 0
      %1311 = vmatpush1.bf16.msra.mxu0 0
      %1312 = vmatprep.subr.bf16.mxu0 0
      %1313 = vmatpush1.bf16.msra.mxu0 0
      %1314 = vmatprep.mubr.bf16.mxu0 %v1256
      %1315 = vmatmul.mubr.bf16.gmra.mrb[0].mxu0 %v944
      %v1316 = vpop.f32.mrb[0].mxu0
      %v1317 = vadd.f32 %v1136, %v1316
      %v1318 = vpop.f32.mrb[0].mxu0
      %v1319 = vpop.f32.mrb[0].mxu0
      %v1320 = vadd.f32 %v1139, %v1319
      %v1321 = vpop.f32.mrb[0].mxu0
      %1322 = vmatprep.mubr.bf16.mxu0 %v1259
      %1323 = vmatmul.mubr.bf16.gmra.mrb[0].mxu0 %v946
      %v1324 = vpop.f32.mrb[0].mxu0
      %v1325 = vadd.f32 %v1144, %v1324
      %v1326 = vpop.f32.mrb[0].mxu0
      %v1327 = vpop.f32.mrb[0].mxu0
      %v1328 = vadd.f32 %v1147, %v1327
      %v1329 = vpop.f32.mrb[0].mxu0
      %1330 = vmatprep.mubr.bf16.mxu0 %v1262
      %1331 = vmatmul.mubr.bf16.gmra.mrb[0].mxu0 %v948
      %v1332 = vpop.f32.mrb[0].mxu0
      %v1333 = vadd.f32 %v1152, %v1332
      %v1334 = vpop.f32.mrb[0].mxu0
      %v1335 = vpop.f32.mrb[0].mxu0
      %v1336 = vadd.f32 %v1155, %v1335
      %v1337 = vpop.f32.mrb[0].mxu0
      %1338 = vmatprep.mubr.bf16.mxu0 %v1265
      %1339 = vmatmul.mubr.bf16.gmra.mrb[0].mxu0 %v950
      %v1340 = vpop.f32.mrb[0].mxu0
      %v1341 = vadd.f32 %v1160, %v1340
      %v1342 = vpop.f32.mrb[0].mxu0
      %v1343 = vpop.f32.mrb[0].mxu0
      %v1344 = vadd.f32 %v1163, %v1343
      %v1345 = vpop.f32.mrb[0].mxu0
      %1346 = vmatprep.mubr.bf16.mxu0 %v1268
      %1347 = vmatmul.mubr.bf16.gmra.mrb[0].mxu0 %v952
      %v1348 = vpop.f32.mrb[0].mxu0
      %v1349 = vadd.f32 %v1168, %v1348
      %v1350 = vpop.f32.mrb[0].mxu0
      %v1351 = vpop.f32.mrb[0].mxu0
      %v1352 = vadd.f32 %v1171, %v1351
      %v1353 = vpop.f32.mrb[0].mxu0
      %1354 = vmatprep.mubr.bf16.mxu0 %v1271
      %1355 = vmatmul.mubr.bf16.gmra.mrb[0].mxu0 %v954
      %v1356 = vpop.f32.mrb[0].mxu0
      %v1357 = vadd.f32 %v1176, %v1356
      %v1358 = vpop.f32.mrb[0].mxu0
      %v1359 = vpop.f32.mrb[0].mxu0
      %v1360 = vadd.f32 %v1179, %v1359
      %v1361 = vpop.f32.mrb[0].mxu0
      %1362 = vmatprep.mubr.bf16.mxu0 %v1274
      %1363 = vmatmul.mubr.bf16.gmra.mrb[0].mxu0 %v956
      %v1364 = vpop.f32.mrb[0].mxu0
      %v1365 = vadd.f32 %v1184, %v1364
      %v1366 = vpop.f32.mrb[0].mxu0
      %v1367 = vpop.f32.mrb[0].mxu0
      %v1368 = vadd.f32 %v1187, %v1367
      %v1369 = vpop.f32.mrb[0].mxu0
      %1370 = vmatprep.mubr.bf16.mxu0 %v1277
      %1371 = vmatmul.mubr.bf16.gmra.mrb[0].mxu0 %v958
      %v1372 = vpop.f32.mrb[0].mxu0
      %v1373 = vadd.f32 %v1192, %v1372
      %v1374 = vpop.f32.mrb[0].mxu0
      %v1375 = vpop.f32.mrb[0].mxu0
      %v1376 = vadd.f32 %v1195, %v1375
      %v1377 = vpop.f32.mrb[0].mxu0
      %1378 = vdwg.mxu0
      %s1379 = scalar_lea.vmem [#allocation2], 32
      %v1380 = vld [vmem:[%s1379] sm:$0xff]
      %v1381 = vld [vmem:[%s1379 + $0x8] sm:$0xff]
      %v1382 = vld [vmem:[%s1379 + $0x10] sm:$0xff]
      %v1383 = vld [vmem:[%s1379 + $0x18] sm:$0xff]
      %v1384 = vld [vmem:[%s1379 + $0x20] sm:$0xff]
      %v1385 = vld [vmem:[%s1379 + $0x28] sm:$0xff]
      %v1386 = vld [vmem:[%s1379 + $0x30] sm:$0xff]
      %v1387 = vld [vmem:[%s1379 + $0x38] sm:$0xff]
      %v1388 = vld [vmem:[%s1379 + $0x40] sm:$0xff]
      %v1389 = vld [vmem:[%s1379 + $0x48] sm:$0xff]
      %v1390 = vld [vmem:[%s1379 + $0x50] sm:$0xff]
      %v1391 = vld [vmem:[%s1379 + $0x58] sm:$0xff]
      %v1392 = vld [vmem:[%s1379 + $0x60] sm:$0xff]
      %v1393 = vld [vmem:[%s1379 + $0x68] sm:$0xff]
      %v1394 = vld [vmem:[%s1379 + $0x70] sm:$0xff]
      %v1395 = vld [vmem:[%s1379 + $0x78] sm:$0xff]
      %s1396 = scalar_lea.vmem %s5, 152
      %v1397 = vld [vmem:[%s1396] sm:$0xf]
      %v1398 = vld [vmem:[%s1396 + $0x4] sm:$0xf]
      %v1399 = vld [vmem:[%s1396 + $0x8] sm:$0xf]
      %v1400 = vld [vmem:[%s1396 + $0xc] sm:$0xf]
      %v1401 = vld [vmem:[%s1396 + $0x10] sm:$0xf]
      %v1402 = vld [vmem:[%s1396 + $0x14] sm:$0xf]
      %v1403 = vld [vmem:[%s1396 + $0x18] sm:$0xf]
      %v1404 = vld [vmem:[%s1396 + $0x1c] sm:$0xf]
      %v1405 = vld [vmem:[%s1396 + $0x20] sm:$0xf]
      %v1406 = vld [vmem:[%s1396 + $0x24] sm:$0xf]
      %v1407 = vld [vmem:[%s1396 + $0x28] sm:$0xf]
      %v1408 = vld [vmem:[%s1396 + $0x2c] sm:$0xf]
      %v1409 = vld [vmem:[%s1396 + $0x30] sm:$0xf]
      %v1410 = vld [vmem:[%s1396 + $0x34] sm:$0xf]
      %v1411 = vld [vmem:[%s1396 + $0x38] sm:$0xf]
      %v1412 = vld [vmem:[%s1396 + $0x3c] sm:$0xf]
      %v1413 = vld [vmem:[%s1396 + $0x40] sm:$0xf]
      %v1414 = vld [vmem:[%s1396 + $0x44] sm:$0xf]
      %v1415 = vld [vmem:[%s1396 + $0x48] sm:$0x7]
      %v1435 = vunpack.c.l.b16 %v1397
      %v1436 = vunpack.c.l.b16 %v1398
      %v1437 = vunpack.c.l.b16 %v1399
      %v1438 = vunpack.c.l.b16 %v1400
      %v1439 = vunpack.c.l.b16 %v1401
      %v1440 = vunpack.c.l.b16 %v1402
      %v1441 = vunpack.c.l.b16 %v1403
      %v1442 = vunpack.c.l.b16 %v1404
      %v1443 = vunpack.c.l.b16 %v1405
      %v1444 = vunpack.c.l.b16 %v1406
      %v1445 = vunpack.c.l.b16 %v1407
      %v1446 = vunpack.c.l.b16 %v1408
      %v1447 = vunpack.c.l.b16 %v1409
      %v1448 = vunpack.c.l.b16 %v1410
      %v1449 = vunpack.c.l.b16 %v1411
      %v1450 = vunpack.c.l.b16 %v1412
      %v1451 = vunpack.c.l.b16 %v1413
      %v1452 = vunpack.c.l.b16 %v1414
      %v1453 = vunpack.c.l.b16 %v1415
      %v1454 = vpack.c.b16 %v1436, %v1435
      %v1455 = vpack.c.b16 %v1438, %v1437
      %v1456 = vpack.c.b16 %v1440, %v1439
      %v1457 = vpack.c.b16 %v1442, %v1441
      %v1458 = vpack.c.b16 %v1444, %v1443
      %v1459 = vpack.c.b16 %v1446, %v1445
      %v1460 = vpack.c.b16 %v1448, %v1447
      %v1461 = vpack.c.b16 %v1450, %v1449
      %v1462 = vpack.c.b16 %v1452, %v1451
      %v1463 = vpack.c.b16 %v1453, %v1453
      %v1474 = vsel %vm924, %v1381, 0
      %v1477 = vsel %vm924, %v1383, 0
      %v1480 = vsel %vm924, %v1385, 0
      %v1483 = vsel %vm924, %v1387, 0
      %v1486 = vsel %vm924, %v1389, 0
      %v1489 = vsel %vm924, %v1391, 0
      %v1492 = vsel %vm924, %v1393, 0
      %v1495 = vsel %vm924, %v1395, 0
      %v1498 = vsel %vm1097, %v1463, 0
      %1500 = vmatprep.subr.bf16.mxu0 0
      %1501 = vmatpush1.bf16.msra.mxu0 %v1454
      %1502 = vmatprep.subr.bf16.mxu0 0
      %1503 = vmatpush1.bf16.msra.mxu0 %v1455
      %1504 = vmatprep.subr.bf16.mxu0 0
      %1505 = vmatpush1.bf16.msra.mxu0 %v1456
      %1506 = vmatprep.subr.bf16.mxu0 0
      %1507 = vmatpush1.bf16.msra.mxu0 %v1457
      %1508 = vmatprep.subr.bf16.mxu0 0
      %1509 = vmatpush1.bf16.msra.mxu0 %v1458
      %1510 = vmatprep.subr.bf16.mxu0 0
      %1511 = vmatpush1.bf16.msra.mxu0 %v1459
      %1512 = vmatprep.subr.bf16.mxu0 0
      %1513 = vmatpush1.bf16.msra.mxu0 %v1460
      %1514 = vmatprep.subr.bf16.mxu0 0
      %1515 = vmatpush1.bf16.msra.mxu0 %v1461
      %1516 = vmatprep.subr.bf16.mxu0 0
      %1517 = vmatpush1.bf16.msra.mxu0 %v1462
      %1518 = vmatprep.subr.bf16.mxu0 0
      %1519 = vmatpush1.bf16.msra.mxu0 %v1498
      %1520 = vmatprep.subr.bf16.mxu0 0
      %1521 = vmatpush1.bf16.msra.mxu0 0
      %1522 = vmatprep.subr.bf16.mxu0 0
      %1523 = vmatpush1.bf16.msra.mxu0 0
      %1524 = vmatprep.subr.bf16.mxu0 0
      %1525 = vmatpush1.bf16.msra.mxu0 0
      %1526 = vmatprep.subr.bf16.mxu0 0
      %1527 = vmatpush1.bf16.msra.mxu0 0
      %1528 = vmatprep.subr.bf16.mxu0 0
      %1529 = vmatpush1.bf16.msra.mxu0 0
      %1530 = vmatprep.subr.bf16.mxu0 0
      %1531 = vmatpush1.bf16.msra.mxu0 0
      %1532 = vmatprep.mubr.bf16.mxu0 %v1474
      %1533 = vmatmul.mubr.bf16.gmra.mrb[0].mxu0 %v1380
      %v1534 = vpop.f32.mrb[0].mxu0
      %v1535 = vadd.f32 0.0, %v1534
      %v1536 = vpop.f32.mrb[0].mxu0
      %v1537 = vpop.f32.mrb[0].mxu0
      %v1538 = vadd.f32 0.0, %v1537
      %v1539 = vpop.f32.mrb[0].mxu0
      %1540 = vmatprep.mubr.bf16.mxu0 %v1477
      %1541 = vmatmul.mubr.bf16.gmra.mrb[0].mxu0 %v1382
      %v1542 = vpop.f32.mrb[0].mxu0
      %v1543 = vadd.f32 0.0, %v1542
      %v1544 = vpop.f32.mrb[0].mxu0
      %v1545 = vpop.f32.mrb[0].mxu0
      %v1546 = vadd.f32 0.0, %v1545
      %v1547 = vpop.f32.mrb[0].mxu0
      %1548 = vmatprep.mubr.bf16.mxu0 %v1480
      %1549 = vmatmul.mubr.bf16.gmra.mrb[0].mxu0 %v1384
      %v1550 = vpop.f32.mrb[0].mxu0
      %v1551 = vadd.f32 0.0, %v1550
      %v1552 = vpop.f32.mrb[0].mxu0
      %v1553 = vpop.f32.mrb[0].mxu0
      %v1554 = vadd.f32 0.0, %v1553
      %v1555 = vpop.f32.mrb[0].mxu0
      %1556 = vmatprep.mubr.bf16.mxu0 %v1483
      %1557 = vmatmul.mubr.bf16.gmra.mrb[0].mxu0 %v1386
      %v1558 = vpop.f32.mrb[0].mxu0
      %v1559 = vadd.f32 0.0, %v1558
      %v1560 = vpop.f32.mrb[0].mxu0
      %v1561 = vpop.f32.mrb[0].mxu0
      %v1562 = vadd.f32 0.0, %v1561
      %v1563 = vpop.f32.mrb[0].mxu0
      %1564 = vmatprep.mubr.bf16.mxu0 %v1486
      %1565 = vmatmul.mubr.bf16.gmra.mrb[0].mxu0 %v1388
      %v1566 = vpop.f32.mrb[0].mxu0
      %v1567 = vadd.f32 0.0, %v1566
      %v1568 = vpop.f32.mrb[0].mxu0
      %v1569 = vpop.f32.mrb[0].mxu0
      %v1570 = vadd.f32 0.0, %v1569
      %v1571 = vpop.f32.mrb[0].mxu0
      %1572 = vmatprep.mubr.bf16.mxu0 %v1489
      %1573 = vmatmul.mubr.bf16.gmra.mrb[0].mxu0 %v1390
      %v1574 = vpop.f32.mrb[0].mxu0
      %v1575 = vadd.f32 0.0, %v1574
      %v1576 = vpop.f32.mrb[0].mxu0
      %v1577 = vpop.f32.mrb[0].mxu0
      %v1578 = vadd.f32 0.0, %v1577
      %v1579 = vpop.f32.mrb[0].mxu0
      %1580 = vmatprep.mubr.bf16.mxu0 %v1492
      %1581 = vmatmul.mubr.bf16.gmra.mrb[0].mxu0 %v1392
      %v1582 = vpop.f32.mrb[0].mxu0
      %v1583 = vadd.f32 0.0, %v1582
      %v1584 = vpop.f32.mrb[0].mxu0
      %v1585 = vpop.f32.mrb[0].mxu0
      %v1586 = vadd.f32 0.0, %v1585
      %v1587 = vpop.f32.mrb[0].mxu0
      %1588 = vmatprep.mubr.bf16.mxu0 %v1495
      %1589 = vmatmul.mubr.bf16.gmra.mrb[0].mxu0 %v1394
      %v1590 = vpop.f32.mrb[0].mxu0
      %v1591 = vadd.f32 0.0, %v1590
      %v1592 = vpop.f32.mrb[0].mxu0
      %v1593 = vpop.f32.mrb[0].mxu0
      %v1594 = vadd.f32 0.0, %v1593
      %v1595 = vpop.f32.mrb[0].mxu0
      %1596 = vdwg.mxu0
      %v1597 = vadd.f32 %v1317, %v1535
      %v1598 = vadd.f32 %v1320, %v1538
      %v1599 = vadd.f32 %v1325, %v1543
      %v1600 = vadd.f32 %v1328, %v1546
      %v1601 = vadd.f32 %v1333, %v1551
      %v1602 = vadd.f32 %v1336, %v1554
      %v1603 = vadd.f32 %v1341, %v1559
      %v1604 = vadd.f32 %v1344, %v1562
      %v1605 = vadd.f32 %v1349, %v1567
      %v1606 = vadd.f32 %v1352, %v1570
      %v1607 = vadd.f32 %v1357, %v1575
      %v1608 = vadd.f32 %v1360, %v1578
      %v1609 = vadd.f32 %v1365, %v1583
      %v1610 = vadd.f32 %v1368, %v1586
      %v1611 = vadd.f32 %v1373, %v1591
      %v1612 = vadd.f32 %v1376, %v1594
      %v1613 = vld [vmem:[%s6] sm:$0x1]
      %v1615 = vlaneseq
      %v1616 = vshrl.u32 %v1615, 7
      %v1617 = vsub.s32 0, %v1616
      %v1618 = vrot.slane %v1613, %v1617
      %v1620 = vadd.f32 %v1597, %v1618
      %v1621 = vadd.f32 %v1598, %v1618
      %v1622 = vadd.f32 %v1599, %v1618
      %v1623 = vadd.f32 %v1600, %v1618
      %v1624 = vadd.f32 %v1601, %v1618
      %v1625 = vadd.f32 %v1602, %v1618
      %v1626 = vadd.f32 %v1603, %v1618
      %v1627 = vadd.f32 %v1604, %v1618
      %v1628 = vadd.f32 %v1605, %v1618
      %v1629 = vadd.f32 %v1606, %v1618
      %v1630 = vadd.f32 %v1607, %v1618
      %v1631 = vadd.f32 %v1608, %v1618
      %v1632 = vadd.f32 %v1609, %v1618
      %v1633 = vadd.f32 %v1610, %v1618
      %v1634 = vadd.f32 %v1611, %v1618
      %v1635 = vadd.f32 %v1612, %v1618
      %v1636 = vpack.c.bf16 %v1621, %v1620
      %v1637 = vpack.c.bf16 %v1623, %v1622
      %v1638 = vpack.c.bf16 %v1625, %v1624
      %v1639 = vpack.c.bf16 %v1627, %v1626
      %v1640 = vpack.c.bf16 %v1629, %v1628
      %v1641 = vpack.c.bf16 %v1631, %v1630
      %v1642 = vpack.c.bf16 %v1633, %v1632
      %v1643 = vpack.c.bf16 %v1635, %v1634
      %v1652 = vunpack.c.l.b16 %v1636
      %v1653 = vunpack.c.h.b16 %v1636
      %v1654 = vunpack.c.l.b16 %v1637
      %v1655 = vunpack.c.h.b16 %v1637
      %v1656 = vunpack.c.l.b16 %v1638
      %v1657 = vunpack.c.h.b16 %v1638
      %v1658 = vunpack.c.l.b16 %v1639
      %v1659 = vunpack.c.h.b16 %v1639
      %v1660 = vunpack.c.l.b16 %v1640
      %v1661 = vunpack.c.h.b16 %v1640
      %v1662 = vunpack.c.l.b16 %v1641
      %v1663 = vunpack.c.h.b16 %v1641
      %v1664 = vunpack.c.l.b16 %v1642
      %v1665 = vunpack.c.h.b16 %v1642
      %v1666 = vunpack.c.l.b16 %v1643
      %v1667 = vunpack.c.h.b16 %v1643
      %v1668 = vpack.c.b16 %v1652, %v1652
      %v1669 = vpack.c.b16 %v1653, %v1653
      %v1670 = vpack.c.b16 %v1654, %v1654
      %v1671 = vpack.c.b16 %v1655, %v1655
      %v1672 = vpack.c.b16 %v1656, %v1656
      %v1673 = vpack.c.b16 %v1657, %v1657
      %v1674 = vpack.c.b16 %v1658, %v1658
      %v1675 = vpack.c.b16 %v1659, %v1659
      %v1676 = vpack.c.b16 %v1660, %v1660
      %v1677 = vpack.c.b16 %v1661, %v1661
      %v1678 = vpack.c.b16 %v1662, %v1662
      %v1679 = vpack.c.b16 %v1663, %v1663
      %v1680 = vpack.c.b16 %v1664, %v1664
      %v1681 = vpack.c.b16 %v1665, %v1665
      %v1682 = vpack.c.b16 %v1666, %v1666
      %v1683 = vpack.c.b16 %v1667, %v1667
      %vm1700 = vcmask 199680
      %1701 = vst.msk [vmem:[%s484] sm:$0xf] %vm1700, %v1668
      %1702 = vst.msk [vmem:[%s484 + $0x4] sm:$0xf] %vm1700, %v1669
      %1703 = vst.msk [vmem:[%s484 + $0x8] sm:$0xf] %vm1700, %v1670
      %1704 = vst.msk [vmem:[%s484 + $0xc] sm:$0xf] %vm1700, %v1671
      %1705 = vst.msk [vmem:[%s484 + $0x10] sm:$0xf] %vm1700, %v1672
      %1706 = vst.msk [vmem:[%s484 + $0x14] sm:$0xf] %vm1700, %v1673
      %1707 = vst.msk [vmem:[%s484 + $0x18] sm:$0xf] %vm1700, %v1674
      %1708 = vst.msk [vmem:[%s484 + $0x1c] sm:$0xf] %vm1700, %v1675
      %1709 = vst.msk [vmem:[%s484 + $0x20] sm:$0xf] %vm1700, %v1676
      %1710 = vst.msk [vmem:[%s484 + $0x24] sm:$0xf] %vm1700, %v1677
      %1711 = vst.msk [vmem:[%s484 + $0x28] sm:$0xf] %vm1700, %v1678
      %1712 = vst.msk [vmem:[%s484 + $0x2c] sm:$0xf] %vm1700, %v1679
      %1713 = vst.msk [vmem:[%s484 + $0x30] sm:$0xf] %vm1700, %v1680
      %1714 = vst.msk [vmem:[%s484 + $0x34] sm:$0xf] %vm1700, %v1681
      %1715 = vst.msk [vmem:[%s484 + $0x38] sm:$0xf] %vm1700, %v1682
      %1716 = vst.msk [vmem:[%s484 + $0x3c] sm:$0xf] %vm1700, %v1683
      %vm1717 = vcmask 203776
      %v1718 = vsel %vm1717, %v1620, 0.0
      %v1719 = vsel %vm1717, %v1621, 0.0
      %v1720 = vadd.f32 %v1718, %v1719
      %v1721 = vsel %vm1717, %v1622, 0.0
      %v1722 = vadd.f32 %v1720, %v1721
      %v1723 = vsel %vm1717, %v1623, 0.0
      %v1724 = vadd.f32 %v1722, %v1723
      %v1725 = vsel %vm1717, %v1624, 0.0
      %v1726 = vadd.f32 %v1724, %v1725
      %v1727 = vsel %vm1717, %v1625, 0.0
      %v1728 = vadd.f32 %v1726, %v1727
      %v1729 = vsel %vm1717, %v1626, 0.0
      %v1730 = vadd.f32 %v1728, %v1729
      %v1731 = vsel %vm1717, %v1627, 0.0
      %v1732 = vadd.f32 %v1730, %v1731
      %v1733 = vsel %vm1717, %v1628, 0.0
      %v1734 = vadd.f32 %v1732, %v1733
      %v1735 = vsel %vm1717, %v1629, 0.0
      %v1736 = vadd.f32 %v1734, %v1735
      %v1737 = vsel %vm1717, %v1630, 0.0
      %v1738 = vadd.f32 %v1736, %v1737
      %v1739 = vsel %vm1717, %v1631, 0.0
      %v1740 = vadd.f32 %v1738, %v1739
      %v1741 = vsel %vm1717, %v1632, 0.0
      %v1742 = vadd.f32 %v1740, %v1741
      %v1743 = vsel %vm1717, %v1633, 0.0
      %v1744 = vadd.f32 %v1742, %v1743
      %v1745 = vsel %vm1717, %v1634, 0.0
      %v1746 = vadd.f32 %v1744, %v1745
      %v1747 = vsel %vm1717, %v1635, 0.0
      %v1748 = vadd.f32 %v1746, %v1747
      %v1749 = vrot.slane %v1748, 4
      %v1750 = vadd.f32 %v1748, %v1749
      %v1751 = vrot.slane %v1750, 2
      %v1752 = vadd.f32 %v1750, %v1751
      %v1753 = vrot.slane %v1752, 1
      %v1754 = vadd.f32 %v1752, %v1753
      %v1755 = vmul.f32 %v1620, %v1620
      %v1756 = vmul.f32 %v1621, %v1621
      %v1757 = vmul.f32 %v1622, %v1622
      %v1758 = vmul.f32 %v1623, %v1623
      %v1759 = vmul.f32 %v1624, %v1624
      %v1760 = vmul.f32 %v1625, %v1625
      %v1761 = vmul.f32 %v1626, %v1626
      %v1762 = vmul.f32 %v1627, %v1627
      %v1763 = vmul.f32 %v1628, %v1628
      %v1764 = vmul.f32 %v1629, %v1629
      %v1765 = vmul.f32 %v1630, %v1630
      %v1766 = vmul.f32 %v1631, %v1631
      %v1767 = vmul.f32 %v1632, %v1632
      %v1768 = vmul.f32 %v1633, %v1633
      %v1769 = vmul.f32 %v1634, %v1634
      %v1770 = vmul.f32 %v1635, %v1635
      %v1771 = vsel %vm1717, %v1755, 0.0
      %v1772 = vsel %vm1717, %v1756, 0.0
      %v1773 = vadd.f32 %v1771, %v1772
      %v1774 = vsel %vm1717, %v1757, 0.0
      %v1775 = vadd.f32 %v1773, %v1774
      %v1776 = vsel %vm1717, %v1758, 0.0
      %v1777 = vadd.f32 %v1775, %v1776
      %v1778 = vsel %vm1717, %v1759, 0.0
      %v1779 = vadd.f32 %v1777, %v1778
      %v1780 = vsel %vm1717, %v1760, 0.0
      %v1781 = vadd.f32 %v1779, %v1780
      %v1782 = vsel %vm1717, %v1761, 0.0
      %v1783 = vadd.f32 %v1781, %v1782
      %v1784 = vsel %vm1717, %v1762, 0.0
      %v1785 = vadd.f32 %v1783, %v1784
      %v1786 = vsel %vm1717, %v1763, 0.0
      %v1787 = vadd.f32 %v1785, %v1786
      %v1788 = vsel %vm1717, %v1764, 0.0
      %v1789 = vadd.f32 %v1787, %v1788
      %v1790 = vsel %vm1717, %v1765, 0.0
      %v1791 = vadd.f32 %v1789, %v1790
      %v1792 = vsel %vm1717, %v1766, 0.0
      %v1793 = vadd.f32 %v1791, %v1792
      %v1794 = vsel %vm1717, %v1767, 0.0
      %v1795 = vadd.f32 %v1793, %v1794
      %v1796 = vsel %vm1717, %v1768, 0.0
      %v1797 = vadd.f32 %v1795, %v1796
      %v1798 = vsel %vm1717, %v1769, 0.0
      %v1799 = vadd.f32 %v1797, %v1798
      %v1800 = vsel %vm1717, %v1770, 0.0
      %v1801 = vadd.f32 %v1799, %v1800
      %v1802 = vrot.slane %v1801, 4
      %v1803 = vadd.f32 %v1801, %v1802
      %v1804 = vrot.slane %v1803, 2
      %v1805 = vadd.f32 %v1803, %v1804
      %v1806 = vrot.slane %v1805, 1
      %v1807 = vadd.f32 %v1805, %v1806
      %v1808 = vlaneseq
      %v1809 = vshrl.u32 %v1808, 7
      %vm1810 = vcmp.eq.s32.totalorder %v1809, 0
      %vm1811 = vcmp.eq.s32.totalorder %v1809, 1
      %v1812 = vsel %vm1811, %v1807, 0.0
      %v1813 = vsel %vm1810, %v1754, %v1812
      %1814 = vst.msk [vmem:[%s493] sm:$0xff] %vm1717, %v1813
      %s1815 = smul.u32 16, %s25
      %p1816 = scmp.lt.s32.totalorder %s24, 1
      %s1817 = scalar_select %p1816, %s24, 1
      %p1818 = scmp.lt.s32.totalorder %s1815, 31
      %s1819 = scalar_select %p1818, %s1815, 31
      %s1820 = smul.addr %s1817, 32
      %s1821 = sadd.s32 %s1819, %s1820
      %s1822 = smul.addr %s1821, 4
      %s1823 = scalar_lea.vmem %s7, %s1822
      %p1824 = scmp.lt.s32.totalorder %s24, 1
      %s1825 = scalar_select %p1824, %s24, 1
      %p1826 = scmp.lt.s32.totalorder %s25, 1
      %s1827 = scalar_select %p1826, %s25, 1
      %s1828 = smul.addr %s1825, 2
      %s1829 = sadd.s32 %s1827, %s1828
      %s1830 = smul.addr %s1829, 8
      %s1831 = scalar_lea.vmem %s8, %s1830
      // Predicated region
      $region49: #{cnn_generator_forward.6} parent=47 // pred_check
        %p1832 = pneg %p236
      $region50: #{cnn_generator_forward.6} parent=47 // pred_check_branch
        %1834 = sbr.rel (%p1832) target = $region52
      $region51: #{cnn_generator_forward.6} parent=47 // pred_region
        %s1835 = smul.u32 16, %s25
      $region52: #{cnn_generator_forward.6} parent=47 // pred_fallthru
        _
      // Predicated region
      $region53: #{cnn_generator_forward.6} parent=47 // pred_check
        %p1836 = pneg %p264
      $region54: #{cnn_generator_forward.6} parent=47 // pred_check_branch
        %1838 = sbr.rel (%p1836) target = $region56
      $region55: #{cnn_generator_forward.6} parent=47 // pred_region
        _
      $region56: #{cnn_generator_forward.6} parent=47 // pred_fallthru
        _
    $region48: #{cnn_generator_forward.6} parent=5 // pred_fallthru
      _
    %p1839 = scmp.le.s32.totalorder 2, %s15
    // Predicated region
    $region57: #{cnn_generator_forward.6} parent=5 // pred_check
      %p1840 = pneg %p1839
    $region58: #{cnn_generator_forward.6} parent=5 // pred_check_branch
      %1842 = sbr.rel (%p1840) target = $region60
    $region59: #{cnn_generator_forward.6} parent=5 // pred_region
      %s1843 = ssub.s32 %s15, 2
      // Predicated region
      $region61: #{cnn_generator_forward.6} parent=59 // pred_check
        %p1844 = pneg %p242
      $region62: #{cnn_generator_forward.6} parent=59 // pred_check_branch
        %1846 = sbr.rel (%p1844) target = $region64
      $region63: #{cnn_generator_forward.6} parent=59 // pred_region
        %s1847 = smul.u32 16, %s27
        %p1848 = scmp.lt.s32.totalorder %s26, 1
        %s1849 = scalar_select %p1848, %s26, 1
        %p1850 = scmp.lt.s32.totalorder %s1847, 31
        %s1851 = scalar_select %p1850, %s1847, 31
        %s1852 = smul.addr %s1849, 32
        %s1853 = sadd.s32 %s1851, %s1852
        %s1854 = smul.addr %s1853, 4
        %s1855 = scalar_lea.vmem %s7, %s1854
      $region64: #{cnn_generator_forward.6} parent=59 // pred_fallthru
        _
      // Predicated region
      $region65: #{cnn_generator_forward.6} parent=59 // pred_check
        %p1856 = pneg %p270
      $region66: #{cnn_generator_forward.6} parent=59 // pred_check_branch
        %1858 = sbr.rel (%p1856) target = $region68
      $region67: #{cnn_generator_forward.6} parent=59 // pred_region
        %p1859 = scmp.lt.s32.totalorder %s26, 1
        %s1860 = scalar_select %p1859, %s26, 1
        %p1861 = scmp.lt.s32.totalorder %s27, 1
        %s1862 = scalar_select %p1861, %s27, 1
        %s1863 = smul.addr %s1860, 2
        %s1864 = sadd.s32 %s1862, %s1863
        %s1865 = smul.addr %s1864, 8
        %s1866 = scalar_lea.vmem %s8, %s1865
      $region68: #{cnn_generator_forward.6} parent=59 // pred_fallthru
        _
    $region60: #{cnn_generator_forward.6} parent=5 // pred_fallthru
      _
  $region6: #{cnn_generator_forward.6} parent=0 // loop_footer
    %s19 = sadd.s32 1, %s15
  $region7: #{cnn_generator_forward.6} parent=0 // loop_footer_branch
    %14 = sbr.rel target = $region3
  $region8: #{cnn_generator_forward.6} parent=0 // loop_exit
    _

// kernel: cnn_generator_forward.7
$region0: #{cnn_generator_forward.7}
  #allocation0 [shape = 'u32[]', space=smem, size = 0x4, offset = 0x4, fixed_abs, tag = 'smem constant byte address 0x4 - core index']
  #allocation1 [shape = 'u32[144,128]{1,0:T(1,128)}', space=vmem, size = 0x12000, scoped, tag = 'internal scratch']
  %s0 = inlined_call_operand.vmem [shape: bf16[2,128,50], index: 0, kind: input, shape index: {}]
  %s1 = inlined_call_operand.vmem [shape: f32[1,50], index: 1, kind: input, shape index: {}]
  %s2 = inlined_call_operand.vmem [shape: f32[1,50], index: 2, kind: input, shape index: {}]
  %s3 = inlined_call_operand.vmem [shape: bf16[2,50,3], index: 3, kind: input, shape index: {}]
  %s4 = inlined_call_operand.vmem [shape: f32[1,3], index: 4, kind: input, shape index: {}]
  %s5 = inlined_call_operand.vmem [shape: f32[2,64,3], index: 5, kind: output, shape index: {}]
  %s6 = sld [smem:[#allocation0]]
  $region53: #{cnn_generator_forward.7} parent=0
    _
  %s8 = ssub.s32 1, %s6
  %s9 = scalar_select 0, %s8, %s6
  loop: start=0, step=1, limit=6
  $region2: #{cnn_generator_forward.7} parent=0 // loop_pre_header
    _
  $region3: #{cnn_generator_forward.7} parent=0 // loop_header
    %s11 = sphi 0, %s15
    %p12 = scmp.ge.s32.totalorder %s11, 6
    %s18 = sphi 0, %s30
    %s19 = sphi 0, %s26
    %s20 = sphi 0, %s18
    %s21 = sphi 0, %s19
    %s22 = sphi 0, %s20
    %s23 = sphi 0, %s21
    %s35 = sphi 0, %s37
    %s38 = sphi 0, %s35
    %s39 = sphi 0, %s38
    %s55 = sphi 0, %s39
    %s59 = sphi 0, %s59
    %s61 = sphi 0, %s59
    %s62 = sphi 0, %s61
    %s76 = sphi 0, %s62
    %s80 = sphi 0, %s80
    %s82 = sphi 0, %s80
    %s83 = sphi 0, %s82
    %s97 = sphi 0, %s83
    %s101 = sphi 0, %s101
    %s103 = sphi 0, %s101
    %s104 = sphi 0, %s103
    %s118 = sphi 0, %s104
    %s122 = sphi 0, %s122
    %s124 = sphi 0, %s122
    %s125 = sphi 0, %s124
    %s139 = sphi 0, %s125
    %s147 = sphi 0, %s149
    %s150 = sphi 0, %s147
    %s151 = sphi 0, %s150
    %s167 = sphi 0, %s151
  $region4: #{cnn_generator_forward.7} parent=0 // loop_header_branch
    %14 = sbr.rel (%p12) target = $region8
  $region5: #{cnn_generator_forward.7} parent=0 // loop_body
    %s16 = ssub.s32 %s11, 1
    %s17 = ssub.s32 %s11, 2
    %s24 = sadd.s32 1, %s19
    %p25 = scmp.ge.s32.totalorder %s24, 2
    %s26 = scalar_select %p25, 0, %s24
    %s27 = sadd.s32 1, %s18
    %s28 = scalar_select %p25, %s27, %s18
    %p29 = scmp.ge.s32.totalorder %s28, 2
    %s30 = scalar_select %p29, 0, %s28
    %s31 = ssub.s32 %s18, %s30
    %s32 = ssub.s32 %s19, %s26
    %s33 = sor.u32 %s31, %s32
    %p34 = scmp.eq.s32.totalorder %s33, 0
    %s36 = sadd.s32 %s35, 1
    %s37 = scalar_select %p34, %s35, %s36
    %p40 = pneg %p34
    %p41 = scmp.eq.s32.totalorder %s11, 3
    %p42 = por %p40, %p41
    %p43 = scmp.ne.s32.totalorder %s35, %s38
    %p44 = scmp.eq.s32.totalorder %s11, 0
    %p45 = por %p43, %p44
    %p46 = scmp.ne.s32.totalorder %s35, %s38
    %p47 = scmp.eq.s32.totalorder %s16, 3
    %p48 = por %p46, %p47
    %p49 = scmp.ne.s32.totalorder %s38, %s39
    %p50 = scmp.eq.s32.totalorder %s16, 0
    %p51 = por %p49, %p50
    %p52 = scmp.ne.s32.totalorder %s38, %s39
    %p53 = scmp.eq.s32.totalorder %s17, 3
    %p54 = por %p52, %p53
    %p56 = scmp.ne.s32.totalorder %s39, %s55
    %p57 = scmp.eq.s32.totalorder %s17, 0
    %p58 = por %p56, %p57
    %s60 = sadd.s32 %s59, 1
    %p63 = scmp.eq.s32.totalorder %s11, 3
    %p64 = scmp.ne.s32.totalorder %s59, %s61
    %p65 = scmp.eq.s32.totalorder %s11, 0
    %p66 = por %p64, %p65
    %p67 = scmp.ne.s32.totalorder %s59, %s61
    %p68 = scmp.eq.s32.totalorder %s16, 3
    %p69 = por %p67, %p68
    %p70 = scmp.ne.s32.totalorder %s61, %s62
    %p71 = scmp.eq.s32.totalorder %s16, 0
    %p72 = por %p70, %p71
    %p73 = scmp.ne.s32.totalorder %s61, %s62
    %p74 = scmp.eq.s32.totalorder %s17, 3
    %p75 = por %p73, %p74
    %p77 = scmp.ne.s32.totalorder %s62, %s76
    %p78 = scmp.eq.s32.totalorder %s17, 0
    %p79 = por %p77, %p78
    %s81 = sadd.s32 %s80, 1
    %p84 = scmp.eq.s32.totalorder %s11, 3
    %p85 = scmp.ne.s32.totalorder %s80, %s82
    %p86 = scmp.eq.s32.totalorder %s11, 0
    %p87 = por %p85, %p86
    %p88 = scmp.ne.s32.totalorder %s80, %s82
    %p89 = scmp.eq.s32.totalorder %s16, 3
    %p90 = por %p88, %p89
    %p91 = scmp.ne.s32.totalorder %s82, %s83
    %p92 = scmp.eq.s32.totalorder %s16, 0
    %p93 = por %p91, %p92
    %p94 = scmp.ne.s32.totalorder %s82, %s83
    %p95 = scmp.eq.s32.totalorder %s17, 3
    %p96 = por %p94, %p95
    %p98 = scmp.ne.s32.totalorder %s83, %s97
    %p99 = scmp.eq.s32.totalorder %s17, 0
    %p100 = por %p98, %p99
    %s102 = sadd.s32 %s101, 1
    %p105 = scmp.eq.s32.totalorder %s11, 3
    %p106 = scmp.ne.s32.totalorder %s101, %s103
    %p107 = scmp.eq.s32.totalorder %s11, 0
    %p108 = por %p106, %p107
    %p109 = scmp.ne.s32.totalorder %s101, %s103
    %p110 = scmp.eq.s32.totalorder %s16, 3
    %p111 = por %p109, %p110
    %p112 = scmp.ne.s32.totalorder %s103, %s104
    %p113 = scmp.eq.s32.totalorder %s16, 0
    %p114 = por %p112, %p113
    %p115 = scmp.ne.s32.totalorder %s103, %s104
    %p116 = scmp.eq.s32.totalorder %s17, 3
    %p117 = por %p115, %p116
    %p119 = scmp.ne.s32.totalorder %s104, %s118
    %p120 = scmp.eq.s32.totalorder %s17, 0
    %p121 = por %p119, %p120
    %s123 = sadd.s32 %s122, 1
    %p126 = scmp.eq.s32.totalorder %s11, 3
    %p127 = scmp.ne.s32.totalorder %s122, %s124
    %p128 = scmp.eq.s32.totalorder %s11, 0
    %p129 = por %p127, %p128
    %p130 = scmp.ne.s32.totalorder %s122, %s124
    %p131 = scmp.eq.s32.totalorder %s16, 3
    %p132 = por %p130, %p131
    %p133 = scmp.ne.s32.totalorder %s124, %s125
    %p134 = scmp.eq.s32.totalorder %s16, 0
    %p135 = por %p133, %p134
    %p136 = scmp.ne.s32.totalorder %s124, %s125
    %p137 = scmp.eq.s32.totalorder %s17, 3
    %p138 = por %p136, %p137
    %p140 = scmp.ne.s32.totalorder %s125, %s139
    %p141 = scmp.eq.s32.totalorder %s17, 0
    %p142 = por %p140, %p141
    %s143 = ssub.s32 %s18, %s30
    %s144 = ssub.s32 %s19, %s26
    %s145 = sor.u32 %s143, %s144
    %p146 = scmp.eq.s32.totalorder %s145, 0
    %s148 = sadd.s32 %s147, 1
    %s149 = scalar_select %p146, %s147, %s148
    %p152 = pneg %p146
    %p153 = scmp.eq.s32.totalorder %s11, 3
    %p154 = por %p152, %p153
    %p155 = scmp.ne.s32.totalorder %s147, %s150
    %p156 = scmp.eq.s32.totalorder %s11, 0
    %p157 = por %p155, %p156
    %p158 = scmp.ne.s32.totalorder %s147, %s150
    %p159 = scmp.eq.s32.totalorder %s16, 3
    %p160 = por %p158, %p159
    %p161 = scmp.ne.s32.totalorder %s150, %s151
    %p162 = scmp.eq.s32.totalorder %s16, 0
    %p163 = por %p161, %p162
    %p164 = scmp.ne.s32.totalorder %s150, %s151
    %p165 = scmp.eq.s32.totalorder %s17, 3
    %p166 = por %p164, %p165
    %p168 = scmp.ne.s32.totalorder %s151, %s167
    %p169 = scmp.eq.s32.totalorder %s17, 0
    %p170 = por %p168, %p169
    %p171 = scmp.le.s32.totalorder 1, %s11
    %p172 = scmp.lt.s32.totalorder %s11, 5
    %p173 = pnand %p171, %p172
    %p174 = pneg %p173
    // Predicated region
    $region9: #{cnn_generator_forward.7} parent=5 // pred_check
      _
    $region10: #{cnn_generator_forward.7} parent=5 // pred_check_branch
      %176 = sbr.rel (%p173) target = $region12
    $region11: #{cnn_generator_forward.7} parent=5 // pred_region
      %s177 = ssub.s32 %s11, 1
      // Predicated region
      $region13: #{cnn_generator_forward.7} parent=11 // pred_check
        %p178 = pneg %p72
      $region14: #{cnn_generator_forward.7} parent=11 // pred_check_branch
        %180 = sbr.rel (%p178) target = $region16
      $region15: #{cnn_generator_forward.7} parent=11 // pred_region
        _
      $region16: #{cnn_generator_forward.7} parent=11 // pred_fallthru
        _
      // Predicated region
      $region17: #{cnn_generator_forward.7} parent=11 // pred_check
        %p181 = pneg %p93
      $region18: #{cnn_generator_forward.7} parent=11 // pred_check_branch
        %183 = sbr.rel (%p181) target = $region20
      $region19: #{cnn_generator_forward.7} parent=11 // pred_region
        _
      $region20: #{cnn_generator_forward.7} parent=11 // pred_fallthru
        _
      // Predicated region
      $region21: #{cnn_generator_forward.7} parent=11 // pred_check
        %p184 = pneg %p114
      $region22: #{cnn_generator_forward.7} parent=11 // pred_check_branch
        %186 = sbr.rel (%p184) target = $region24
      $region23: #{cnn_generator_forward.7} parent=11 // pred_region
        _
      $region24: #{cnn_generator_forward.7} parent=11 // pred_fallthru
        _
      // Predicated region
      $region25: #{cnn_generator_forward.7} parent=11 // pred_check
        %p187 = pneg %p135
      $region26: #{cnn_generator_forward.7} parent=11 // pred_check_branch
        %189 = sbr.rel (%p187) target = $region28
      $region27: #{cnn_generator_forward.7} parent=11 // pred_region
        _
      $region28: #{cnn_generator_forward.7} parent=11 // pred_fallthru
        _
    $region12: #{cnn_generator_forward.7} parent=5 // pred_fallthru
      _
    %p190 = scmp.lt.s32.totalorder %s11, 4
    // Predicated region
    $region29: #{cnn_generator_forward.7} parent=5 // pred_check
      %p191 = pneg %p190
    $region30: #{cnn_generator_forward.7} parent=5 // pred_check_branch
      %193 = sbr.rel (%p191) target = $region32
    $region31: #{cnn_generator_forward.7} parent=5 // pred_region
      // Predicated region
      $region33: #{cnn_generator_forward.7} parent=31 // pred_check
        %p194 = pneg %p45
      $region34: #{cnn_generator_forward.7} parent=31 // pred_check_branch
        %196 = sbr.rel (%p194) target = $region36
      $region35: #{cnn_generator_forward.7} parent=31 // pred_region
        %s197 = smul.u32 8, %s19
        %p198 = scmp.lt.s32.totalorder %s18, 1
        %s199 = scalar_select %p198, %s18, 1
        %p200 = scmp.lt.s32.totalorder %s197, 15
        %s201 = scalar_select %p200, %s197, 15
        %s202 = smul.addr %s199, 16
        %s203 = sadd.s32 %s201, %s202
        %s204 = smul.addr %s203, 4
        %s205 = scalar_lea.vmem %s0, %s204
        %s206 = smul.u32 8, %s19
      $region36: #{cnn_generator_forward.7} parent=31 // pred_fallthru
        _
    $region32: #{cnn_generator_forward.7} parent=5 // pred_fallthru
      _
    %p207 = scmp.le.s32.totalorder 1, %s11
    %p208 = scmp.lt.s32.totalorder %s11, 5
    %p209 = pnand %p207, %p208
    %p210 = pneg %p209
    // Predicated region
    $region37: #{cnn_generator_forward.7} parent=5 // pred_check
      _
    $region38: #{cnn_generator_forward.7} parent=5 // pred_check_branch
      %212 = sbr.rel (%p209) target = $region40
    $region39: #{cnn_generator_forward.7} parent=5 // pred_region
      %s213 = ssub.s32 %s11, 1
      %s214 = smul.u32 8, %s21
      %p215 = scmp.lt.s32.totalorder %s20, 1
      %s216 = scalar_select %p215, %s20, 1
      %p217 = scmp.lt.s32.totalorder %s214, 15
      %s218 = scalar_select %p217, %s214, 15
      %s219 = smul.addr %s216, 16
      %s220 = sadd.s32 %s218, %s219
      %s221 = smul.addr %s220, 4
      %s222 = scalar_lea.vmem %s0, %s221
      %p223 = pneg %p51
      %p224 = pneg %p48
      %p225 = pneg %p72
      %p226 = pneg %p69
      %p227 = pneg %p93
      %p228 = pneg %p90
      %p229 = pneg %p114
      %p230 = pneg %p111
      %p231 = pneg %p135
      %p232 = pneg %p132
      %p233 = pneg %p163
      %p234 = pneg %p160
      %s235 = smul.u32 4, %s21
      %p236 = scmp.lt.s32.totalorder %s20, 1
      %s237 = scalar_select %p236, %s20, 1
      %p238 = scmp.lt.s32.totalorder %s235, 7
      %s239 = scalar_select %p238, %s235, 7
      %s240 = smul.addr %s237, 8
      %s241 = sadd.s32 %s239, %s240
      %s242 = smul.addr %s241, 8
      %s243 = scalar_lea.vmem %s5, %s242
      %s244 = smul.u32 8, %s21
      %p245 = scmp.lt.s32.totalorder %s20, 1
      %s246 = scalar_select %p245, %s20, 1
      %p247 = scmp.lt.s32.totalorder %s244, 15
      %s248 = scalar_select %p247, %s244, 15
      %s249 = smul.addr %s246, 16
      %s250 = sadd.s32 %s248, %s249
      %s251 = smul.addr %s250, 4
      %s252 = scalar_lea.vmem %s0, %s251
      %s253 = smul.u32 8, %s21
      %s254 = smul.u32 4, %s21
      %p255 = scmp.lt.s32.totalorder %s20, 1
      %s256 = scalar_select %p255, %s20, 1
      %p257 = scmp.lt.s32.totalorder %s254, 7
      %s258 = scalar_select %p257, %s254, 7
      %s259 = smul.addr %s256, 8
      %s260 = sadd.s32 %s258, %s259
      %s261 = smul.addr %s260, 8
      %s262 = scalar_lea.vmem %s5, %s261
      %s263 = smul.u32 4, %s21
      %v265 = vld [vmem:[%s252] sm:$0xf]
      %v266 = vld [vmem:[%s252 + $0x4] sm:$0xf]
      %v267 = vld [vmem:[%s252 + $0x8] sm:$0xf]
      %v268 = vld [vmem:[%s252 + $0xc] sm:$0xf]
      %v269 = vld [vmem:[%s252 + $0x10] sm:$0xf]
      %v270 = vld [vmem:[%s252 + $0x14] sm:$0xf]
      %v271 = vld [vmem:[%s252 + $0x18] sm:$0xf]
      %v272 = vld [vmem:[%s252 + $0x1c] sm:$0xf]
      %v273 = vunpack.c.l.bf16 %v265
      %v274 = vunpack.c.l.bf16 %v266
      %v275 = vunpack.c.l.bf16 %v267
      %v276 = vunpack.c.l.bf16 %v268
      %v277 = vunpack.c.l.bf16 %v269
      %v278 = vunpack.c.l.bf16 %v270
      %v279 = vunpack.c.l.bf16 %v271
      %v280 = vunpack.c.l.bf16 %v272
      %v281 = vld [vmem:[%s1] sm:$0x1]
      %v283 = vlaneseq
      %v284 = vshrl.u32 %v283, 7
      %v285 = vsub.s32 0, %v284
      %v286 = vrot.slane %v281, %v285
      %v288 = vmul.f32 %v273, %v286
      %v289 = vmul.f32 %v274, %v286
      %v290 = vmul.f32 %v275, %v286
      %v291 = vmul.f32 %v276, %v286
      %v292 = vmul.f32 %v277, %v286
      %v293 = vmul.f32 %v278, %v286
      %v294 = vmul.f32 %v279, %v286
      %v295 = vmul.f32 %v280, %v286
      %v296 = vld [vmem:[%s2] sm:$0x1]
      %v298 = vlaneseq
      %v299 = vshrl.u32 %v298, 7
      %v300 = vsub.s32 0, %v299
      %v301 = vrot.slane %v296, %v300
      %v303 = vadd.f32 %v288, %v301
      %v304 = vadd.f32 %v289, %v301
      %v305 = vadd.f32 %v290, %v301
      %v306 = vadd.f32 %v291, %v301
      %v307 = vadd.f32 %v292, %v301
      %v308 = vadd.f32 %v293, %v301
      %v309 = vadd.f32 %v294, %v301
      %v310 = vadd.f32 %v295, %v301
      %v311 = vmax.f32 %v303, 0.0
      %v312 = vmax.f32 %v304, 0.0
      %v313 = vmax.f32 %v305, 0.0
      %v314 = vmax.f32 %v306, 0.0
      %v315 = vmax.f32 %v307, 0.0
      %v316 = vmax.f32 %v308, 0.0
      %v317 = vmax.f32 %v309, 0.0
      %v318 = vmax.f32 %v310, 0.0
      %v319 = vpack.c.bf16 %v312, %v311
      %v320 = vpack.c.bf16 %v314, %v313
      %v321 = vpack.c.bf16 %v316, %v315
      %v322 = vpack.c.bf16 %v318, %v317
      %v327 = vunpack.c.l.b16 %v319
      %v328 = vunpack.c.h.b16 %v319
      %v329 = vunpack.c.l.b16 %v320
      %v330 = vunpack.c.h.b16 %v320
      %v331 = vunpack.c.l.b16 %v321
      %v332 = vunpack.c.h.b16 %v321
      %v333 = vunpack.c.l.b16 %v322
      %v334 = vunpack.c.h.b16 %v322
      %v335 = vld [vmem:[%s3] sm:$0xf]
      %v336 = vld [vmem:[%s3 + $0x4] sm:$0xf]
      %v337 = vld [vmem:[%s3 + $0x8] sm:$0xf]
      %v338 = vld [vmem:[%s3 + $0xc] sm:$0xf]
      %v339 = vld [vmem:[%s3 + $0x10] sm:$0xf]
      %v340 = vld [vmem:[%s3 + $0x14] sm:$0xf]
      %v341 = vld [vmem:[%s3 + $0x18] sm:$0x1]
      %s342 = scalar_lea.vmem %s3, 28
      %v343 = vld [vmem:[%s342] sm:$0xf]
      %v344 = vld [vmem:[%s342 + $0x4] sm:$0xf]
      %v345 = vld [vmem:[%s342 + $0x8] sm:$0xf]
      %v346 = vld [vmem:[%s342 + $0xc] sm:$0xf]
      %v347 = vld [vmem:[%s342 + $0x10] sm:$0xf]
      %v348 = vld [vmem:[%s342 + $0x14] sm:$0xf]
      %v349 = vld [vmem:[%s342 + $0x18] sm:$0x1]
      %v350 = vpack.c.b16 %v330, %v328
      %v351 = vpack.c.b16 %v334, %v332
      %v359 = vunpack.c.l.b16 %v343
      %v360 = vunpack.c.l.b16 %v344
      %v361 = vunpack.c.l.b16 %v345
      %v362 = vunpack.c.l.b16 %v346
      %v363 = vunpack.c.l.b16 %v347
      %v364 = vunpack.c.l.b16 %v348
      %v365 = vunpack.c.l.b16 %v349
      %v366 = vpack.c.b16 %v360, %v359
      %v367 = vpack.c.b16 %v362, %v361
      %v368 = vpack.c.b16 %v364, %v363
      %v369 = vpack.c.b16 %v365, %v365
      %vm373 = vcmask 408576
      %v375 = vsel %vm373, %v350, 0
      %v378 = vsel %vm373, %v351, 0
      %vm380 = vcmask 1040384
      %v382 = vsel %vm380, %v369, 0
      %384 = vmatprep.subr.bf16.mxu0 0
      %385 = vmatpush1.bf16.msra.mxu0 %v366
      %386 = vmatprep.subr.bf16.mxu0 0
      %387 = vmatpush1.bf16.msra.mxu0 %v367
      %388 = vmatprep.subr.bf16.mxu0 0
      %389 = vmatpush1.bf16.msra.mxu0 %v368
      %390 = vmatprep.subr.bf16.mxu0 0
      %391 = vmatpush1.bf16.msra.mxu0 %v382
      %392 = vmatprep.subr.bf16.mxu0 0
      %393 = vmatpush1.bf16.msra.mxu0 0
      %394 = vmatprep.subr.bf16.mxu0 0
      %395 = vmatpush1.bf16.msra.mxu0 0
      %396 = vmatprep.subr.bf16.mxu0 0
      %397 = vmatpush1.bf16.msra.mxu0 0
      %398 = vmatprep.subr.bf16.mxu0 0
      %399 = vmatpush1.bf16.msra.mxu0 0
      %400 = vmatprep.subr.bf16.mxu0 0
      %401 = vmatpush1.bf16.msra.mxu0 0
      %402 = vmatprep.subr.bf16.mxu0 0
      %403 = vmatpush1.bf16.msra.mxu0 0
      %404 = vmatprep.subr.bf16.mxu0 0
      %405 = vmatpush1.bf16.msra.mxu0 0
      %406 = vmatprep.subr.bf16.mxu0 0
      %407 = vmatpush1.bf16.msra.mxu0 0
      %408 = vmatprep.subr.bf16.mxu0 0
      %409 = vmatpush1.bf16.msra.mxu0 0
      %410 = vmatprep.subr.bf16.mxu0 0
      %411 = vmatpush1.bf16.msra.mxu0 0
      %412 = vmatprep.subr.bf16.mxu0 0
      %413 = vmatpush1.bf16.msra.mxu0 0
      %414 = vmatprep.subr.bf16.mxu0 0
      %415 = vmatpush1.bf16.msra.mxu0 0
      %416 = vmatprep.mubr.bf16.mxu0 0
      %417 = vmatmul.mubr.bf16.gmra.mrb[0].mxu0 %v375
      %v418 = vpop.f32.mrb[0].mxu0
      %v419 = vadd.f32 0.0, %v418
      %v420 = vpop.f32.mrb[0].mxu0
      %v421 = vpop.f32.mrb[0].mxu0
      %v422 = vadd.f32 0.0, %v421
      %v423 = vpop.f32.mrb[0].mxu0
      %424 = vmatprep.mubr.bf16.mxu0 0
      %425 = vmatmul.mubr.bf16.gmra.mrb[0].mxu0 %v378
      %v426 = vpop.f32.mrb[0].mxu0
      %v427 = vadd.f32 0.0, %v426
      %v428 = vpop.f32.mrb[0].mxu0
      %v429 = vpop.f32.mrb[0].mxu0
      %v430 = vadd.f32 0.0, %v429
      %v431 = vpop.f32.mrb[0].mxu0
      %432 = vdwg.mxu0
      %v433 = vpack.c.b16 %v329, %v327
      %v434 = vpack.c.b16 %v333, %v331
      %v442 = vunpack.c.l.b16 %v335
      %v443 = vunpack.c.l.b16 %v336
      %v444 = vunpack.c.l.b16 %v337
      %v445 = vunpack.c.l.b16 %v338
      %v446 = vunpack.c.l.b16 %v339
      %v447 = vunpack.c.l.b16 %v340
      %v448 = vunpack.c.l.b16 %v341
      %v449 = vpack.c.b16 %v443, %v442
      %v450 = vpack.c.b16 %v445, %v444
      %v451 = vpack.c.b16 %v447, %v446
      %v452 = vpack.c.b16 %v448, %v448
      %v457 = vsel %vm373, %v433, 0
      %v460 = vsel %vm373, %v434, 0
      %v463 = vsel %vm380, %v452, 0
      %465 = vmatprep.subr.bf16.mxu0 0
      %466 = vmatpush1.bf16.msra.mxu0 %v449
      %467 = vmatprep.subr.bf16.mxu0 0
      %468 = vmatpush1.bf16.msra.mxu0 %v450
      %469 = vmatprep.subr.bf16.mxu0 0
      %470 = vmatpush1.bf16.msra.mxu0 %v451
      %471 = vmatprep.subr.bf16.mxu0 0
      %472 = vmatpush1.bf16.msra.mxu0 %v463
      %473 = vmatprep.subr.bf16.mxu0 0
      %474 = vmatpush1.bf16.msra.mxu0 0
      %475 = vmatprep.subr.bf16.mxu0 0
      %476 = vmatpush1.bf16.msra.mxu0 0
      %477 = vmatprep.subr.bf16.mxu0 0
      %478 = vmatpush1.bf16.msra.mxu0 0
      %479 = vmatprep.subr.bf16.mxu0 0
      %480 = vmatpush1.bf16.msra.mxu0 0
      %481 = vmatprep.subr.bf16.mxu0 0
      %482 = vmatpush1.bf16.msra.mxu0 0
      %483 = vmatprep.subr.bf16.mxu0 0
      %484 = vmatpush1.bf16.msra.mxu0 0
      %485 = vmatprep.subr.bf16.mxu0 0
      %486 = vmatpush1.bf16.msra.mxu0 0
      %487 = vmatprep.subr.bf16.mxu0 0
      %488 = vmatpush1.bf16.msra.mxu0 0
      %489 = vmatprep.subr.bf16.mxu0 0
      %490 = vmatpush1.bf16.msra.mxu0 0
      %491 = vmatprep.subr.bf16.mxu0 0
      %492 = vmatpush1.bf16.msra.mxu0 0
      %493 = vmatprep.subr.bf16.mxu0 0
      %494 = vmatpush1.bf16.msra.mxu0 0
      %495 = vmatprep.subr.bf16.mxu0 0
      %496 = vmatpush1.bf16.msra.mxu0 0
      %497 = vmatprep.mubr.bf16.mxu0 0
      %498 = vmatmul.mubr.bf16.gmra.mrb[0].mxu0 %v457
      %v499 = vpop.f32.mrb[0].mxu0
      %v500 = vadd.f32 %v419, %v499
      %v501 = vpop.f32.mrb[0].mxu0
      %v502 = vpop.f32.mrb[0].mxu0
      %v503 = vadd.f32 %v422, %v502
      %v504 = vpop.f32.mrb[0].mxu0
      %505 = vmatprep.mubr.bf16.mxu0 0
      %506 = vmatmul.mubr.bf16.gmra.mrb[0].mxu0 %v460
      %v507 = vpop.f32.mrb[0].mxu0
      %v508 = vadd.f32 %v427, %v507
      %v509 = vpop.f32.mrb[0].mxu0
      %v510 = vpop.f32.mrb[0].mxu0
      %v511 = vadd.f32 %v430, %v510
      %v512 = vpop.f32.mrb[0].mxu0
      %513 = vdwg.mxu0
      %v514 = vld [vmem:[%s4] sm:$0x1]
      %v516 = vlaneseq
      %v517 = vshrl.u32 %v516, 7
      %v518 = vsub.s32 0, %v517
      %v519 = vrot.slane %v514, %v518
      %v521 = vadd.f32 %v500, %v519
      %v522 = vadd.f32 %v503, %v519
      %v523 = vadd.f32 %v508, %v519
      %v524 = vadd.f32 %v511, %v519
      %v525 = vtanh.pop %v521
      %v526 = vtanh.pop %v522
      %v527 = vtanh.pop %v523
      %v528 = vtanh.pop %v524
      %vm529 = vcmask 23552
      %530 = vst.msk [vmem:[%s262] sm:$0xff] %vm529, %v525
      %531 = vst.msk [vmem:[%s262 + $0x8] sm:$0xff] %vm529, %v526
      %532 = vst.msk [vmem:[%s262 + $0x10] sm:$0xff] %vm529, %v527
      %533 = vst.msk [vmem:[%s262 + $0x18] sm:$0xff] %vm529, %v528
      %s534 = smul.u32 4, %s21
      %p535 = scmp.lt.s32.totalorder %s20, 1
      %s536 = scalar_select %p535, %s20, 1
      %p537 = scmp.lt.s32.totalorder %s534, 7
      %s538 = scalar_select %p537, %s534, 7
      %s539 = smul.addr %s536, 8
      %s540 = sadd.s32 %s538, %s539
      %s541 = smul.addr %s540, 8
      %s542 = scalar_lea.vmem %s5, %s541
      // Predicated region
      $region41: #{cnn_generator_forward.7} parent=39 // pred_check
        %p543 = pneg %p160
      $region42: #{cnn_generator_forward.7} parent=39 // pred_check_branch
        %545 = sbr.rel (%p543) target = $region44
      $region43: #{cnn_generator_forward.7} parent=39 // pred_region
        %s546 = smul.u32 4, %s21
      $region44: #{cnn_generator_forward.7} parent=39 // pred_fallthru
        _
    $region40: #{cnn_generator_forward.7} parent=5 // pred_fallthru
      _
    %p547 = scmp.le.s32.totalorder 2, %s11
    // Predicated region
    $region45: #{cnn_generator_forward.7} parent=5 // pred_check
      %p548 = pneg %p547
    $region46: #{cnn_generator_forward.7} parent=5 // pred_check_branch
      %550 = sbr.rel (%p548) target = $region48
    $region47: #{cnn_generator_forward.7} parent=5 // pred_region
      %s551 = ssub.s32 %s11, 2
      // Predicated region
      $region49: #{cnn_generator_forward.7} parent=47 // pred_check
        %p552 = pneg %p166
      $region50: #{cnn_generator_forward.7} parent=47 // pred_check_branch
        %554 = sbr.rel (%p552) target = $region52
      $region51: #{cnn_generator_forward.7} parent=47 // pred_region
        %s555 = smul.u32 4, %s23
        %p556 = scmp.lt.s32.totalorder %s22, 1
        %s557 = scalar_select %p556, %s22, 1
        %p558 = scmp.lt.s32.totalorder %s555, 7
        %s559 = scalar_select %p558, %s555, 7
        %s560 = smul.addr %s557, 8
        %s561 = sadd.s32 %s559, %s560
        %s562 = smul.addr %s561, 8
        %s563 = scalar_lea.vmem %s5, %s562
      $region52: #{cnn_generator_forward.7} parent=47 // pred_fallthru
        _
    $region48: #{cnn_generator_forward.7} parent=5 // pred_fallthru
      _
  $region6: #{cnn_generator_forward.7} parent=0 // loop_footer
    %s15 = sadd.s32 1, %s11
  $region7: #{cnn_generator_forward.7} parent=0 // loop_footer_branch
    %10 = sbr.rel target = $region3
  $region8: #{cnn_generator_forward.7} parent=0 // loop_exit
    _

</llo_original>
